<compile_context>
chip_gen: v7x
topology: tpu7x:2x2x1
jax: 0.10.0
libtpu: 0.0.40
codegen_flags: <defaults>
</compile_context>

<pallas_src>
import functools

import jax
import jax.numpy as jnp
from jax.experimental import pallas as pl
from jax.experimental.pallas import tpu as pltpu

MXU_DTYPE = jnp.bfloat16          # MXU operand dtype (accumulation stays f32)
LN_EPS = 1e-5

# whole-array-resident-in-VMEM spec (parameters: weights / biases / LN gains)
_FULL = pl.BlockSpec(memory_space=pltpu.MemorySpace.VMEM)


# ----------------------------------------------------------------------------
# In-kernel helpers (operate on values, f32 math, bf16 MXU operands)
# ----------------------------------------------------------------------------
def _dot(a, b):
    return jnp.dot(a.astype(MXU_DTYPE), b.astype(MXU_DTYPE),
                   preferred_element_type=jnp.float32)


def _layernorm(x, g, b):
    # biased variance, eps=1e-5 (PyTorch LayerNorm default)
    mu = jnp.mean(x, axis=-1, keepdims=True)
    var = jnp.mean(jnp.square(x - mu), axis=-1, keepdims=True)
    return (x - mu) * jax.lax.rsqrt(var + LN_EPS) * g + b


def _mha(xq, xkv, wq, bq, wk, bk, wv, bv, wo, bo, *, num_heads):
    """Multi-head attention for one batch element.

    xq: (Lq, D), xkv: (S, D) float32.  The 1/sqrt(head_dim) scale is already
    folded into wq / bq by the caller.  Heads are realized with 0/1 lane
    masks: contracting the masked full-width q against k over the full D is
    numerically identical to the per-head contraction, keeps every operand
    lane-dense (no (…,8)-wide slices, no k.T / relayouts), and costs nothing
    extra on the MXU since D < 128 pads to 128 lanes anyway.
    """
    d_model = xq.shape[-1]
    head_dim = d_model // num_heads

    q = _dot(xq, wq) + bq
    k = _dot(xkv, wk) + bk
    v = _dot(xkv, wv) + bv

    lane = jax.lax.broadcasted_iota(jnp.int32, (1, d_model), 1)
    out = jnp.zeros_like(q)
    for h in range(num_heads):
        m = ((lane >= h * head_dim) &
             (lane < (h + 1) * head_dim)).astype(jnp.float32)
        # scores: contract last axes directly (MXU-native, no transpose)
        s = jax.lax.dot_general(
            (q * m).astype(MXU_DTYPE), k.astype(MXU_DTYPE),
            (((1,), (1,)), ((), ())),
            preferred_element_type=jnp.float32)            # (Lq, S)
        s = s - jnp.max(s, axis=-1, keepdims=True)
        p = jnp.exp(s)
        p = p * pl.reciprocal(jnp.sum(p, axis=-1, keepdims=True), approx=True)
        # p @ (v*m) is nonzero only in head-h lanes -> accumulate full width
        out = out + _dot(p, v * m)
    return _dot(out, wo) + bo


def _ffn(x, w1, b1, w2, b2):
    # (tile, 2048) intermediate lives entirely in VMEM / registers
    h = jnp.maximum(_dot(x, w1) + b1, 0.0)
    return _dot(h, w2) + b2


# ----------------------------------------------------------------------------
# Fused layer kernels (one grid step = one batch element)
# ----------------------------------------------------------------------------
def _encoder_layer_kernel(x_ref,
                          wq, bq, wk, bk, wv, bv, wo, bo,
                          g1, be1,
                          w1, b1, w2, b2,
                          g2, be2,
                          o_ref, *, num_heads):
    x = x_ref[...].astype(jnp.float32)
    attn = _mha(x, x, wq[...], bq[...], wk[...], bk[...], wv[...], bv[...],
                wo[...], bo[...], num_heads=num_heads)
    y = _layernorm(x + attn, g1[...], be1[...])
    ff = _ffn(y, w1[...], b1[...], w2[...], b2[...])
    z = _layernorm(y + ff, g2[...], be2[...])
    o_ref[...] = z.astype(o_ref.dtype)


def _decoder_layer_kernel(x_ref, mem_ref,
                          swq, sbq, swk, sbk, swv, sbv, swo, sbo,
                          g1, be1,
                          cwq, cbq, cwk, cbk, cwv, cbv, cwo, cbo,
                          g2, be2,
                          w1, b1, w2, b2,
                          g3, be3,
                          o_ref, *, num_heads):
    x = x_ref[...].astype(jnp.float32)
    mem = mem_ref[...].astype(jnp.float32)
    sa = _mha(x, x, swq[...], sbq[...], swk[...], sbk[...], swv[...], sbv[...],
              swo[...], sbo[...], num_heads=num_heads)
    y = _layernorm(x + sa, g1[...], be1[...])
    ca = _mha(y, mem, cwq[...], cbq[...], cwk[...], cbk[...], cwv[...],
              cbv[...], cwo[...], cbo[...], num_heads=num_heads)
    y2 = _layernorm(y + ca, g2[...], be2[...])
    ff = _ffn(y2, w1[...], b1[...], w2[...], b2[...])
    z = _layernorm(y2 + ff, g3[...], be3[...])
    o_ref[...] = z.astype(o_ref.dtype)


# ----------------------------------------------------------------------------
# pallas_call wrappers
# ----------------------------------------------------------------------------
def _attn_args(p, head_dim):
    # fold the softmax scale into the query projection (exact)
    scale = 1.0 / float(head_dim) ** 0.5
    return [p["wq"] * scale, p["bq"] * scale,
            p["wk"], p["bk"], p["wv"], p["bv"], p["wo"], p["bo"]]


def encoder_layer(x2d, p, *, num_heads, batch, seq_len):
    d_model = x2d.shape[-1]
    head_dim = d_model // num_heads
    args = ([x2d]
            + _attn_args(p["self_attn"], head_dim)
            + [p["ln1_g"], p["ln1_b"],
               p["w1"], p["b1"], p["w2"], p["b2"],
               p["ln2_g"], p["ln2_b"]])
    row_spec = pl.BlockSpec((seq_len, d_model), lambda n: (n, 0))
    in_specs = [row_spec] + [_FULL] * (len(args) - 1)
    return pl.pallas_call(
        functools.partial(_encoder_layer_kernel, num_heads=num_heads),
        out_shape=jax.ShapeDtypeStruct(x2d.shape, x2d.dtype),
        grid=(batch,),
        in_specs=in_specs,
        out_specs=row_spec,
        compiler_params=pltpu.CompilerParams(
            dimension_semantics=("parallel",)),
    )(*args)


def decoder_layer(x2d, mem2d, p, *, num_heads, batch, tgt_len, src_len):
    d_model = x2d.shape[-1]
    head_dim = d_model // num_heads
    args = ([x2d, mem2d]
            + _attn_args(p["self_attn"], head_dim)
            + [p["ln1_g"], p["ln1_b"]]
            + _attn_args(p["cross_attn"], head_dim)
            + [p["ln2_g"], p["ln2_b"],
               p["w1"], p["b1"], p["w2"], p["b2"],
               p["ln3_g"], p["ln3_b"]])
    q_spec = pl.BlockSpec((tgt_len, d_model), lambda n: (n, 0))
    kv_spec = pl.BlockSpec((src_len, d_model), lambda n: (n, 0))
    in_specs = [q_spec, kv_spec] + [_FULL] * (len(args) - 2)
    return pl.pallas_call(
        functools.partial(_decoder_layer_kernel, num_heads=num_heads),
        out_shape=jax.ShapeDtypeStruct(x2d.shape, x2d.dtype),
        grid=(batch,),
        in_specs=in_specs,
        out_specs=q_spec,
        compiler_params=pltpu.CompilerParams(
            dimension_semantics=("parallel",)),
    )(*args)


# ----------------------------------------------------------------------------
# Full transformer forward (encoder -> memory -> decoder)
# ----------------------------------------------------------------------------
def transformer_forward(src, tgt, params, num_heads):
    # src: (S, N, D), tgt: (L, N, D)   (batch_first=False, PyTorch default)
    S, N, D = src.shape
    L = tgt.shape[0]
    # single layout change to batch-major rows; every layer works on this 2D
    # layout so there are no per-layer XLA transposes between kernels.
    src2d = jnp.transpose(src, (1, 0, 2)).reshape(N * S, D)
    tgt2d = jnp.transpose(tgt, (1, 0, 2)).reshape(N * L, D)

    mem2d = src2d
    for lp in params["encoder_layers"]:
        mem2d = encoder_layer(mem2d, lp, num_heads=num_heads,
                              batch=N, seq_len=S)
    out2d = tgt2d
    for lp in params["decoder_layers"]:
        out2d = decoder_layer(out2d, mem2d, lp, num_heads=num_heads,
                              batch=N, tgt_len=L, src_len=S)
    return jnp.transpose(out2d.reshape(N, L, D), (1, 0, 2))


# ----------------------------------------------------------------------------
# Deterministic parameter construction
# ----------------------------------------------------------------------------
def _init_linear(key, din, dout, scale=0.02):
    w = jax.random.normal(key, (din, dout), jnp.float32) * scale
    b = jnp.zeros((1, dout), jnp.float32)
    return w, b


def _init_mha(key, d_model):
    ks = jax.random.split(key, 4)
    wq, bq = _init_linear(ks[0], d_model, d_model)
    wk, bk = _init_linear(ks[1], d_model, d_model)
    wv, bv = _init_linear(ks[2], d_model, d_model)
    wo, bo = _init_linear(ks[3], d_model, d_model)
    return dict(wq=wq, bq=bq, wk=wk, bk=bk, wv=wv, bv=bv, wo=wo, bo=bo)


def _init_ln(d_model):
    return jnp.ones((1, d_model), jnp.float32), jnp.zeros((1, d_model), jnp.float32)


def init_params(key, d_model, num_layers, dim_feedforward=2048):
    params = {"encoder_layers": [], "decoder_layers": []}
    for _ in range(num_layers):
        key, k_attn, k_w1, k_w2 = jax.random.split(key, 4)
        w1, b1 = _init_linear(k_w1, d_model, dim_feedforward)
        w2, b2 = _init_linear(k_w2, dim_feedforward, d_model)
        g1, be1 = _init_ln(d_model)
        g2, be2 = _init_ln(d_model)
        params["encoder_layers"].append(
            dict(self_attn=_init_mha(k_attn, d_model),
                 w1=w1, b1=b1, w2=w2, b2=b2,
                 ln1_g=g1, ln1_b=be1, ln2_g=g2, ln2_b=be2))
    for _ in range(num_layers):
        key, k_sa, k_ca, k_w1, k_w2 = jax.random.split(key, 5)
        w1, b1 = _init_linear(k_w1, d_model, dim_feedforward)
        w2, b2 = _init_linear(k_w2, dim_feedforward, d_model)
        g1, be1 = _init_ln(d_model)
        g2, be2 = _init_ln(d_model)
        g3, be3 = _init_ln(d_model)
        params["decoder_layers"].append(
            dict(self_attn=_init_mha(k_sa, d_model),
                 cross_attn=_init_mha(k_ca, d_model),
                 w1=w1, b1=b1, w2=w2, b2=b2,
                 ln1_g=g1, ln1_b=be1, ln2_g=g2, ln2_b=be2,
                 ln3_g=g3, ln3_b=be3))
    return params


# ----------------------------------------------------------------------------
if __name__ == "__main__":
    input_size = 32      # unused by forward (mirrors the PyTorch module)
    hidden_size = 32     # d_model
    num_heads = 4
    num_layers = 2
    src_len, tgt_len, batch = 8, 8, 2

    key = jax.random.PRNGKey(0)
    key, k_src, k_tgt, k_par = jax.random.split(key, 4)
    src = jax.random.normal(k_src, (src_len, batch, hidden_size), jnp.float32)
    tgt = jax.random.normal(k_tgt, (tgt_len, batch, hidden_size), jnp.float32)

    params = init_params(k_par, hidden_size, num_layers)

    fwd = jax.jit(transformer_forward, static_argnums=(3,))
    out = fwd(src, tgt, params, num_heads)
    out = jax.block_until_ready(out)
    assert out.shape == (tgt_len, batch, hidden_size)
    assert bool(jnp.all(jnp.isfinite(out)))
    print("KERNEL_OK")
</pallas_src>

<mosaic_0001>
module attributes {stable_mosaic.version = 11 : i64} {
  func.func @_encoder_layer_kernel(%arg0: i32, %arg1: memref<8x32xf32, #tpu.memory_space<vmem>>, %arg2: memref<32x32xf32, #tpu.memory_space<vmem>>, %arg3: memref<1x32xf32, #tpu.memory_space<vmem>>, %arg4: memref<32x32xf32, #tpu.memory_space<vmem>>, %arg5: memref<1x32xf32, #tpu.memory_space<vmem>>, %arg6: memref<32x32xf32, #tpu.memory_space<vmem>>, %arg7: memref<1x32xf32, #tpu.memory_space<vmem>>, %arg8: memref<32x32xf32, #tpu.memory_space<vmem>>, %arg9: memref<1x32xf32, #tpu.memory_space<vmem>>, %arg10: memref<1x32xf32, #tpu.memory_space<vmem>>, %arg11: memref<1x32xf32, #tpu.memory_space<vmem>>, %arg12: memref<32x2048xf32, #tpu.memory_space<vmem>>, %arg13: memref<1x2048xf32, #tpu.memory_space<vmem>>, %arg14: memref<2048x32xf32, #tpu.memory_space<vmem>>, %arg15: memref<1x32xf32, #tpu.memory_space<vmem>>, %arg16: memref<1x32xf32, #tpu.memory_space<vmem>>, %arg17: memref<1x32xf32, #tpu.memory_space<vmem>>, %arg18: memref<8x32xf32, #tpu.memory_space<vmem>>) attributes {dimension_semantics = [#tpu.dimension_semantics<parallel>], iteration_bounds = array<i64: 2>, scalar_prefetch = 0 : i64, scratch_operands = 0 : i64, tpu.core_type = #tpu.core_type<tc>, window_params = [{transform_indices = @transform_0, window_bounds = array<i64: 8, 32>}, {pipeline_mode = #tpu.pipeline_mode<synchronous>, transform_indices = @transform_1, window_bounds = array<i64: 32, 32>}, {pipeline_mode = #tpu.pipeline_mode<synchronous>, transform_indices = @transform_2, window_bounds = array<i64: 1, 32>}, {pipeline_mode = #tpu.pipeline_mode<synchronous>, transform_indices = @transform_3, window_bounds = array<i64: 32, 32>}, {pipeline_mode = #tpu.pipeline_mode<synchronous>, transform_indices = @transform_4, window_bounds = array<i64: 1, 32>}, {pipeline_mode = #tpu.pipeline_mode<synchronous>, transform_indices = @transform_5, window_bounds = array<i64: 32, 32>}, {pipeline_mode = #tpu.pipeline_mode<synchronous>, transform_indices = @transform_6, window_bounds = array<i64: 1, 32>}, {pipeline_mode = #tpu.pipeline_mode<synchronous>, transform_indices = @transform_7, window_bounds = array<i64: 32, 32>}, {pipeline_mode = #tpu.pipeline_mode<synchronous>, transform_indices = @transform_8, window_bounds = array<i64: 1, 32>}, {pipeline_mode = #tpu.pipeline_mode<synchronous>, transform_indices = @transform_9, window_bounds = array<i64: 1, 32>}, {pipeline_mode = #tpu.pipeline_mode<synchronous>, transform_indices = @transform_10, window_bounds = array<i64: 1, 32>}, {pipeline_mode = #tpu.pipeline_mode<synchronous>, transform_indices = @transform_11, window_bounds = array<i64: 32, 2048>}, {pipeline_mode = #tpu.pipeline_mode<synchronous>, transform_indices = @transform_12, window_bounds = array<i64: 1, 2048>}, {pipeline_mode = #tpu.pipeline_mode<synchronous>, transform_indices = @transform_13, window_bounds = array<i64: 2048, 32>}, {pipeline_mode = #tpu.pipeline_mode<synchronous>, transform_indices = @transform_14, window_bounds = array<i64: 1, 32>}, {pipeline_mode = #tpu.pipeline_mode<synchronous>, transform_indices = @transform_15, window_bounds = array<i64: 1, 32>}, {pipeline_mode = #tpu.pipeline_mode<synchronous>, transform_indices = @transform_16, window_bounds = array<i64: 1, 32>}, {transform_indices = @transform_17, window_bounds = array<i64: 8, 32>}]} {
    %c0 = arith.constant 0 : index
    %c0_0 = arith.constant 0 : index
    %0 = vector.load %arg1[%c0, %c0_0] : memref<8x32xf32, #tpu.memory_space<vmem>>, vector<8x32xf32>
    %c0_1 = arith.constant 0 : index
    %c0_2 = arith.constant 0 : index
    %1 = vector.load %arg2[%c0_1, %c0_2] : memref<32x32xf32, #tpu.memory_space<vmem>>, vector<32x32xf32>
    %c0_3 = arith.constant 0 : index
    %c0_4 = arith.constant 0 : index
    %2 = vector.load %arg3[%c0_3, %c0_4] : memref<1x32xf32, #tpu.memory_space<vmem>>, vector<1x32xf32>
    %c0_5 = arith.constant 0 : index
    %c0_6 = arith.constant 0 : index
    %3 = vector.load %arg4[%c0_5, %c0_6] : memref<32x32xf32, #tpu.memory_space<vmem>>, vector<32x32xf32>
    %c0_7 = arith.constant 0 : index
    %c0_8 = arith.constant 0 : index
    %4 = vector.load %arg5[%c0_7, %c0_8] : memref<1x32xf32, #tpu.memory_space<vmem>>, vector<1x32xf32>
    %c0_9 = arith.constant 0 : index
    %c0_10 = arith.constant 0 : index
    %5 = vector.load %arg6[%c0_9, %c0_10] : memref<32x32xf32, #tpu.memory_space<vmem>>, vector<32x32xf32>
    %c0_11 = arith.constant 0 : index
    %c0_12 = arith.constant 0 : index
    %6 = vector.load %arg7[%c0_11, %c0_12] : memref<1x32xf32, #tpu.memory_space<vmem>>, vector<1x32xf32>
    %c0_13 = arith.constant 0 : index
    %c0_14 = arith.constant 0 : index
    %7 = vector.load %arg8[%c0_13, %c0_14] : memref<32x32xf32, #tpu.memory_space<vmem>>, vector<32x32xf32>
    %c0_15 = arith.constant 0 : index
    %c0_16 = arith.constant 0 : index
    %8 = vector.load %arg9[%c0_15, %c0_16] : memref<1x32xf32, #tpu.memory_space<vmem>>, vector<1x32xf32>
    %9 = arith.truncf %0 : vector<8x32xf32> to vector<8x32xbf16>
    %10 = arith.truncf %1 : vector<32x32xf32> to vector<32x32xbf16>
    %cst = arith.constant dense<0.000000e+00> : vector<8x32xf32>
    %11 = tpu.matmul %9, %10, %cst {dimension_numbers = #tpu.dot_dimension_numbers<[1], [0], [0], [1], [0, 0, 1, 1], [], []>} : vector<8x32xbf16>, vector<32x32xbf16>, vector<8x32xf32> -> vector<8x32xf32>
    %12 = vector.broadcast %2 : vector<1x32xf32> to vector<8x32xf32>
    %13 = arith.addf %11, %12 : vector<8x32xf32>
    %14 = arith.truncf %0 : vector<8x32xf32> to vector<8x32xbf16>
    %15 = arith.truncf %3 : vector<32x32xf32> to vector<32x32xbf16>
    %cst_17 = arith.constant dense<0.000000e+00> : vector<8x32xf32>
    %16 = tpu.matmul %14, %15, %cst_17 {dimension_numbers = #tpu.dot_dimension_numbers<[1], [0], [0], [1], [0, 0, 1, 1], [], []>} : vector<8x32xbf16>, vector<32x32xbf16>, vector<8x32xf32> -> vector<8x32xf32>
    %17 = vector.broadcast %4 : vector<1x32xf32> to vector<8x32xf32>
    %18 = arith.addf %16, %17 : vector<8x32xf32>
    %19 = arith.truncf %0 : vector<8x32xf32> to vector<8x32xbf16>
    %20 = arith.truncf %5 : vector<32x32xf32> to vector<32x32xbf16>
    %cst_18 = arith.constant dense<0.000000e+00> : vector<8x32xf32>
    %21 = tpu.matmul %19, %20, %cst_18 {dimension_numbers = #tpu.dot_dimension_numbers<[1], [0], [0], [1], [0, 0, 1, 1], [], []>} : vector<8x32xbf16>, vector<32x32xbf16>, vector<8x32xf32> -> vector<8x32xf32>
    %22 = vector.broadcast %6 : vector<1x32xf32> to vector<8x32xf32>
    %23 = arith.addf %21, %22 : vector<8x32xf32>
    %24 = tpu.iota {dimensions = array<i32: 1>} : vector<1x32xi32>
    %cst_19 = arith.constant 0.000000e+00 : f32
    %25 = vector.broadcast %cst_19 : f32 to vector<8x32xf32>
    %c0_i32 = arith.constant 0 : i32
    %26 = vector.broadcast %c0_i32 : i32 to vector<1x32xi32>
    %27 = arith.cmpi sge, %24, %26 : vector<1x32xi32>
    %c8_i32 = arith.constant 8 : i32
    %28 = vector.broadcast %c8_i32 : i32 to vector<1x32xi32>
    %29 = arith.cmpi slt, %24, %28 : vector<1x32xi32>
    %30 = arith.andi %27, %29 : vector<1x32xi1>
    %31 = arith.extui %30 : vector<1x32xi1> to vector<1x32xi32>
    %32 = arith.sitofp %31 : vector<1x32xi32> to vector<1x32xf32>
    %33 = vector.broadcast %32 : vector<1x32xf32> to vector<8x32xf32>
    %34 = arith.mulf %13, %33 : vector<8x32xf32>
    %35 = arith.truncf %34 : vector<8x32xf32> to vector<8x32xbf16>
    %36 = arith.truncf %18 : vector<8x32xf32> to vector<8x32xbf16>
    %cst_20 = arith.constant dense<0.000000e+00> : vector<8x8xf32>
    %37 = tpu.matmul %35, %36, %cst_20 {dimension_numbers = #tpu.dot_dimension_numbers<[1], [1], [0], [0], [0, 0, 1, 0], [], []>} : vector<8x32xbf16>, vector<8x32xbf16>, vector<8x8xf32> -> vector<8x8xf32>
    %cst_21 = arith.constant dense<0xFF800000> : vector<8xf32>
    %38 = vector.multi_reduction <maximumf>, %37, %cst_21 [1] : vector<8x8xf32> to vector<8xf32>
    %39 = vector.shape_cast %38 : vector<8xf32> to vector<8x1xf32>
    %40 = vector.broadcast %39 : vector<8x1xf32> to vector<8x8xf32>
    %41 = arith.subf %37, %40 : vector<8x8xf32>
    %42 = math.exp %41 : vector<8x8xf32>
    %cst_22 = arith.constant dense<0.000000e+00> : vector<8xf32>
    %43 = vector.multi_reduction <add>, %42, %cst_22 [1] : vector<8x8xf32> to vector<8xf32>
    %44 = vector.shape_cast %43 : vector<8xf32> to vector<8x1xf32>
    %45 = tpu.reciprocal %44 {approx = true} : vector<8x1xf32> -> vector<8x1xf32>
    %46 = vector.broadcast %45 : vector<8x1xf32> to vector<8x8xf32>
    %47 = arith.mulf %42, %46 : vector<8x8xf32>
    %48 = vector.broadcast %32 : vector<1x32xf32> to vector<8x32xf32>
    %49 = arith.mulf %23, %48 : vector<8x32xf32>
    %50 = arith.truncf %47 : vector<8x8xf32> to vector<8x8xbf16>
    %51 = arith.truncf %49 : vector<8x32xf32> to vector<8x32xbf16>
    %cst_23 = arith.constant dense<0.000000e+00> : vector<8x32xf32>
    %52 = tpu.matmul %50, %51, %cst_23 {dimension_numbers = #tpu.dot_dimension_numbers<[1], [0], [0], [1], [0, 0, 1, 1], [], []>} : vector<8x8xbf16>, vector<8x32xbf16>, vector<8x32xf32> -> vector<8x32xf32>
    %53 = arith.addf %25, %52 : vector<8x32xf32>
    %c8_i32_24 = arith.constant 8 : i32
    %54 = vector.broadcast %c8_i32_24 : i32 to vector<1x32xi32>
    %55 = arith.cmpi sge, %24, %54 : vector<1x32xi32>
    %c16_i32 = arith.constant 16 : i32
    %56 = vector.broadcast %c16_i32 : i32 to vector<1x32xi32>
    %57 = arith.cmpi slt, %24, %56 : vector<1x32xi32>
    %58 = arith.andi %55, %57 : vector<1x32xi1>
    %59 = arith.extui %58 : vector<1x32xi1> to vector<1x32xi32>
    %60 = arith.sitofp %59 : vector<1x32xi32> to vector<1x32xf32>
    %61 = vector.broadcast %60 : vector<1x32xf32> to vector<8x32xf32>
    %62 = arith.mulf %13, %61 : vector<8x32xf32>
    %63 = arith.truncf %62 : vector<8x32xf32> to vector<8x32xbf16>
    %64 = arith.truncf %18 : vector<8x32xf32> to vector<8x32xbf16>
    %cst_25 = arith.constant dense<0.000000e+00> : vector<8x8xf32>
    %65 = tpu.matmul %63, %64, %cst_25 {dimension_numbers = #tpu.dot_dimension_numbers<[1], [1], [0], [0], [0, 0, 1, 0], [], []>} : vector<8x32xbf16>, vector<8x32xbf16>, vector<8x8xf32> -> vector<8x8xf32>
    %cst_26 = arith.constant dense<0xFF800000> : vector<8xf32>
    %66 = vector.multi_reduction <maximumf>, %65, %cst_26 [1] : vector<8x8xf32> to vector<8xf32>
    %67 = vector.shape_cast %66 : vector<8xf32> to vector<8x1xf32>
    %68 = vector.broadcast %67 : vector<8x1xf32> to vector<8x8xf32>
    %69 = arith.subf %65, %68 : vector<8x8xf32>
    %70 = math.exp %69 : vector<8x8xf32>
    %cst_27 = arith.constant dense<0.000000e+00> : vector<8xf32>
    %71 = vector.multi_reduction <add>, %70, %cst_27 [1] : vector<8x8xf32> to vector<8xf32>
    %72 = vector.shape_cast %71 : vector<8xf32> to vector<8x1xf32>
    %73 = tpu.reciprocal %72 {approx = true} : vector<8x1xf32> -> vector<8x1xf32>
    %74 = vector.broadcast %73 : vector<8x1xf32> to vector<8x8xf32>
    %75 = arith.mulf %70, %74 : vector<8x8xf32>
    %76 = vector.broadcast %60 : vector<1x32xf32> to vector<8x32xf32>
    %77 = arith.mulf %23, %76 : vector<8x32xf32>
    %78 = arith.truncf %75 : vector<8x8xf32> to vector<8x8xbf16>
    %79 = arith.truncf %77 : vector<8x32xf32> to vector<8x32xbf16>
    %cst_28 = arith.constant dense<0.000000e+00> : vector<8x32xf32>
    %80 = tpu.matmul %78, %79, %cst_28 {dimension_numbers = #tpu.dot_dimension_numbers<[1], [0], [0], [1], [0, 0, 1, 1], [], []>} : vector<8x8xbf16>, vector<8x32xbf16>, vector<8x32xf32> -> vector<8x32xf32>
    %81 = arith.addf %53, %80 : vector<8x32xf32>
    %c16_i32_29 = arith.constant 16 : i32
    %82 = vector.broadcast %c16_i32_29 : i32 to vector<1x32xi32>
    %83 = arith.cmpi sge, %24, %82 : vector<1x32xi32>
    %c24_i32 = arith.constant 24 : i32
    %84 = vector.broadcast %c24_i32 : i32 to vector<1x32xi32>
    %85 = arith.cmpi slt, %24, %84 : vector<1x32xi32>
    %86 = arith.andi %83, %85 : vector<1x32xi1>
    %87 = arith.extui %86 : vector<1x32xi1> to vector<1x32xi32>
    %88 = arith.sitofp %87 : vector<1x32xi32> to vector<1x32xf32>
    %89 = vector.broadcast %88 : vector<1x32xf32> to vector<8x32xf32>
    %90 = arith.mulf %13, %89 : vector<8x32xf32>
    %91 = arith.truncf %90 : vector<8x32xf32> to vector<8x32xbf16>
    %92 = arith.truncf %18 : vector<8x32xf32> to vector<8x32xbf16>
    %cst_30 = arith.constant dense<0.000000e+00> : vector<8x8xf32>
    %93 = tpu.matmul %91, %92, %cst_30 {dimension_numbers = #tpu.dot_dimension_numbers<[1], [1], [0], [0], [0, 0, 1, 0], [], []>} : vector<8x32xbf16>, vector<8x32xbf16>, vector<8x8xf32> -> vector<8x8xf32>
    %cst_31 = arith.constant dense<0xFF800000> : vector<8xf32>
    %94 = vector.multi_reduction <maximumf>, %93, %cst_31 [1] : vector<8x8xf32> to vector<8xf32>
    %95 = vector.shape_cast %94 : vector<8xf32> to vector<8x1xf32>
    %96 = vector.broadcast %95 : vector<8x1xf32> to vector<8x8xf32>
    %97 = arith.subf %93, %96 : vector<8x8xf32>
    %98 = math.exp %97 : vector<8x8xf32>
    %cst_32 = arith.constant dense<0.000000e+00> : vector<8xf32>
    %99 = vector.multi_reduction <add>, %98, %cst_32 [1] : vector<8x8xf32> to vector<8xf32>
    %100 = vector.shape_cast %99 : vector<8xf32> to vector<8x1xf32>
    %101 = tpu.reciprocal %100 {approx = true} : vector<8x1xf32> -> vector<8x1xf32>
    %102 = vector.broadcast %101 : vector<8x1xf32> to vector<8x8xf32>
    %103 = arith.mulf %98, %102 : vector<8x8xf32>
    %104 = vector.broadcast %88 : vector<1x32xf32> to vector<8x32xf32>
    %105 = arith.mulf %23, %104 : vector<8x32xf32>
    %106 = arith.truncf %103 : vector<8x8xf32> to vector<8x8xbf16>
    %107 = arith.truncf %105 : vector<8x32xf32> to vector<8x32xbf16>
    %cst_33 = arith.constant dense<0.000000e+00> : vector<8x32xf32>
    %108 = tpu.matmul %106, %107, %cst_33 {dimension_numbers = #tpu.dot_dimension_numbers<[1], [0], [0], [1], [0, 0, 1, 1], [], []>} : vector<8x8xbf16>, vector<8x32xbf16>, vector<8x32xf32> -> vector<8x32xf32>
    %109 = arith.addf %81, %108 : vector<8x32xf32>
    %c24_i32_34 = arith.constant 24 : i32
    %110 = vector.broadcast %c24_i32_34 : i32 to vector<1x32xi32>
    %111 = arith.cmpi sge, %24, %110 : vector<1x32xi32>
    %c32_i32 = arith.constant 32 : i32
    %112 = vector.broadcast %c32_i32 : i32 to vector<1x32xi32>
    %113 = arith.cmpi slt, %24, %112 : vector<1x32xi32>
    %114 = arith.andi %111, %113 : vector<1x32xi1>
    %115 = arith.extui %114 : vector<1x32xi1> to vector<1x32xi32>
    %116 = arith.sitofp %115 : vector<1x32xi32> to vector<1x32xf32>
    %117 = vector.broadcast %116 : vector<1x32xf32> to vector<8x32xf32>
    %118 = arith.mulf %13, %117 : vector<8x32xf32>
    %119 = arith.truncf %118 : vector<8x32xf32> to vector<8x32xbf16>
    %120 = arith.truncf %18 : vector<8x32xf32> to vector<8x32xbf16>
    %cst_35 = arith.constant dense<0.000000e+00> : vector<8x8xf32>
    %121 = tpu.matmul %119, %120, %cst_35 {dimension_numbers = #tpu.dot_dimension_numbers<[1], [1], [0], [0], [0, 0, 1, 0], [], []>} : vector<8x32xbf16>, vector<8x32xbf16>, vector<8x8xf32> -> vector<8x8xf32>
    %cst_36 = arith.constant dense<0xFF800000> : vector<8xf32>
    %122 = vector.multi_reduction <maximumf>, %121, %cst_36 [1] : vector<8x8xf32> to vector<8xf32>
    %123 = vector.shape_cast %122 : vector<8xf32> to vector<8x1xf32>
    %124 = vector.broadcast %123 : vector<8x1xf32> to vector<8x8xf32>
    %125 = arith.subf %121, %124 : vector<8x8xf32>
    %126 = math.exp %125 : vector<8x8xf32>
    %cst_37 = arith.constant dense<0.000000e+00> : vector<8xf32>
    %127 = vector.multi_reduction <add>, %126, %cst_37 [1] : vector<8x8xf32> to vector<8xf32>
    %128 = vector.shape_cast %127 : vector<8xf32> to vector<8x1xf32>
    %129 = tpu.reciprocal %128 {approx = true} : vector<8x1xf32> -> vector<8x1xf32>
    %130 = vector.broadcast %129 : vector<8x1xf32> to vector<8x8xf32>
    %131 = arith.mulf %126, %130 : vector<8x8xf32>
    %132 = vector.broadcast %116 : vector<1x32xf32> to vector<8x32xf32>
    %133 = arith.mulf %23, %132 : vector<8x32xf32>
    %134 = arith.truncf %131 : vector<8x8xf32> to vector<8x8xbf16>
    %135 = arith.truncf %133 : vector<8x32xf32> to vector<8x32xbf16>
    %cst_38 = arith.constant dense<0.000000e+00> : vector<8x32xf32>
    %136 = tpu.matmul %134, %135, %cst_38 {dimension_numbers = #tpu.dot_dimension_numbers<[1], [0], [0], [1], [0, 0, 1, 1], [], []>} : vector<8x8xbf16>, vector<8x32xbf16>, vector<8x32xf32> -> vector<8x32xf32>
    %137 = arith.addf %109, %136 : vector<8x32xf32>
    %138 = arith.truncf %137 : vector<8x32xf32> to vector<8x32xbf16>
    %139 = arith.truncf %7 : vector<32x32xf32> to vector<32x32xbf16>
    %cst_39 = arith.constant dense<0.000000e+00> : vector<8x32xf32>
    %140 = tpu.matmul %138, %139, %cst_39 {dimension_numbers = #tpu.dot_dimension_numbers<[1], [0], [0], [1], [0, 0, 1, 1], [], []>} : vector<8x32xbf16>, vector<32x32xbf16>, vector<8x32xf32> -> vector<8x32xf32>
    %141 = vector.broadcast %8 : vector<1x32xf32> to vector<8x32xf32>
    %142 = arith.addf %140, %141 : vector<8x32xf32>
    %143 = arith.addf %0, %142 : vector<8x32xf32>
    %c0_40 = arith.constant 0 : index
    %c0_41 = arith.constant 0 : index
    %144 = vector.load %arg10[%c0_40, %c0_41] : memref<1x32xf32, #tpu.memory_space<vmem>>, vector<1x32xf32>
    %c0_42 = arith.constant 0 : index
    %c0_43 = arith.constant 0 : index
    %145 = vector.load %arg11[%c0_42, %c0_43] : memref<1x32xf32, #tpu.memory_space<vmem>>, vector<1x32xf32>
    %cst_44 = arith.constant dense<0.000000e+00> : vector<8xf32>
    %146 = vector.multi_reduction <add>, %143, %cst_44 [1] : vector<8x32xf32> to vector<8xf32>
    %147 = vector.shape_cast %146 : vector<8xf32> to vector<8x1xf32>
    %cst_45 = arith.constant 3.200000e+01 : f32
    %148 = vector.broadcast %cst_45 : f32 to vector<8x1xf32>
    %149 = arith.divf %147, %148 : vector<8x1xf32>
    %150 = vector.broadcast %149 : vector<8x1xf32> to vector<8x32xf32>
    %151 = arith.subf %143, %150 : vector<8x32xf32>
    %152 = arith.mulf %151, %151 : vector<8x32xf32>
    %cst_46 = arith.constant dense<0.000000e+00> : vector<8xf32>
    %153 = vector.multi_reduction <add>, %152, %cst_46 [1] : vector<8x32xf32> to vector<8xf32>
    %154 = vector.shape_cast %153 : vector<8xf32> to vector<8x1xf32>
    %cst_47 = arith.constant 3.200000e+01 : f32
    %155 = vector.broadcast %cst_47 : f32 to vector<8x1xf32>
    %156 = arith.divf %154, %155 : vector<8x1xf32>
    %157 = vector.broadcast %149 : vector<8x1xf32> to vector<8x32xf32>
    %158 = arith.subf %143, %157 : vector<8x32xf32>
    %cst_48 = arith.constant 9.99999974E-6 : f32
    %159 = vector.broadcast %cst_48 : f32 to vector<8x1xf32>
    %160 = arith.addf %156, %159 : vector<8x1xf32>
    %161 = math.rsqrt %160 : vector<8x1xf32>
    %162 = vector.broadcast %161 : vector<8x1xf32> to vector<8x32xf32>
    %163 = arith.mulf %158, %162 : vector<8x32xf32>
    %164 = vector.broadcast %144 : vector<1x32xf32> to vector<8x32xf32>
    %165 = arith.mulf %163, %164 : vector<8x32xf32>
    %166 = vector.broadcast %145 : vector<1x32xf32> to vector<8x32xf32>
    %167 = arith.addf %165, %166 : vector<8x32xf32>
    %c0_49 = arith.constant 0 : index
    %c0_50 = arith.constant 0 : index
    %168 = vector.load %arg12[%c0_49, %c0_50] : memref<32x2048xf32, #tpu.memory_space<vmem>>, vector<32x2048xf32>
    %c0_51 = arith.constant 0 : index
    %c0_52 = arith.constant 0 : index
    %169 = vector.load %arg13[%c0_51, %c0_52] : memref<1x2048xf32, #tpu.memory_space<vmem>>, vector<1x2048xf32>
    %c0_53 = arith.constant 0 : index
    %c0_54 = arith.constant 0 : index
    %170 = vector.load %arg14[%c0_53, %c0_54] : memref<2048x32xf32, #tpu.memory_space<vmem>>, vector<2048x32xf32>
    %c0_55 = arith.constant 0 : index
    %c0_56 = arith.constant 0 : index
    %171 = vector.load %arg15[%c0_55, %c0_56] : memref<1x32xf32, #tpu.memory_space<vmem>>, vector<1x32xf32>
    %172 = arith.truncf %167 : vector<8x32xf32> to vector<8x32xbf16>
    %173 = arith.truncf %168 : vector<32x2048xf32> to vector<32x2048xbf16>
    %cst_57 = arith.constant dense<0.000000e+00> : vector<8x2048xf32>
    %174 = tpu.matmul %172, %173, %cst_57 {dimension_numbers = #tpu.dot_dimension_numbers<[1], [0], [0], [1], [0, 0, 1, 1], [], []>} : vector<8x32xbf16>, vector<32x2048xbf16>, vector<8x2048xf32> -> vector<8x2048xf32>
    %175 = vector.broadcast %169 : vector<1x2048xf32> to vector<8x2048xf32>
    %176 = arith.addf %174, %175 : vector<8x2048xf32>
    %cst_58 = arith.constant 0.000000e+00 : f32
    %177 = vector.broadcast %cst_58 : f32 to vector<8x2048xf32>
    %178 = arith.maximumf %176, %177 : vector<8x2048xf32>
    %179 = arith.truncf %178 : vector<8x2048xf32> to vector<8x2048xbf16>
    %180 = arith.truncf %170 : vector<2048x32xf32> to vector<2048x32xbf16>
    %cst_59 = arith.constant dense<0.000000e+00> : vector<8x32xf32>
    %181 = tpu.matmul %179, %180, %cst_59 {dimension_numbers = #tpu.dot_dimension_numbers<[1], [0], [0], [1], [0, 0, 1, 1], [], []>} : vector<8x2048xbf16>, vector<2048x32xbf16>, vector<8x32xf32> -> vector<8x32xf32>
    %182 = vector.broadcast %171 : vector<1x32xf32> to vector<8x32xf32>
    %183 = arith.addf %181, %182 : vector<8x32xf32>
    %184 = arith.addf %167, %183 : vector<8x32xf32>
    %c0_60 = arith.constant 0 : index
    %c0_61 = arith.constant 0 : index
    %185 = vector.load %arg16[%c0_60, %c0_61] : memref<1x32xf32, #tpu.memory_space<vmem>>, vector<1x32xf32>
    %c0_62 = arith.constant 0 : index
    %c0_63 = arith.constant 0 : index
    %186 = vector.load %arg17[%c0_62, %c0_63] : memref<1x32xf32, #tpu.memory_space<vmem>>, vector<1x32xf32>
    %cst_64 = arith.constant dense<0.000000e+00> : vector<8xf32>
    %187 = vector.multi_reduction <add>, %184, %cst_64 [1] : vector<8x32xf32> to vector<8xf32>
    %188 = vector.shape_cast %187 : vector<8xf32> to vector<8x1xf32>
    %cst_65 = arith.constant 3.200000e+01 : f32
    %189 = vector.broadcast %cst_65 : f32 to vector<8x1xf32>
    %190 = arith.divf %188, %189 : vector<8x1xf32>
    %191 = vector.broadcast %190 : vector<8x1xf32> to vector<8x32xf32>
    %192 = arith.subf %184, %191 : vector<8x32xf32>
    %193 = arith.mulf %192, %192 : vector<8x32xf32>
    %cst_66 = arith.constant dense<0.000000e+00> : vector<8xf32>
    %194 = vector.multi_reduction <add>, %193, %cst_66 [1] : vector<8x32xf32> to vector<8xf32>
    %195 = vector.shape_cast %194 : vector<8xf32> to vector<8x1xf32>
    %cst_67 = arith.constant 3.200000e+01 : f32
    %196 = vector.broadcast %cst_67 : f32 to vector<8x1xf32>
    %197 = arith.divf %195, %196 : vector<8x1xf32>
    %198 = vector.broadcast %190 : vector<8x1xf32> to vector<8x32xf32>
    %199 = arith.subf %184, %198 : vector<8x32xf32>
    %cst_68 = arith.constant 9.99999974E-6 : f32
    %200 = vector.broadcast %cst_68 : f32 to vector<8x1xf32>
    %201 = arith.addf %197, %200 : vector<8x1xf32>
    %202 = math.rsqrt %201 : vector<8x1xf32>
    %203 = vector.broadcast %202 : vector<8x1xf32> to vector<8x32xf32>
    %204 = arith.mulf %199, %203 : vector<8x32xf32>
    %205 = vector.broadcast %185 : vector<1x32xf32> to vector<8x32xf32>
    %206 = arith.mulf %204, %205 : vector<8x32xf32>
    %207 = vector.broadcast %186 : vector<1x32xf32> to vector<8x32xf32>
    %208 = arith.addf %206, %207 : vector<8x32xf32>
    %c0_69 = arith.constant 0 : index
    %c0_70 = arith.constant 0 : index
    %209 = vector.load %arg18[%c0_69, %c0_70] : memref<8x32xf32, #tpu.memory_space<vmem>>, vector<8x32xf32>
    tpu.vector_store %arg18[%c0_69, %c0_70], %208 {strides = array<i32>} : memref<8x32xf32, #tpu.memory_space<vmem>>, vector<8x32xf32>,
    return
  }
  func.func @transform_0(%arg0: i32) -> (i32, i32) {
    %c0_i32 = arith.constant 0 : i32
    %c0_i32_0 = arith.constant 0 : i32
    return %arg0, %c0_i32 : i32, i32
  }
  func.func @transform_1(%arg0: i32) -> (i32, i32) {
    %c0_i32 = arith.constant 0 : i32
    %c0_i32_0 = arith.constant 0 : i32
    %c0_i32_1 = arith.constant 0 : i32
    return %c0_i32, %c0_i32_0 : i32, i32
  }
  func.func @transform_2(%arg0: i32) -> (i32, i32) {
    %c0_i32 = arith.constant 0 : i32
    %c0_i32_0 = arith.constant 0 : i32
    %c0_i32_1 = arith.constant 0 : i32
    return %c0_i32, %c0_i32_0 : i32, i32
  }
  func.func @transform_3(%arg0: i32) -> (i32, i32) {
    %c0_i32 = arith.constant 0 : i32
    %c0_i32_0 = arith.constant 0 : i32
    %c0_i32_1 = arith.constant 0 : i32
    return %c0_i32, %c0_i32_0 : i32, i32
  }
  func.func @transform_4(%arg0: i32) -> (i32, i32) {
    %c0_i32 = arith.constant 0 : i32
    %c0_i32_0 = arith.constant 0 : i32
    %c0_i32_1 = arith.constant 0 : i32
    return %c0_i32, %c0_i32_0 : i32, i32
  }
  func.func @transform_5(%arg0: i32) -> (i32, i32) {
    %c0_i32 = arith.constant 0 : i32
    %c0_i32_0 = arith.constant 0 : i32
    %c0_i32_1 = arith.constant 0 : i32
    return %c0_i32, %c0_i32_0 : i32, i32
  }
  func.func @transform_6(%arg0: i32) -> (i32, i32) {
    %c0_i32 = arith.constant 0 : i32
    %c0_i32_0 = arith.constant 0 : i32
    %c0_i32_1 = arith.constant 0 : i32
    return %c0_i32, %c0_i32_0 : i32, i32
  }
  func.func @transform_7(%arg0: i32) -> (i32, i32) {
    %c0_i32 = arith.constant 0 : i32
    %c0_i32_0 = arith.constant 0 : i32
    %c0_i32_1 = arith.constant 0 : i32
    return %c0_i32, %c0_i32_0 : i32, i32
  }
  func.func @transform_8(%arg0: i32) -> (i32, i32) {
    %c0_i32 = arith.constant 0 : i32
    %c0_i32_0 = arith.constant 0 : i32
    %c0_i32_1 = arith.constant 0 : i32
    return %c0_i32, %c0_i32_0 : i32, i32
  }
  func.func @transform_9(%arg0: i32) -> (i32, i32) {
    %c0_i32 = arith.constant 0 : i32
    %c0_i32_0 = arith.constant 0 : i32
    %c0_i32_1 = arith.constant 0 : i32
    return %c0_i32, %c0_i32_0 : i32, i32
  }
  func.func @transform_10(%arg0: i32) -> (i32, i32) {
    %c0_i32 = arith.constant 0 : i32
    %c0_i32_0 = arith.constant 0 : i32
    %c0_i32_1 = arith.constant 0 : i32
    return %c0_i32, %c0_i32_0 : i32, i32
  }
  func.func @transform_11(%arg0: i32) -> (i32, i32) {
    %c0_i32 = arith.constant 0 : i32
    %c0_i32_0 = arith.constant 0 : i32
    %c0_i32_1 = arith.constant 0 : i32
    return %c0_i32, %c0_i32_0 : i32, i32
  }
  func.func @transform_12(%arg0: i32) -> (i32, i32) {
    %c0_i32 = arith.constant 0 : i32
    %c0_i32_0 = arith.constant 0 : i32
    %c0_i32_1 = arith.constant 0 : i32
    return %c0_i32, %c0_i32_0 : i32, i32
  }
  func.func @transform_13(%arg0: i32) -> (i32, i32) {
    %c0_i32 = arith.constant 0 : i32
    %c0_i32_0 = arith.constant 0 : i32
    %c0_i32_1 = arith.constant 0 : i32
    return %c0_i32, %c0_i32_0 : i32, i32
  }
  func.func @transform_14(%arg0: i32) -> (i32, i32) {
    %c0_i32 = arith.constant 0 : i32
    %c0_i32_0 = arith.constant 0 : i32
    %c0_i32_1 = arith.constant 0 : i32
    return %c0_i32, %c0_i32_0 : i32, i32
  }
  func.func @transform_15(%arg0: i32) -> (i32, i32) {
    %c0_i32 = arith.constant 0 : i32
    %c0_i32_0 = arith.constant 0 : i32
    %c0_i32_1 = arith.constant 0 : i32
    return %c0_i32, %c0_i32_0 : i32, i32
  }
  func.func @transform_16(%arg0: i32) -> (i32, i32) {
    %c0_i32 = arith.constant 0 : i32
    %c0_i32_0 = arith.constant 0 : i32
    %c0_i32_1 = arith.constant 0 : i32
    return %c0_i32, %c0_i32_0 : i32, i32
  }
  func.func @transform_17(%arg0: i32) -> (i32, i32) {
    %c0_i32 = arith.constant 0 : i32
    %c0_i32_0 = arith.constant 0 : i32
    return %arg0, %c0_i32 : i32, i32
  }
}

module attributes {stable_mosaic.version = 11 : i64} {
  func.func @_decoder_layer_kernel(%arg0: i32, %arg1: memref<8x32xf32, #tpu.memory_space<vmem>>, %arg2: memref<8x32xf32, #tpu.memory_space<vmem>>, %arg3: memref<32x32xf32, #tpu.memory_space<vmem>>, %arg4: memref<1x32xf32, #tpu.memory_space<vmem>>, %arg5: memref<32x32xf32, #tpu.memory_space<vmem>>, %arg6: memref<1x32xf32, #tpu.memory_space<vmem>>, %arg7: memref<32x32xf32, #tpu.memory_space<vmem>>, %arg8: memref<1x32xf32, #tpu.memory_space<vmem>>, %arg9: memref<32x32xf32, #tpu.memory_space<vmem>>, %arg10: memref<1x32xf32, #tpu.memory_space<vmem>>, %arg11: memref<1x32xf32, #tpu.memory_space<vmem>>, %arg12: memref<1x32xf32, #tpu.memory_space<vmem>>, %arg13: memref<32x32xf32, #tpu.memory_space<vmem>>, %arg14: memref<1x32xf32, #tpu.memory_space<vmem>>, %arg15: memref<32x32xf32, #tpu.memory_space<vmem>>, %arg16: memref<1x32xf32, #tpu.memory_space<vmem>>, %arg17: memref<32x32xf32, #tpu.memory_space<vmem>>, %arg18: memref<1x32xf32, #tpu.memory_space<vmem>>, %arg19: memref<32x32xf32, #tpu.memory_space<vmem>>, %arg20: memref<1x32xf32, #tpu.memory_space<vmem>>, %arg21: memref<1x32xf32, #tpu.memory_space<vmem>>, %arg22: memref<1x32xf32, #tpu.memory_space<vmem>>, %arg23: memref<32x2048xf32, #tpu.memory_space<vmem>>, %arg24: memref<1x2048xf32, #tpu.memory_space<vmem>>, %arg25: memref<2048x32xf32, #tpu.memory_space<vmem>>, %arg26: memref<1x32xf32, #tpu.memory_space<vmem>>, %arg27: memref<1x32xf32, #tpu.memory_space<vmem>>, %arg28: memref<1x32xf32, #tpu.memory_space<vmem>>, %arg29: memref<8x32xf32, #tpu.memory_space<vmem>>) attributes {dimension_semantics = [#tpu.dimension_semantics<parallel>], iteration_bounds = array<i64: 2>, scalar_prefetch = 0 : i64, scratch_operands = 0 : i64, tpu.core_type = #tpu.core_type<tc>, window_params = [{transform_indices = @transform_0, window_bounds = array<i64: 8, 32>}, {transform_indices = @transform_1, window_bounds = array<i64: 8, 32>}, {pipeline_mode = #tpu.pipeline_mode<synchronous>, transform_indices = @transform_2, window_bounds = array<i64: 32, 32>}, {pipeline_mode = #tpu.pipeline_mode<synchronous>, transform_indices = @transform_3, window_bounds = array<i64: 1, 32>}, {pipeline_mode = #tpu.pipeline_mode<synchronous>, transform_indices = @transform_4, window_bounds = array<i64: 32, 32>}, {pipeline_mode = #tpu.pipeline_mode<synchronous>, transform_indices = @transform_5, window_bounds = array<i64: 1, 32>}, {pipeline_mode = #tpu.pipeline_mode<synchronous>, transform_indices = @transform_6, window_bounds = array<i64: 32, 32>}, {pipeline_mode = #tpu.pipeline_mode<synchronous>, transform_indices = @transform_7, window_bounds = array<i64: 1, 32>}, {pipeline_mode = #tpu.pipeline_mode<synchronous>, transform_indices = @transform_8, window_bounds = array<i64: 32, 32>}, {pipeline_mode = #tpu.pipeline_mode<synchronous>, transform_indices = @transform_9, window_bounds = array<i64: 1, 32>}, {pipeline_mode = #tpu.pipeline_mode<synchronous>, transform_indices = @transform_10, window_bounds = array<i64: 1, 32>}, {pipeline_mode = #tpu.pipeline_mode<synchronous>, transform_indices = @transform_11, window_bounds = array<i64: 1, 32>}, {pipeline_mode = #tpu.pipeline_mode<synchronous>, transform_indices = @transform_12, window_bounds = array<i64: 32, 32>}, {pipeline_mode = #tpu.pipeline_mode<synchronous>, transform_indices = @transform_13, window_bounds = array<i64: 1, 32>}, {pipeline_mode = #tpu.pipeline_mode<synchronous>, transform_indices = @transform_14, window_bounds = array<i64: 32, 32>}, {pipeline_mode = #tpu.pipeline_mode<synchronous>, transform_indices = @transform_15, window_bounds = array<i64: 1, 32>}, {pipeline_mode = #tpu.pipeline_mode<synchronous>, transform_indices = @transform_16, window_bounds = array<i64: 32, 32>}, {pipeline_mode = #tpu.pipeline_mode<synchronous>, transform_indices = @transform_17, window_bounds = array<i64: 1, 32>}, {pipeline_mode = #tpu.pipeline_mode<synchronous>, transform_indices = @transform_18, window_bounds = array<i64: 32, 32>}, {pipeline_mode = #tpu.pipeline_mode<synchronous>, transform_indices = @transform_19, window_bounds = array<i64: 1, 32>}, {pipeline_mode = #tpu.pipeline_mode<synchronous>, transform_indices = @transform_20, window_bounds = array<i64: 1, 32>}, {pipeline_mode = #tpu.pipeline_mode<synchronous>, transform_indices = @transform_21, window_bounds = array<i64: 1, 32>}, {pipeline_mode = #tpu.pipeline_mode<synchronous>, transform_indices = @transform_22, window_bounds = array<i64: 32, 2048>}, {pipeline_mode = #tpu.pipeline_mode<synchronous>, transform_indices = @transform_23, window_bounds = array<i64: 1, 2048>}, {pipeline_mode = #tpu.pipeline_mode<synchronous>, transform_indices = @transform_24, window_bounds = array<i64: 2048, 32>}, {pipeline_mode = #tpu.pipeline_mode<synchronous>, transform_indices = @transform_25, window_bounds = array<i64: 1, 32>}, {pipeline_mode = #tpu.pipeline_mode<synchronous>, transform_indices = @transform_26, window_bounds = array<i64: 1, 32>}, {pipeline_mode = #tpu.pipeline_mode<synchronous>, transform_indices = @transform_27, window_bounds = array<i64: 1, 32>}, {transform_indices = @transform_28, window_bounds = array<i64: 8, 32>}]} {
    %c0 = arith.constant 0 : index
    %c0_0 = arith.constant 0 : index
    %0 = vector.load %arg1[%c0, %c0_0] : memref<8x32xf32, #tpu.memory_space<vmem>>, vector<8x32xf32>
    %c0_1 = arith.constant 0 : index
    %c0_2 = arith.constant 0 : index
    %1 = vector.load %arg2[%c0_1, %c0_2] : memref<8x32xf32, #tpu.memory_space<vmem>>, vector<8x32xf32>
    %c0_3 = arith.constant 0 : index
    %c0_4 = arith.constant 0 : index
    %2 = vector.load %arg3[%c0_3, %c0_4] : memref<32x32xf32, #tpu.memory_space<vmem>>, vector<32x32xf32>
    %c0_5 = arith.constant 0 : index
    %c0_6 = arith.constant 0 : index
    %3 = vector.load %arg4[%c0_5, %c0_6] : memref<1x32xf32, #tpu.memory_space<vmem>>, vector<1x32xf32>
    %c0_7 = arith.constant 0 : index
    %c0_8 = arith.constant 0 : index
    %4 = vector.load %arg5[%c0_7, %c0_8] : memref<32x32xf32, #tpu.memory_space<vmem>>, vector<32x32xf32>
    %c0_9 = arith.constant 0 : index
    %c0_10 = arith.constant 0 : index
    %5 = vector.load %arg6[%c0_9, %c0_10] : memref<1x32xf32, #tpu.memory_space<vmem>>, vector<1x32xf32>
    %c0_11 = arith.constant 0 : index
    %c0_12 = arith.constant 0 : index
    %6 = vector.load %arg7[%c0_11, %c0_12] : memref<32x32xf32, #tpu.memory_space<vmem>>, vector<32x32xf32>
    %c0_13 = arith.constant 0 : index
    %c0_14 = arith.constant 0 : index
    %7 = vector.load %arg8[%c0_13, %c0_14] : memref<1x32xf32, #tpu.memory_space<vmem>>, vector<1x32xf32>
    %c0_15 = arith.constant 0 : index
    %c0_16 = arith.constant 0 : index
    %8 = vector.load %arg9[%c0_15, %c0_16] : memref<32x32xf32, #tpu.memory_space<vmem>>, vector<32x32xf32>
    %c0_17 = arith.constant 0 : index
    %c0_18 = arith.constant 0 : index
    %9 = vector.load %arg10[%c0_17, %c0_18] : memref<1x32xf32, #tpu.memory_space<vmem>>, vector<1x32xf32>
    %10 = arith.truncf %0 : vector<8x32xf32> to vector<8x32xbf16>
    %11 = arith.truncf %2 : vector<32x32xf32> to vector<32x32xbf16>
    %cst = arith.constant dense<0.000000e+00> : vector<8x32xf32>
    %12 = tpu.matmul %10, %11, %cst {dimension_numbers = #tpu.dot_dimension_numbers<[1], [0], [0], [1], [0, 0, 1, 1], [], []>} : vector<8x32xbf16>, vector<32x32xbf16>, vector<8x32xf32> -> vector<8x32xf32>
    %13 = vector.broadcast %3 : vector<1x32xf32> to vector<8x32xf32>
    %14 = arith.addf %12, %13 : vector<8x32xf32>
    %15 = arith.truncf %0 : vector<8x32xf32> to vector<8x32xbf16>
    %16 = arith.truncf %4 : vector<32x32xf32> to vector<32x32xbf16>
    %cst_19 = arith.constant dense<0.000000e+00> : vector<8x32xf32>
    %17 = tpu.matmul %15, %16, %cst_19 {dimension_numbers = #tpu.dot_dimension_numbers<[1], [0], [0], [1], [0, 0, 1, 1], [], []>} : vector<8x32xbf16>, vector<32x32xbf16>, vector<8x32xf32> -> vector<8x32xf32>
    %18 = vector.broadcast %5 : vector<1x32xf32> to vector<8x32xf32>
    %19 = arith.addf %17, %18 : vector<8x32xf32>
    %20 = arith.truncf %0 : vector<8x32xf32> to vector<8x32xbf16>
    %21 = arith.truncf %6 : vector<32x32xf32> to vector<32x32xbf16>
    %cst_20 = arith.constant dense<0.000000e+00> : vector<8x32xf32>
    %22 = tpu.matmul %20, %21, %cst_20 {dimension_numbers = #tpu.dot_dimension_numbers<[1], [0], [0], [1], [0, 0, 1, 1], [], []>} : vector<8x32xbf16>, vector<32x32xbf16>, vector<8x32xf32> -> vector<8x32xf32>
    %23 = vector.broadcast %7 : vector<1x32xf32> to vector<8x32xf32>
    %24 = arith.addf %22, %23 : vector<8x32xf32>
    %25 = tpu.iota {dimensions = array<i32: 1>} : vector<1x32xi32>
    %cst_21 = arith.constant 0.000000e+00 : f32
    %26 = vector.broadcast %cst_21 : f32 to vector<8x32xf32>
    %c0_i32 = arith.constant 0 : i32
    %27 = vector.broadcast %c0_i32 : i32 to vector<1x32xi32>
    %28 = arith.cmpi sge, %25, %27 : vector<1x32xi32>
    %c8_i32 = arith.constant 8 : i32
    %29 = vector.broadcast %c8_i32 : i32 to vector<1x32xi32>
    %30 = arith.cmpi slt, %25, %29 : vector<1x32xi32>
    %31 = arith.andi %28, %30 : vector<1x32xi1>
    %32 = arith.extui %31 : vector<1x32xi1> to vector<1x32xi32>
    %33 = arith.sitofp %32 : vector<1x32xi32> to vector<1x32xf32>
    %34 = vector.broadcast %33 : vector<1x32xf32> to vector<8x32xf32>
    %35 = arith.mulf %14, %34 : vector<8x32xf32>
    %36 = arith.truncf %35 : vector<8x32xf32> to vector<8x32xbf16>
    %37 = arith.truncf %19 : vector<8x32xf32> to vector<8x32xbf16>
    %cst_22 = arith.constant dense<0.000000e+00> : vector<8x8xf32>
    %38 = tpu.matmul %36, %37, %cst_22 {dimension_numbers = #tpu.dot_dimension_numbers<[1], [1], [0], [0], [0, 0, 1, 0], [], []>} : vector<8x32xbf16>, vector<8x32xbf16>, vector<8x8xf32> -> vector<8x8xf32>
    %cst_23 = arith.constant dense<0xFF800000> : vector<8xf32>
    %39 = vector.multi_reduction <maximumf>, %38, %cst_23 [1] : vector<8x8xf32> to vector<8xf32>
    %40 = vector.shape_cast %39 : vector<8xf32> to vector<8x1xf32>
    %41 = vector.broadcast %40 : vector<8x1xf32> to vector<8x8xf32>
    %42 = arith.subf %38, %41 : vector<8x8xf32>
    %43 = math.exp %42 : vector<8x8xf32>
    %cst_24 = arith.constant dense<0.000000e+00> : vector<8xf32>
    %44 = vector.multi_reduction <add>, %43, %cst_24 [1] : vector<8x8xf32> to vector<8xf32>
    %45 = vector.shape_cast %44 : vector<8xf32> to vector<8x1xf32>
    %46 = tpu.reciprocal %45 {approx = true} : vector<8x1xf32> -> vector<8x1xf32>
    %47 = vector.broadcast %46 : vector<8x1xf32> to vector<8x8xf32>
    %48 = arith.mulf %43, %47 : vector<8x8xf32>
    %49 = vector.broadcast %33 : vector<1x32xf32> to vector<8x32xf32>
    %50 = arith.mulf %24, %49 : vector<8x32xf32>
    %51 = arith.truncf %48 : vector<8x8xf32> to vector<8x8xbf16>
    %52 = arith.truncf %50 : vector<8x32xf32> to vector<8x32xbf16>
    %cst_25 = arith.constant dense<0.000000e+00> : vector<8x32xf32>
    %53 = tpu.matmul %51, %52, %cst_25 {dimension_numbers = #tpu.dot_dimension_numbers<[1], [0], [0], [1], [0, 0, 1, 1], [], []>} : vector<8x8xbf16>, vector<8x32xbf16>, vector<8x32xf32> -> vector<8x32xf32>
    %54 = arith.addf %26, %53 : vector<8x32xf32>
    %c8_i32_26 = arith.constant 8 : i32
    %55 = vector.broadcast %c8_i32_26 : i32 to vector<1x32xi32>
    %56 = arith.cmpi sge, %25, %55 : vector<1x32xi32>
    %c16_i32 = arith.constant 16 : i32
    %57 = vector.broadcast %c16_i32 : i32 to vector<1x32xi32>
    %58 = arith.cmpi slt, %25, %57 : vector<1x32xi32>
    %59 = arith.andi %56, %58 : vector<1x32xi1>
    %60 = arith.extui %59 : vector<1x32xi1> to vector<1x32xi32>
    %61 = arith.sitofp %60 : vector<1x32xi32> to vector<1x32xf32>
    %62 = vector.broadcast %61 : vector<1x32xf32> to vector<8x32xf32>
    %63 = arith.mulf %14, %62 : vector<8x32xf32>
    %64 = arith.truncf %63 : vector<8x32xf32> to vector<8x32xbf16>
    %65 = arith.truncf %19 : vector<8x32xf32> to vector<8x32xbf16>
    %cst_27 = arith.constant dense<0.000000e+00> : vector<8x8xf32>
    %66 = tpu.matmul %64, %65, %cst_27 {dimension_numbers = #tpu.dot_dimension_numbers<[1], [1], [0], [0], [0, 0, 1, 0], [], []>} : vector<8x32xbf16>, vector<8x32xbf16>, vector<8x8xf32> -> vector<8x8xf32>
    %cst_28 = arith.constant dense<0xFF800000> : vector<8xf32>
    %67 = vector.multi_reduction <maximumf>, %66, %cst_28 [1] : vector<8x8xf32> to vector<8xf32>
    %68 = vector.shape_cast %67 : vector<8xf32> to vector<8x1xf32>
    %69 = vector.broadcast %68 : vector<8x1xf32> to vector<8x8xf32>
    %70 = arith.subf %66, %69 : vector<8x8xf32>
    %71 = math.exp %70 : vector<8x8xf32>
    %cst_29 = arith.constant dense<0.000000e+00> : vector<8xf32>
    %72 = vector.multi_reduction <add>, %71, %cst_29 [1] : vector<8x8xf32> to vector<8xf32>
    %73 = vector.shape_cast %72 : vector<8xf32> to vector<8x1xf32>
    %74 = tpu.reciprocal %73 {approx = true} : vector<8x1xf32> -> vector<8x1xf32>
    %75 = vector.broadcast %74 : vector<8x1xf32> to vector<8x8xf32>
    %76 = arith.mulf %71, %75 : vector<8x8xf32>
    %77 = vector.broadcast %61 : vector<1x32xf32> to vector<8x32xf32>
    %78 = arith.mulf %24, %77 : vector<8x32xf32>
    %79 = arith.truncf %76 : vector<8x8xf32> to vector<8x8xbf16>
    %80 = arith.truncf %78 : vector<8x32xf32> to vector<8x32xbf16>
    %cst_30 = arith.constant dense<0.000000e+00> : vector<8x32xf32>
    %81 = tpu.matmul %79, %80, %cst_30 {dimension_numbers = #tpu.dot_dimension_numbers<[1], [0], [0], [1], [0, 0, 1, 1], [], []>} : vector<8x8xbf16>, vector<8x32xbf16>, vector<8x32xf32> -> vector<8x32xf32>
    %82 = arith.addf %54, %81 : vector<8x32xf32>
    %c16_i32_31 = arith.constant 16 : i32
    %83 = vector.broadcast %c16_i32_31 : i32 to vector<1x32xi32>
    %84 = arith.cmpi sge, %25, %83 : vector<1x32xi32>
    %c24_i32 = arith.constant 24 : i32
    %85 = vector.broadcast %c24_i32 : i32 to vector<1x32xi32>
    %86 = arith.cmpi slt, %25, %85 : vector<1x32xi32>
    %87 = arith.andi %84, %86 : vector<1x32xi1>
    %88 = arith.extui %87 : vector<1x32xi1> to vector<1x32xi32>
    %89 = arith.sitofp %88 : vector<1x32xi32> to vector<1x32xf32>
    %90 = vector.broadcast %89 : vector<1x32xf32> to vector<8x32xf32>
    %91 = arith.mulf %14, %90 : vector<8x32xf32>
    %92 = arith.truncf %91 : vector<8x32xf32> to vector<8x32xbf16>
    %93 = arith.truncf %19 : vector<8x32xf32> to vector<8x32xbf16>
    %cst_32 = arith.constant dense<0.000000e+00> : vector<8x8xf32>
    %94 = tpu.matmul %92, %93, %cst_32 {dimension_numbers = #tpu.dot_dimension_numbers<[1], [1], [0], [0], [0, 0, 1, 0], [], []>} : vector<8x32xbf16>, vector<8x32xbf16>, vector<8x8xf32> -> vector<8x8xf32>
    %cst_33 = arith.constant dense<0xFF800000> : vector<8xf32>
    %95 = vector.multi_reduction <maximumf>, %94, %cst_33 [1] : vector<8x8xf32> to vector<8xf32>
    %96 = vector.shape_cast %95 : vector<8xf32> to vector<8x1xf32>
    %97 = vector.broadcast %96 : vector<8x1xf32> to vector<8x8xf32>
    %98 = arith.subf %94, %97 : vector<8x8xf32>
    %99 = math.exp %98 : vector<8x8xf32>
    %cst_34 = arith.constant dense<0.000000e+00> : vector<8xf32>
    %100 = vector.multi_reduction <add>, %99, %cst_34 [1] : vector<8x8xf32> to vector<8xf32>
    %101 = vector.shape_cast %100 : vector<8xf32> to vector<8x1xf32>
    %102 = tpu.reciprocal %101 {approx = true} : vector<8x1xf32> -> vector<8x1xf32>
    %103 = vector.broadcast %102 : vector<8x1xf32> to vector<8x8xf32>
    %104 = arith.mulf %99, %103 : vector<8x8xf32>
    %105 = vector.broadcast %89 : vector<1x32xf32> to vector<8x32xf32>
    %106 = arith.mulf %24, %105 : vector<8x32xf32>
    %107 = arith.truncf %104 : vector<8x8xf32> to vector<8x8xbf16>
    %108 = arith.truncf %106 : vector<8x32xf32> to vector<8x32xbf16>
    %cst_35 = arith.constant dense<0.000000e+00> : vector<8x32xf32>
    %109 = tpu.matmul %107, %108, %cst_35 {dimension_numbers = #tpu.dot_dimension_numbers<[1], [0], [0], [1], [0, 0, 1, 1], [], []>} : vector<8x8xbf16>, vector<8x32xbf16>, vector<8x32xf32> -> vector<8x32xf32>
    %110 = arith.addf %82, %109 : vector<8x32xf32>
    %c24_i32_36 = arith.constant 24 : i32
    %111 = vector.broadcast %c24_i32_36 : i32 to vector<1x32xi32>
    %112 = arith.cmpi sge, %25, %111 : vector<1x32xi32>
    %c32_i32 = arith.constant 32 : i32
    %113 = vector.broadcast %c32_i32 : i32 to vector<1x32xi32>
    %114 = arith.cmpi slt, %25, %113 : vector<1x32xi32>
    %115 = arith.andi %112, %114 : vector<1x32xi1>
    %116 = arith.extui %115 : vector<1x32xi1> to vector<1x32xi32>
    %117 = arith.sitofp %116 : vector<1x32xi32> to vector<1x32xf32>
    %118 = vector.broadcast %117 : vector<1x32xf32> to vector<8x32xf32>
    %119 = arith.mulf %14, %118 : vector<8x32xf32>
    %120 = arith.truncf %119 : vector<8x32xf32> to vector<8x32xbf16>
    %121 = arith.truncf %19 : vector<8x32xf32> to vector<8x32xbf16>
    %cst_37 = arith.constant dense<0.000000e+00> : vector<8x8xf32>
    %122 = tpu.matmul %120, %121, %cst_37 {dimension_numbers = #tpu.dot_dimension_numbers<[1], [1], [0], [0], [0, 0, 1, 0], [], []>} : vector<8x32xbf16>, vector<8x32xbf16>, vector<8x8xf32> -> vector<8x8xf32>
    %cst_38 = arith.constant dense<0xFF800000> : vector<8xf32>
    %123 = vector.multi_reduction <maximumf>, %122, %cst_38 [1] : vector<8x8xf32> to vector<8xf32>
    %124 = vector.shape_cast %123 : vector<8xf32> to vector<8x1xf32>
    %125 = vector.broadcast %124 : vector<8x1xf32> to vector<8x8xf32>
    %126 = arith.subf %122, %125 : vector<8x8xf32>
    %127 = math.exp %126 : vector<8x8xf32>
    %cst_39 = arith.constant dense<0.000000e+00> : vector<8xf32>
    %128 = vector.multi_reduction <add>, %127, %cst_39 [1] : vector<8x8xf32> to vector<8xf32>
    %129 = vector.shape_cast %128 : vector<8xf32> to vector<8x1xf32>
    %130 = tpu.reciprocal %129 {approx = true} : vector<8x1xf32> -> vector<8x1xf32>
    %131 = vector.broadcast %130 : vector<8x1xf32> to vector<8x8xf32>
    %132 = arith.mulf %127, %131 : vector<8x8xf32>
    %133 = vector.broadcast %117 : vector<1x32xf32> to vector<8x32xf32>
    %134 = arith.mulf %24, %133 : vector<8x32xf32>
    %135 = arith.truncf %132 : vector<8x8xf32> to vector<8x8xbf16>
    %136 = arith.truncf %134 : vector<8x32xf32> to vector<8x32xbf16>
    %cst_40 = arith.constant dense<0.000000e+00> : vector<8x32xf32>
    %137 = tpu.matmul %135, %136, %cst_40 {dimension_numbers = #tpu.dot_dimension_numbers<[1], [0], [0], [1], [0, 0, 1, 1], [], []>} : vector<8x8xbf16>, vector<8x32xbf16>, vector<8x32xf32> -> vector<8x32xf32>
    %138 = arith.addf %110, %137 : vector<8x32xf32>
    %139 = arith.truncf %138 : vector<8x32xf32> to vector<8x32xbf16>
    %140 = arith.truncf %8 : vector<32x32xf32> to vector<32x32xbf16>
    %cst_41 = arith.constant dense<0.000000e+00> : vector<8x32xf32>
    %141 = tpu.matmul %139, %140, %cst_41 {dimension_numbers = #tpu.dot_dimension_numbers<[1], [0], [0], [1], [0, 0, 1, 1], [], []>} : vector<8x32xbf16>, vector<32x32xbf16>, vector<8x32xf32> -> vector<8x32xf32>
    %142 = vector.broadcast %9 : vector<1x32xf32> to vector<8x32xf32>
    %143 = arith.addf %141, %142 : vector<8x32xf32>
    %144 = arith.addf %0, %143 : vector<8x32xf32>
    %c0_42 = arith.constant 0 : index
    %c0_43 = arith.constant 0 : index
    %145 = vector.load %arg11[%c0_42, %c0_43] : memref<1x32xf32, #tpu.memory_space<vmem>>, vector<1x32xf32>
    %c0_44 = arith.constant 0 : index
    %c0_45 = arith.constant 0 : index
    %146 = vector.load %arg12[%c0_44, %c0_45] : memref<1x32xf32, #tpu.memory_space<vmem>>, vector<1x32xf32>
    %cst_46 = arith.constant dense<0.000000e+00> : vector<8xf32>
    %147 = vector.multi_reduction <add>, %144, %cst_46 [1] : vector<8x32xf32> to vector<8xf32>
    %148 = vector.shape_cast %147 : vector<8xf32> to vector<8x1xf32>
    %cst_47 = arith.constant 3.200000e+01 : f32
    %149 = vector.broadcast %cst_47 : f32 to vector<8x1xf32>
    %150 = arith.divf %148, %149 : vector<8x1xf32>
    %151 = vector.broadcast %150 : vector<8x1xf32> to vector<8x32xf32>
    %152 = arith.subf %144, %151 : vector<8x32xf32>
    %153 = arith.mulf %152, %152 : vector<8x32xf32>
    %cst_48 = arith.constant dense<0.000000e+00> : vector<8xf32>
    %154 = vector.multi_reduction <add>, %153, %cst_48 [1] : vector<8x32xf32> to vector<8xf32>
    %155 = vector.shape_cast %154 : vector<8xf32> to vector<8x1xf32>
    %cst_49 = arith.constant 3.200000e+01 : f32
    %156 = vector.broadcast %cst_49 : f32 to vector<8x1xf32>
    %157 = arith.divf %155, %156 : vector<8x1xf32>
    %158 = vector.broadcast %150 : vector<8x1xf32> to vector<8x32xf32>
    %159 = arith.subf %144, %158 : vector<8x32xf32>
    %cst_50 = arith.constant 9.99999974E-6 : f32
    %160 = vector.broadcast %cst_50 : f32 to vector<8x1xf32>
    %161 = arith.addf %157, %160 : vector<8x1xf32>
    %162 = math.rsqrt %161 : vector<8x1xf32>
    %163 = vector.broadcast %162 : vector<8x1xf32> to vector<8x32xf32>
    %164 = arith.mulf %159, %163 : vector<8x32xf32>
    %165 = vector.broadcast %145 : vector<1x32xf32> to vector<8x32xf32>
    %166 = arith.mulf %164, %165 : vector<8x32xf32>
    %167 = vector.broadcast %146 : vector<1x32xf32> to vector<8x32xf32>
    %168 = arith.addf %166, %167 : vector<8x32xf32>
    %c0_51 = arith.constant 0 : index
    %c0_52 = arith.constant 0 : index
    %169 = vector.load %arg13[%c0_51, %c0_52] : memref<32x32xf32, #tpu.memory_space<vmem>>, vector<32x32xf32>
    %c0_53 = arith.constant 0 : index
    %c0_54 = arith.constant 0 : index
    %170 = vector.load %arg14[%c0_53, %c0_54] : memref<1x32xf32, #tpu.memory_space<vmem>>, vector<1x32xf32>
    %c0_55 = arith.constant 0 : index
    %c0_56 = arith.constant 0 : index
    %171 = vector.load %arg15[%c0_55, %c0_56] : memref<32x32xf32, #tpu.memory_space<vmem>>, vector<32x32xf32>
    %c0_57 = arith.constant 0 : index
    %c0_58 = arith.constant 0 : index
    %172 = vector.load %arg16[%c0_57, %c0_58] : memref<1x32xf32, #tpu.memory_space<vmem>>, vector<1x32xf32>
    %c0_59 = arith.constant 0 : index
    %c0_60 = arith.constant 0 : index
    %173 = vector.load %arg17[%c0_59, %c0_60] : memref<32x32xf32, #tpu.memory_space<vmem>>, vector<32x32xf32>
    %c0_61 = arith.constant 0 : index
    %c0_62 = arith.constant 0 : index
    %174 = vector.load %arg18[%c0_61, %c0_62] : memref<1x32xf32, #tpu.memory_space<vmem>>, vector<1x32xf32>
    %c0_63 = arith.constant 0 : index
    %c0_64 = arith.constant 0 : index
    %175 = vector.load %arg19[%c0_63, %c0_64] : memref<32x32xf32, #tpu.memory_space<vmem>>, vector<32x32xf32>
    %c0_65 = arith.constant 0 : index
    %c0_66 = arith.constant 0 : index
    %176 = vector.load %arg20[%c0_65, %c0_66] : memref<1x32xf32, #tpu.memory_space<vmem>>, vector<1x32xf32>
    %177 = arith.truncf %168 : vector<8x32xf32> to vector<8x32xbf16>
    %178 = arith.truncf %169 : vector<32x32xf32> to vector<32x32xbf16>
    %cst_67 = arith.constant dense<0.000000e+00> : vector<8x32xf32>
    %179 = tpu.matmul %177, %178, %cst_67 {dimension_numbers = #tpu.dot_dimension_numbers<[1], [0], [0], [1], [0, 0, 1, 1], [], []>} : vector<8x32xbf16>, vector<32x32xbf16>, vector<8x32xf32> -> vector<8x32xf32>
    %180 = vector.broadcast %170 : vector<1x32xf32> to vector<8x32xf32>
    %181 = arith.addf %179, %180 : vector<8x32xf32>
    %182 = arith.truncf %1 : vector<8x32xf32> to vector<8x32xbf16>
    %183 = arith.truncf %171 : vector<32x32xf32> to vector<32x32xbf16>
    %cst_68 = arith.constant dense<0.000000e+00> : vector<8x32xf32>
    %184 = tpu.matmul %182, %183, %cst_68 {dimension_numbers = #tpu.dot_dimension_numbers<[1], [0], [0], [1], [0, 0, 1, 1], [], []>} : vector<8x32xbf16>, vector<32x32xbf16>, vector<8x32xf32> -> vector<8x32xf32>
    %185 = vector.broadcast %172 : vector<1x32xf32> to vector<8x32xf32>
    %186 = arith.addf %184, %185 : vector<8x32xf32>
    %187 = arith.truncf %1 : vector<8x32xf32> to vector<8x32xbf16>
    %188 = arith.truncf %173 : vector<32x32xf32> to vector<32x32xbf16>
    %cst_69 = arith.constant dense<0.000000e+00> : vector<8x32xf32>
    %189 = tpu.matmul %187, %188, %cst_69 {dimension_numbers = #tpu.dot_dimension_numbers<[1], [0], [0], [1], [0, 0, 1, 1], [], []>} : vector<8x32xbf16>, vector<32x32xbf16>, vector<8x32xf32> -> vector<8x32xf32>
    %190 = vector.broadcast %174 : vector<1x32xf32> to vector<8x32xf32>
    %191 = arith.addf %189, %190 : vector<8x32xf32>
    %192 = tpu.iota {dimensions = array<i32: 1>} : vector<1x32xi32>
    %cst_70 = arith.constant 0.000000e+00 : f32
    %193 = vector.broadcast %cst_70 : f32 to vector<8x32xf32>
    %c0_i32_71 = arith.constant 0 : i32
    %194 = vector.broadcast %c0_i32_71 : i32 to vector<1x32xi32>
    %195 = arith.cmpi sge, %192, %194 : vector<1x32xi32>
    %c8_i32_72 = arith.constant 8 : i32
    %196 = vector.broadcast %c8_i32_72 : i32 to vector<1x32xi32>
    %197 = arith.cmpi slt, %192, %196 : vector<1x32xi32>
    %198 = arith.andi %195, %197 : vector<1x32xi1>
    %199 = arith.extui %198 : vector<1x32xi1> to vector<1x32xi32>
    %200 = arith.sitofp %199 : vector<1x32xi32> to vector<1x32xf32>
    %201 = vector.broadcast %200 : vector<1x32xf32> to vector<8x32xf32>
    %202 = arith.mulf %181, %201 : vector<8x32xf32>
    %203 = arith.truncf %202 : vector<8x32xf32> to vector<8x32xbf16>
    %204 = arith.truncf %186 : vector<8x32xf32> to vector<8x32xbf16>
    %cst_73 = arith.constant dense<0.000000e+00> : vector<8x8xf32>
    %205 = tpu.matmul %203, %204, %cst_73 {dimension_numbers = #tpu.dot_dimension_numbers<[1], [1], [0], [0], [0, 0, 1, 0], [], []>} : vector<8x32xbf16>, vector<8x32xbf16>, vector<8x8xf32> -> vector<8x8xf32>
    %cst_74 = arith.constant dense<0xFF800000> : vector<8xf32>
    %206 = vector.multi_reduction <maximumf>, %205, %cst_74 [1] : vector<8x8xf32> to vector<8xf32>
    %207 = vector.shape_cast %206 : vector<8xf32> to vector<8x1xf32>
    %208 = vector.broadcast %207 : vector<8x1xf32> to vector<8x8xf32>
    %209 = arith.subf %205, %208 : vector<8x8xf32>
    %210 = math.exp %209 : vector<8x8xf32>
    %cst_75 = arith.constant dense<0.000000e+00> : vector<8xf32>
    %211 = vector.multi_reduction <add>, %210, %cst_75 [1] : vector<8x8xf32> to vector<8xf32>
    %212 = vector.shape_cast %211 : vector<8xf32> to vector<8x1xf32>
    %213 = tpu.reciprocal %212 {approx = true} : vector<8x1xf32> -> vector<8x1xf32>
    %214 = vector.broadcast %213 : vector<8x1xf32> to vector<8x8xf32>
    %215 = arith.mulf %210, %214 : vector<8x8xf32>
    %216 = vector.broadcast %200 : vector<1x32xf32> to vector<8x32xf32>
    %217 = arith.mulf %191, %216 : vector<8x32xf32>
    %218 = arith.truncf %215 : vector<8x8xf32> to vector<8x8xbf16>
    %219 = arith.truncf %217 : vector<8x32xf32> to vector<8x32xbf16>
    %cst_76 = arith.constant dense<0.000000e+00> : vector<8x32xf32>
    %220 = tpu.matmul %218, %219, %cst_76 {dimension_numbers = #tpu.dot_dimension_numbers<[1], [0], [0], [1], [0, 0, 1, 1], [], []>} : vector<8x8xbf16>, vector<8x32xbf16>, vector<8x32xf32> -> vector<8x32xf32>
    %221 = arith.addf %193, %220 : vector<8x32xf32>
    %c8_i32_77 = arith.constant 8 : i32
    %222 = vector.broadcast %c8_i32_77 : i32 to vector<1x32xi32>
    %223 = arith.cmpi sge, %192, %222 : vector<1x32xi32>
    %c16_i32_78 = arith.constant 16 : i32
    %224 = vector.broadcast %c16_i32_78 : i32 to vector<1x32xi32>
    %225 = arith.cmpi slt, %192, %224 : vector<1x32xi32>
    %226 = arith.andi %223, %225 : vector<1x32xi1>
    %227 = arith.extui %226 : vector<1x32xi1> to vector<1x32xi32>
    %228 = arith.sitofp %227 : vector<1x32xi32> to vector<1x32xf32>
    %229 = vector.broadcast %228 : vector<1x32xf32> to vector<8x32xf32>
    %230 = arith.mulf %181, %229 : vector<8x32xf32>
    %231 = arith.truncf %230 : vector<8x32xf32> to vector<8x32xbf16>
    %232 = arith.truncf %186 : vector<8x32xf32> to vector<8x32xbf16>
    %cst_79 = arith.constant dense<0.000000e+00> : vector<8x8xf32>
    %233 = tpu.matmul %231, %232, %cst_79 {dimension_numbers = #tpu.dot_dimension_numbers<[1], [1], [0], [0], [0, 0, 1, 0], [], []>} : vector<8x32xbf16>, vector<8x32xbf16>, vector<8x8xf32> -> vector<8x8xf32>
    %cst_80 = arith.constant dense<0xFF800000> : vector<8xf32>
    %234 = vector.multi_reduction <maximumf>, %233, %cst_80 [1] : vector<8x8xf32> to vector<8xf32>
    %235 = vector.shape_cast %234 : vector<8xf32> to vector<8x1xf32>
    %236 = vector.broadcast %235 : vector<8x1xf32> to vector<8x8xf32>
    %237 = arith.subf %233, %236 : vector<8x8xf32>
    %238 = math.exp %237 : vector<8x8xf32>
    %cst_81 = arith.constant dense<0.000000e+00> : vector<8xf32>
    %239 = vector.multi_reduction <add>, %238, %cst_81 [1] : vector<8x8xf32> to vector<8xf32>
    %240 = vector.shape_cast %239 : vector<8xf32> to vector<8x1xf32>
    %241 = tpu.reciprocal %240 {approx = true} : vector<8x1xf32> -> vector<8x1xf32>
    %242 = vector.broadcast %241 : vector<8x1xf32> to vector<8x8xf32>
    %243 = arith.mulf %238, %242 : vector<8x8xf32>
    %244 = vector.broadcast %228 : vector<1x32xf32> to vector<8x32xf32>
    %245 = arith.mulf %191, %244 : vector<8x32xf32>
    %246 = arith.truncf %243 : vector<8x8xf32> to vector<8x8xbf16>
    %247 = arith.truncf %245 : vector<8x32xf32> to vector<8x32xbf16>
    %cst_82 = arith.constant dense<0.000000e+00> : vector<8x32xf32>
    %248 = tpu.matmul %246, %247, %cst_82 {dimension_numbers = #tpu.dot_dimension_numbers<[1], [0], [0], [1], [0, 0, 1, 1], [], []>} : vector<8x8xbf16>, vector<8x32xbf16>, vector<8x32xf32> -> vector<8x32xf32>
    %249 = arith.addf %221, %248 : vector<8x32xf32>
    %c16_i32_83 = arith.constant 16 : i32
    %250 = vector.broadcast %c16_i32_83 : i32 to vector<1x32xi32>
    %251 = arith.cmpi sge, %192, %250 : vector<1x32xi32>
    %c24_i32_84 = arith.constant 24 : i32
    %252 = vector.broadcast %c24_i32_84 : i32 to vector<1x32xi32>
    %253 = arith.cmpi slt, %192, %252 : vector<1x32xi32>
    %254 = arith.andi %251, %253 : vector<1x32xi1>
    %255 = arith.extui %254 : vector<1x32xi1> to vector<1x32xi32>
    %256 = arith.sitofp %255 : vector<1x32xi32> to vector<1x32xf32>
    %257 = vector.broadcast %256 : vector<1x32xf32> to vector<8x32xf32>
    %258 = arith.mulf %181, %257 : vector<8x32xf32>
    %259 = arith.truncf %258 : vector<8x32xf32> to vector<8x32xbf16>
    %260 = arith.truncf %186 : vector<8x32xf32> to vector<8x32xbf16>
    %cst_85 = arith.constant dense<0.000000e+00> : vector<8x8xf32>
    %261 = tpu.matmul %259, %260, %cst_85 {dimension_numbers = #tpu.dot_dimension_numbers<[1], [1], [0], [0], [0, 0, 1, 0], [], []>} : vector<8x32xbf16>, vector<8x32xbf16>, vector<8x8xf32> -> vector<8x8xf32>
    %cst_86 = arith.constant dense<0xFF800000> : vector<8xf32>
    %262 = vector.multi_reduction <maximumf>, %261, %cst_86 [1] : vector<8x8xf32> to vector<8xf32>
    %263 = vector.shape_cast %262 : vector<8xf32> to vector<8x1xf32>
    %264 = vector.broadcast %263 : vector<8x1xf32> to vector<8x8xf32>
    %265 = arith.subf %261, %264 : vector<8x8xf32>
    %266 = math.exp %265 : vector<8x8xf32>
    %cst_87 = arith.constant dense<0.000000e+00> : vector<8xf32>
    %267 = vector.multi_reduction <add>, %266, %cst_87 [1] : vector<8x8xf32> to vector<8xf32>
    %268 = vector.shape_cast %267 : vector<8xf32> to vector<8x1xf32>
    %269 = tpu.reciprocal %268 {approx = true} : vector<8x1xf32> -> vector<8x1xf32>
    %270 = vector.broadcast %269 : vector<8x1xf32> to vector<8x8xf32>
    %271 = arith.mulf %266, %270 : vector<8x8xf32>
    %272 = vector.broadcast %256 : vector<1x32xf32> to vector<8x32xf32>
    %273 = arith.mulf %191, %272 : vector<8x32xf32>
    %274 = arith.truncf %271 : vector<8x8xf32> to vector<8x8xbf16>
    %275 = arith.truncf %273 : vector<8x32xf32> to vector<8x32xbf16>
    %cst_88 = arith.constant dense<0.000000e+00> : vector<8x32xf32>
    %276 = tpu.matmul %274, %275, %cst_88 {dimension_numbers = #tpu.dot_dimension_numbers<[1], [0], [0], [1], [0, 0, 1, 1], [], []>} : vector<8x8xbf16>, vector<8x32xbf16>, vector<8x32xf32> -> vector<8x32xf32>
    %277 = arith.addf %249, %276 : vector<8x32xf32>
    %c24_i32_89 = arith.constant 24 : i32
    %278 = vector.broadcast %c24_i32_89 : i32 to vector<1x32xi32>
    %279 = arith.cmpi sge, %192, %278 : vector<1x32xi32>
    %c32_i32_90 = arith.constant 32 : i32
    %280 = vector.broadcast %c32_i32_90 : i32 to vector<1x32xi32>
    %281 = arith.cmpi slt, %192, %280 : vector<1x32xi32>
    %282 = arith.andi %279, %281 : vector<1x32xi1>
    %283 = arith.extui %282 : vector<1x32xi1> to vector<1x32xi32>
    %284 = arith.sitofp %283 : vector<1x32xi32> to vector<1x32xf32>
    %285 = vector.broadcast %284 : vector<1x32xf32> to vector<8x32xf32>
    %286 = arith.mulf %181, %285 : vector<8x32xf32>
    %287 = arith.truncf %286 : vector<8x32xf32> to vector<8x32xbf16>
    %288 = arith.truncf %186 : vector<8x32xf32> to vector<8x32xbf16>
    %cst_91 = arith.constant dense<0.000000e+00> : vector<8x8xf32>
    %289 = tpu.matmul %287, %288, %cst_91 {dimension_numbers = #tpu.dot_dimension_numbers<[1], [1], [0], [0], [0, 0, 1, 0], [], []>} : vector<8x32xbf16>, vector<8x32xbf16>, vector<8x8xf32> -> vector<8x8xf32>
    %cst_92 = arith.constant dense<0xFF800000> : vector<8xf32>
    %290 = vector.multi_reduction <maximumf>, %289, %cst_92 [1] : vector<8x8xf32> to vector<8xf32>
    %291 = vector.shape_cast %290 : vector<8xf32> to vector<8x1xf32>
    %292 = vector.broadcast %291 : vector<8x1xf32> to vector<8x8xf32>
    %293 = arith.subf %289, %292 : vector<8x8xf32>
    %294 = math.exp %293 : vector<8x8xf32>
    %cst_93 = arith.constant dense<0.000000e+00> : vector<8xf32>
    %295 = vector.multi_reduction <add>, %294, %cst_93 [1] : vector<8x8xf32> to vector<8xf32>
    %296 = vector.shape_cast %295 : vector<8xf32> to vector<8x1xf32>
    %297 = tpu.reciprocal %296 {approx = true} : vector<8x1xf32> -> vector<8x1xf32>
    %298 = vector.broadcast %297 : vector<8x1xf32> to vector<8x8xf32>
    %299 = arith.mulf %294, %298 : vector<8x8xf32>
    %300 = vector.broadcast %284 : vector<1x32xf32> to vector<8x32xf32>
    %301 = arith.mulf %191, %300 : vector<8x32xf32>
    %302 = arith.truncf %299 : vector<8x8xf32> to vector<8x8xbf16>
    %303 = arith.truncf %301 : vector<8x32xf32> to vector<8x32xbf16>
    %cst_94 = arith.constant dense<0.000000e+00> : vector<8x32xf32>
    %304 = tpu.matmul %302, %303, %cst_94 {dimension_numbers = #tpu.dot_dimension_numbers<[1], [0], [0], [1], [0, 0, 1, 1], [], []>} : vector<8x8xbf16>, vector<8x32xbf16>, vector<8x32xf32> -> vector<8x32xf32>
    %305 = arith.addf %277, %304 : vector<8x32xf32>
    %306 = arith.truncf %305 : vector<8x32xf32> to vector<8x32xbf16>
    %307 = arith.truncf %175 : vector<32x32xf32> to vector<32x32xbf16>
    %cst_95 = arith.constant dense<0.000000e+00> : vector<8x32xf32>
    %308 = tpu.matmul %306, %307, %cst_95 {dimension_numbers = #tpu.dot_dimension_numbers<[1], [0], [0], [1], [0, 0, 1, 1], [], []>} : vector<8x32xbf16>, vector<32x32xbf16>, vector<8x32xf32> -> vector<8x32xf32>
    %309 = vector.broadcast %176 : vector<1x32xf32> to vector<8x32xf32>
    %310 = arith.addf %308, %309 : vector<8x32xf32>
    %311 = arith.addf %168, %310 : vector<8x32xf32>
    %c0_96 = arith.constant 0 : index
    %c0_97 = arith.constant 0 : index
    %312 = vector.load %arg21[%c0_96, %c0_97] : memref<1x32xf32, #tpu.memory_space<vmem>>, vector<1x32xf32>
    %c0_98 = arith.constant 0 : index
    %c0_99 = arith.constant 0 : index
    %313 = vector.load %arg22[%c0_98, %c0_99] : memref<1x32xf32, #tpu.memory_space<vmem>>, vector<1x32xf32>
    %cst_100 = arith.constant dense<0.000000e+00> : vector<8xf32>
    %314 = vector.multi_reduction <add>, %311, %cst_100 [1] : vector<8x32xf32> to vector<8xf32>
    %315 = vector.shape_cast %314 : vector<8xf32> to vector<8x1xf32>
    %cst_101 = arith.constant 3.200000e+01 : f32
    %316 = vector.broadcast %cst_101 : f32 to vector<8x1xf32>
    %317 = arith.divf %315, %316 : vector<8x1xf32>
    %318 = vector.broadcast %317 : vector<8x1xf32> to vector<8x32xf32>
    %319 = arith.subf %311, %318 : vector<8x32xf32>
    %320 = arith.mulf %319, %319 : vector<8x32xf32>
    %cst_102 = arith.constant dense<0.000000e+00> : vector<8xf32>
    %321 = vector.multi_reduction <add>, %320, %cst_102 [1] : vector<8x32xf32> to vector<8xf32>
    %322 = vector.shape_cast %321 : vector<8xf32> to vector<8x1xf32>
    %cst_103 = arith.constant 3.200000e+01 : f32
    %323 = vector.broadcast %cst_103 : f32 to vector<8x1xf32>
    %324 = arith.divf %322, %323 : vector<8x1xf32>
    %325 = vector.broadcast %317 : vector<8x1xf32> to vector<8x32xf32>
    %326 = arith.subf %311, %325 : vector<8x32xf32>
    %cst_104 = arith.constant 9.99999974E-6 : f32
    %327 = vector.broadcast %cst_104 : f32 to vector<8x1xf32>
    %328 = arith.addf %324, %327 : vector<8x1xf32>
    %329 = math.rsqrt %328 : vector<8x1xf32>
    %330 = vector.broadcast %329 : vector<8x1xf32> to vector<8x32xf32>
    %331 = arith.mulf %326, %330 : vector<8x32xf32>
    %332 = vector.broadcast %312 : vector<1x32xf32> to vector<8x32xf32>
    %333 = arith.mulf %331, %332 : vector<8x32xf32>
    %334 = vector.broadcast %313 : vector<1x32xf32> to vector<8x32xf32>
    %335 = arith.addf %333, %334 : vector<8x32xf32>
    %c0_105 = arith.constant 0 : index
    %c0_106 = arith.constant 0 : index
    %336 = vector.load %arg23[%c0_105, %c0_106] : memref<32x2048xf32, #tpu.memory_space<vmem>>, vector<32x2048xf32>
    %c0_107 = arith.constant 0 : index
    %c0_108 = arith.constant 0 : index
    %337 = vector.load %arg24[%c0_107, %c0_108] : memref<1x2048xf32, #tpu.memory_space<vmem>>, vector<1x2048xf32>
    %c0_109 = arith.constant 0 : index
    %c0_110 = arith.constant 0 : index
    %338 = vector.load %arg25[%c0_109, %c0_110] : memref<2048x32xf32, #tpu.memory_space<vmem>>, vector<2048x32xf32>
    %c0_111 = arith.constant 0 : index
    %c0_112 = arith.constant 0 : index
    %339 = vector.load %arg26[%c0_111, %c0_112] : memref<1x32xf32, #tpu.memory_space<vmem>>, vector<1x32xf32>
    %340 = arith.truncf %335 : vector<8x32xf32> to vector<8x32xbf16>
    %341 = arith.truncf %336 : vector<32x2048xf32> to vector<32x2048xbf16>
    %cst_113 = arith.constant dense<0.000000e+00> : vector<8x2048xf32>
    %342 = tpu.matmul %340, %341, %cst_113 {dimension_numbers = #tpu.dot_dimension_numbers<[1], [0], [0], [1], [0, 0, 1, 1], [], []>} : vector<8x32xbf16>, vector<32x2048xbf16>, vector<8x2048xf32> -> vector<8x2048xf32>
    %343 = vector.broadcast %337 : vector<1x2048xf32> to vector<8x2048xf32>
    %344 = arith.addf %342, %343 : vector<8x2048xf32>
    %cst_114 = arith.constant 0.000000e+00 : f32
    %345 = vector.broadcast %cst_114 : f32 to vector<8x2048xf32>
    %346 = arith.maximumf %344, %345 : vector<8x2048xf32>
    %347 = arith.truncf %346 : vector<8x2048xf32> to vector<8x2048xbf16>
    %348 = arith.truncf %338 : vector<2048x32xf32> to vector<2048x32xbf16>
    %cst_115 = arith.constant dense<0.000000e+00> : vector<8x32xf32>
    %349 = tpu.matmul %347, %348, %cst_115 {dimension_numbers = #tpu.dot_dimension_numbers<[1], [0], [0], [1], [0, 0, 1, 1], [], []>} : vector<8x2048xbf16>, vector<2048x32xbf16>, vector<8x32xf32> -> vector<8x32xf32>
    %350 = vector.broadcast %339 : vector<1x32xf32> to vector<8x32xf32>
    %351 = arith.addf %349, %350 : vector<8x32xf32>
    %352 = arith.addf %335, %351 : vector<8x32xf32>
    %c0_116 = arith.constant 0 : index
    %c0_117 = arith.constant 0 : index
    %353 = vector.load %arg27[%c0_116, %c0_117] : memref<1x32xf32, #tpu.memory_space<vmem>>, vector<1x32xf32>
    %c0_118 = arith.constant 0 : index
    %c0_119 = arith.constant 0 : index
    %354 = vector.load %arg28[%c0_118, %c0_119] : memref<1x32xf32, #tpu.memory_space<vmem>>, vector<1x32xf32>
    %cst_120 = arith.constant dense<0.000000e+00> : vector<8xf32>
    %355 = vector.multi_reduction <add>, %352, %cst_120 [1] : vector<8x32xf32> to vector<8xf32>
    %356 = vector.shape_cast %355 : vector<8xf32> to vector<8x1xf32>
    %cst_121 = arith.constant 3.200000e+01 : f32
    %357 = vector.broadcast %cst_121 : f32 to vector<8x1xf32>
    %358 = arith.divf %356, %357 : vector<8x1xf32>
    %359 = vector.broadcast %358 : vector<8x1xf32> to vector<8x32xf32>
    %360 = arith.subf %352, %359 : vector<8x32xf32>
    %361 = arith.mulf %360, %360 : vector<8x32xf32>
    %cst_122 = arith.constant dense<0.000000e+00> : vector<8xf32>
    %362 = vector.multi_reduction <add>, %361, %cst_122 [1] : vector<8x32xf32> to vector<8xf32>
    %363 = vector.shape_cast %362 : vector<8xf32> to vector<8x1xf32>
    %cst_123 = arith.constant 3.200000e+01 : f32
    %364 = vector.broadcast %cst_123 : f32 to vector<8x1xf32>
    %365 = arith.divf %363, %364 : vector<8x1xf32>
    %366 = vector.broadcast %358 : vector<8x1xf32> to vector<8x32xf32>
    %367 = arith.subf %352, %366 : vector<8x32xf32>
    %cst_124 = arith.constant 9.99999974E-6 : f32
    %368 = vector.broadcast %cst_124 : f32 to vector<8x1xf32>
    %369 = arith.addf %365, %368 : vector<8x1xf32>
    %370 = math.rsqrt %369 : vector<8x1xf32>
    %371 = vector.broadcast %370 : vector<8x1xf32> to vector<8x32xf32>
    %372 = arith.mulf %367, %371 : vector<8x32xf32>
    %373 = vector.broadcast %353 : vector<1x32xf32> to vector<8x32xf32>
    %374 = arith.mulf %372, %373 : vector<8x32xf32>
    %375 = vector.broadcast %354 : vector<1x32xf32> to vector<8x32xf32>
    %376 = arith.addf %374, %375 : vector<8x32xf32>
    %c0_125 = arith.constant 0 : index
    %c0_126 = arith.constant 0 : index
    %377 = vector.load %arg29[%c0_125, %c0_126] : memref<8x32xf32, #tpu.memory_space<vmem>>, vector<8x32xf32>
    tpu.vector_store %arg29[%c0_125, %c0_126], %376 {strides = array<i32>} : memref<8x32xf32, #tpu.memory_space<vmem>>, vector<8x32xf32>,
    return
  }
  func.func @transform_0(%arg0: i32) -> (i32, i32) {
    %c0_i32 = arith.constant 0 : i32
    %c0_i32_0 = arith.constant 0 : i32
    return %arg0, %c0_i32 : i32, i32
  }
  func.func @transform_1(%arg0: i32) -> (i32, i32) {
    %c0_i32 = arith.constant 0 : i32
    %c0_i32_0 = arith.constant 0 : i32
    return %arg0, %c0_i32 : i32, i32
  }
  func.func @transform_2(%arg0: i32) -> (i32, i32) {
    %c0_i32 = arith.constant 0 : i32
    %c0_i32_0 = arith.constant 0 : i32
    %c0_i32_1 = arith.constant 0 : i32
    return %c0_i32, %c0_i32_0 : i32, i32
  }
  func.func @transform_3(%arg0: i32) -> (i32, i32) {
    %c0_i32 = arith.constant 0 : i32
    %c0_i32_0 = arith.constant 0 : i32
    %c0_i32_1 = arith.constant 0 : i32
    return %c0_i32, %c0_i32_0 : i32, i32
  }
  func.func @transform_4(%arg0: i32) -> (i32, i32) {
    %c0_i32 = arith.constant 0 : i32
    %c0_i32_0 = arith.constant 0 : i32
    %c0_i32_1 = arith.constant 0 : i32
    return %c0_i32, %c0_i32_0 : i32, i32
  }
  func.func @transform_5(%arg0: i32) -> (i32, i32) {
    %c0_i32 = arith.constant 0 : i32
    %c0_i32_0 = arith.constant 0 : i32
    %c0_i32_1 = arith.constant 0 : i32
    return %c0_i32, %c0_i32_0 : i32, i32
  }
  func.func @transform_6(%arg0: i32) -> (i32, i32) {
    %c0_i32 = arith.constant 0 : i32
    %c0_i32_0 = arith.constant 0 : i32
    %c0_i32_1 = arith.constant 0 : i32
    return %c0_i32, %c0_i32_0 : i32, i32
  }
  func.func @transform_7(%arg0: i32) -> (i32, i32) {
    %c0_i32 = arith.constant 0 : i32
    %c0_i32_0 = arith.constant 0 : i32
    %c0_i32_1 = arith.constant 0 : i32
    return %c0_i32, %c0_i32_0 : i32, i32
  }
  func.func @transform_8(%arg0: i32) -> (i32, i32) {
    %c0_i32 = arith.constant 0 : i32
    %c0_i32_0 = arith.constant 0 : i32
    %c0_i32_1 = arith.constant 0 : i32
    return %c0_i32, %c0_i32_0 : i32, i32
  }
  func.func @transform_9(%arg0: i32) -> (i32, i32) {
    %c0_i32 = arith.constant 0 : i32
    %c0_i32_0 = arith.constant 0 : i32
    %c0_i32_1 = arith.constant 0 : i32
    return %c0_i32, %c0_i32_0 : i32, i32
  }
  func.func @transform_10(%arg0: i32) -> (i32, i32) {
    %c0_i32 = arith.constant 0 : i32
    %c0_i32_0 = arith.constant 0 : i32
    %c0_i32_1 = arith.constant 0 : i32
    return %c0_i32, %c0_i32_0 : i32, i32
  }
  func.func @transform_11(%arg0: i32) -> (i32, i32) {
    %c0_i32 = arith.constant 0 : i32
    %c0_i32_0 = arith.constant 0 : i32
    %c0_i32_1 = arith.constant 0 : i32
    return %c0_i32, %c0_i32_0 : i32, i32
  }
  func.func @transform_12(%arg0: i32) -> (i32, i32) {
    %c0_i32 = arith.constant 0 : i32
    %c0_i32_0 = arith.constant 0 : i32
    %c0_i32_1 = arith.constant 0 : i32
    return %c0_i32, %c0_i32_0 : i32, i32
  }
  func.func @transform_13(%arg0: i32) -> (i32, i32) {
    %c0_i32 = arith.constant 0 : i32
    %c0_i32_0 = arith.constant 0 : i32
    %c0_i32_1 = arith.constant 0 : i32
    return %c0_i32, %c0_i32_0 : i32, i32
  }
  func.func @transform_14(%arg0: i32) -> (i32, i32) {
    %c0_i32 = arith.constant 0 : i32
    %c0_i32_0 = arith.constant 0 : i32
    %c0_i32_1 = arith.constant 0 : i32
    return %c0_i32, %c0_i32_0 : i32, i32
  }
  func.func @transform_15(%arg0: i32) -> (i32, i32) {
    %c0_i32 = arith.constant 0 : i32
    %c0_i32_0 = arith.constant 0 : i32
    %c0_i32_1 = arith.constant 0 : i32
    return %c0_i32, %c0_i32_0 : i32, i32
  }
  func.func @transform_16(%arg0: i32) -> (i32, i32) {
    %c0_i32 = arith.constant 0 : i32
    %c0_i32_0 = arith.constant 0 : i32
    %c0_i32_1 = arith.constant 0 : i32
    return %c0_i32, %c0_i32_0 : i32, i32
  }
  func.func @transform_17(%arg0: i32) -> (i32, i32) {
    %c0_i32 = arith.constant 0 : i32
    %c0_i32_0 = arith.constant 0 : i32
    %c0_i32_1 = arith.constant 0 : i32
    return %c0_i32, %c0_i32_0 : i32, i32
  }
  func.func @transform_18(%arg0: i32) -> (i32, i32) {
    %c0_i32 = arith.constant 0 : i32
    %c0_i32_0 = arith.constant 0 : i32
    %c0_i32_1 = arith.constant 0 : i32
    return %c0_i32, %c0_i32_0 : i32, i32
  }
  func.func @transform_19(%arg0: i32) -> (i32, i32) {
    %c0_i32 = arith.constant 0 : i32
    %c0_i32_0 = arith.constant 0 : i32
    %c0_i32_1 = arith.constant 0 : i32
    return %c0_i32, %c0_i32_0 : i32, i32
  }
  func.func @transform_20(%arg0: i32) -> (i32, i32) {
    %c0_i32 = arith.constant 0 : i32
    %c0_i32_0 = arith.constant 0 : i32
    %c0_i32_1 = arith.constant 0 : i32
    return %c0_i32, %c0_i32_0 : i32, i32
  }
  func.func @transform_21(%arg0: i32) -> (i32, i32) {
    %c0_i32 = arith.constant 0 : i32
    %c0_i32_0 = arith.constant 0 : i32
    %c0_i32_1 = arith.constant 0 : i32
    return %c0_i32, %c0_i32_0 : i32, i32
  }
  func.func @transform_22(%arg0: i32) -> (i32, i32) {
    %c0_i32 = arith.constant 0 : i32
    %c0_i32_0 = arith.constant 0 : i32
    %c0_i32_1 = arith.constant 0 : i32
    return %c0_i32, %c0_i32_0 : i32, i32
  }
  func.func @transform_23(%arg0: i32) -> (i32, i32) {
    %c0_i32 = arith.constant 0 : i32
    %c0_i32_0 = arith.constant 0 : i32
    %c0_i32_1 = arith.constant 0 : i32
    return %c0_i32, %c0_i32_0 : i32, i32
  }
  func.func @transform_24(%arg0: i32) -> (i32, i32) {
    %c0_i32 = arith.constant 0 : i32
    %c0_i32_0 = arith.constant 0 : i32
    %c0_i32_1 = arith.constant 0 : i32
    return %c0_i32, %c0_i32_0 : i32, i32
  }
  func.func @transform_25(%arg0: i32) -> (i32, i32) {
    %c0_i32 = arith.constant 0 : i32
    %c0_i32_0 = arith.constant 0 : i32
    %c0_i32_1 = arith.constant 0 : i32
    return %c0_i32, %c0_i32_0 : i32, i32
  }
  func.func @transform_26(%arg0: i32) -> (i32, i32) {
    %c0_i32 = arith.constant 0 : i32
    %c0_i32_0 = arith.constant 0 : i32
    %c0_i32_1 = arith.constant 0 : i32
    return %c0_i32, %c0_i32_0 : i32, i32
  }
  func.func @transform_27(%arg0: i32) -> (i32, i32) {
    %c0_i32 = arith.constant 0 : i32
    %c0_i32_0 = arith.constant 0 : i32
    %c0_i32_1 = arith.constant 0 : i32
    return %c0_i32, %c0_i32_0 : i32, i32
  }
  func.func @transform_28(%arg0: i32) -> (i32, i32) {
    %c0_i32 = arith.constant 0 : i32
    %c0_i32_0 = arith.constant 0 : i32
    return %arg0, %c0_i32 : i32, i32
  }
}

</mosaic_0001>

<llo_original>
// kernel: transformer_forward.4
$region0: #{transformer_forward.4}
  #allocation0 [shape = 'u32[]', space=smem, size = 0x4, offset = 0x4, fixed_abs, tag = 'smem constant byte address 0x4 - core index']
  #allocation1 [shape = 'u32[144,128]{1,0:T(1,128)}', space=vmem, size = 0x12000, scoped, tag = 'internal scratch']
  %s0 = inlined_call_operand.vmem [shape: f32[16,32], index: 0, kind: input, shape index: {}]
  %s1 = inlined_call_operand.vmem [shape: f32[32,32], index: 1, kind: input, shape index: {}]
  %s2 = inlined_call_operand.vmem [shape: f32[1,32], index: 2, kind: input, shape index: {}]
  %s3 = inlined_call_operand.vmem [shape: f32[32,32], index: 3, kind: input, shape index: {}]
  %s4 = inlined_call_operand.vmem [shape: f32[1,32], index: 4, kind: input, shape index: {}]
  %s5 = inlined_call_operand.vmem [shape: f32[32,32], index: 5, kind: input, shape index: {}]
  %s6 = inlined_call_operand.vmem [shape: f32[1,32], index: 6, kind: input, shape index: {}]
  %s7 = inlined_call_operand.vmem [shape: f32[32,32], index: 7, kind: input, shape index: {}]
  %s8 = inlined_call_operand.vmem [shape: f32[1,32], index: 8, kind: input, shape index: {}]
  %s9 = inlined_call_operand.vmem [shape: f32[1,32], index: 9, kind: input, shape index: {}]
  %s10 = inlined_call_operand.vmem [shape: f32[1,32], index: 10, kind: input, shape index: {}]
  %s11 = inlined_call_operand.vmem [shape: f32[32,2048], index: 11, kind: input, shape index: {}]
  %s12 = inlined_call_operand.vmem [shape: f32[1,2048], index: 12, kind: input, shape index: {}]
  %s13 = inlined_call_operand.vmem [shape: f32[2048,32], index: 13, kind: input, shape index: {}]
  %s14 = inlined_call_operand.vmem [shape: f32[1,32], index: 14, kind: input, shape index: {}]
  %s15 = inlined_call_operand.vmem [shape: f32[1,32], index: 15, kind: input, shape index: {}]
  %s16 = inlined_call_operand.vmem [shape: f32[1,32], index: 16, kind: input, shape index: {}]
  %s17 = inlined_call_operand.vmem [shape: f32[16,32], index: 17, kind: output, shape index: {}]
  %s18 = sld [smem:[#allocation0]]
  $region101: #{transformer_forward.4} parent=0
    _
  %s20 = ssub.s32 1, %s18
  %s21 = scalar_select 0, %s20, %s18
  loop: start=0, step=1, limit=4
  $region2: #{transformer_forward.4} parent=0 // loop_pre_header
    _
  $region3: #{transformer_forward.4} parent=0 // loop_header
    %s23 = sphi 0, %s27
    %p24 = scmp.ge.s32.totalorder %s23, 4
    %s33 = sphi 0, %s35
    %s36 = sphi 0, %s33
    %s37 = sphi 0, %s36
    %s53 = sphi 0, %s37
    %s57 = sphi 0, %s57
    %s59 = sphi 0, %s57
    %s60 = sphi 0, %s59
    %s74 = sphi 0, %s60
    %s78 = sphi 0, %s78
    %s80 = sphi 0, %s78
    %s81 = sphi 0, %s80
    %s95 = sphi 0, %s81
    %s99 = sphi 0, %s99
    %s101 = sphi 0, %s99
    %s102 = sphi 0, %s101
    %s116 = sphi 0, %s102
    %s120 = sphi 0, %s120
    %s122 = sphi 0, %s120
    %s123 = sphi 0, %s122
    %s137 = sphi 0, %s123
    %s141 = sphi 0, %s141
    %s143 = sphi 0, %s141
    %s144 = sphi 0, %s143
    %s158 = sphi 0, %s144
    %s162 = sphi 0, %s162
    %s164 = sphi 0, %s162
    %s165 = sphi 0, %s164
    %s179 = sphi 0, %s165
    %s183 = sphi 0, %s183
    %s185 = sphi 0, %s183
    %s186 = sphi 0, %s185
    %s200 = sphi 0, %s186
    %s204 = sphi 0, %s204
    %s206 = sphi 0, %s204
    %s207 = sphi 0, %s206
    %s221 = sphi 0, %s207
    %s225 = sphi 0, %s225
    %s227 = sphi 0, %s225
    %s228 = sphi 0, %s227
    %s242 = sphi 0, %s228
    %s246 = sphi 0, %s246
    %s248 = sphi 0, %s246
    %s249 = sphi 0, %s248
    %s263 = sphi 0, %s249
    %s267 = sphi 0, %s267
    %s269 = sphi 0, %s267
    %s270 = sphi 0, %s269
    %s284 = sphi 0, %s270
    %s288 = sphi 0, %s288
    %s290 = sphi 0, %s288
    %s291 = sphi 0, %s290
    %s305 = sphi 0, %s291
    %s309 = sphi 0, %s309
    %s311 = sphi 0, %s309
    %s312 = sphi 0, %s311
    %s326 = sphi 0, %s312
    %s330 = sphi 0, %s330
    %s332 = sphi 0, %s330
    %s333 = sphi 0, %s332
    %s347 = sphi 0, %s333
    %s351 = sphi 0, %s351
    %s353 = sphi 0, %s351
    %s354 = sphi 0, %s353
    %s368 = sphi 0, %s354
    %s372 = sphi 0, %s372
    %s374 = sphi 0, %s372
    %s375 = sphi 0, %s374
    %s389 = sphi 0, %s375
    %s395 = sphi 0, %s397
    %s398 = sphi 0, %s395
    %s399 = sphi 0, %s398
    %s415 = sphi 0, %s399
  $region4: #{transformer_forward.4} parent=0 // loop_header_branch
    %26 = sbr.rel (%p24) target = $region8
  $region5: #{transformer_forward.4} parent=0 // loop_body
    %s28 = ssub.s32 %s23, 1
    %s29 = ssub.s32 %s23, 2
    %s30 = sadd.s32 %s23, 1
    %s31 = ssub.s32 %s23, %s30
    %p32 = scmp.eq.s32.totalorder %s31, 0
    %s34 = sadd.s32 %s33, 1
    %s35 = scalar_select %p32, %s33, %s34
    %p38 = pneg %p32
    %p39 = scmp.eq.s32.totalorder %s23, 1
    %p40 = por %p38, %p39
    %p41 = scmp.ne.s32.totalorder %s33, %s36
    %p42 = scmp.eq.s32.totalorder %s23, 0
    %p43 = por %p41, %p42
    %p44 = scmp.ne.s32.totalorder %s33, %s36
    %p45 = scmp.eq.s32.totalorder %s28, 1
    %p46 = por %p44, %p45
    %p47 = scmp.ne.s32.totalorder %s36, %s37
    %p48 = scmp.eq.s32.totalorder %s28, 0
    %p49 = por %p47, %p48
    %p50 = scmp.ne.s32.totalorder %s36, %s37
    %p51 = scmp.eq.s32.totalorder %s29, 1
    %p52 = por %p50, %p51
    %p54 = scmp.ne.s32.totalorder %s37, %s53
    %p55 = scmp.eq.s32.totalorder %s29, 0
    %p56 = por %p54, %p55
    %s58 = sadd.s32 %s57, 1
    %p61 = scmp.eq.s32.totalorder %s23, 1
    %p62 = scmp.ne.s32.totalorder %s57, %s59
    %p63 = scmp.eq.s32.totalorder %s23, 0
    %p64 = por %p62, %p63
    %p65 = scmp.ne.s32.totalorder %s57, %s59
    %p66 = scmp.eq.s32.totalorder %s28, 1
    %p67 = por %p65, %p66
    %p68 = scmp.ne.s32.totalorder %s59, %s60
    %p69 = scmp.eq.s32.totalorder %s28, 0
    %p70 = por %p68, %p69
    %p71 = scmp.ne.s32.totalorder %s59, %s60
    %p72 = scmp.eq.s32.totalorder %s29, 1
    %p73 = por %p71, %p72
    %p75 = scmp.ne.s32.totalorder %s60, %s74
    %p76 = scmp.eq.s32.totalorder %s29, 0
    %p77 = por %p75, %p76
    %s79 = sadd.s32 %s78, 1
    %p82 = scmp.eq.s32.totalorder %s23, 1
    %p83 = scmp.ne.s32.totalorder %s78, %s80
    %p84 = scmp.eq.s32.totalorder %s23, 0
    %p85 = por %p83, %p84
    %p86 = scmp.ne.s32.totalorder %s78, %s80
    %p87 = scmp.eq.s32.totalorder %s28, 1
    %p88 = por %p86, %p87
    %p89 = scmp.ne.s32.totalorder %s80, %s81
    %p90 = scmp.eq.s32.totalorder %s28, 0
    %p91 = por %p89, %p90
    %p92 = scmp.ne.s32.totalorder %s80, %s81
    %p93 = scmp.eq.s32.totalorder %s29, 1
    %p94 = por %p92, %p93
    %p96 = scmp.ne.s32.totalorder %s81, %s95
    %p97 = scmp.eq.s32.totalorder %s29, 0
    %p98 = por %p96, %p97
    %s100 = sadd.s32 %s99, 1
    %p103 = scmp.eq.s32.totalorder %s23, 1
    %p104 = scmp.ne.s32.totalorder %s99, %s101
    %p105 = scmp.eq.s32.totalorder %s23, 0
    %p106 = por %p104, %p105
    %p107 = scmp.ne.s32.totalorder %s99, %s101
    %p108 = scmp.eq.s32.totalorder %s28, 1
    %p109 = por %p107, %p108
    %p110 = scmp.ne.s32.totalorder %s101, %s102
    %p111 = scmp.eq.s32.totalorder %s28, 0
    %p112 = por %p110, %p111
    %p113 = scmp.ne.s32.totalorder %s101, %s102
    %p114 = scmp.eq.s32.totalorder %s29, 1
    %p115 = por %p113, %p114
    %p117 = scmp.ne.s32.totalorder %s102, %s116
    %p118 = scmp.eq.s32.totalorder %s29, 0
    %p119 = por %p117, %p118
    %s121 = sadd.s32 %s120, 1
    %p124 = scmp.eq.s32.totalorder %s23, 1
    %p125 = scmp.ne.s32.totalorder %s120, %s122
    %p126 = scmp.eq.s32.totalorder %s23, 0
    %p127 = por %p125, %p126
    %p128 = scmp.ne.s32.totalorder %s120, %s122
    %p129 = scmp.eq.s32.totalorder %s28, 1
    %p130 = por %p128, %p129
    %p131 = scmp.ne.s32.totalorder %s122, %s123
    %p132 = scmp.eq.s32.totalorder %s28, 0
    %p133 = por %p131, %p132
    %p134 = scmp.ne.s32.totalorder %s122, %s123
    %p135 = scmp.eq.s32.totalorder %s29, 1
    %p136 = por %p134, %p135
    %p138 = scmp.ne.s32.totalorder %s123, %s137
    %p139 = scmp.eq.s32.totalorder %s29, 0
    %p140 = por %p138, %p139
    %s142 = sadd.s32 %s141, 1
    %p145 = scmp.eq.s32.totalorder %s23, 1
    %p146 = scmp.ne.s32.totalorder %s141, %s143
    %p147 = scmp.eq.s32.totalorder %s23, 0
    %p148 = por %p146, %p147
    %p149 = scmp.ne.s32.totalorder %s141, %s143
    %p150 = scmp.eq.s32.totalorder %s28, 1
    %p151 = por %p149, %p150
    %p152 = scmp.ne.s32.totalorder %s143, %s144
    %p153 = scmp.eq.s32.totalorder %s28, 0
    %p154 = por %p152, %p153
    %p155 = scmp.ne.s32.totalorder %s143, %s144
    %p156 = scmp.eq.s32.totalorder %s29, 1
    %p157 = por %p155, %p156
    %p159 = scmp.ne.s32.totalorder %s144, %s158
    %p160 = scmp.eq.s32.totalorder %s29, 0
    %p161 = por %p159, %p160
    %s163 = sadd.s32 %s162, 1
    %p166 = scmp.eq.s32.totalorder %s23, 1
    %p167 = scmp.ne.s32.totalorder %s162, %s164
    %p168 = scmp.eq.s32.totalorder %s23, 0
    %p169 = por %p167, %p168
    %p170 = scmp.ne.s32.totalorder %s162, %s164
    %p171 = scmp.eq.s32.totalorder %s28, 1
    %p172 = por %p170, %p171
    %p173 = scmp.ne.s32.totalorder %s164, %s165
    %p174 = scmp.eq.s32.totalorder %s28, 0
    %p175 = por %p173, %p174
    %p176 = scmp.ne.s32.totalorder %s164, %s165
    %p177 = scmp.eq.s32.totalorder %s29, 1
    %p178 = por %p176, %p177
    %p180 = scmp.ne.s32.totalorder %s165, %s179
    %p181 = scmp.eq.s32.totalorder %s29, 0
    %p182 = por %p180, %p181
    %s184 = sadd.s32 %s183, 1
    %p187 = scmp.eq.s32.totalorder %s23, 1
    %p188 = scmp.ne.s32.totalorder %s183, %s185
    %p189 = scmp.eq.s32.totalorder %s23, 0
    %p190 = por %p188, %p189
    %p191 = scmp.ne.s32.totalorder %s183, %s185
    %p192 = scmp.eq.s32.totalorder %s28, 1
    %p193 = por %p191, %p192
    %p194 = scmp.ne.s32.totalorder %s185, %s186
    %p195 = scmp.eq.s32.totalorder %s28, 0
    %p196 = por %p194, %p195
    %p197 = scmp.ne.s32.totalorder %s185, %s186
    %p198 = scmp.eq.s32.totalorder %s29, 1
    %p199 = por %p197, %p198
    %p201 = scmp.ne.s32.totalorder %s186, %s200
    %p202 = scmp.eq.s32.totalorder %s29, 0
    %p203 = por %p201, %p202
    %s205 = sadd.s32 %s204, 1
    %p208 = scmp.eq.s32.totalorder %s23, 1
    %p209 = scmp.ne.s32.totalorder %s204, %s206
    %p210 = scmp.eq.s32.totalorder %s23, 0
    %p211 = por %p209, %p210
    %p212 = scmp.ne.s32.totalorder %s204, %s206
    %p213 = scmp.eq.s32.totalorder %s28, 1
    %p214 = por %p212, %p213
    %p215 = scmp.ne.s32.totalorder %s206, %s207
    %p216 = scmp.eq.s32.totalorder %s28, 0
    %p217 = por %p215, %p216
    %p218 = scmp.ne.s32.totalorder %s206, %s207
    %p219 = scmp.eq.s32.totalorder %s29, 1
    %p220 = por %p218, %p219
    %p222 = scmp.ne.s32.totalorder %s207, %s221
    %p223 = scmp.eq.s32.totalorder %s29, 0
    %p224 = por %p222, %p223
    %s226 = sadd.s32 %s225, 1
    %p229 = scmp.eq.s32.totalorder %s23, 1
    %p230 = scmp.ne.s32.totalorder %s225, %s227
    %p231 = scmp.eq.s32.totalorder %s23, 0
    %p232 = por %p230, %p231
    %p233 = scmp.ne.s32.totalorder %s225, %s227
    %p234 = scmp.eq.s32.totalorder %s28, 1
    %p235 = por %p233, %p234
    %p236 = scmp.ne.s32.totalorder %s227, %s228
    %p237 = scmp.eq.s32.totalorder %s28, 0
    %p238 = por %p236, %p237
    %p239 = scmp.ne.s32.totalorder %s227, %s228
    %p240 = scmp.eq.s32.totalorder %s29, 1
    %p241 = por %p239, %p240
    %p243 = scmp.ne.s32.totalorder %s228, %s242
    %p244 = scmp.eq.s32.totalorder %s29, 0
    %p245 = por %p243, %p244
    %s247 = sadd.s32 %s246, 1
    %p250 = scmp.eq.s32.totalorder %s23, 1
    %p251 = scmp.ne.s32.totalorder %s246, %s248
    %p252 = scmp.eq.s32.totalorder %s23, 0
    %p253 = por %p251, %p252
    %p254 = scmp.ne.s32.totalorder %s246, %s248
    %p255 = scmp.eq.s32.totalorder %s28, 1
    %p256 = por %p254, %p255
    %p257 = scmp.ne.s32.totalorder %s248, %s249
    %p258 = scmp.eq.s32.totalorder %s28, 0
    %p259 = por %p257, %p258
    %p260 = scmp.ne.s32.totalorder %s248, %s249
    %p261 = scmp.eq.s32.totalorder %s29, 1
    %p262 = por %p260, %p261
    %p264 = scmp.ne.s32.totalorder %s249, %s263
    %p265 = scmp.eq.s32.totalorder %s29, 0
    %p266 = por %p264, %p265
    %s268 = sadd.s32 %s267, 1
    %p271 = scmp.eq.s32.totalorder %s23, 1
    %p272 = scmp.ne.s32.totalorder %s267, %s269
    %p273 = scmp.eq.s32.totalorder %s23, 0
    %p274 = por %p272, %p273
    %p275 = scmp.ne.s32.totalorder %s267, %s269
    %p276 = scmp.eq.s32.totalorder %s28, 1
    %p277 = por %p275, %p276
    %p278 = scmp.ne.s32.totalorder %s269, %s270
    %p279 = scmp.eq.s32.totalorder %s28, 0
    %p280 = por %p278, %p279
    %p281 = scmp.ne.s32.totalorder %s269, %s270
    %p282 = scmp.eq.s32.totalorder %s29, 1
    %p283 = por %p281, %p282
    %p285 = scmp.ne.s32.totalorder %s270, %s284
    %p286 = scmp.eq.s32.totalorder %s29, 0
    %p287 = por %p285, %p286
    %s289 = sadd.s32 %s288, 1
    %p292 = scmp.eq.s32.totalorder %s23, 1
    %p293 = scmp.ne.s32.totalorder %s288, %s290
    %p294 = scmp.eq.s32.totalorder %s23, 0
    %p295 = por %p293, %p294
    %p296 = scmp.ne.s32.totalorder %s288, %s290
    %p297 = scmp.eq.s32.totalorder %s28, 1
    %p298 = por %p296, %p297
    %p299 = scmp.ne.s32.totalorder %s290, %s291
    %p300 = scmp.eq.s32.totalorder %s28, 0
    %p301 = por %p299, %p300
    %p302 = scmp.ne.s32.totalorder %s290, %s291
    %p303 = scmp.eq.s32.totalorder %s29, 1
    %p304 = por %p302, %p303
    %p306 = scmp.ne.s32.totalorder %s291, %s305
    %p307 = scmp.eq.s32.totalorder %s29, 0
    %p308 = por %p306, %p307
    %s310 = sadd.s32 %s309, 1
    %p313 = scmp.eq.s32.totalorder %s23, 1
    %p314 = scmp.ne.s32.totalorder %s309, %s311
    %p315 = scmp.eq.s32.totalorder %s23, 0
    %p316 = por %p314, %p315
    %p317 = scmp.ne.s32.totalorder %s309, %s311
    %p318 = scmp.eq.s32.totalorder %s28, 1
    %p319 = por %p317, %p318
    %p320 = scmp.ne.s32.totalorder %s311, %s312
    %p321 = scmp.eq.s32.totalorder %s28, 0
    %p322 = por %p320, %p321
    %p323 = scmp.ne.s32.totalorder %s311, %s312
    %p324 = scmp.eq.s32.totalorder %s29, 1
    %p325 = por %p323, %p324
    %p327 = scmp.ne.s32.totalorder %s312, %s326
    %p328 = scmp.eq.s32.totalorder %s29, 0
    %p329 = por %p327, %p328
    %s331 = sadd.s32 %s330, 1
    %p334 = scmp.eq.s32.totalorder %s23, 1
    %p335 = scmp.ne.s32.totalorder %s330, %s332
    %p336 = scmp.eq.s32.totalorder %s23, 0
    %p337 = por %p335, %p336
    %p338 = scmp.ne.s32.totalorder %s330, %s332
    %p339 = scmp.eq.s32.totalorder %s28, 1
    %p340 = por %p338, %p339
    %p341 = scmp.ne.s32.totalorder %s332, %s333
    %p342 = scmp.eq.s32.totalorder %s28, 0
    %p343 = por %p341, %p342
    %p344 = scmp.ne.s32.totalorder %s332, %s333
    %p345 = scmp.eq.s32.totalorder %s29, 1
    %p346 = por %p344, %p345
    %p348 = scmp.ne.s32.totalorder %s333, %s347
    %p349 = scmp.eq.s32.totalorder %s29, 0
    %p350 = por %p348, %p349
    %s352 = sadd.s32 %s351, 1
    %p355 = scmp.eq.s32.totalorder %s23, 1
    %p356 = scmp.ne.s32.totalorder %s351, %s353
    %p357 = scmp.eq.s32.totalorder %s23, 0
    %p358 = por %p356, %p357
    %p359 = scmp.ne.s32.totalorder %s351, %s353
    %p360 = scmp.eq.s32.totalorder %s28, 1
    %p361 = por %p359, %p360
    %p362 = scmp.ne.s32.totalorder %s353, %s354
    %p363 = scmp.eq.s32.totalorder %s28, 0
    %p364 = por %p362, %p363
    %p365 = scmp.ne.s32.totalorder %s353, %s354
    %p366 = scmp.eq.s32.totalorder %s29, 1
    %p367 = por %p365, %p366
    %p369 = scmp.ne.s32.totalorder %s354, %s368
    %p370 = scmp.eq.s32.totalorder %s29, 0
    %p371 = por %p369, %p370
    %s373 = sadd.s32 %s372, 1
    %p376 = scmp.eq.s32.totalorder %s23, 1
    %p377 = scmp.ne.s32.totalorder %s372, %s374
    %p378 = scmp.eq.s32.totalorder %s23, 0
    %p379 = por %p377, %p378
    %p380 = scmp.ne.s32.totalorder %s372, %s374
    %p381 = scmp.eq.s32.totalorder %s28, 1
    %p382 = por %p380, %p381
    %p383 = scmp.ne.s32.totalorder %s374, %s375
    %p384 = scmp.eq.s32.totalorder %s28, 0
    %p385 = por %p383, %p384
    %p386 = scmp.ne.s32.totalorder %s374, %s375
    %p387 = scmp.eq.s32.totalorder %s29, 1
    %p388 = por %p386, %p387
    %p390 = scmp.ne.s32.totalorder %s375, %s389
    %p391 = scmp.eq.s32.totalorder %s29, 0
    %p392 = por %p390, %p391
    %s393 = ssub.s32 %s23, %s30
    %p394 = scmp.eq.s32.totalorder %s393, 0
    %s396 = sadd.s32 %s395, 1
    %s397 = scalar_select %p394, %s395, %s396
    %p400 = pneg %p394
    %p401 = scmp.eq.s32.totalorder %s23, 1
    %p402 = por %p400, %p401
    %p403 = scmp.ne.s32.totalorder %s395, %s398
    %p404 = scmp.eq.s32.totalorder %s23, 0
    %p405 = por %p403, %p404
    %p406 = scmp.ne.s32.totalorder %s395, %s398
    %p407 = scmp.eq.s32.totalorder %s28, 1
    %p408 = por %p406, %p407
    %p409 = scmp.ne.s32.totalorder %s398, %s399
    %p410 = scmp.eq.s32.totalorder %s28, 0
    %p411 = por %p409, %p410
    %p412 = scmp.ne.s32.totalorder %s398, %s399
    %p413 = scmp.eq.s32.totalorder %s29, 1
    %p414 = por %p412, %p413
    %p416 = scmp.ne.s32.totalorder %s399, %s415
    %p417 = scmp.eq.s32.totalorder %s29, 0
    %p418 = por %p416, %p417
    %p419 = scmp.le.s32.totalorder 1, %s23
    %p420 = scmp.lt.s32.totalorder %s23, 3
    %p421 = pnand %p419, %p420
    %p422 = pneg %p421
    // Predicated region
    $region9: #{transformer_forward.4} parent=5 // pred_check
      _
    $region10: #{transformer_forward.4} parent=5 // pred_check_branch
      %424 = sbr.rel (%p421) target = $region12
    $region11: #{transformer_forward.4} parent=5 // pred_region
      %s425 = ssub.s32 %s23, 1
      // Predicated region
      $region13: #{transformer_forward.4} parent=11 // pred_check
        %p426 = pneg %p70
      $region14: #{transformer_forward.4} parent=11 // pred_check_branch
        %428 = sbr.rel (%p426) target = $region16
      $region15: #{transformer_forward.4} parent=11 // pred_region
        _
      $region16: #{transformer_forward.4} parent=11 // pred_fallthru
        _
      // Predicated region
      $region17: #{transformer_forward.4} parent=11 // pred_check
        %p429 = pneg %p91
      $region18: #{transformer_forward.4} parent=11 // pred_check_branch
        %431 = sbr.rel (%p429) target = $region20
      $region19: #{transformer_forward.4} parent=11 // pred_region
        _
      $region20: #{transformer_forward.4} parent=11 // pred_fallthru
        _
      // Predicated region
      $region21: #{transformer_forward.4} parent=11 // pred_check
        %p432 = pneg %p112
      $region22: #{transformer_forward.4} parent=11 // pred_check_branch
        %434 = sbr.rel (%p432) target = $region24
      $region23: #{transformer_forward.4} parent=11 // pred_region
        _
      $region24: #{transformer_forward.4} parent=11 // pred_fallthru
        _
      // Predicated region
      $region25: #{transformer_forward.4} parent=11 // pred_check
        %p435 = pneg %p133
      $region26: #{transformer_forward.4} parent=11 // pred_check_branch
        %437 = sbr.rel (%p435) target = $region28
      $region27: #{transformer_forward.4} parent=11 // pred_region
        _
      $region28: #{transformer_forward.4} parent=11 // pred_fallthru
        _
      // Predicated region
      $region29: #{transformer_forward.4} parent=11 // pred_check
        %p438 = pneg %p154
      $region30: #{transformer_forward.4} parent=11 // pred_check_branch
        %440 = sbr.rel (%p438) target = $region32
      $region31: #{transformer_forward.4} parent=11 // pred_region
        _
      $region32: #{transformer_forward.4} parent=11 // pred_fallthru
        _
      // Predicated region
      $region33: #{transformer_forward.4} parent=11 // pred_check
        %p441 = pneg %p175
      $region34: #{transformer_forward.4} parent=11 // pred_check_branch
        %443 = sbr.rel (%p441) target = $region36
      $region35: #{transformer_forward.4} parent=11 // pred_region
        _
      $region36: #{transformer_forward.4} parent=11 // pred_fallthru
        _
      // Predicated region
      $region37: #{transformer_forward.4} parent=11 // pred_check
        %p444 = pneg %p196
      $region38: #{transformer_forward.4} parent=11 // pred_check_branch
        %446 = sbr.rel (%p444) target = $region40
      $region39: #{transformer_forward.4} parent=11 // pred_region
        _
      $region40: #{transformer_forward.4} parent=11 // pred_fallthru
        _
      // Predicated region
      $region41: #{transformer_forward.4} parent=11 // pred_check
        %p447 = pneg %p217
      $region42: #{transformer_forward.4} parent=11 // pred_check_branch
        %449 = sbr.rel (%p447) target = $region44
      $region43: #{transformer_forward.4} parent=11 // pred_region
        _
      $region44: #{transformer_forward.4} parent=11 // pred_fallthru
        _
      // Predicated region
      $region45: #{transformer_forward.4} parent=11 // pred_check
        %p450 = pneg %p238
      $region46: #{transformer_forward.4} parent=11 // pred_check_branch
        %452 = sbr.rel (%p450) target = $region48
      $region47: #{transformer_forward.4} parent=11 // pred_region
        _
      $region48: #{transformer_forward.4} parent=11 // pred_fallthru
        _
      // Predicated region
      $region49: #{transformer_forward.4} parent=11 // pred_check
        %p453 = pneg %p259
      $region50: #{transformer_forward.4} parent=11 // pred_check_branch
        %455 = sbr.rel (%p453) target = $region52
      $region51: #{transformer_forward.4} parent=11 // pred_region
        _
      $region52: #{transformer_forward.4} parent=11 // pred_fallthru
        _
      // Predicated region
      $region53: #{transformer_forward.4} parent=11 // pred_check
        %p456 = pneg %p280
      $region54: #{transformer_forward.4} parent=11 // pred_check_branch
        %458 = sbr.rel (%p456) target = $region56
      $region55: #{transformer_forward.4} parent=11 // pred_region
        _
      $region56: #{transformer_forward.4} parent=11 // pred_fallthru
        _
      // Predicated region
      $region57: #{transformer_forward.4} parent=11 // pred_check
        %p459 = pneg %p301
      $region58: #{transformer_forward.4} parent=11 // pred_check_branch
        %461 = sbr.rel (%p459) target = $region60
      $region59: #{transformer_forward.4} parent=11 // pred_region
        _
      $region60: #{transformer_forward.4} parent=11 // pred_fallthru
        _
      // Predicated region
      $region61: #{transformer_forward.4} parent=11 // pred_check
        %p462 = pneg %p322
      $region62: #{transformer_forward.4} parent=11 // pred_check_branch
        %464 = sbr.rel (%p462) target = $region64
      $region63: #{transformer_forward.4} parent=11 // pred_region
        _
      $region64: #{transformer_forward.4} parent=11 // pred_fallthru
        _
      // Predicated region
      $region65: #{transformer_forward.4} parent=11 // pred_check
        %p465 = pneg %p343
      $region66: #{transformer_forward.4} parent=11 // pred_check_branch
        %467 = sbr.rel (%p465) target = $region68
      $region67: #{transformer_forward.4} parent=11 // pred_region
        _
      $region68: #{transformer_forward.4} parent=11 // pred_fallthru
        _
      // Predicated region
      $region69: #{transformer_forward.4} parent=11 // pred_check
        %p468 = pneg %p364
      $region70: #{transformer_forward.4} parent=11 // pred_check_branch
        %470 = sbr.rel (%p468) target = $region72
      $region71: #{transformer_forward.4} parent=11 // pred_region
        _
      $region72: #{transformer_forward.4} parent=11 // pred_fallthru
        _
      // Predicated region
      $region73: #{transformer_forward.4} parent=11 // pred_check
        %p471 = pneg %p385
      $region74: #{transformer_forward.4} parent=11 // pred_check_branch
        %473 = sbr.rel (%p471) target = $region76
      $region75: #{transformer_forward.4} parent=11 // pred_region
        _
      $region76: #{transformer_forward.4} parent=11 // pred_fallthru
        _
    $region12: #{transformer_forward.4} parent=5 // pred_fallthru
      _
    %p474 = scmp.lt.s32.totalorder %s23, 2
    // Predicated region
    $region77: #{transformer_forward.4} parent=5 // pred_check
      %p475 = pneg %p474
    $region78: #{transformer_forward.4} parent=5 // pred_check_branch
      %477 = sbr.rel (%p475) target = $region80
    $region79: #{transformer_forward.4} parent=5 // pred_region
      // Predicated region
      $region81: #{transformer_forward.4} parent=79 // pred_check
        %p478 = pneg %p43
      $region82: #{transformer_forward.4} parent=79 // pred_check_branch
        %480 = sbr.rel (%p478) target = $region84
      $region83: #{transformer_forward.4} parent=79 // pred_region
        %p481 = scmp.lt.s32.totalorder %s23, 1
        %s482 = scalar_select %p481, %s23, 1
        %s483 = smul.addr %s482, 8
        %s484 = scalar_lea.vmem %s0, %s483
      $region84: #{transformer_forward.4} parent=79 // pred_fallthru
        _
    $region80: #{transformer_forward.4} parent=5 // pred_fallthru
      _
    %p485 = scmp.le.s32.totalorder 1, %s23
    %p486 = scmp.lt.s32.totalorder %s23, 3
    %p487 = pnand %p485, %p486
    %p488 = pneg %p487
    // Predicated region
    $region85: #{transformer_forward.4} parent=5 // pred_check
      _
    $region86: #{transformer_forward.4} parent=5 // pred_check_branch
      %490 = sbr.rel (%p487) target = $region88
    $region87: #{transformer_forward.4} parent=5 // pred_region
      %s491 = ssub.s32 %s23, 1
      %p492 = scmp.lt.s32.totalorder %s28, 1
      %s493 = scalar_select %p492, %s28, 1
      %s494 = smul.addr %s493, 8
      %s495 = scalar_lea.vmem %s0, %s494
      %p496 = pneg %p49
      %p497 = pneg %p46
      %p498 = pneg %p70
      %p499 = pneg %p67
      %p500 = pneg %p91
      %p501 = pneg %p88
      %p502 = pneg %p112
      %p503 = pneg %p109
      %p504 = pneg %p133
      %p505 = pneg %p130
      %p506 = pneg %p154
      %p507 = pneg %p151
      %p508 = pneg %p175
      %p509 = pneg %p172
      %p510 = pneg %p196
      %p511 = pneg %p193
      %p512 = pneg %p217
      %p513 = pneg %p214
      %p514 = pneg %p238
      %p515 = pneg %p235
      %p516 = pneg %p259
      %p517 = pneg %p256
      %p518 = pneg %p280
      %p519 = pneg %p277
      %p520 = pneg %p301
      %p521 = pneg %p298
      %p522 = pneg %p322
      %p523 = pneg %p319
      %p524 = pneg %p343
      %p525 = pneg %p340
      %p526 = pneg %p364
      %p527 = pneg %p361
      %p528 = pneg %p385
      %p529 = pneg %p382
      %p530 = pneg %p411
      %p531 = pneg %p408
      %p532 = scmp.lt.s32.totalorder %s28, 1
      %s533 = scalar_select %p532, %s28, 1
      %s534 = smul.addr %s533, 8
      %s535 = scalar_lea.vmem %s17, %s534
      %p536 = scmp.lt.s32.totalorder %s28, 1
      %s537 = scalar_select %p536, %s28, 1
      %s538 = smul.addr %s537, 8
      %s539 = scalar_lea.vmem %s0, %s538
      %p540 = scmp.lt.s32.totalorder %s28, 1
      %s541 = scalar_select %p540, %s28, 1
      %s542 = smul.addr %s541, 8
      %s543 = scalar_lea.vmem %s17, %s542
      %v545 = vld [vmem:[%s539] sm:$0xff]
      %v546 = vld [vmem:[%s1] sm:$0xff]
      %v547 = vld [vmem:[%s1 + $0x8] sm:$0xff]
      %v548 = vld [vmem:[%s1 + $0x10] sm:$0xff]
      %v549 = vld [vmem:[%s1 + $0x18] sm:$0xff]
      %v550 = vld [vmem:[%s2] sm:$0x1]
      %v551 = vld [vmem:[%s3] sm:$0xff]
      %v552 = vld [vmem:[%s3 + $0x8] sm:$0xff]
      %v553 = vld [vmem:[%s3 + $0x10] sm:$0xff]
      %v554 = vld [vmem:[%s3 + $0x18] sm:$0xff]
      %v555 = vld [vmem:[%s4] sm:$0x1]
      %v556 = vld [vmem:[%s5] sm:$0xff]
      %v557 = vld [vmem:[%s5 + $0x8] sm:$0xff]
      %v558 = vld [vmem:[%s5 + $0x10] sm:$0xff]
      %v559 = vld [vmem:[%s5 + $0x18] sm:$0xff]
      %v560 = vld [vmem:[%s6] sm:$0x1]
      %v561 = vld [vmem:[%s7] sm:$0xff]
      %v562 = vld [vmem:[%s7 + $0x8] sm:$0xff]
      %v563 = vld [vmem:[%s7 + $0x10] sm:$0xff]
      %v564 = vld [vmem:[%s7 + $0x18] sm:$0xff]
      %v565 = vld [vmem:[%s8] sm:$0x1]
      %v566 = vpack.c.bf16 %v545, %v545
      %v567 = vpack.c.bf16 %v547, %v546
      %v568 = vpack.c.bf16 %v549, %v548
      %v570 = vlaneseq
      %v571 = vshrl.u32 %v570, 7
      %v572 = vsub.s32 0, %v571
      %v573 = vrot.slane %v550, %v572
      %vm575 = vcmask 261120
      %v577 = vsel %vm575, %v566, 0
      %579 = vmatprep.subr.bf16.mxu0 0
      %580 = vmatpush1.bf16.msra.mxu0 %v567
      %581 = vmatprep.subr.bf16.mxu0 0
      %582 = vmatpush1.bf16.msra.mxu0 %v568
      %583 = vmatprep.subr.bf16.mxu0 0
      %584 = vmatpush1.bf16.msra.mxu0 0
      %585 = vmatprep.subr.bf16.mxu0 0
      %586 = vmatpush1.bf16.msra.mxu0 0
      %587 = vmatprep.subr.bf16.mxu0 0
      %588 = vmatpush1.bf16.msra.mxu0 0
      %589 = vmatprep.subr.bf16.mxu0 0
      %590 = vmatpush1.bf16.msra.mxu0 0
      %591 = vmatprep.subr.bf16.mxu0 0
      %592 = vmatpush1.bf16.msra.mxu0 0
      %593 = vmatprep.subr.bf16.mxu0 0
      %594 = vmatpush1.bf16.msra.mxu0 0
      %595 = vmatprep.subr.bf16.mxu0 0
      %596 = vmatpush1.bf16.msra.mxu0 0
      %597 = vmatprep.subr.bf16.mxu0 0
      %598 = vmatpush1.bf16.msra.mxu0 0
      %599 = vmatprep.subr.bf16.mxu0 0
      %600 = vmatpush1.bf16.msra.mxu0 0
      %601 = vmatprep.subr.bf16.mxu0 0
      %602 = vmatpush1.bf16.msra.mxu0 0
      %603 = vmatprep.subr.bf16.mxu0 0
      %604 = vmatpush1.bf16.msra.mxu0 0
      %605 = vmatprep.subr.bf16.mxu0 0
      %606 = vmatpush1.bf16.msra.mxu0 0
      %607 = vmatprep.subr.bf16.mxu0 0
      %608 = vmatpush1.bf16.msra.mxu0 0
      %609 = vmatprep.subr.bf16.mxu0 0
      %610 = vmatpush1.bf16.msra.mxu0 0
      %611 = vmatprep.mubr.bf16.mxu0 0
      %612 = vmatmul.mubr.bf16.gmra.mrb[0].mxu0 %v577
      %v613 = vpop.f32.mrb[0].mxu0
      %v614 = vadd.f32 %v573, %v613
      %v615 = vpop.f32.mrb[0].mxu0
      %v616 = vpop.f32.mrb[0].mxu0
      %v617 = vpop.f32.mrb[0].mxu0
      %618 = vdwg.mxu0
      %v619 = vpack.c.bf16 %v552, %v551
      %v620 = vpack.c.bf16 %v554, %v553
      %v622 = vlaneseq
      %v623 = vshrl.u32 %v622, 7
      %v624 = vsub.s32 0, %v623
      %v625 = vrot.slane %v555, %v624
      %627 = vmatprep.subr.bf16.mxu0 0
      %628 = vmatpush1.bf16.msra.mxu0 %v619
      %629 = vmatprep.subr.bf16.mxu0 0
      %630 = vmatpush1.bf16.msra.mxu0 %v620
      %631 = vmatprep.subr.bf16.mxu0 0
      %632 = vmatpush1.bf16.msra.mxu0 0
      %633 = vmatprep.subr.bf16.mxu0 0
      %634 = vmatpush1.bf16.msra.mxu0 0
      %635 = vmatprep.subr.bf16.mxu0 0
      %636 = vmatpush1.bf16.msra.mxu0 0
      %637 = vmatprep.subr.bf16.mxu0 0
      %638 = vmatpush1.bf16.msra.mxu0 0
      %639 = vmatprep.subr.bf16.mxu0 0
      %640 = vmatpush1.bf16.msra.mxu0 0
      %641 = vmatprep.subr.bf16.mxu0 0
      %642 = vmatpush1.bf16.msra.mxu0 0
      %643 = vmatprep.subr.bf16.mxu0 0
      %644 = vmatpush1.bf16.msra.mxu0 0
      %645 = vmatprep.subr.bf16.mxu0 0
      %646 = vmatpush1.bf16.msra.mxu0 0
      %647 = vmatprep.subr.bf16.mxu0 0
      %648 = vmatpush1.bf16.msra.mxu0 0
      %649 = vmatprep.subr.bf16.mxu0 0
      %650 = vmatpush1.bf16.msra.mxu0 0
      %651 = vmatprep.subr.bf16.mxu0 0
      %652 = vmatpush1.bf16.msra.mxu0 0
      %653 = vmatprep.subr.bf16.mxu0 0
      %654 = vmatpush1.bf16.msra.mxu0 0
      %655 = vmatprep.subr.bf16.mxu0 0
      %656 = vmatpush1.bf16.msra.mxu0 0
      %657 = vmatprep.subr.bf16.mxu0 0
      %658 = vmatpush1.bf16.msra.mxu0 0
      %659 = vmatprep.mubr.bf16.mxu0 0
      %660 = vmatmul.mubr.bf16.gmra.mrb[0].mxu0 %v577
      %v661 = vpop.f32.mrb[0].mxu0
      %v662 = vadd.f32 %v625, %v661
      %v663 = vpop.f32.mrb[0].mxu0
      %v664 = vpop.f32.mrb[0].mxu0
      %v665 = vpop.f32.mrb[0].mxu0
      %666 = vdwg.mxu0
      %v667 = vpack.c.bf16 %v557, %v556
      %v668 = vpack.c.bf16 %v559, %v558
      %v670 = vlaneseq
      %v671 = vshrl.u32 %v670, 7
      %v672 = vsub.s32 0, %v671
      %v673 = vrot.slane %v560, %v672
      %675 = vmatprep.subr.bf16.mxu0 0
      %676 = vmatpush1.bf16.msra.mxu0 %v667
      %677 = vmatprep.subr.bf16.mxu0 0
      %678 = vmatpush1.bf16.msra.mxu0 %v668
      %679 = vmatprep.subr.bf16.mxu0 0
      %680 = vmatpush1.bf16.msra.mxu0 0
      %681 = vmatprep.subr.bf16.mxu0 0
      %682 = vmatpush1.bf16.msra.mxu0 0
      %683 = vmatprep.subr.bf16.mxu0 0
      %684 = vmatpush1.bf16.msra.mxu0 0
      %685 = vmatprep.subr.bf16.mxu0 0
      %686 = vmatpush1.bf16.msra.mxu0 0
      %687 = vmatprep.subr.bf16.mxu0 0
      %688 = vmatpush1.bf16.msra.mxu0 0
      %689 = vmatprep.subr.bf16.mxu0 0
      %690 = vmatpush1.bf16.msra.mxu0 0
      %691 = vmatprep.subr.bf16.mxu0 0
      %692 = vmatpush1.bf16.msra.mxu0 0
      %693 = vmatprep.subr.bf16.mxu0 0
      %694 = vmatpush1.bf16.msra.mxu0 0
      %695 = vmatprep.subr.bf16.mxu0 0
      %696 = vmatpush1.bf16.msra.mxu0 0
      %697 = vmatprep.subr.bf16.mxu0 0
      %698 = vmatpush1.bf16.msra.mxu0 0
      %699 = vmatprep.subr.bf16.mxu0 0
      %700 = vmatpush1.bf16.msra.mxu0 0
      %701 = vmatprep.subr.bf16.mxu0 0
      %702 = vmatpush1.bf16.msra.mxu0 0
      %703 = vmatprep.subr.bf16.mxu0 0
      %704 = vmatpush1.bf16.msra.mxu0 0
      %705 = vmatprep.subr.bf16.mxu0 0
      %706 = vmatpush1.bf16.msra.mxu0 0
      %707 = vmatprep.mubr.bf16.mxu0 0
      %708 = vmatmul.mubr.bf16.gmra.mrb[0].mxu0 %v577
      %v709 = vpop.f32.mrb[0].mxu0
      %v710 = vadd.f32 %v673, %v709
      %v711 = vpop.f32.mrb[0].mxu0
      %v712 = vpop.f32.mrb[0].mxu0
      %v713 = vpop.f32.mrb[0].mxu0
      %714 = vdwg.mxu0
      %v715 = vlaneseq
      %v716 = vand.u32 %v715, 127
      %vm717 = vcmp.ge.s32.totalorder %v716, 0
      %vm718 = vcmp.lt.s32.totalorder %v716, 8
      %vm719 = vmand %vm717, %vm718
      %v720 = vsel %vm719, 1, 0
      %v721 = vcvt.s32.f32 %v720
      %v722 = vmul.f32 %v614, %v721
      %v723 = vpack.c.bf16 %v722, %v722
      %v724 = vpack.c.bf16 %v662, %v662
      %v726 = vsel %vm575, %v723, 0
      %v729 = vsel %vm575, %v724, 0
      %731 = vmatprep.subr.bf16.mxu0 0
      %732 = vmatpush1.bf16.xpose.msra.mxu0 %v729
      %733 = vmatprep.subr.bf16.mxu0 0
      %734 = vmatpush1.bf16.xpose.msra.mxu0 0
      %735 = vmatprep.subr.bf16.mxu0 0
      %736 = vmatpush1.bf16.xpose.msra.mxu0 0
      %737 = vmatprep.subr.bf16.mxu0 0
      %738 = vmatpush1.bf16.xpose.msra.mxu0 0
      %739 = vmatprep.subr.bf16.mxu0 0
      %740 = vmatpush1.bf16.xpose.msra.mxu0 0
      %741 = vmatprep.subr.bf16.mxu0 0
      %742 = vmatpush1.bf16.xpose.msra.mxu0 0
      %743 = vmatprep.subr.bf16.mxu0 0
      %744 = vmatpush1.bf16.xpose.msra.mxu0 0
      %745 = vmatprep.subr.bf16.mxu0 0
      %746 = vmatpush1.bf16.xpose.msra.mxu0 0
      %747 = vmatprep.subr.bf16.mxu0 0
      %748 = vmatpush1.bf16.xpose.msra.mxu0 0
      %749 = vmatprep.subr.bf16.mxu0 0
      %750 = vmatpush1.bf16.xpose.msra.mxu0 0
      %751 = vmatprep.subr.bf16.mxu0 0
      %752 = vmatpush1.bf16.xpose.msra.mxu0 0
      %753 = vmatprep.subr.bf16.mxu0 0
      %754 = vmatpush1.bf16.xpose.msra.mxu0 0
      %755 = vmatprep.subr.bf16.mxu0 0
      %756 = vmatpush1.bf16.xpose.msra.mxu0 0
      %757 = vmatprep.subr.bf16.mxu0 0
      %758 = vmatpush1.bf16.xpose.msra.mxu0 0
      %759 = vmatprep.subr.bf16.mxu0 0
      %760 = vmatpush1.bf16.xpose.msra.mxu0 0
      %761 = vmatprep.subr.bf16.mxu0 0
      %762 = vmatpush1.bf16.xpose.msra.mxu0 0
      %763 = vmatprep.mubr.bf16.mxu0 0
      %764 = vmatmul.mubr.bf16.gmra.mrb[0].mxu0 %v726
      %v765 = vpop.f32.mrb[0].mxu0
      %v766 = vadd.f32 0.0, %v765
      %v767 = vpop.f32.mrb[0].mxu0
      %v768 = vpop.f32.mrb[0].mxu0
      %v769 = vpop.f32.mrb[0].mxu0
      %770 = vdwg.mxu0
      %vm771 = vcmask 64512
      %v772 = vsel %vm771, %v766, -inf
      %773 = vmax.xlane.f32.xlu0 %v772
      %v774 = vpop.xlane.xlu0 %773
      %v775 = vsub.f32 %v766, %v774
      %v776 = vmul.f32 %v775, 1.442695
      %v777 = vpow.pop %v776
      %v778 = vsel %vm771, %v777, 0.0
      %779 = vadd.xlane.f32.xlu0 %v778
      %v780 = vpop.xlane.xlu0 %779
      %v781 = vrcp.pop %v780
      %v782 = vmul.f32 %v777, %v781
      %v783 = vmul.f32 %v710, %v721
      %v784 = vpack.c.bf16 %v782, %v782
      %v785 = vpack.c.bf16 %v783, %v783
      %vm786 = vcmp.ge.s32.totalorder %v716, 8
      %vm787 = vcmp.lt.s32.totalorder %v716, 16
      %vm788 = vmand %vm786, %vm787
      %v789 = vsel %vm788, 1, 0
      %v790 = vcvt.s32.f32 %v789
      %v791 = vmul.f32 %v614, %v790
      %v792 = vpack.c.bf16 %v791, %v791
      %v794 = vsel %vm575, %v792, 0
      %796 = vmatprep.subr.bf16.mxu0 0
      %797 = vmatpush1.bf16.xpose.msra.mxu0 %v729
      %798 = vmatprep.subr.bf16.mxu0 0
      %799 = vmatpush1.bf16.xpose.msra.mxu0 0
      %800 = vmatprep.subr.bf16.mxu0 0
      %801 = vmatpush1.bf16.xpose.msra.mxu0 0
      %802 = vmatprep.subr.bf16.mxu0 0
      %803 = vmatpush1.bf16.xpose.msra.mxu0 0
      %804 = vmatprep.subr.bf16.mxu0 0
      %805 = vmatpush1.bf16.xpose.msra.mxu0 0
      %806 = vmatprep.subr.bf16.mxu0 0
      %807 = vmatpush1.bf16.xpose.msra.mxu0 0
      %808 = vmatprep.subr.bf16.mxu0 0
      %809 = vmatpush1.bf16.xpose.msra.mxu0 0
      %810 = vmatprep.subr.bf16.mxu0 0
      %811 = vmatpush1.bf16.xpose.msra.mxu0 0
      %812 = vmatprep.subr.bf16.mxu0 0
      %813 = vmatpush1.bf16.xpose.msra.mxu0 0
      %814 = vmatprep.subr.bf16.mxu0 0
      %815 = vmatpush1.bf16.xpose.msra.mxu0 0
      %816 = vmatprep.subr.bf16.mxu0 0
      %817 = vmatpush1.bf16.xpose.msra.mxu0 0
      %818 = vmatprep.subr.bf16.mxu0 0
      %819 = vmatpush1.bf16.xpose.msra.mxu0 0
      %820 = vmatprep.subr.bf16.mxu0 0
      %821 = vmatpush1.bf16.xpose.msra.mxu0 0
      %822 = vmatprep.subr.bf16.mxu0 0
      %823 = vmatpush1.bf16.xpose.msra.mxu0 0
      %824 = vmatprep.subr.bf16.mxu0 0
      %825 = vmatpush1.bf16.xpose.msra.mxu0 0
      %826 = vmatprep.subr.bf16.mxu0 0
      %827 = vmatpush1.bf16.xpose.msra.mxu0 0
      %828 = vmatprep.mubr.bf16.mxu0 0
      %829 = vmatmul.mubr.bf16.gmra.mrb[0].mxu0 %v794
      %v830 = vpop.f32.mrb[0].mxu0
      %v831 = vadd.f32 0.0, %v830
      %v832 = vpop.f32.mrb[0].mxu0
      %v833 = vpop.f32.mrb[0].mxu0
      %v834 = vpop.f32.mrb[0].mxu0
      %835 = vdwg.mxu0
      %v836 = vsel %vm771, %v831, -inf
      %837 = vmax.xlane.f32.xlu0 %v836
      %v838 = vpop.xlane.xlu0 %837
      %v839 = vsub.f32 %v831, %v838
      %v840 = vmul.f32 %v839, 1.442695
      %v841 = vpow.pop %v840
      %v842 = vsel %vm771, %v841, 0.0
      %843 = vadd.xlane.f32.xlu0 %v842
      %v844 = vpop.xlane.xlu0 %843
      %v845 = vrcp.pop %v844
      %v846 = vmul.f32 %v841, %v845
      %v847 = vmul.f32 %v710, %v790
      %v848 = vpack.c.bf16 %v846, %v846
      %v849 = vpack.c.bf16 %v847, %v847
      %v851 = vsel %vm771, %v848, 0
      %vm853 = vcmask 1043456
      %v855 = vsel %vm853, %v849, 0
      %857 = vmatprep.subr.bf16.mxu0 0
      %858 = vmatpush1.bf16.msra.mxu0 %v855
      %859 = vmatprep.subr.bf16.mxu0 0
      %860 = vmatpush1.bf16.msra.mxu0 0
      %861 = vmatprep.subr.bf16.mxu0 0
      %862 = vmatpush1.bf16.msra.mxu0 0
      %863 = vmatprep.subr.bf16.mxu0 0
      %864 = vmatpush1.bf16.msra.mxu0 0
      %865 = vmatprep.subr.bf16.mxu0 0
      %866 = vmatpush1.bf16.msra.mxu0 0
      %867 = vmatprep.subr.bf16.mxu0 0
      %868 = vmatpush1.bf16.msra.mxu0 0
      %869 = vmatprep.subr.bf16.mxu0 0
      %870 = vmatpush1.bf16.msra.mxu0 0
      %871 = vmatprep.subr.bf16.mxu0 0
      %872 = vmatpush1.bf16.msra.mxu0 0
      %873 = vmatprep.subr.bf16.mxu0 0
      %874 = vmatpush1.bf16.msra.mxu0 0
      %875 = vmatprep.subr.bf16.mxu0 0
      %876 = vmatpush1.bf16.msra.mxu0 0
      %877 = vmatprep.subr.bf16.mxu0 0
      %878 = vmatpush1.bf16.msra.mxu0 0
      %879 = vmatprep.subr.bf16.mxu0 0
      %880 = vmatpush1.bf16.msra.mxu0 0
      %881 = vmatprep.subr.bf16.mxu0 0
      %882 = vmatpush1.bf16.msra.mxu0 0
      %883 = vmatprep.subr.bf16.mxu0 0
      %884 = vmatpush1.bf16.msra.mxu0 0
      %885 = vmatprep.subr.bf16.mxu0 0
      %886 = vmatpush1.bf16.msra.mxu0 0
      %887 = vmatprep.subr.bf16.mxu0 0
      %888 = vmatpush1.bf16.msra.mxu0 0
      %889 = vmatprep.mubr.bf16.mxu0 0
      %890 = vmatmul.mubr.bf16.gmra.mrb[0].mxu0 %v851
      %v891 = vpop.f32.mrb[0].mxu0
      %v892 = vadd.f32 0.0, %v891
      %v893 = vpop.f32.mrb[0].mxu0
      %v894 = vpop.f32.mrb[0].mxu0
      %v895 = vpop.f32.mrb[0].mxu0
      %896 = vdwg.mxu0
      %v898 = vsel %vm771, %v784, 0
      %v901 = vsel %vm853, %v785, 0
      %903 = vmatprep.subr.bf16.mxu0 0
      %904 = vmatpush1.bf16.msra.mxu0 %v901
      %905 = vmatprep.subr.bf16.mxu0 0
      %906 = vmatpush1.bf16.msra.mxu0 0
      %907 = vmatprep.subr.bf16.mxu0 0
      %908 = vmatpush1.bf16.msra.mxu0 0
      %909 = vmatprep.subr.bf16.mxu0 0
      %910 = vmatpush1.bf16.msra.mxu0 0
      %911 = vmatprep.subr.bf16.mxu0 0
      %912 = vmatpush1.bf16.msra.mxu0 0
      %913 = vmatprep.subr.bf16.mxu0 0
      %914 = vmatpush1.bf16.msra.mxu0 0
      %915 = vmatprep.subr.bf16.mxu0 0
      %916 = vmatpush1.bf16.msra.mxu0 0
      %917 = vmatprep.subr.bf16.mxu0 0
      %918 = vmatpush1.bf16.msra.mxu0 0
      %919 = vmatprep.subr.bf16.mxu0 0
      %920 = vmatpush1.bf16.msra.mxu0 0
      %921 = vmatprep.subr.bf16.mxu0 0
      %922 = vmatpush1.bf16.msra.mxu0 0
      %923 = vmatprep.subr.bf16.mxu0 0
      %924 = vmatpush1.bf16.msra.mxu0 0
      %925 = vmatprep.subr.bf16.mxu0 0
      %926 = vmatpush1.bf16.msra.mxu0 0
      %927 = vmatprep.subr.bf16.mxu0 0
      %928 = vmatpush1.bf16.msra.mxu0 0
      %929 = vmatprep.subr.bf16.mxu0 0
      %930 = vmatpush1.bf16.msra.mxu0 0
      %931 = vmatprep.subr.bf16.mxu0 0
      %932 = vmatpush1.bf16.msra.mxu0 0
      %933 = vmatprep.subr.bf16.mxu0 0
      %934 = vmatpush1.bf16.msra.mxu0 0
      %935 = vmatprep.mubr.bf16.mxu0 0
      %936 = vmatmul.mubr.bf16.gmra.mrb[0].mxu0 %v898
      %v937 = vpop.f32.mrb[0].mxu0
      %v938 = vadd.f32 %v892, %v937
      %v939 = vpop.f32.mrb[0].mxu0
      %v940 = vpop.f32.mrb[0].mxu0
      %v941 = vpop.f32.mrb[0].mxu0
      %942 = vdwg.mxu0
      %vm943 = vcmp.ge.s32.totalorder %v716, 16
      %vm944 = vcmp.lt.s32.totalorder %v716, 24
      %vm945 = vmand %vm943, %vm944
      %v946 = vsel %vm945, 1, 0
      %v947 = vcvt.s32.f32 %v946
      %v948 = vmul.f32 %v614, %v947
      %v949 = vpack.c.bf16 %v948, %v948
      %v951 = vsel %vm575, %v949, 0
      %953 = vmatprep.subr.bf16.mxu0 0
      %954 = vmatpush1.bf16.xpose.msra.mxu0 %v729
      %955 = vmatprep.subr.bf16.mxu0 0
      %956 = vmatpush1.bf16.xpose.msra.mxu0 0
      %957 = vmatprep.subr.bf16.mxu0 0
      %958 = vmatpush1.bf16.xpose.msra.mxu0 0
      %959 = vmatprep.subr.bf16.mxu0 0
      %960 = vmatpush1.bf16.xpose.msra.mxu0 0
      %961 = vmatprep.subr.bf16.mxu0 0
      %962 = vmatpush1.bf16.xpose.msra.mxu0 0
      %963 = vmatprep.subr.bf16.mxu0 0
      %964 = vmatpush1.bf16.xpose.msra.mxu0 0
      %965 = vmatprep.subr.bf16.mxu0 0
      %966 = vmatpush1.bf16.xpose.msra.mxu0 0
      %967 = vmatprep.subr.bf16.mxu0 0
      %968 = vmatpush1.bf16.xpose.msra.mxu0 0
      %969 = vmatprep.subr.bf16.mxu0 0
      %970 = vmatpush1.bf16.xpose.msra.mxu0 0
      %971 = vmatprep.subr.bf16.mxu0 0
      %972 = vmatpush1.bf16.xpose.msra.mxu0 0
      %973 = vmatprep.subr.bf16.mxu0 0
      %974 = vmatpush1.bf16.xpose.msra.mxu0 0
      %975 = vmatprep.subr.bf16.mxu0 0
      %976 = vmatpush1.bf16.xpose.msra.mxu0 0
      %977 = vmatprep.subr.bf16.mxu0 0
      %978 = vmatpush1.bf16.xpose.msra.mxu0 0
      %979 = vmatprep.subr.bf16.mxu0 0
      %980 = vmatpush1.bf16.xpose.msra.mxu0 0
      %981 = vmatprep.subr.bf16.mxu0 0
      %982 = vmatpush1.bf16.xpose.msra.mxu0 0
      %983 = vmatprep.subr.bf16.mxu0 0
      %984 = vmatpush1.bf16.xpose.msra.mxu0 0
      %985 = vmatprep.mubr.bf16.mxu0 0
      %986 = vmatmul.mubr.bf16.gmra.mrb[0].mxu0 %v951
      %v987 = vpop.f32.mrb[0].mxu0
      %v988 = vadd.f32 0.0, %v987
      %v989 = vpop.f32.mrb[0].mxu0
      %v990 = vpop.f32.mrb[0].mxu0
      %v991 = vpop.f32.mrb[0].mxu0
      %992 = vdwg.mxu0
      %v993 = vsel %vm771, %v988, -inf
      %994 = vmax.xlane.f32.xlu0 %v993
      %v995 = vpop.xlane.xlu0 %994
      %v996 = vsub.f32 %v988, %v995
      %v997 = vmul.f32 %v996, 1.442695
      %v998 = vpow.pop %v997
      %v999 = vsel %vm771, %v998, 0.0
      %1000 = vadd.xlane.f32.xlu0 %v999
      %v1001 = vpop.xlane.xlu0 %1000
      %v1002 = vrcp.pop %v1001
      %v1003 = vmul.f32 %v998, %v1002
      %v1004 = vmul.f32 %v710, %v947
      %v1005 = vpack.c.bf16 %v1003, %v1003
      %v1006 = vpack.c.bf16 %v1004, %v1004
      %v1008 = vsel %vm771, %v1005, 0
      %v1011 = vsel %vm853, %v1006, 0
      %1013 = vmatprep.subr.bf16.mxu0 0
      %1014 = vmatpush1.bf16.msra.mxu0 %v1011
      %1015 = vmatprep.subr.bf16.mxu0 0
      %1016 = vmatpush1.bf16.msra.mxu0 0
      %1017 = vmatprep.subr.bf16.mxu0 0
      %1018 = vmatpush1.bf16.msra.mxu0 0
      %1019 = vmatprep.subr.bf16.mxu0 0
      %1020 = vmatpush1.bf16.msra.mxu0 0
      %1021 = vmatprep.subr.bf16.mxu0 0
      %1022 = vmatpush1.bf16.msra.mxu0 0
      %1023 = vmatprep.subr.bf16.mxu0 0
      %1024 = vmatpush1.bf16.msra.mxu0 0
      %1025 = vmatprep.subr.bf16.mxu0 0
      %1026 = vmatpush1.bf16.msra.mxu0 0
      %1027 = vmatprep.subr.bf16.mxu0 0
      %1028 = vmatpush1.bf16.msra.mxu0 0
      %1029 = vmatprep.subr.bf16.mxu0 0
      %1030 = vmatpush1.bf16.msra.mxu0 0
      %1031 = vmatprep.subr.bf16.mxu0 0
      %1032 = vmatpush1.bf16.msra.mxu0 0
      %1033 = vmatprep.subr.bf16.mxu0 0
      %1034 = vmatpush1.bf16.msra.mxu0 0
      %1035 = vmatprep.subr.bf16.mxu0 0
      %1036 = vmatpush1.bf16.msra.mxu0 0
      %1037 = vmatprep.subr.bf16.mxu0 0
      %1038 = vmatpush1.bf16.msra.mxu0 0
      %1039 = vmatprep.subr.bf16.mxu0 0
      %1040 = vmatpush1.bf16.msra.mxu0 0
      %1041 = vmatprep.subr.bf16.mxu0 0
      %1042 = vmatpush1.bf16.msra.mxu0 0
      %1043 = vmatprep.subr.bf16.mxu0 0
      %1044 = vmatpush1.bf16.msra.mxu0 0
      %1045 = vmatprep.mubr.bf16.mxu0 0
      %1046 = vmatmul.mubr.bf16.gmra.mrb[0].mxu0 %v1008
      %v1047 = vpop.f32.mrb[0].mxu0
      %v1048 = vadd.f32 0.0, %v1047
      %v1049 = vpop.f32.mrb[0].mxu0
      %v1050 = vpop.f32.mrb[0].mxu0
      %v1051 = vpop.f32.mrb[0].mxu0
      %1052 = vdwg.mxu0
      %v1053 = vadd.f32 %v938, %v1048
      %vm1054 = vcmp.ge.s32.totalorder %v716, 24
      %vm1055 = vcmp.lt.s32.totalorder %v716, 32
      %vm1056 = vmand %vm1054, %vm1055
      %v1057 = vsel %vm1056, 1, 0
      %v1058 = vcvt.s32.f32 %v1057
      %v1059 = vmul.f32 %v614, %v1058
      %v1060 = vpack.c.bf16 %v1059, %v1059
      %v1062 = vsel %vm575, %v1060, 0
      %1064 = vmatprep.subr.bf16.mxu0 0
      %1065 = vmatpush1.bf16.xpose.msra.mxu0 %v729
      %1066 = vmatprep.subr.bf16.mxu0 0
      %1067 = vmatpush1.bf16.xpose.msra.mxu0 0
      %1068 = vmatprep.subr.bf16.mxu0 0
      %1069 = vmatpush1.bf16.xpose.msra.mxu0 0
      %1070 = vmatprep.subr.bf16.mxu0 0
      %1071 = vmatpush1.bf16.xpose.msra.mxu0 0
      %1072 = vmatprep.subr.bf16.mxu0 0
      %1073 = vmatpush1.bf16.xpose.msra.mxu0 0
      %1074 = vmatprep.subr.bf16.mxu0 0
      %1075 = vmatpush1.bf16.xpose.msra.mxu0 0
      %1076 = vmatprep.subr.bf16.mxu0 0
      %1077 = vmatpush1.bf16.xpose.msra.mxu0 0
      %1078 = vmatprep.subr.bf16.mxu0 0
      %1079 = vmatpush1.bf16.xpose.msra.mxu0 0
      %1080 = vmatprep.subr.bf16.mxu0 0
      %1081 = vmatpush1.bf16.xpose.msra.mxu0 0
      %1082 = vmatprep.subr.bf16.mxu0 0
      %1083 = vmatpush1.bf16.xpose.msra.mxu0 0
      %1084 = vmatprep.subr.bf16.mxu0 0
      %1085 = vmatpush1.bf16.xpose.msra.mxu0 0
      %1086 = vmatprep.subr.bf16.mxu0 0
      %1087 = vmatpush1.bf16.xpose.msra.mxu0 0
      %1088 = vmatprep.subr.bf16.mxu0 0
      %1089 = vmatpush1.bf16.xpose.msra.mxu0 0
      %1090 = vmatprep.subr.bf16.mxu0 0
      %1091 = vmatpush1.bf16.xpose.msra.mxu0 0
      %1092 = vmatprep.subr.bf16.mxu0 0
      %1093 = vmatpush1.bf16.xpose.msra.mxu0 0
      %1094 = vmatprep.subr.bf16.mxu0 0
      %1095 = vmatpush1.bf16.xpose.msra.mxu0 0
      %1096 = vmatprep.mubr.bf16.mxu0 0
      %1097 = vmatmul.mubr.bf16.gmra.mrb[0].mxu0 %v1062
      %v1098 = vpop.f32.mrb[0].mxu0
      %v1099 = vadd.f32 0.0, %v1098
      %v1100 = vpop.f32.mrb[0].mxu0
      %v1101 = vpop.f32.mrb[0].mxu0
      %v1102 = vpop.f32.mrb[0].mxu0
      %1103 = vdwg.mxu0
      %v1104 = vsel %vm771, %v1099, -inf
      %1105 = vmax.xlane.f32.xlu0 %v1104
      %v1106 = vpop.xlane.xlu0 %1105
      %v1107 = vsub.f32 %v1099, %v1106
      %v1108 = vmul.f32 %v1107, 1.442695
      %v1109 = vpow.pop %v1108
      %v1110 = vsel %vm771, %v1109, 0.0
      %1111 = vadd.xlane.f32.xlu0 %v1110
      %v1112 = vpop.xlane.xlu0 %1111
      %v1113 = vrcp.pop %v1112
      %v1114 = vmul.f32 %v1109, %v1113
      %v1115 = vmul.f32 %v710, %v1058
      %v1116 = vpack.c.bf16 %v1114, %v1114
      %v1117 = vpack.c.bf16 %v1115, %v1115
      %v1119 = vsel %vm771, %v1116, 0
      %v1122 = vsel %vm853, %v1117, 0
      %1124 = vmatprep.subr.bf16.mxu0 0
      %1125 = vmatpush1.bf16.msra.mxu0 %v1122
      %1126 = vmatprep.subr.bf16.mxu0 0
      %1127 = vmatpush1.bf16.msra.mxu0 0
      %1128 = vmatprep.subr.bf16.mxu0 0
      %1129 = vmatpush1.bf16.msra.mxu0 0
      %1130 = vmatprep.subr.bf16.mxu0 0
      %1131 = vmatpush1.bf16.msra.mxu0 0
      %1132 = vmatprep.subr.bf16.mxu0 0
      %1133 = vmatpush1.bf16.msra.mxu0 0
      %1134 = vmatprep.subr.bf16.mxu0 0
      %1135 = vmatpush1.bf16.msra.mxu0 0
      %1136 = vmatprep.subr.bf16.mxu0 0
      %1137 = vmatpush1.bf16.msra.mxu0 0
      %1138 = vmatprep.subr.bf16.mxu0 0
      %1139 = vmatpush1.bf16.msra.mxu0 0
      %1140 = vmatprep.subr.bf16.mxu0 0
      %1141 = vmatpush1.bf16.msra.mxu0 0
      %1142 = vmatprep.subr.bf16.mxu0 0
      %1143 = vmatpush1.bf16.msra.mxu0 0
      %1144 = vmatprep.subr.bf16.mxu0 0
      %1145 = vmatpush1.bf16.msra.mxu0 0
      %1146 = vmatprep.subr.bf16.mxu0 0
      %1147 = vmatpush1.bf16.msra.mxu0 0
      %1148 = vmatprep.subr.bf16.mxu0 0
      %1149 = vmatpush1.bf16.msra.mxu0 0
      %1150 = vmatprep.subr.bf16.mxu0 0
      %1151 = vmatpush1.bf16.msra.mxu0 0
      %1152 = vmatprep.subr.bf16.mxu0 0
      %1153 = vmatpush1.bf16.msra.mxu0 0
      %1154 = vmatprep.subr.bf16.mxu0 0
      %1155 = vmatpush1.bf16.msra.mxu0 0
      %1156 = vmatprep.mubr.bf16.mxu0 0
      %1157 = vmatmul.mubr.bf16.gmra.mrb[0].mxu0 %v1119
      %v1158 = vpop.f32.mrb[0].mxu0
      %v1159 = vadd.f32 0.0, %v1158
      %v1160 = vpop.f32.mrb[0].mxu0
      %v1161 = vpop.f32.mrb[0].mxu0
      %v1162 = vpop.f32.mrb[0].mxu0
      %1163 = vdwg.mxu0
      %v1164 = vadd.f32 %v1053, %v1159
      %v1165 = vpack.c.bf16 %v1164, %v1164
      %v1166 = vpack.c.bf16 %v562, %v561
      %v1167 = vpack.c.bf16 %v564, %v563
      %v1169 = vlaneseq
      %v1170 = vshrl.u32 %v1169, 7
      %v1171 = vsub.s32 0, %v1170
      %v1172 = vrot.slane %v565, %v1171
      %v1175 = vsel %vm575, %v1165, 0
      %1177 = vmatprep.subr.bf16.mxu0 0
      %1178 = vmatpush1.bf16.msra.mxu0 %v1166
      %1179 = vmatprep.subr.bf16.mxu0 0
      %1180 = vmatpush1.bf16.msra.mxu0 %v1167
      %1181 = vmatprep.subr.bf16.mxu0 0
      %1182 = vmatpush1.bf16.msra.mxu0 0
      %1183 = vmatprep.subr.bf16.mxu0 0
      %1184 = vmatpush1.bf16.msra.mxu0 0
      %1185 = vmatprep.subr.bf16.mxu0 0
      %1186 = vmatpush1.bf16.msra.mxu0 0
      %1187 = vmatprep.subr.bf16.mxu0 0
      %1188 = vmatpush1.bf16.msra.mxu0 0
      %1189 = vmatprep.subr.bf16.mxu0 0
      %1190 = vmatpush1.bf16.msra.mxu0 0
      %1191 = vmatprep.subr.bf16.mxu0 0
      %1192 = vmatpush1.bf16.msra.mxu0 0
      %1193 = vmatprep.subr.bf16.mxu0 0
      %1194 = vmatpush1.bf16.msra.mxu0 0
      %1195 = vmatprep.subr.bf16.mxu0 0
      %1196 = vmatpush1.bf16.msra.mxu0 0
      %1197 = vmatprep.subr.bf16.mxu0 0
      %1198 = vmatpush1.bf16.msra.mxu0 0
      %1199 = vmatprep.subr.bf16.mxu0 0
      %1200 = vmatpush1.bf16.msra.mxu0 0
      %1201 = vmatprep.subr.bf16.mxu0 0
      %1202 = vmatpush1.bf16.msra.mxu0 0
      %1203 = vmatprep.subr.bf16.mxu0 0
      %1204 = vmatpush1.bf16.msra.mxu0 0
      %1205 = vmatprep.subr.bf16.mxu0 0
      %1206 = vmatpush1.bf16.msra.mxu0 0
      %1207 = vmatprep.subr.bf16.mxu0 0
      %1208 = vmatpush1.bf16.msra.mxu0 0
      %1209 = vmatprep.mubr.bf16.mxu0 0
      %1210 = vmatmul.mubr.bf16.gmra.mrb[0].mxu0 %v1175
      %v1211 = vpop.f32.mrb[0].mxu0
      %v1212 = vadd.f32 %v1172, %v1211
      %v1213 = vpop.f32.mrb[0].mxu0
      %v1214 = vpop.f32.mrb[0].mxu0
      %v1215 = vpop.f32.mrb[0].mxu0
      %1216 = vdwg.mxu0
      %v1217 = vadd.f32 %v545, %v1212
      %v1218 = vld [vmem:[%s9] sm:$0x1]
      %v1219 = vld [vmem:[%s10] sm:$0x1]
      %v1220 = vsel %vm575, %v1217, 0.0
      %1221 = vadd.xlane.f32.xlu0 %v1220
      %v1222 = vpop.xlane.xlu0 %1221
      %v1223 = vrcp.pop 32.0
      %v1224 = vmul.f32 %v1222, %v1223
      %v1225 = vsub.f32 %v1217, %v1224
      %v1226 = vmul.f32 %v1225, %v1225
      %v1227 = vsel %vm575, %v1226, 0.0
      %1228 = vadd.xlane.f32.xlu0 %v1227
      %v1229 = vpop.xlane.xlu0 %1228
      %v1230 = vmul.f32 %v1229, %v1223
      %v1231 = vadd.f32 %v1230, 1e-05
      %v1232 = vrsqrt.pop %v1231
      %v1233 = vmul.f32 %v1225, %v1232
      %v1235 = vlaneseq
      %v1236 = vshrl.u32 %v1235, 7
      %v1237 = vsub.s32 0, %v1236
      %v1238 = vrot.slane %v1218, %v1237
      %v1240 = vmul.f32 %v1233, %v1238
      %v1242 = vlaneseq
      %v1243 = vshrl.u32 %v1242, 7
      %v1244 = vsub.s32 0, %v1243
      %v1245 = vrot.slane %v1219, %v1244
      %v1247 = vadd.f32 %v1240, %v1245
      %v1248 = vld [vmem:[%s11] sm:$0xff]
      %v1249 = vld [vmem:[%s11 + $0x8] sm:$0xff]
      %v1250 = vld [vmem:[%s11 + $0x10] sm:$0xff]
      %v1251 = vld [vmem:[%s11 + $0x18] sm:$0xff]
      %v1252 = vld [vmem:[%s11 + $0x20] sm:$0xff]
      %v1253 = vld [vmem:[%s11 + $0x28] sm:$0xff]
      %v1254 = vld [vmem:[%s11 + $0x30] sm:$0xff]
      %v1255 = vld [vmem:[%s11 + $0x38] sm:$0xff]
      %v1256 = vld [vmem:[%s11 + $0x40] sm:$0xff]
      %v1257 = vld [vmem:[%s11 + $0x48] sm:$0xff]
      %v1258 = vld [vmem:[%s11 + $0x50] sm:$0xff]
      %v1259 = vld [vmem:[%s11 + $0x58] sm:$0xff]
      %v1260 = vld [vmem:[%s11 + $0x60] sm:$0xff]
      %v1261 = vld [vmem:[%s11 + $0x68] sm:$0xff]
      %v1262 = vld [vmem:[%s11 + $0x70] sm:$0xff]
      %v1263 = vld [vmem:[%s11 + $0x78] sm:$0xff]
      %v1264 = vld [vmem:[%s11 + $0x80] sm:$0xff]
      %v1265 = vld [vmem:[%s11 + $0x88] sm:$0xff]
      %v1266 = vld [vmem:[%s11 + $0x90] sm:$0xff]
      %v1267 = vld [vmem:[%s11 + $0x98] sm:$0xff]
      %v1268 = vld [vmem:[%s11 + $0xa0] sm:$0xff]
      %v1269 = vld [vmem:[%s11 + $0xa8] sm:$0xff]
      %v1270 = vld [vmem:[%s11 + $0xb0] sm:$0xff]
      %v1271 = vld [vmem:[%s11 + $0xb8] sm:$0xff]
      %v1272 = vld [vmem:[%s11 + $0xc0] sm:$0xff]
      %v1273 = vld [vmem:[%s11 + $0xc8] sm:$0xff]
      %v1274 = vld [vmem:[%s11 + $0xd0] sm:$0xff]
      %v1275 = vld [vmem:[%s11 + $0xd8] sm:$0xff]
      %v1276 = vld [vmem:[%s11 + $0xe0] sm:$0xff]
      %v1277 = vld [vmem:[%s11 + $0xe8] sm:$0xff]
      %v1278 = vld [vmem:[%s11 + $0xf0] sm:$0xff]
      %v1279 = vld [vmem:[%s11 + $0xf8] sm:$0xff]
      %v1280 = vld [vmem:[%s11 + $0x100] sm:$0xff]
      %v1281 = vld [vmem:[%s11 + $0x108] sm:$0xff]
      %v1282 = vld [vmem:[%s11 + $0x110] sm:$0xff]
      %v1283 = vld [vmem:[%s11 + $0x118] sm:$0xff]
      %v1284 = vld [vmem:[%s11 + $0x120] sm:$0xff]
      %v1285 = vld [vmem:[%s11 + $0x128] sm:$0xff]
      %v1286 = vld [vmem:[%s11 + $0x130] sm:$0xff]
      %v1287 = vld [vmem:[%s11 + $0x138] sm:$0xff]
      %v1288 = vld [vmem:[%s11 + $0x140] sm:$0xff]
      %v1289 = vld [vmem:[%s11 + $0x148] sm:$0xff]
      %v1290 = vld [vmem:[%s11 + $0x150] sm:$0xff]
      %v1291 = vld [vmem:[%s11 + $0x158] sm:$0xff]
      %v1292 = vld [vmem:[%s11 + $0x160] sm:$0xff]
      %v1293 = vld [vmem:[%s11 + $0x168] sm:$0xff]
      %v1294 = vld [vmem:[%s11 + $0x170] sm:$0xff]
      %v1295 = vld [vmem:[%s11 + $0x178] sm:$0xff]
      %v1296 = vld [vmem:[%s11 + $0x180] sm:$0xff]
      %v1297 = vld [vmem:[%s11 + $0x188] sm:$0xff]
      %v1298 = vld [vmem:[%s11 + $0x190] sm:$0xff]
      %v1299 = vld [vmem:[%s11 + $0x198] sm:$0xff]
      %v1300 = vld [vmem:[%s11 + $0x1a0] sm:$0xff]
      %v1301 = vld [vmem:[%s11 + $0x1a8] sm:$0xff]
      %v1302 = vld [vmem:[%s11 + $0x1b0] sm:$0xff]
      %v1303 = vld [vmem:[%s11 + $0x1b8] sm:$0xff]
      %v1304 = vld [vmem:[%s11 + $0x1c0] sm:$0xff]
      %v1305 = vld [vmem:[%s11 + $0x1c8] sm:$0xff]
      %v1306 = vld [vmem:[%s11 + $0x1d0] sm:$0xff]
      %v1307 = vld [vmem:[%s11 + $0x1d8] sm:$0xff]
      %v1308 = vld [vmem:[%s11 + $0x1e0] sm:$0xff]
      %v1309 = vld [vmem:[%s11 + $0x1e8] sm:$0xff]
      %v1310 = vld [vmem:[%s11 + $0x1f0] sm:$0xff]
      %v1311 = vld [vmem:[%s11 + $0x1f8] sm:$0xff]
      %v1312 = vld [vmem:[%s12] sm:$0xff]
      %v1313 = vld [vmem:[%s12 + $0x8] sm:$0xff]
      %v1314 = vld [vmem:[%s13] sm:$0xff]
      %v1315 = vld [vmem:[%s13 + $0x8] sm:$0xff]
      %v1316 = vld [vmem:[%s13 + $0x10] sm:$0xff]
      %v1317 = vld [vmem:[%s13 + $0x18] sm:$0xff]
      %v1318 = vld [vmem:[%s13 + $0x20] sm:$0xff]
      %v1319 = vld [vmem:[%s13 + $0x28] sm:$0xff]
      %v1320 = vld [vmem:[%s13 + $0x30] sm:$0xff]
      %v1321 = vld [vmem:[%s13 + $0x38] sm:$0xff]
      %v1322 = vld [vmem:[%s13 + $0x40] sm:$0xff]
      %v1323 = vld [vmem:[%s13 + $0x48] sm:$0xff]
      %v1324 = vld [vmem:[%s13 + $0x50] sm:$0xff]
      %v1325 = vld [vmem:[%s13 + $0x58] sm:$0xff]
      %v1326 = vld [vmem:[%s13 + $0x60] sm:$0xff]
      %v1327 = vld [vmem:[%s13 + $0x68] sm:$0xff]
      %v1328 = vld [vmem:[%s13 + $0x70] sm:$0xff]
      %v1329 = vld [vmem:[%s13 + $0x78] sm:$0xff]
      %v1330 = vld [vmem:[%s13 + $0x80] sm:$0xff]
      %v1331 = vld [vmem:[%s13 + $0x88] sm:$0xff]
      %v1332 = vld [vmem:[%s13 + $0x90] sm:$0xff]
      %v1333 = vld [vmem:[%s13 + $0x98] sm:$0xff]
      %v1334 = vld [vmem:[%s13 + $0xa0] sm:$0xff]
      %v1335 = vld [vmem:[%s13 + $0xa8] sm:$0xff]
      %v1336 = vld [vmem:[%s13 + $0xb0] sm:$0xff]
      %v1337 = vld [vmem:[%s13 + $0xb8] sm:$0xff]
      %v1338 = vld [vmem:[%s13 + $0xc0] sm:$0xff]
      %v1339 = vld [vmem:[%s13 + $0xc8] sm:$0xff]
      %v1340 = vld [vmem:[%s13 + $0xd0] sm:$0xff]
      %v1341 = vld [vmem:[%s13 + $0xd8] sm:$0xff]
      %v1342 = vld [vmem:[%s13 + $0xe0] sm:$0xff]
      %v1343 = vld [vmem:[%s13 + $0xe8] sm:$0xff]
      %v1344 = vld [vmem:[%s13 + $0xf0] sm:$0xff]
      %v1345 = vld [vmem:[%s13 + $0xf8] sm:$0xff]
      %v1346 = vld [vmem:[%s13 + $0x100] sm:$0xff]
      %v1347 = vld [vmem:[%s13 + $0x108] sm:$0xff]
      %v1348 = vld [vmem:[%s13 + $0x110] sm:$0xff]
      %v1349 = vld [vmem:[%s13 + $0x118] sm:$0xff]
      %v1350 = vld [vmem:[%s13 + $0x120] sm:$0xff]
      %v1351 = vld [vmem:[%s13 + $0x128] sm:$0xff]
      %v1352 = vld [vmem:[%s13 + $0x130] sm:$0xff]
      %v1353 = vld [vmem:[%s13 + $0x138] sm:$0xff]
      %v1354 = vld [vmem:[%s13 + $0x140] sm:$0xff]
      %v1355 = vld [vmem:[%s13 + $0x148] sm:$0xff]
      %v1356 = vld [vmem:[%s13 + $0x150] sm:$0xff]
      %v1357 = vld [vmem:[%s13 + $0x158] sm:$0xff]
      %v1358 = vld [vmem:[%s13 + $0x160] sm:$0xff]
      %v1359 = vld [vmem:[%s13 + $0x168] sm:$0xff]
      %v1360 = vld [vmem:[%s13 + $0x170] sm:$0xff]
      %v1361 = vld [vmem:[%s13 + $0x178] sm:$0xff]
      %v1362 = vld [vmem:[%s13 + $0x180] sm:$0xff]
      %v1363 = vld [vmem:[%s13 + $0x188] sm:$0xff]
      %v1364 = vld [vmem:[%s13 + $0x190] sm:$0xff]
      %v1365 = vld [vmem:[%s13 + $0x198] sm:$0xff]
      %v1366 = vld [vmem:[%s13 + $0x1a0] sm:$0xff]
      %v1367 = vld [vmem:[%s13 + $0x1a8] sm:$0xff]
      %v1368 = vld [vmem:[%s13 + $0x1b0] sm:$0xff]
      %v1369 = vld [vmem:[%s13 + $0x1b8] sm:$0xff]
      %v1370 = vld [vmem:[%s13 + $0x1c0] sm:$0xff]
      %v1371 = vld [vmem:[%s13 + $0x1c8] sm:$0xff]
      %v1372 = vld [vmem:[%s13 + $0x1d0] sm:$0xff]
      %v1373 = vld [vmem:[%s13 + $0x1d8] sm:$0xff]
      %v1374 = vld [vmem:[%s13 + $0x1e0] sm:$0xff]
      %v1375 = vld [vmem:[%s13 + $0x1e8] sm:$0xff]
      %v1376 = vld [vmem:[%s13 + $0x1f0] sm:$0xff]
      %v1377 = vld [vmem:[%s13 + $0x1f8] sm:$0xff]
      %v1378 = vld [vmem:[%s13 + $0x200] sm:$0xff]
      %v1379 = vld [vmem:[%s13 + $0x208] sm:$0xff]
      %v1380 = vld [vmem:[%s13 + $0x210] sm:$0xff]
      %v1381 = vld [vmem:[%s13 + $0x218] sm:$0xff]
      %v1382 = vld [vmem:[%s13 + $0x220] sm:$0xff]
      %v1383 = vld [vmem:[%s13 + $0x228] sm:$0xff]
      %v1384 = vld [vmem:[%s13 + $0x230] sm:$0xff]
      %v1385 = vld [vmem:[%s13 + $0x238] sm:$0xff]
      %v1386 = vld [vmem:[%s13 + $0x240] sm:$0xff]
      %v1387 = vld [vmem:[%s13 + $0x248] sm:$0xff]
      %v1388 = vld [vmem:[%s13 + $0x250] sm:$0xff]
      %v1389 = vld [vmem:[%s13 + $0x258] sm:$0xff]
      %v1390 = vld [vmem:[%s13 + $0x260] sm:$0xff]
      %v1391 = vld [vmem:[%s13 + $0x268] sm:$0xff]
      %v1392 = vld [vmem:[%s13 + $0x270] sm:$0xff]
      %v1393 = vld [vmem:[%s13 + $0x278] sm:$0xff]
      %v1394 = vld [vmem:[%s13 + $0x280] sm:$0xff]
      %v1395 = vld [vmem:[%s13 + $0x288] sm:$0xff]
      %v1396 = vld [vmem:[%s13 + $0x290] sm:$0xff]
      %v1397 = vld [vmem:[%s13 + $0x298] sm:$0xff]
      %v1398 = vld [vmem:[%s13 + $0x2a0] sm:$0xff]
      %v1399 = vld [vmem:[%s13 + $0x2a8] sm:$0xff]
      %v1400 = vld [vmem:[%s13 + $0x2b0] sm:$0xff]
      %v1401 = vld [vmem:[%s13 + $0x2b8] sm:$0xff]
      %v1402 = vld [vmem:[%s13 + $0x2c0] sm:$0xff]
      %v1403 = vld [vmem:[%s13 + $0x2c8] sm:$0xff]
      %v1404 = vld [vmem:[%s13 + $0x2d0] sm:$0xff]
      %v1405 = vld [vmem:[%s13 + $0x2d8] sm:$0xff]
      %v1406 = vld [vmem:[%s13 + $0x2e0] sm:$0xff]
      %v1407 = vld [vmem:[%s13 + $0x2e8] sm:$0xff]
      %v1408 = vld [vmem:[%s13 + $0x2f0] sm:$0xff]
      %v1409 = vld [vmem:[%s13 + $0x2f8] sm:$0xff]
      %v1410 = vld [vmem:[%s13 + $0x300] sm:$0xff]
      %v1411 = vld [vmem:[%s13 + $0x308] sm:$0xff]
      %v1412 = vld [vmem:[%s13 + $0x310] sm:$0xff]
      %v1413 = vld [vmem:[%s13 + $0x318] sm:$0xff]
      %v1414 = vld [vmem:[%s13 + $0x320] sm:$0xff]
      %v1415 = vld [vmem:[%s13 + $0x328] sm:$0xff]
      %v1416 = vld [vmem:[%s13 + $0x330] sm:$0xff]
      %v1417 = vld [vmem:[%s13 + $0x338] sm:$0xff]
      %v1418 = vld [vmem:[%s13 + $0x340] sm:$0xff]
      %v1419 = vld [vmem:[%s13 + $0x348] sm:$0xff]
      %v1420 = vld [vmem:[%s13 + $0x350] sm:$0xff]
      %v1421 = vld [vmem:[%s13 + $0x358] sm:$0xff]
      %v1422 = vld [vmem:[%s13 + $0x360] sm:$0xff]
      %v1423 = vld [vmem:[%s13 + $0x368] sm:$0xff]
      %v1424 = vld [vmem:[%s13 + $0x370] sm:$0xff]
      %v1425 = vld [vmem:[%s13 + $0x378] sm:$0xff]
      %v1426 = vld [vmem:[%s13 + $0x380] sm:$0xff]
      %v1427 = vld [vmem:[%s13 + $0x388] sm:$0xff]
      %v1428 = vld [vmem:[%s13 + $0x390] sm:$0xff]
      %v1429 = vld [vmem:[%s13 + $0x398] sm:$0xff]
      %v1430 = vld [vmem:[%s13 + $0x3a0] sm:$0xff]
      %v1431 = vld [vmem:[%s13 + $0x3a8] sm:$0xff]
      %v1432 = vld [vmem:[%s13 + $0x3b0] sm:$0xff]
      %v1433 = vld [vmem:[%s13 + $0x3b8] sm:$0xff]
      %v1434 = vld [vmem:[%s13 + $0x3c0] sm:$0xff]
      %v1435 = vld [vmem:[%s13 + $0x3c8] sm:$0xff]
      %v1436 = vld [vmem:[%s13 + $0x3d0] sm:$0xff]
      %v1437 = vld [vmem:[%s13 + $0x3d8] sm:$0xff]
      %v1438 = vld [vmem:[%s13 + $0x3e0] sm:$0xff]
      %v1439 = vld [vmem:[%s13 + $0x3e8] sm:$0xff]
      %v1440 = vld [vmem:[%s13 + $0x3f0] sm:$0xff]
      %v1441 = vld [vmem:[%s13 + $0x3f8] sm:$0xff]
      %v1442 = vld [vmem:[%s13 + $0x400] sm:$0xff]
      %v1443 = vld [vmem:[%s13 + $0x408] sm:$0xff]
      %v1444 = vld [vmem:[%s13 + $0x410] sm:$0xff]
      %v1445 = vld [vmem:[%s13 + $0x418] sm:$0xff]
      %v1446 = vld [vmem:[%s13 + $0x420] sm:$0xff]
      %v1447 = vld [vmem:[%s13 + $0x428] sm:$0xff]
      %v1448 = vld [vmem:[%s13 + $0x430] sm:$0xff]
      %v1449 = vld [vmem:[%s13 + $0x438] sm:$0xff]
      %v1450 = vld [vmem:[%s13 + $0x440] sm:$0xff]
      %v1451 = vld [vmem:[%s13 + $0x448] sm:$0xff]
      %v1452 = vld [vmem:[%s13 + $0x450] sm:$0xff]
      %v1453 = vld [vmem:[%s13 + $0x458] sm:$0xff]
      %v1454 = vld [vmem:[%s13 + $0x460] sm:$0xff]
      %v1455 = vld [vmem:[%s13 + $0x468] sm:$0xff]
      %v1456 = vld [vmem:[%s13 + $0x470] sm:$0xff]
      %v1457 = vld [vmem:[%s13 + $0x478] sm:$0xff]
      %v1458 = vld [vmem:[%s13 + $0x480] sm:$0xff]
      %v1459 = vld [vmem:[%s13 + $0x488] sm:$0xff]
      %v1460 = vld [vmem:[%s13 + $0x490] sm:$0xff]
      %v1461 = vld [vmem:[%s13 + $0x498] sm:$0xff]
      %v1462 = vld [vmem:[%s13 + $0x4a0] sm:$0xff]
      %v1463 = vld [vmem:[%s13 + $0x4a8] sm:$0xff]
      %v1464 = vld [vmem:[%s13 + $0x4b0] sm:$0xff]
      %v1465 = vld [vmem:[%s13 + $0x4b8] sm:$0xff]
      %v1466 = vld [vmem:[%s13 + $0x4c0] sm:$0xff]
      %v1467 = vld [vmem:[%s13 + $0x4c8] sm:$0xff]
      %v1468 = vld [vmem:[%s13 + $0x4d0] sm:$0xff]
      %v1469 = vld [vmem:[%s13 + $0x4d8] sm:$0xff]
      %v1470 = vld [vmem:[%s13 + $0x4e0] sm:$0xff]
      %v1471 = vld [vmem:[%s13 + $0x4e8] sm:$0xff]
      %v1472 = vld [vmem:[%s13 + $0x4f0] sm:$0xff]
      %v1473 = vld [vmem:[%s13 + $0x4f8] sm:$0xff]
      %v1474 = vld [vmem:[%s13 + $0x500] sm:$0xff]
      %v1475 = vld [vmem:[%s13 + $0x508] sm:$0xff]
      %v1476 = vld [vmem:[%s13 + $0x510] sm:$0xff]
      %v1477 = vld [vmem:[%s13 + $0x518] sm:$0xff]
      %v1478 = vld [vmem:[%s13 + $0x520] sm:$0xff]
      %v1479 = vld [vmem:[%s13 + $0x528] sm:$0xff]
      %v1480 = vld [vmem:[%s13 + $0x530] sm:$0xff]
      %v1481 = vld [vmem:[%s13 + $0x538] sm:$0xff]
      %v1482 = vld [vmem:[%s13 + $0x540] sm:$0xff]
      %v1483 = vld [vmem:[%s13 + $0x548] sm:$0xff]
      %v1484 = vld [vmem:[%s13 + $0x550] sm:$0xff]
      %v1485 = vld [vmem:[%s13 + $0x558] sm:$0xff]
      %v1486 = vld [vmem:[%s13 + $0x560] sm:$0xff]
      %v1487 = vld [vmem:[%s13 + $0x568] sm:$0xff]
      %v1488 = vld [vmem:[%s13 + $0x570] sm:$0xff]
      %v1489 = vld [vmem:[%s13 + $0x578] sm:$0xff]
      %v1490 = vld [vmem:[%s13 + $0x580] sm:$0xff]
      %v1491 = vld [vmem:[%s13 + $0x588] sm:$0xff]
      %v1492 = vld [vmem:[%s13 + $0x590] sm:$0xff]
      %v1493 = vld [vmem:[%s13 + $0x598] sm:$0xff]
      %v1494 = vld [vmem:[%s13 + $0x5a0] sm:$0xff]
      %v1495 = vld [vmem:[%s13 + $0x5a8] sm:$0xff]
      %v1496 = vld [vmem:[%s13 + $0x5b0] sm:$0xff]
      %v1497 = vld [vmem:[%s13 + $0x5b8] sm:$0xff]
      %v1498 = vld [vmem:[%s13 + $0x5c0] sm:$0xff]
      %v1499 = vld [vmem:[%s13 + $0x5c8] sm:$0xff]
      %v1500 = vld [vmem:[%s13 + $0x5d0] sm:$0xff]
      %v1501 = vld [vmem:[%s13 + $0x5d8] sm:$0xff]
      %v1502 = vld [vmem:[%s13 + $0x5e0] sm:$0xff]
      %v1503 = vld [vmem:[%s13 + $0x5e8] sm:$0xff]
      %v1504 = vld [vmem:[%s13 + $0x5f0] sm:$0xff]
      %v1505 = vld [vmem:[%s13 + $0x5f8] sm:$0xff]
      %v1506 = vld [vmem:[%s13 + $0x600] sm:$0xff]
      %v1507 = vld [vmem:[%s13 + $0x608] sm:$0xff]
      %v1508 = vld [vmem:[%s13 + $0x610] sm:$0xff]
      %v1509 = vld [vmem:[%s13 + $0x618] sm:$0xff]
      %v1510 = vld [vmem:[%s13 + $0x620] sm:$0xff]
      %v1511 = vld [vmem:[%s13 + $0x628] sm:$0xff]
      %v1512 = vld [vmem:[%s13 + $0x630] sm:$0xff]
      %v1513 = vld [vmem:[%s13 + $0x638] sm:$0xff]
      %v1514 = vld [vmem:[%s13 + $0x640] sm:$0xff]
      %v1515 = vld [vmem:[%s13 + $0x648] sm:$0xff]
      %v1516 = vld [vmem:[%s13 + $0x650] sm:$0xff]
      %v1517 = vld [vmem:[%s13 + $0x658] sm:$0xff]
      %v1518 = vld [vmem:[%s13 + $0x660] sm:$0xff]
      %v1519 = vld [vmem:[%s13 + $0x668] sm:$0xff]
      %v1520 = vld [vmem:[%s13 + $0x670] sm:$0xff]
      %v1521 = vld [vmem:[%s13 + $0x678] sm:$0xff]
      %v1522 = vld [vmem:[%s13 + $0x680] sm:$0xff]
      %v1523 = vld [vmem:[%s13 + $0x688] sm:$0xff]
      %v1524 = vld [vmem:[%s13 + $0x690] sm:$0xff]
      %v1525 = vld [vmem:[%s13 + $0x698] sm:$0xff]
      %v1526 = vld [vmem:[%s13 + $0x6a0] sm:$0xff]
      %v1527 = vld [vmem:[%s13 + $0x6a8] sm:$0xff]
      %v1528 = vld [vmem:[%s13 + $0x6b0] sm:$0xff]
      %v1529 = vld [vmem:[%s13 + $0x6b8] sm:$0xff]
      %v1530 = vld [vmem:[%s13 + $0x6c0] sm:$0xff]
      %v1531 = vld [vmem:[%s13 + $0x6c8] sm:$0xff]
      %v1532 = vld [vmem:[%s13 + $0x6d0] sm:$0xff]
      %v1533 = vld [vmem:[%s13 + $0x6d8] sm:$0xff]
      %v1534 = vld [vmem:[%s13 + $0x6e0] sm:$0xff]
      %v1535 = vld [vmem:[%s13 + $0x6e8] sm:$0xff]
      %v1536 = vld [vmem:[%s13 + $0x6f0] sm:$0xff]
      %v1537 = vld [vmem:[%s13 + $0x6f8] sm:$0xff]
      %v1538 = vld [vmem:[%s13 + $0x700] sm:$0xff]
      %v1539 = vld [vmem:[%s13 + $0x708] sm:$0xff]
      %v1540 = vld [vmem:[%s13 + $0x710] sm:$0xff]
      %v1541 = vld [vmem:[%s13 + $0x718] sm:$0xff]
      %v1542 = vld [vmem:[%s13 + $0x720] sm:$0xff]
      %v1543 = vld [vmem:[%s13 + $0x728] sm:$0xff]
      %v1544 = vld [vmem:[%s13 + $0x730] sm:$0xff]
      %v1545 = vld [vmem:[%s13 + $0x738] sm:$0xff]
      %v1546 = vld [vmem:[%s13 + $0x740] sm:$0xff]
      %v1547 = vld [vmem:[%s13 + $0x748] sm:$0xff]
      %v1548 = vld [vmem:[%s13 + $0x750] sm:$0xff]
      %v1549 = vld [vmem:[%s13 + $0x758] sm:$0xff]
      %v1550 = vld [vmem:[%s13 + $0x760] sm:$0xff]
      %v1551 = vld [vmem:[%s13 + $0x768] sm:$0xff]
      %v1552 = vld [vmem:[%s13 + $0x770] sm:$0xff]
      %v1553 = vld [vmem:[%s13 + $0x778] sm:$0xff]
      %v1554 = vld [vmem:[%s13 + $0x780] sm:$0xff]
      %v1555 = vld [vmem:[%s13 + $0x788] sm:$0xff]
      %v1556 = vld [vmem:[%s13 + $0x790] sm:$0xff]
      %v1557 = vld [vmem:[%s13 + $0x798] sm:$0xff]
      %v1558 = vld [vmem:[%s13 + $0x7a0] sm:$0xff]
      %v1559 = vld [vmem:[%s13 + $0x7a8] sm:$0xff]
      %v1560 = vld [vmem:[%s13 + $0x7b0] sm:$0xff]
      %v1561 = vld [vmem:[%s13 + $0x7b8] sm:$0xff]
      %v1562 = vld [vmem:[%s13 + $0x7c0] sm:$0xff]
      %v1563 = vld [vmem:[%s13 + $0x7c8] sm:$0xff]
      %v1564 = vld [vmem:[%s13 + $0x7d0] sm:$0xff]
      %v1565 = vld [vmem:[%s13 + $0x7d8] sm:$0xff]
      %v1566 = vld [vmem:[%s13 + $0x7e0] sm:$0xff]
      %v1567 = vld [vmem:[%s13 + $0x7e8] sm:$0xff]
      %v1568 = vld [vmem:[%s13 + $0x7f0] sm:$0xff]
      %v1569 = vld [vmem:[%s13 + $0x7f8] sm:$0xff]
      %v1570 = vld [vmem:[%s14] sm:$0x1]
      %v1571 = vpack.c.bf16 %v1247, %v1247
      %v1572 = vpack.c.bf16 %v1264, %v1248
      %v1573 = vpack.c.bf16 %v1265, %v1249
      %v1574 = vpack.c.bf16 %v1266, %v1250
      %v1575 = vpack.c.bf16 %v1267, %v1251
      %v1576 = vpack.c.bf16 %v1268, %v1252
      %v1577 = vpack.c.bf16 %v1269, %v1253
      %v1578 = vpack.c.bf16 %v1270, %v1254
      %v1579 = vpack.c.bf16 %v1271, %v1255
      %v1580 = vpack.c.bf16 %v1272, %v1256
      %v1581 = vpack.c.bf16 %v1273, %v1257
      %v1582 = vpack.c.bf16 %v1274, %v1258
      %v1583 = vpack.c.bf16 %v1275, %v1259
      %v1584 = vpack.c.bf16 %v1276, %v1260
      %v1585 = vpack.c.bf16 %v1277, %v1261
      %v1586 = vpack.c.bf16 %v1278, %v1262
      %v1587 = vpack.c.bf16 %v1279, %v1263
      %v1588 = vpack.c.bf16 %v1296, %v1280
      %v1589 = vpack.c.bf16 %v1297, %v1281
      %v1590 = vpack.c.bf16 %v1298, %v1282
      %v1591 = vpack.c.bf16 %v1299, %v1283
      %v1592 = vpack.c.bf16 %v1300, %v1284
      %v1593 = vpack.c.bf16 %v1301, %v1285
      %v1594 = vpack.c.bf16 %v1302, %v1286
      %v1595 = vpack.c.bf16 %v1303, %v1287
      %v1596 = vpack.c.bf16 %v1304, %v1288
      %v1597 = vpack.c.bf16 %v1305, %v1289
      %v1598 = vpack.c.bf16 %v1306, %v1290
      %v1599 = vpack.c.bf16 %v1307, %v1291
      %v1600 = vpack.c.bf16 %v1308, %v1292
      %v1601 = vpack.c.bf16 %v1309, %v1293
      %v1602 = vpack.c.bf16 %v1310, %v1294
      %v1603 = vpack.c.bf16 %v1311, %v1295
      %v1606 = vlaneseq
      %v1607 = vshrl.u32 %v1606, 7
      %v1608 = vsub.s32 0, %v1607
      %v1609 = vrot.slane %v1312, %v1608
      %v1610 = vlaneseq
      %v1611 = vshrl.u32 %v1610, 7
      %v1612 = vsub.s32 1, %v1611
      %v1613 = vrot.slane %v1312, %v1612
      %v1614 = vlaneseq
      %v1615 = vshrl.u32 %v1614, 7
      %v1616 = vsub.s32 2, %v1615
      %v1617 = vrot.slane %v1312, %v1616
      %v1618 = vlaneseq
      %v1619 = vshrl.u32 %v1618, 7
      %v1620 = vsub.s32 3, %v1619
      %v1621 = vrot.slane %v1312, %v1620
      %v1622 = vlaneseq
      %v1623 = vshrl.u32 %v1622, 7
      %v1624 = vsub.s32 4, %v1623
      %v1625 = vrot.slane %v1312, %v1624
      %v1626 = vlaneseq
      %v1627 = vshrl.u32 %v1626, 7
      %v1628 = vsub.s32 5, %v1627
      %v1629 = vrot.slane %v1312, %v1628
      %v1630 = vlaneseq
      %v1631 = vshrl.u32 %v1630, 7
      %v1632 = vsub.s32 6, %v1631
      %v1633 = vrot.slane %v1312, %v1632
      %v1634 = vlaneseq
      %v1635 = vshrl.u32 %v1634, 7
      %v1636 = vsub.s32 7, %v1635
      %v1637 = vrot.slane %v1312, %v1636
      %v1638 = vlaneseq
      %v1639 = vshrl.u32 %v1638, 7
      %v1640 = vsub.s32 0, %v1639
      %v1641 = vrot.slane %v1313, %v1640
      %v1642 = vlaneseq
      %v1643 = vshrl.u32 %v1642, 7
      %v1644 = vsub.s32 1, %v1643
      %v1645 = vrot.slane %v1313, %v1644
      %v1646 = vlaneseq
      %v1647 = vshrl.u32 %v1646, 7
      %v1648 = vsub.s32 2, %v1647
      %v1649 = vrot.slane %v1313, %v1648
      %v1650 = vlaneseq
      %v1651 = vshrl.u32 %v1650, 7
      %v1652 = vsub.s32 3, %v1651
      %v1653 = vrot.slane %v1313, %v1652
      %v1654 = vlaneseq
      %v1655 = vshrl.u32 %v1654, 7
      %v1656 = vsub.s32 4, %v1655
      %v1657 = vrot.slane %v1313, %v1656
      %v1658 = vlaneseq
      %v1659 = vshrl.u32 %v1658, 7
      %v1660 = vsub.s32 5, %v1659
      %v1661 = vrot.slane %v1313, %v1660
      %v1662 = vlaneseq
      %v1663 = vshrl.u32 %v1662, 7
      %v1664 = vsub.s32 6, %v1663
      %v1665 = vrot.slane %v1313, %v1664
      %v1666 = vlaneseq
      %v1667 = vshrl.u32 %v1666, 7
      %v1668 = vsub.s32 7, %v1667
      %v1669 = vrot.slane %v1313, %v1668
      %v1687 = vsel %vm575, %v1571, 0
      %1689 = vmatprep.subr.bf16.mxu0 %v1573
      %1690 = vmatpush1.bf16.msra.mxu0 %v1572
      %1691 = vmatprep.subr.bf16.mxu0 %v1589
      %1692 = vmatpush1.bf16.msra.mxu0 %v1588
      %1693 = vmatprep.subr.bf16.mxu0 0
      %1694 = vmatpush1.bf16.msra.mxu0 0
      %1695 = vmatprep.subr.bf16.mxu0 0
      %1696 = vmatpush1.bf16.msra.mxu0 0
      %1697 = vmatprep.subr.bf16.mxu0 0
      %1698 = vmatpush1.bf16.msra.mxu0 0
      %1699 = vmatprep.subr.bf16.mxu0 0
      %1700 = vmatpush1.bf16.msra.mxu0 0
      %1701 = vmatprep.subr.bf16.mxu0 0
      %1702 = vmatpush1.bf16.msra.mxu0 0
      %1703 = vmatprep.subr.bf16.mxu0 0
      %1704 = vmatpush1.bf16.msra.mxu0 0
      %1705 = vmatprep.subr.bf16.mxu0 0
      %1706 = vmatpush1.bf16.msra.mxu0 0
      %1707 = vmatprep.subr.bf16.mxu0 0
      %1708 = vmatpush1.bf16.msra.mxu0 0
      %1709 = vmatprep.subr.bf16.mxu0 0
      %1710 = vmatpush1.bf16.msra.mxu0 0
      %1711 = vmatprep.subr.bf16.mxu0 0
      %1712 = vmatpush1.bf16.msra.mxu0 0
      %1713 = vmatprep.subr.bf16.mxu0 0
      %1714 = vmatpush1.bf16.msra.mxu0 0
      %1715 = vmatprep.subr.bf16.mxu0 0
      %1716 = vmatpush1.bf16.msra.mxu0 0
      %1717 = vmatprep.subr.bf16.mxu0 0
      %1718 = vmatpush1.bf16.msra.mxu0 0
      %1719 = vmatprep.subr.bf16.mxu0 0
      %1720 = vmatpush1.bf16.msra.mxu0 0
      %1721 = vmatprep.mubr.bf16.mxu0 0
      %1722 = vmatmul.mubr.bf16.gmra.mrb[0].mxu0 %v1687
      %v1723 = vpop.f32.mrb[0].mxu0
      %v1724 = vadd.f32 %v1609, %v1723
      %v1725 = vpop.f32.mrb[0].mxu0
      %v1726 = vadd.f32 %v1613, %v1725
      %v1727 = vpop.f32.mrb[0].mxu0
      %v1728 = vpop.f32.mrb[0].mxu0
      %1729 = vdwg.mxu0
      %1730 = vmatprep.subr.bf16.mxu0 %v1575
      %1731 = vmatpush1.bf16.msra.mxu0 %v1574
      %1732 = vmatprep.subr.bf16.mxu0 %v1591
      %1733 = vmatpush1.bf16.msra.mxu0 %v1590
      %1734 = vmatprep.subr.bf16.mxu0 0
      %1735 = vmatpush1.bf16.msra.mxu0 0
      %1736 = vmatprep.subr.bf16.mxu0 0
      %1737 = vmatpush1.bf16.msra.mxu0 0
      %1738 = vmatprep.subr.bf16.mxu0 0
      %1739 = vmatpush1.bf16.msra.mxu0 0
      %1740 = vmatprep.subr.bf16.mxu0 0
      %1741 = vmatpush1.bf16.msra.mxu0 0
      %1742 = vmatprep.subr.bf16.mxu0 0
      %1743 = vmatpush1.bf16.msra.mxu0 0
      %1744 = vmatprep.subr.bf16.mxu0 0
      %1745 = vmatpush1.bf16.msra.mxu0 0
      %1746 = vmatprep.subr.bf16.mxu0 0
      %1747 = vmatpush1.bf16.msra.mxu0 0
      %1748 = vmatprep.subr.bf16.mxu0 0
      %1749 = vmatpush1.bf16.msra.mxu0 0
      %1750 = vmatprep.subr.bf16.mxu0 0
      %1751 = vmatpush1.bf16.msra.mxu0 0
      %1752 = vmatprep.subr.bf16.mxu0 0
      %1753 = vmatpush1.bf16.msra.mxu0 0
      %1754 = vmatprep.subr.bf16.mxu0 0
      %1755 = vmatpush1.bf16.msra.mxu0 0
      %1756 = vmatprep.subr.bf16.mxu0 0
      %1757 = vmatpush1.bf16.msra.mxu0 0
      %1758 = vmatprep.subr.bf16.mxu0 0
      %1759 = vmatpush1.bf16.msra.mxu0 0
      %1760 = vmatprep.subr.bf16.mxu0 0
      %1761 = vmatpush1.bf16.msra.mxu0 0
      %1762 = vmatprep.mubr.bf16.mxu0 0
      %1763 = vmatmul.mubr.bf16.gmra.mrb[0].mxu0 %v1687
      %v1764 = vpop.f32.mrb[0].mxu0
      %v1765 = vadd.f32 %v1617, %v1764
      %v1766 = vpop.f32.mrb[0].mxu0
      %v1767 = vadd.f32 %v1621, %v1766
      %v1768 = vpop.f32.mrb[0].mxu0
      %v1769 = vpop.f32.mrb[0].mxu0
      %1770 = vdwg.mxu0
      %1771 = vmatprep.subr.bf16.mxu0 %v1577
      %1772 = vmatpush1.bf16.msra.mxu0 %v1576
      %1773 = vmatprep.subr.bf16.mxu0 %v1593
      %1774 = vmatpush1.bf16.msra.mxu0 %v1592
      %1775 = vmatprep.subr.bf16.mxu0 0
      %1776 = vmatpush1.bf16.msra.mxu0 0
      %1777 = vmatprep.subr.bf16.mxu0 0
      %1778 = vmatpush1.bf16.msra.mxu0 0
      %1779 = vmatprep.subr.bf16.mxu0 0
      %1780 = vmatpush1.bf16.msra.mxu0 0
      %1781 = vmatprep.subr.bf16.mxu0 0
      %1782 = vmatpush1.bf16.msra.mxu0 0
      %1783 = vmatprep.subr.bf16.mxu0 0
      %1784 = vmatpush1.bf16.msra.mxu0 0
      %1785 = vmatprep.subr.bf16.mxu0 0
      %1786 = vmatpush1.bf16.msra.mxu0 0
      %1787 = vmatprep.subr.bf16.mxu0 0
      %1788 = vmatpush1.bf16.msra.mxu0 0
      %1789 = vmatprep.subr.bf16.mxu0 0
      %1790 = vmatpush1.bf16.msra.mxu0 0
      %1791 = vmatprep.subr.bf16.mxu0 0
      %1792 = vmatpush1.bf16.msra.mxu0 0
      %1793 = vmatprep.subr.bf16.mxu0 0
      %1794 = vmatpush1.bf16.msra.mxu0 0
      %1795 = vmatprep.subr.bf16.mxu0 0
      %1796 = vmatpush1.bf16.msra.mxu0 0
      %1797 = vmatprep.subr.bf16.mxu0 0
      %1798 = vmatpush1.bf16.msra.mxu0 0
      %1799 = vmatprep.subr.bf16.mxu0 0
      %1800 = vmatpush1.bf16.msra.mxu0 0
      %1801 = vmatprep.subr.bf16.mxu0 0
      %1802 = vmatpush1.bf16.msra.mxu0 0
      %1803 = vmatprep.mubr.bf16.mxu0 0
      %1804 = vmatmul.mubr.bf16.gmra.mrb[0].mxu0 %v1687
      %v1805 = vpop.f32.mrb[0].mxu0
      %v1806 = vadd.f32 %v1625, %v1805
      %v1807 = vpop.f32.mrb[0].mxu0
      %v1808 = vadd.f32 %v1629, %v1807
      %v1809 = vpop.f32.mrb[0].mxu0
      %v1810 = vpop.f32.mrb[0].mxu0
      %1811 = vdwg.mxu0
      %1812 = vmatprep.subr.bf16.mxu0 %v1579
      %1813 = vmatpush1.bf16.msra.mxu0 %v1578
      %1814 = vmatprep.subr.bf16.mxu0 %v1595
      %1815 = vmatpush1.bf16.msra.mxu0 %v1594
      %1816 = vmatprep.subr.bf16.mxu0 0
      %1817 = vmatpush1.bf16.msra.mxu0 0
      %1818 = vmatprep.subr.bf16.mxu0 0
      %1819 = vmatpush1.bf16.msra.mxu0 0
      %1820 = vmatprep.subr.bf16.mxu0 0
      %1821 = vmatpush1.bf16.msra.mxu0 0
      %1822 = vmatprep.subr.bf16.mxu0 0
      %1823 = vmatpush1.bf16.msra.mxu0 0
      %1824 = vmatprep.subr.bf16.mxu0 0
      %1825 = vmatpush1.bf16.msra.mxu0 0
      %1826 = vmatprep.subr.bf16.mxu0 0
      %1827 = vmatpush1.bf16.msra.mxu0 0
      %1828 = vmatprep.subr.bf16.mxu0 0
      %1829 = vmatpush1.bf16.msra.mxu0 0
      %1830 = vmatprep.subr.bf16.mxu0 0
      %1831 = vmatpush1.bf16.msra.mxu0 0
      %1832 = vmatprep.subr.bf16.mxu0 0
      %1833 = vmatpush1.bf16.msra.mxu0 0
      %1834 = vmatprep.subr.bf16.mxu0 0
      %1835 = vmatpush1.bf16.msra.mxu0 0
      %1836 = vmatprep.subr.bf16.mxu0 0
      %1837 = vmatpush1.bf16.msra.mxu0 0
      %1838 = vmatprep.subr.bf16.mxu0 0
      %1839 = vmatpush1.bf16.msra.mxu0 0
      %1840 = vmatprep.subr.bf16.mxu0 0
      %1841 = vmatpush1.bf16.msra.mxu0 0
      %1842 = vmatprep.subr.bf16.mxu0 0
      %1843 = vmatpush1.bf16.msra.mxu0 0
      %1844 = vmatprep.mubr.bf16.mxu0 0
      %1845 = vmatmul.mubr.bf16.gmra.mrb[0].mxu0 %v1687
      %v1846 = vpop.f32.mrb[0].mxu0
      %v1847 = vadd.f32 %v1633, %v1846
      %v1848 = vpop.f32.mrb[0].mxu0
      %v1849 = vadd.f32 %v1637, %v1848
      %v1850 = vpop.f32.mrb[0].mxu0
      %v1851 = vpop.f32.mrb[0].mxu0
      %1852 = vdwg.mxu0
      %1853 = vmatprep.subr.bf16.mxu0 %v1581
      %1854 = vmatpush1.bf16.msra.mxu0 %v1580
      %1855 = vmatprep.subr.bf16.mxu0 %v1597
      %1856 = vmatpush1.bf16.msra.mxu0 %v1596
      %1857 = vmatprep.subr.bf16.mxu0 0
      %1858 = vmatpush1.bf16.msra.mxu0 0
      %1859 = vmatprep.subr.bf16.mxu0 0
      %1860 = vmatpush1.bf16.msra.mxu0 0
      %1861 = vmatprep.subr.bf16.mxu0 0
      %1862 = vmatpush1.bf16.msra.mxu0 0
      %1863 = vmatprep.subr.bf16.mxu0 0
      %1864 = vmatpush1.bf16.msra.mxu0 0
      %1865 = vmatprep.subr.bf16.mxu0 0
      %1866 = vmatpush1.bf16.msra.mxu0 0
      %1867 = vmatprep.subr.bf16.mxu0 0
      %1868 = vmatpush1.bf16.msra.mxu0 0
      %1869 = vmatprep.subr.bf16.mxu0 0
      %1870 = vmatpush1.bf16.msra.mxu0 0
      %1871 = vmatprep.subr.bf16.mxu0 0
      %1872 = vmatpush1.bf16.msra.mxu0 0
      %1873 = vmatprep.subr.bf16.mxu0 0
      %1874 = vmatpush1.bf16.msra.mxu0 0
      %1875 = vmatprep.subr.bf16.mxu0 0
      %1876 = vmatpush1.bf16.msra.mxu0 0
      %1877 = vmatprep.subr.bf16.mxu0 0
      %1878 = vmatpush1.bf16.msra.mxu0 0
      %1879 = vmatprep.subr.bf16.mxu0 0
      %1880 = vmatpush1.bf16.msra.mxu0 0
      %1881 = vmatprep.subr.bf16.mxu0 0
      %1882 = vmatpush1.bf16.msra.mxu0 0
      %1883 = vmatprep.subr.bf16.mxu0 0
      %1884 = vmatpush1.bf16.msra.mxu0 0
      %1885 = vmatprep.mubr.bf16.mxu0 0
      %1886 = vmatmul.mubr.bf16.gmra.mrb[0].mxu0 %v1687
      %v1887 = vpop.f32.mrb[0].mxu0
      %v1888 = vadd.f32 %v1641, %v1887
      %v1889 = vpop.f32.mrb[0].mxu0
      %v1890 = vadd.f32 %v1645, %v1889
      %v1891 = vpop.f32.mrb[0].mxu0
      %v1892 = vpop.f32.mrb[0].mxu0
      %1893 = vdwg.mxu0
      %1894 = vmatprep.subr.bf16.mxu0 %v1583
      %1895 = vmatpush1.bf16.msra.mxu0 %v1582
      %1896 = vmatprep.subr.bf16.mxu0 %v1599
      %1897 = vmatpush1.bf16.msra.mxu0 %v1598
      %1898 = vmatprep.subr.bf16.mxu0 0
      %1899 = vmatpush1.bf16.msra.mxu0 0
      %1900 = vmatprep.subr.bf16.mxu0 0
      %1901 = vmatpush1.bf16.msra.mxu0 0
      %1902 = vmatprep.subr.bf16.mxu0 0
      %1903 = vmatpush1.bf16.msra.mxu0 0
      %1904 = vmatprep.subr.bf16.mxu0 0
      %1905 = vmatpush1.bf16.msra.mxu0 0
      %1906 = vmatprep.subr.bf16.mxu0 0
      %1907 = vmatpush1.bf16.msra.mxu0 0
      %1908 = vmatprep.subr.bf16.mxu0 0
      %1909 = vmatpush1.bf16.msra.mxu0 0
      %1910 = vmatprep.subr.bf16.mxu0 0
      %1911 = vmatpush1.bf16.msra.mxu0 0
      %1912 = vmatprep.subr.bf16.mxu0 0
      %1913 = vmatpush1.bf16.msra.mxu0 0
      %1914 = vmatprep.subr.bf16.mxu0 0
      %1915 = vmatpush1.bf16.msra.mxu0 0
      %1916 = vmatprep.subr.bf16.mxu0 0
      %1917 = vmatpush1.bf16.msra.mxu0 0
      %1918 = vmatprep.subr.bf16.mxu0 0
      %1919 = vmatpush1.bf16.msra.mxu0 0
      %1920 = vmatprep.subr.bf16.mxu0 0
      %1921 = vmatpush1.bf16.msra.mxu0 0
      %1922 = vmatprep.subr.bf16.mxu0 0
      %1923 = vmatpush1.bf16.msra.mxu0 0
      %1924 = vmatprep.subr.bf16.mxu0 0
      %1925 = vmatpush1.bf16.msra.mxu0 0
      %1926 = vmatprep.mubr.bf16.mxu0 0
      %1927 = vmatmul.mubr.bf16.gmra.mrb[0].mxu0 %v1687
      %v1928 = vpop.f32.mrb[0].mxu0
      %v1929 = vadd.f32 %v1649, %v1928
      %v1930 = vpop.f32.mrb[0].mxu0
      %v1931 = vadd.f32 %v1653, %v1930
      %v1932 = vpop.f32.mrb[0].mxu0
      %v1933 = vpop.f32.mrb[0].mxu0
      %1934 = vdwg.mxu0
      %1935 = vmatprep.subr.bf16.mxu0 %v1585
      %1936 = vmatpush1.bf16.msra.mxu0 %v1584
      %1937 = vmatprep.subr.bf16.mxu0 %v1601
      %1938 = vmatpush1.bf16.msra.mxu0 %v1600
      %1939 = vmatprep.subr.bf16.mxu0 0
      %1940 = vmatpush1.bf16.msra.mxu0 0
      %1941 = vmatprep.subr.bf16.mxu0 0
      %1942 = vmatpush1.bf16.msra.mxu0 0
      %1943 = vmatprep.subr.bf16.mxu0 0
      %1944 = vmatpush1.bf16.msra.mxu0 0
      %1945 = vmatprep.subr.bf16.mxu0 0
      %1946 = vmatpush1.bf16.msra.mxu0 0
      %1947 = vmatprep.subr.bf16.mxu0 0
      %1948 = vmatpush1.bf16.msra.mxu0 0
      %1949 = vmatprep.subr.bf16.mxu0 0
      %1950 = vmatpush1.bf16.msra.mxu0 0
      %1951 = vmatprep.subr.bf16.mxu0 0
      %1952 = vmatpush1.bf16.msra.mxu0 0
      %1953 = vmatprep.subr.bf16.mxu0 0
      %1954 = vmatpush1.bf16.msra.mxu0 0
      %1955 = vmatprep.subr.bf16.mxu0 0
      %1956 = vmatpush1.bf16.msra.mxu0 0
      %1957 = vmatprep.subr.bf16.mxu0 0
      %1958 = vmatpush1.bf16.msra.mxu0 0
      %1959 = vmatprep.subr.bf16.mxu0 0
      %1960 = vmatpush1.bf16.msra.mxu0 0
      %1961 = vmatprep.subr.bf16.mxu0 0
      %1962 = vmatpush1.bf16.msra.mxu0 0
      %1963 = vmatprep.subr.bf16.mxu0 0
      %1964 = vmatpush1.bf16.msra.mxu0 0
      %1965 = vmatprep.subr.bf16.mxu0 0
      %1966 = vmatpush1.bf16.msra.mxu0 0
      %1967 = vmatprep.mubr.bf16.mxu0 0
      %1968 = vmatmul.mubr.bf16.gmra.mrb[0].mxu0 %v1687
      %v1969 = vpop.f32.mrb[0].mxu0
      %v1970 = vadd.f32 %v1657, %v1969
      %v1971 = vpop.f32.mrb[0].mxu0
      %v1972 = vadd.f32 %v1661, %v1971
      %v1973 = vpop.f32.mrb[0].mxu0
      %v1974 = vpop.f32.mrb[0].mxu0
      %1975 = vdwg.mxu0
      %1976 = vmatprep.subr.bf16.mxu0 %v1587
      %1977 = vmatpush1.bf16.msra.mxu0 %v1586
      %1978 = vmatprep.subr.bf16.mxu0 %v1603
      %1979 = vmatpush1.bf16.msra.mxu0 %v1602
      %1980 = vmatprep.subr.bf16.mxu0 0
      %1981 = vmatpush1.bf16.msra.mxu0 0
      %1982 = vmatprep.subr.bf16.mxu0 0
      %1983 = vmatpush1.bf16.msra.mxu0 0
      %1984 = vmatprep.subr.bf16.mxu0 0
      %1985 = vmatpush1.bf16.msra.mxu0 0
      %1986 = vmatprep.subr.bf16.mxu0 0
      %1987 = vmatpush1.bf16.msra.mxu0 0
      %1988 = vmatprep.subr.bf16.mxu0 0
      %1989 = vmatpush1.bf16.msra.mxu0 0
      %1990 = vmatprep.subr.bf16.mxu0 0
      %1991 = vmatpush1.bf16.msra.mxu0 0
      %1992 = vmatprep.subr.bf16.mxu0 0
      %1993 = vmatpush1.bf16.msra.mxu0 0
      %1994 = vmatprep.subr.bf16.mxu0 0
      %1995 = vmatpush1.bf16.msra.mxu0 0
      %1996 = vmatprep.subr.bf16.mxu0 0
      %1997 = vmatpush1.bf16.msra.mxu0 0
      %1998 = vmatprep.subr.bf16.mxu0 0
      %1999 = vmatpush1.bf16.msra.mxu0 0
      %2000 = vmatprep.subr.bf16.mxu0 0
      %2001 = vmatpush1.bf16.msra.mxu0 0
      %2002 = vmatprep.subr.bf16.mxu0 0
      %2003 = vmatpush1.bf16.msra.mxu0 0
      %2004 = vmatprep.subr.bf16.mxu0 0
      %2005 = vmatpush1.bf16.msra.mxu0 0
      %2006 = vmatprep.subr.bf16.mxu0 0
      %2007 = vmatpush1.bf16.msra.mxu0 0
      %2008 = vmatprep.mubr.bf16.mxu0 0
      %2009 = vmatmul.mubr.bf16.gmra.mrb[0].mxu0 %v1687
      %v2010 = vpop.f32.mrb[0].mxu0
      %v2011 = vadd.f32 %v1665, %v2010
      %v2012 = vpop.f32.mrb[0].mxu0
      %v2013 = vadd.f32 %v1669, %v2012
      %v2014 = vpop.f32.mrb[0].mxu0
      %v2015 = vpop.f32.mrb[0].mxu0
      %2016 = vdwg.mxu0
      %v2017 = vmax.f32 %v1724, 0.0
      %v2018 = vmax.f32 %v1726, 0.0
      %v2019 = vmax.f32 %v1765, 0.0
      %v2020 = vmax.f32 %v1767, 0.0
      %v2021 = vmax.f32 %v1806, 0.0
      %v2022 = vmax.f32 %v1808, 0.0
      %v2023 = vmax.f32 %v1847, 0.0
      %v2024 = vmax.f32 %v1849, 0.0
      %v2025 = vmax.f32 %v1888, 0.0
      %v2026 = vmax.f32 %v1890, 0.0
      %v2027 = vmax.f32 %v1929, 0.0
      %v2028 = vmax.f32 %v1931, 0.0
      %v2029 = vmax.f32 %v1970, 0.0
      %v2030 = vmax.f32 %v1972, 0.0
      %v2031 = vmax.f32 %v2011, 0.0
      %v2032 = vmax.f32 %v2013, 0.0
      %v2033 = vpack.c.bf16 %v2017, %v2017
      %v2034 = vpack.c.bf16 %v2018, %v2018
      %v2035 = vpack.c.bf16 %v2019, %v2019
      %v2036 = vpack.c.bf16 %v2020, %v2020
      %v2037 = vpack.c.bf16 %v2021, %v2021
      %v2038 = vpack.c.bf16 %v2022, %v2022
      %v2039 = vpack.c.bf16 %v2023, %v2023
      %v2040 = vpack.c.bf16 %v2024, %v2024
      %v2041 = vpack.c.bf16 %v2025, %v2025
      %v2042 = vpack.c.bf16 %v2026, %v2026
      %v2043 = vpack.c.bf16 %v2027, %v2027
      %v2044 = vpack.c.bf16 %v2028, %v2028
      %v2045 = vpack.c.bf16 %v2029, %v2029
      %v2046 = vpack.c.bf16 %v2030, %v2030
      %v2047 = vpack.c.bf16 %v2031, %v2031
      %v2048 = vpack.c.bf16 %v2032, %v2032
      %v2049 = vpack.c.bf16 %v1315, %v1314
      %v2050 = vpack.c.bf16 %v1317, %v1316
      %v2051 = vpack.c.bf16 %v1319, %v1318
      %v2052 = vpack.c.bf16 %v1321, %v1320
      %v2053 = vpack.c.bf16 %v1323, %v1322
      %v2054 = vpack.c.bf16 %v1325, %v1324
      %v2055 = vpack.c.bf16 %v1327, %v1326
      %v2056 = vpack.c.bf16 %v1329, %v1328
      %v2057 = vpack.c.bf16 %v1331, %v1330
      %v2058 = vpack.c.bf16 %v1333, %v1332
      %v2059 = vpack.c.bf16 %v1335, %v1334
      %v2060 = vpack.c.bf16 %v1337, %v1336
      %v2061 = vpack.c.bf16 %v1339, %v1338
      %v2062 = vpack.c.bf16 %v1341, %v1340
      %v2063 = vpack.c.bf16 %v1343, %v1342
      %v2064 = vpack.c.bf16 %v1345, %v1344
      %v2065 = vpack.c.bf16 %v1347, %v1346
      %v2066 = vpack.c.bf16 %v1349, %v1348
      %v2067 = vpack.c.bf16 %v1351, %v1350
      %v2068 = vpack.c.bf16 %v1353, %v1352
      %v2069 = vpack.c.bf16 %v1355, %v1354
      %v2070 = vpack.c.bf16 %v1357, %v1356
      %v2071 = vpack.c.bf16 %v1359, %v1358
      %v2072 = vpack.c.bf16 %v1361, %v1360
      %v2073 = vpack.c.bf16 %v1363, %v1362
      %v2074 = vpack.c.bf16 %v1365, %v1364
      %v2075 = vpack.c.bf16 %v1367, %v1366
      %v2076 = vpack.c.bf16 %v1369, %v1368
      %v2077 = vpack.c.bf16 %v1371, %v1370
      %v2078 = vpack.c.bf16 %v1373, %v1372
      %v2079 = vpack.c.bf16 %v1375, %v1374
      %v2080 = vpack.c.bf16 %v1377, %v1376
      %v2081 = vpack.c.bf16 %v1379, %v1378
      %v2082 = vpack.c.bf16 %v1381, %v1380
      %v2083 = vpack.c.bf16 %v1383, %v1382
      %v2084 = vpack.c.bf16 %v1385, %v1384
      %v2085 = vpack.c.bf16 %v1387, %v1386
      %v2086 = vpack.c.bf16 %v1389, %v1388
      %v2087 = vpack.c.bf16 %v1391, %v1390
      %v2088 = vpack.c.bf16 %v1393, %v1392
      %v2089 = vpack.c.bf16 %v1395, %v1394
      %v2090 = vpack.c.bf16 %v1397, %v1396
      %v2091 = vpack.c.bf16 %v1399, %v1398
      %v2092 = vpack.c.bf16 %v1401, %v1400
      %v2093 = vpack.c.bf16 %v1403, %v1402
      %v2094 = vpack.c.bf16 %v1405, %v1404
      %v2095 = vpack.c.bf16 %v1407, %v1406
      %v2096 = vpack.c.bf16 %v1409, %v1408
      %v2097 = vpack.c.bf16 %v1411, %v1410
      %v2098 = vpack.c.bf16 %v1413, %v1412
      %v2099 = vpack.c.bf16 %v1415, %v1414
      %v2100 = vpack.c.bf16 %v1417, %v1416
      %v2101 = vpack.c.bf16 %v1419, %v1418
      %v2102 = vpack.c.bf16 %v1421, %v1420
      %v2103 = vpack.c.bf16 %v1423, %v1422
      %v2104 = vpack.c.bf16 %v1425, %v1424
      %v2105 = vpack.c.bf16 %v1427, %v1426
      %v2106 = vpack.c.bf16 %v1429, %v1428
      %v2107 = vpack.c.bf16 %v1431, %v1430
      %v2108 = vpack.c.bf16 %v1433, %v1432
      %v2109 = vpack.c.bf16 %v1435, %v1434
      %v2110 = vpack.c.bf16 %v1437, %v1436
      %v2111 = vpack.c.bf16 %v1439, %v1438
      %v2112 = vpack.c.bf16 %v1441, %v1440
      %v2113 = vpack.c.bf16 %v1443, %v1442
      %v2114 = vpack.c.bf16 %v1445, %v1444
      %v2115 = vpack.c.bf16 %v1447, %v1446
      %v2116 = vpack.c.bf16 %v1449, %v1448
      %v2117 = vpack.c.bf16 %v1451, %v1450
      %v2118 = vpack.c.bf16 %v1453, %v1452
      %v2119 = vpack.c.bf16 %v1455, %v1454
      %v2120 = vpack.c.bf16 %v1457, %v1456
      %v2121 = vpack.c.bf16 %v1459, %v1458
      %v2122 = vpack.c.bf16 %v1461, %v1460
      %v2123 = vpack.c.bf16 %v1463, %v1462
      %v2124 = vpack.c.bf16 %v1465, %v1464
      %v2125 = vpack.c.bf16 %v1467, %v1466
      %v2126 = vpack.c.bf16 %v1469, %v1468
      %v2127 = vpack.c.bf16 %v1471, %v1470
      %v2128 = vpack.c.bf16 %v1473, %v1472
      %v2129 = vpack.c.bf16 %v1475, %v1474
      %v2130 = vpack.c.bf16 %v1477, %v1476
      %v2131 = vpack.c.bf16 %v1479, %v1478
      %v2132 = vpack.c.bf16 %v1481, %v1480
      %v2133 = vpack.c.bf16 %v1483, %v1482
      %v2134 = vpack.c.bf16 %v1485, %v1484
      %v2135 = vpack.c.bf16 %v1487, %v1486
      %v2136 = vpack.c.bf16 %v1489, %v1488
      %v2137 = vpack.c.bf16 %v1491, %v1490
      %v2138 = vpack.c.bf16 %v1493, %v1492
      %v2139 = vpack.c.bf16 %v1495, %v1494
      %v2140 = vpack.c.bf16 %v1497, %v1496
      %v2141 = vpack.c.bf16 %v1499, %v1498
      %v2142 = vpack.c.bf16 %v1501, %v1500
      %v2143 = vpack.c.bf16 %v1503, %v1502
      %v2144 = vpack.c.bf16 %v1505, %v1504
      %v2145 = vpack.c.bf16 %v1507, %v1506
      %v2146 = vpack.c.bf16 %v1509, %v1508
      %v2147 = vpack.c.bf16 %v1511, %v1510
      %v2148 = vpack.c.bf16 %v1513, %v1512
      %v2149 = vpack.c.bf16 %v1515, %v1514
      %v2150 = vpack.c.bf16 %v1517, %v1516
      %v2151 = vpack.c.bf16 %v1519, %v1518
      %v2152 = vpack.c.bf16 %v1521, %v1520
      %v2153 = vpack.c.bf16 %v1523, %v1522
      %v2154 = vpack.c.bf16 %v1525, %v1524
      %v2155 = vpack.c.bf16 %v1527, %v1526
      %v2156 = vpack.c.bf16 %v1529, %v1528
      %v2157 = vpack.c.bf16 %v1531, %v1530
      %v2158 = vpack.c.bf16 %v1533, %v1532
      %v2159 = vpack.c.bf16 %v1535, %v1534
      %v2160 = vpack.c.bf16 %v1537, %v1536
      %v2161 = vpack.c.bf16 %v1539, %v1538
      %v2162 = vpack.c.bf16 %v1541, %v1540
      %v2163 = vpack.c.bf16 %v1543, %v1542
      %v2164 = vpack.c.bf16 %v1545, %v1544
      %v2165 = vpack.c.bf16 %v1547, %v1546
      %v2166 = vpack.c.bf16 %v1549, %v1548
      %v2167 = vpack.c.bf16 %v1551, %v1550
      %v2168 = vpack.c.bf16 %v1553, %v1552
      %v2169 = vpack.c.bf16 %v1555, %v1554
      %v2170 = vpack.c.bf16 %v1557, %v1556
      %v2171 = vpack.c.bf16 %v1559, %v1558
      %v2172 = vpack.c.bf16 %v1561, %v1560
      %v2173 = vpack.c.bf16 %v1563, %v1562
      %v2174 = vpack.c.bf16 %v1565, %v1564
      %v2175 = vpack.c.bf16 %v1567, %v1566
      %v2176 = vpack.c.bf16 %v1569, %v1568
      %v2178 = vlaneseq
      %v2179 = vshrl.u32 %v2178, 7
      %v2180 = vsub.s32 0, %v2179
      %v2181 = vrot.slane %v1570, %v2180
      %2183 = vmatprep.subr.bf16.mxu0 0
      %2184 = vmatpush1.bf16.msra.mxu0 %v2049
      %2185 = vmatprep.subr.bf16.mxu0 0
      %2186 = vmatpush1.bf16.msra.mxu0 %v2050
      %2187 = vmatprep.subr.bf16.mxu0 0
      %2188 = vmatpush1.bf16.msra.mxu0 %v2051
      %2189 = vmatprep.subr.bf16.mxu0 0
      %2190 = vmatpush1.bf16.msra.mxu0 %v2052
      %2191 = vmatprep.subr.bf16.mxu0 0
      %2192 = vmatpush1.bf16.msra.mxu0 %v2053
      %2193 = vmatprep.subr.bf16.mxu0 0
      %2194 = vmatpush1.bf16.msra.mxu0 %v2054
      %2195 = vmatprep.subr.bf16.mxu0 0
      %2196 = vmatpush1.bf16.msra.mxu0 %v2055
      %2197 = vmatprep.subr.bf16.mxu0 0
      %2198 = vmatpush1.bf16.msra.mxu0 %v2056
      %2199 = vmatprep.subr.bf16.mxu0 0
      %2200 = vmatpush1.bf16.msra.mxu0 %v2057
      %2201 = vmatprep.subr.bf16.mxu0 0
      %2202 = vmatpush1.bf16.msra.mxu0 %v2058
      %2203 = vmatprep.subr.bf16.mxu0 0
      %2204 = vmatpush1.bf16.msra.mxu0 %v2059
      %2205 = vmatprep.subr.bf16.mxu0 0
      %2206 = vmatpush1.bf16.msra.mxu0 %v2060
      %2207 = vmatprep.subr.bf16.mxu0 0
      %2208 = vmatpush1.bf16.msra.mxu0 %v2061
      %2209 = vmatprep.subr.bf16.mxu0 0
      %2210 = vmatpush1.bf16.msra.mxu0 %v2062
      %2211 = vmatprep.subr.bf16.mxu0 0
      %2212 = vmatpush1.bf16.msra.mxu0 %v2063
      %2213 = vmatprep.subr.bf16.mxu0 0
      %2214 = vmatpush1.bf16.msra.mxu0 %v2064
      %2215 = vmatprep.mubr.bf16.mxu0 %v2034
      %2216 = vmatmul.mubr.bf16.gmra.mrb[0].mxu0 %v2033
      %v2217 = vpop.f32.mrb[0].mxu0
      %v2218 = vadd.f32 %v2181, %v2217
      %v2219 = vpop.f32.mrb[0].mxu0
      %v2220 = vpop.f32.mrb[0].mxu0
      %v2221 = vpop.f32.mrb[0].mxu0
      %2222 = vdwg.mxu0
      %2223 = vmatprep.subr.bf16.mxu0 0
      %2224 = vmatpush1.bf16.msra.mxu0 %v2065
      %2225 = vmatprep.subr.bf16.mxu0 0
      %2226 = vmatpush1.bf16.msra.mxu0 %v2066
      %2227 = vmatprep.subr.bf16.mxu0 0
      %2228 = vmatpush1.bf16.msra.mxu0 %v2067
      %2229 = vmatprep.subr.bf16.mxu0 0
      %2230 = vmatpush1.bf16.msra.mxu0 %v2068
      %2231 = vmatprep.subr.bf16.mxu0 0
      %2232 = vmatpush1.bf16.msra.mxu0 %v2069
      %2233 = vmatprep.subr.bf16.mxu0 0
      %2234 = vmatpush1.bf16.msra.mxu0 %v2070
      %2235 = vmatprep.subr.bf16.mxu0 0
      %2236 = vmatpush1.bf16.msra.mxu0 %v2071
      %2237 = vmatprep.subr.bf16.mxu0 0
      %2238 = vmatpush1.bf16.msra.mxu0 %v2072
      %2239 = vmatprep.subr.bf16.mxu0 0
      %2240 = vmatpush1.bf16.msra.mxu0 %v2073
      %2241 = vmatprep.subr.bf16.mxu0 0
      %2242 = vmatpush1.bf16.msra.mxu0 %v2074
      %2243 = vmatprep.subr.bf16.mxu0 0
      %2244 = vmatpush1.bf16.msra.mxu0 %v2075
      %2245 = vmatprep.subr.bf16.mxu0 0
      %2246 = vmatpush1.bf16.msra.mxu0 %v2076
      %2247 = vmatprep.subr.bf16.mxu0 0
      %2248 = vmatpush1.bf16.msra.mxu0 %v2077
      %2249 = vmatprep.subr.bf16.mxu0 0
      %2250 = vmatpush1.bf16.msra.mxu0 %v2078
      %2251 = vmatprep.subr.bf16.mxu0 0
      %2252 = vmatpush1.bf16.msra.mxu0 %v2079
      %2253 = vmatprep.subr.bf16.mxu0 0
      %2254 = vmatpush1.bf16.msra.mxu0 %v2080
      %2255 = vmatprep.mubr.bf16.mxu0 %v2036
      %2256 = vmatmul.mubr.bf16.gmra.mrb[0].mxu0 %v2035
      %v2257 = vpop.f32.mrb[0].mxu0
      %v2258 = vadd.f32 %v2218, %v2257
      %v2259 = vpop.f32.mrb[0].mxu0
      %v2260 = vpop.f32.mrb[0].mxu0
      %v2261 = vpop.f32.mrb[0].mxu0
      %2262 = vdwg.mxu0
      %2263 = vmatprep.subr.bf16.mxu0 0
      %2264 = vmatpush1.bf16.msra.mxu0 %v2081
      %2265 = vmatprep.subr.bf16.mxu0 0
      %2266 = vmatpush1.bf16.msra.mxu0 %v2082
      %2267 = vmatprep.subr.bf16.mxu0 0
      %2268 = vmatpush1.bf16.msra.mxu0 %v2083
      %2269 = vmatprep.subr.bf16.mxu0 0
      %2270 = vmatpush1.bf16.msra.mxu0 %v2084
      %2271 = vmatprep.subr.bf16.mxu0 0
      %2272 = vmatpush1.bf16.msra.mxu0 %v2085
      %2273 = vmatprep.subr.bf16.mxu0 0
      %2274 = vmatpush1.bf16.msra.mxu0 %v2086
      %2275 = vmatprep.subr.bf16.mxu0 0
      %2276 = vmatpush1.bf16.msra.mxu0 %v2087
      %2277 = vmatprep.subr.bf16.mxu0 0
      %2278 = vmatpush1.bf16.msra.mxu0 %v2088
      %2279 = vmatprep.subr.bf16.mxu0 0
      %2280 = vmatpush1.bf16.msra.mxu0 %v2089
      %2281 = vmatprep.subr.bf16.mxu0 0
      %2282 = vmatpush1.bf16.msra.mxu0 %v2090
      %2283 = vmatprep.subr.bf16.mxu0 0
      %2284 = vmatpush1.bf16.msra.mxu0 %v2091
      %2285 = vmatprep.subr.bf16.mxu0 0
      %2286 = vmatpush1.bf16.msra.mxu0 %v2092
      %2287 = vmatprep.subr.bf16.mxu0 0
      %2288 = vmatpush1.bf16.msra.mxu0 %v2093
      %2289 = vmatprep.subr.bf16.mxu0 0
      %2290 = vmatpush1.bf16.msra.mxu0 %v2094
      %2291 = vmatprep.subr.bf16.mxu0 0
      %2292 = vmatpush1.bf16.msra.mxu0 %v2095
      %2293 = vmatprep.subr.bf16.mxu0 0
      %2294 = vmatpush1.bf16.msra.mxu0 %v2096
      %2295 = vmatprep.mubr.bf16.mxu0 %v2038
      %2296 = vmatmul.mubr.bf16.gmra.mrb[0].mxu0 %v2037
      %v2297 = vpop.f32.mrb[0].mxu0
      %v2298 = vadd.f32 %v2258, %v2297
      %v2299 = vpop.f32.mrb[0].mxu0
      %v2300 = vpop.f32.mrb[0].mxu0
      %v2301 = vpop.f32.mrb[0].mxu0
      %2302 = vdwg.mxu0
      %2303 = vmatprep.subr.bf16.mxu0 0
      %2304 = vmatpush1.bf16.msra.mxu0 %v2097
      %2305 = vmatprep.subr.bf16.mxu0 0
      %2306 = vmatpush1.bf16.msra.mxu0 %v2098
      %2307 = vmatprep.subr.bf16.mxu0 0
      %2308 = vmatpush1.bf16.msra.mxu0 %v2099
      %2309 = vmatprep.subr.bf16.mxu0 0
      %2310 = vmatpush1.bf16.msra.mxu0 %v2100
      %2311 = vmatprep.subr.bf16.mxu0 0
      %2312 = vmatpush1.bf16.msra.mxu0 %v2101
      %2313 = vmatprep.subr.bf16.mxu0 0
      %2314 = vmatpush1.bf16.msra.mxu0 %v2102
      %2315 = vmatprep.subr.bf16.mxu0 0
      %2316 = vmatpush1.bf16.msra.mxu0 %v2103
      %2317 = vmatprep.subr.bf16.mxu0 0
      %2318 = vmatpush1.bf16.msra.mxu0 %v2104
      %2319 = vmatprep.subr.bf16.mxu0 0
      %2320 = vmatpush1.bf16.msra.mxu0 %v2105
      %2321 = vmatprep.subr.bf16.mxu0 0
      %2322 = vmatpush1.bf16.msra.mxu0 %v2106
      %2323 = vmatprep.subr.bf16.mxu0 0
      %2324 = vmatpush1.bf16.msra.mxu0 %v2107
      %2325 = vmatprep.subr.bf16.mxu0 0
      %2326 = vmatpush1.bf16.msra.mxu0 %v2108
      %2327 = vmatprep.subr.bf16.mxu0 0
      %2328 = vmatpush1.bf16.msra.mxu0 %v2109
      %2329 = vmatprep.subr.bf16.mxu0 0
      %2330 = vmatpush1.bf16.msra.mxu0 %v2110
      %2331 = vmatprep.subr.bf16.mxu0 0
      %2332 = vmatpush1.bf16.msra.mxu0 %v2111
      %2333 = vmatprep.subr.bf16.mxu0 0
      %2334 = vmatpush1.bf16.msra.mxu0 %v2112
      %2335 = vmatprep.mubr.bf16.mxu0 %v2040
      %2336 = vmatmul.mubr.bf16.gmra.mrb[0].mxu0 %v2039
      %v2337 = vpop.f32.mrb[0].mxu0
      %v2338 = vadd.f32 %v2298, %v2337
      %v2339 = vpop.f32.mrb[0].mxu0
      %v2340 = vpop.f32.mrb[0].mxu0
      %v2341 = vpop.f32.mrb[0].mxu0
      %2342 = vdwg.mxu0
      %2343 = vmatprep.subr.bf16.mxu0 0
      %2344 = vmatpush1.bf16.msra.mxu0 %v2113
      %2345 = vmatprep.subr.bf16.mxu0 0
      %2346 = vmatpush1.bf16.msra.mxu0 %v2114
      %2347 = vmatprep.subr.bf16.mxu0 0
      %2348 = vmatpush1.bf16.msra.mxu0 %v2115
      %2349 = vmatprep.subr.bf16.mxu0 0
      %2350 = vmatpush1.bf16.msra.mxu0 %v2116
      %2351 = vmatprep.subr.bf16.mxu0 0
      %2352 = vmatpush1.bf16.msra.mxu0 %v2117
      %2353 = vmatprep.subr.bf16.mxu0 0
      %2354 = vmatpush1.bf16.msra.mxu0 %v2118
      %2355 = vmatprep.subr.bf16.mxu0 0
      %2356 = vmatpush1.bf16.msra.mxu0 %v2119
      %2357 = vmatprep.subr.bf16.mxu0 0
      %2358 = vmatpush1.bf16.msra.mxu0 %v2120
      %2359 = vmatprep.subr.bf16.mxu0 0
      %2360 = vmatpush1.bf16.msra.mxu0 %v2121
      %2361 = vmatprep.subr.bf16.mxu0 0
      %2362 = vmatpush1.bf16.msra.mxu0 %v2122
      %2363 = vmatprep.subr.bf16.mxu0 0
      %2364 = vmatpush1.bf16.msra.mxu0 %v2123
      %2365 = vmatprep.subr.bf16.mxu0 0
      %2366 = vmatpush1.bf16.msra.mxu0 %v2124
      %2367 = vmatprep.subr.bf16.mxu0 0
      %2368 = vmatpush1.bf16.msra.mxu0 %v2125
      %2369 = vmatprep.subr.bf16.mxu0 0
      %2370 = vmatpush1.bf16.msra.mxu0 %v2126
      %2371 = vmatprep.subr.bf16.mxu0 0
      %2372 = vmatpush1.bf16.msra.mxu0 %v2127
      %2373 = vmatprep.subr.bf16.mxu0 0
      %2374 = vmatpush1.bf16.msra.mxu0 %v2128
      %2375 = vmatprep.mubr.bf16.mxu0 %v2042
      %2376 = vmatmul.mubr.bf16.gmra.mrb[0].mxu0 %v2041
      %v2377 = vpop.f32.mrb[0].mxu0
      %v2378 = vadd.f32 %v2338, %v2377
      %v2379 = vpop.f32.mrb[0].mxu0
      %v2380 = vpop.f32.mrb[0].mxu0
      %v2381 = vpop.f32.mrb[0].mxu0
      %2382 = vdwg.mxu0
      %2383 = vmatprep.subr.bf16.mxu0 0
      %2384 = vmatpush1.bf16.msra.mxu0 %v2129
      %2385 = vmatprep.subr.bf16.mxu0 0
      %2386 = vmatpush1.bf16.msra.mxu0 %v2130
      %2387 = vmatprep.subr.bf16.mxu0 0
      %2388 = vmatpush1.bf16.msra.mxu0 %v2131
      %2389 = vmatprep.subr.bf16.mxu0 0
      %2390 = vmatpush1.bf16.msra.mxu0 %v2132
      %2391 = vmatprep.subr.bf16.mxu0 0
      %2392 = vmatpush1.bf16.msra.mxu0 %v2133
      %2393 = vmatprep.subr.bf16.mxu0 0
      %2394 = vmatpush1.bf16.msra.mxu0 %v2134
      %2395 = vmatprep.subr.bf16.mxu0 0
      %2396 = vmatpush1.bf16.msra.mxu0 %v2135
      %2397 = vmatprep.subr.bf16.mxu0 0
      %2398 = vmatpush1.bf16.msra.mxu0 %v2136
      %2399 = vmatprep.subr.bf16.mxu0 0
      %2400 = vmatpush1.bf16.msra.mxu0 %v2137
      %2401 = vmatprep.subr.bf16.mxu0 0
      %2402 = vmatpush1.bf16.msra.mxu0 %v2138
      %2403 = vmatprep.subr.bf16.mxu0 0
      %2404 = vmatpush1.bf16.msra.mxu0 %v2139
      %2405 = vmatprep.subr.bf16.mxu0 0
      %2406 = vmatpush1.bf16.msra.mxu0 %v2140
      %2407 = vmatprep.subr.bf16.mxu0 0
      %2408 = vmatpush1.bf16.msra.mxu0 %v2141
      %2409 = vmatprep.subr.bf16.mxu0 0
      %2410 = vmatpush1.bf16.msra.mxu0 %v2142
      %2411 = vmatprep.subr.bf16.mxu0 0
      %2412 = vmatpush1.bf16.msra.mxu0 %v2143
      %2413 = vmatprep.subr.bf16.mxu0 0
      %2414 = vmatpush1.bf16.msra.mxu0 %v2144
      %2415 = vmatprep.mubr.bf16.mxu0 %v2044
      %2416 = vmatmul.mubr.bf16.gmra.mrb[0].mxu0 %v2043
      %v2417 = vpop.f32.mrb[0].mxu0
      %v2418 = vadd.f32 %v2378, %v2417
      %v2419 = vpop.f32.mrb[0].mxu0
      %v2420 = vpop.f32.mrb[0].mxu0
      %v2421 = vpop.f32.mrb[0].mxu0
      %2422 = vdwg.mxu0
      %2423 = vmatprep.subr.bf16.mxu0 0
      %2424 = vmatpush1.bf16.msra.mxu0 %v2145
      %2425 = vmatprep.subr.bf16.mxu0 0
      %2426 = vmatpush1.bf16.msra.mxu0 %v2146
      %2427 = vmatprep.subr.bf16.mxu0 0
      %2428 = vmatpush1.bf16.msra.mxu0 %v2147
      %2429 = vmatprep.subr.bf16.mxu0 0
      %2430 = vmatpush1.bf16.msra.mxu0 %v2148
      %2431 = vmatprep.subr.bf16.mxu0 0
      %2432 = vmatpush1.bf16.msra.mxu0 %v2149
      %2433 = vmatprep.subr.bf16.mxu0 0
      %2434 = vmatpush1.bf16.msra.mxu0 %v2150
      %2435 = vmatprep.subr.bf16.mxu0 0
      %2436 = vmatpush1.bf16.msra.mxu0 %v2151
      %2437 = vmatprep.subr.bf16.mxu0 0
      %2438 = vmatpush1.bf16.msra.mxu0 %v2152
      %2439 = vmatprep.subr.bf16.mxu0 0
      %2440 = vmatpush1.bf16.msra.mxu0 %v2153
      %2441 = vmatprep.subr.bf16.mxu0 0
      %2442 = vmatpush1.bf16.msra.mxu0 %v2154
      %2443 = vmatprep.subr.bf16.mxu0 0
      %2444 = vmatpush1.bf16.msra.mxu0 %v2155
      %2445 = vmatprep.subr.bf16.mxu0 0
      %2446 = vmatpush1.bf16.msra.mxu0 %v2156
      %2447 = vmatprep.subr.bf16.mxu0 0
      %2448 = vmatpush1.bf16.msra.mxu0 %v2157
      %2449 = vmatprep.subr.bf16.mxu0 0
      %2450 = vmatpush1.bf16.msra.mxu0 %v2158
      %2451 = vmatprep.subr.bf16.mxu0 0
      %2452 = vmatpush1.bf16.msra.mxu0 %v2159
      %2453 = vmatprep.subr.bf16.mxu0 0
      %2454 = vmatpush1.bf16.msra.mxu0 %v2160
      %2455 = vmatprep.mubr.bf16.mxu0 %v2046
      %2456 = vmatmul.mubr.bf16.gmra.mrb[0].mxu0 %v2045
      %v2457 = vpop.f32.mrb[0].mxu0
      %v2458 = vadd.f32 %v2418, %v2457
      %v2459 = vpop.f32.mrb[0].mxu0
      %v2460 = vpop.f32.mrb[0].mxu0
      %v2461 = vpop.f32.mrb[0].mxu0
      %2462 = vdwg.mxu0
      %2463 = vmatprep.subr.bf16.mxu0 0
      %2464 = vmatpush1.bf16.msra.mxu0 %v2161
      %2465 = vmatprep.subr.bf16.mxu0 0
      %2466 = vmatpush1.bf16.msra.mxu0 %v2162
      %2467 = vmatprep.subr.bf16.mxu0 0
      %2468 = vmatpush1.bf16.msra.mxu0 %v2163
      %2469 = vmatprep.subr.bf16.mxu0 0
      %2470 = vmatpush1.bf16.msra.mxu0 %v2164
      %2471 = vmatprep.subr.bf16.mxu0 0
      %2472 = vmatpush1.bf16.msra.mxu0 %v2165
      %2473 = vmatprep.subr.bf16.mxu0 0
      %2474 = vmatpush1.bf16.msra.mxu0 %v2166
      %2475 = vmatprep.subr.bf16.mxu0 0
      %2476 = vmatpush1.bf16.msra.mxu0 %v2167
      %2477 = vmatprep.subr.bf16.mxu0 0
      %2478 = vmatpush1.bf16.msra.mxu0 %v2168
      %2479 = vmatprep.subr.bf16.mxu0 0
      %2480 = vmatpush1.bf16.msra.mxu0 %v2169
      %2481 = vmatprep.subr.bf16.mxu0 0
      %2482 = vmatpush1.bf16.msra.mxu0 %v2170
      %2483 = vmatprep.subr.bf16.mxu0 0
      %2484 = vmatpush1.bf16.msra.mxu0 %v2171
      %2485 = vmatprep.subr.bf16.mxu0 0
      %2486 = vmatpush1.bf16.msra.mxu0 %v2172
      %2487 = vmatprep.subr.bf16.mxu0 0
      %2488 = vmatpush1.bf16.msra.mxu0 %v2173
      %2489 = vmatprep.subr.bf16.mxu0 0
      %2490 = vmatpush1.bf16.msra.mxu0 %v2174
      %2491 = vmatprep.subr.bf16.mxu0 0
      %2492 = vmatpush1.bf16.msra.mxu0 %v2175
      %2493 = vmatprep.subr.bf16.mxu0 0
      %2494 = vmatpush1.bf16.msra.mxu0 %v2176
      %2495 = vmatprep.mubr.bf16.mxu0 %v2048
      %2496 = vmatmul.mubr.bf16.gmra.mrb[0].mxu0 %v2047
      %v2497 = vpop.f32.mrb[0].mxu0
      %v2498 = vadd.f32 %v2458, %v2497
      %v2499 = vpop.f32.mrb[0].mxu0
      %v2500 = vpop.f32.mrb[0].mxu0
      %v2501 = vpop.f32.mrb[0].mxu0
      %2502 = vdwg.mxu0
      %v2503 = vadd.f32 %v1247, %v2498
      %v2504 = vld [vmem:[%s15] sm:$0x1]
      %v2505 = vld [vmem:[%s16] sm:$0x1]
      %v2506 = vsel %vm575, %v2503, 0.0
      %2507 = vadd.xlane.f32.xlu0 %v2506
      %v2508 = vpop.xlane.xlu0 %2507
      %v2509 = vmul.f32 %v2508, %v1223
      %v2510 = vsub.f32 %v2503, %v2509
      %v2511 = vmul.f32 %v2510, %v2510
      %v2512 = vsel %vm575, %v2511, 0.0
      %2513 = vadd.xlane.f32.xlu0 %v2512
      %v2514 = vpop.xlane.xlu0 %2513
      %v2515 = vmul.f32 %v2514, %v1223
      %v2516 = vadd.f32 %v2515, 1e-05
      %v2517 = vrsqrt.pop %v2516
      %v2518 = vmul.f32 %v2510, %v2517
      %v2520 = vlaneseq
      %v2521 = vshrl.u32 %v2520, 7
      %v2522 = vsub.s32 0, %v2521
      %v2523 = vrot.slane %v2504, %v2522
      %v2525 = vmul.f32 %v2518, %v2523
      %v2527 = vlaneseq
      %v2528 = vshrl.u32 %v2527, 7
      %v2529 = vsub.s32 0, %v2528
      %v2530 = vrot.slane %v2505, %v2529
      %v2532 = vadd.f32 %v2525, %v2530
      %2533 = vst.msk [vmem:[%s543] sm:$0xff] %vm575, %v2532
      %p2534 = scmp.lt.s32.totalorder %s28, 1
      %s2535 = scalar_select %p2534, %s28, 1
      %s2536 = smul.addr %s2535, 8
      %s2537 = scalar_lea.vmem %s17, %s2536
      // Predicated region
      $region89: #{transformer_forward.4} parent=87 // pred_check
        %p2538 = pneg %p408
      $region90: #{transformer_forward.4} parent=87 // pred_check_branch
        %2540 = sbr.rel (%p2538) target = $region92
      $region91: #{transformer_forward.4} parent=87 // pred_region
        _
      $region92: #{transformer_forward.4} parent=87 // pred_fallthru
        _
    $region88: #{transformer_forward.4} parent=5 // pred_fallthru
      _
    %p2541 = scmp.le.s32.totalorder 2, %s23
    // Predicated region
    $region93: #{transformer_forward.4} parent=5 // pred_check
      %p2542 = pneg %p2541
    $region94: #{transformer_forward.4} parent=5 // pred_check_branch
      %2544 = sbr.rel (%p2542) target = $region96
    $region95: #{transformer_forward.4} parent=5 // pred_region
      %s2545 = ssub.s32 %s23, 2
      // Predicated region
      $region97: #{transformer_forward.4} parent=95 // pred_check
        %p2546 = pneg %p414
      $region98: #{transformer_forward.4} parent=95 // pred_check_branch
        %2548 = sbr.rel (%p2546) target = $region100
      $region99: #{transformer_forward.4} parent=95 // pred_region
        %p2549 = scmp.lt.s32.totalorder %s29, 1
        %s2550 = scalar_select %p2549, %s29, 1
        %s2551 = smul.addr %s2550, 8
        %s2552 = scalar_lea.vmem %s17, %s2551
      $region100: #{transformer_forward.4} parent=95 // pred_fallthru
        _
    $region96: #{transformer_forward.4} parent=5 // pred_fallthru
      _
  $region6: #{transformer_forward.4} parent=0 // loop_footer
    %s27 = sadd.s32 1, %s23
  $region7: #{transformer_forward.4} parent=0 // loop_footer_branch
    %22 = sbr.rel target = $region3
  $region8: #{transformer_forward.4} parent=0 // loop_exit
    _

// kernel: transformer_forward.6
$region0: #{transformer_forward.6}
  #allocation0 [shape = 'u32[]', space=smem, size = 0x4, offset = 0x4, fixed_abs, tag = 'smem constant byte address 0x4 - core index']
  #allocation1 [shape = 'u32[144,128]{1,0:T(1,128)}', space=vmem, size = 0x12000, scoped, tag = 'internal scratch']
  %s0 = inlined_call_operand.vmem [shape: f32[16,32], index: 0, kind: input, shape index: {}]
  %s1 = inlined_call_operand.vmem [shape: f32[16,32], index: 1, kind: input, shape index: {}]
  %s2 = inlined_call_operand.vmem [shape: f32[32,32], index: 2, kind: input, shape index: {}]
  %s3 = inlined_call_operand.vmem [shape: f32[1,32], index: 3, kind: input, shape index: {}]
  %s4 = inlined_call_operand.vmem [shape: f32[32,32], index: 4, kind: input, shape index: {}]
  %s5 = inlined_call_operand.vmem [shape: f32[1,32], index: 5, kind: input, shape index: {}]
  %s6 = inlined_call_operand.vmem [shape: f32[32,32], index: 6, kind: input, shape index: {}]
  %s7 = inlined_call_operand.vmem [shape: f32[1,32], index: 7, kind: input, shape index: {}]
  %s8 = inlined_call_operand.vmem [shape: f32[32,32], index: 8, kind: input, shape index: {}]
  %s9 = inlined_call_operand.vmem [shape: f32[1,32], index: 9, kind: input, shape index: {}]
  %s10 = inlined_call_operand.vmem [shape: f32[1,32], index: 10, kind: input, shape index: {}]
  %s11 = inlined_call_operand.vmem [shape: f32[1,32], index: 11, kind: input, shape index: {}]
  %s12 = inlined_call_operand.vmem [shape: f32[32,32], index: 12, kind: input, shape index: {}]
  %s13 = inlined_call_operand.vmem [shape: f32[1,32], index: 13, kind: input, shape index: {}]
  %s14 = inlined_call_operand.vmem [shape: f32[32,32], index: 14, kind: input, shape index: {}]
  %s15 = inlined_call_operand.vmem [shape: f32[1,32], index: 15, kind: input, shape index: {}]
  %s16 = inlined_call_operand.vmem [shape: f32[32,32], index: 16, kind: input, shape index: {}]
  %s17 = inlined_call_operand.vmem [shape: f32[1,32], index: 17, kind: input, shape index: {}]
  %s18 = inlined_call_operand.vmem [shape: f32[32,32], index: 18, kind: input, shape index: {}]
  %s19 = inlined_call_operand.vmem [shape: f32[1,32], index: 19, kind: input, shape index: {}]
  %s20 = inlined_call_operand.vmem [shape: f32[1,32], index: 20, kind: input, shape index: {}]
  %s21 = inlined_call_operand.vmem [shape: f32[1,32], index: 21, kind: input, shape index: {}]
  %s22 = inlined_call_operand.vmem [shape: f32[32,2048], index: 22, kind: input, shape index: {}]
  %s23 = inlined_call_operand.vmem [shape: f32[1,2048], index: 23, kind: input, shape index: {}]
  %s24 = inlined_call_operand.vmem [shape: f32[2048,32], index: 24, kind: input, shape index: {}]
  %s25 = inlined_call_operand.vmem [shape: f32[1,32], index: 25, kind: input, shape index: {}]
  %s26 = inlined_call_operand.vmem [shape: f32[1,32], index: 26, kind: input, shape index: {}]
  %s27 = inlined_call_operand.vmem [shape: f32[1,32], index: 27, kind: input, shape index: {}]
  %s28 = inlined_call_operand.vmem [shape: f32[16,32], index: 28, kind: output, shape index: {}]
  %s29 = sld [smem:[#allocation0]]
  $region145: #{transformer_forward.6} parent=0
    _
  %s31 = ssub.s32 1, %s29
  %s32 = scalar_select 0, %s31, %s29
  loop: start=0, step=1, limit=4
  $region2: #{transformer_forward.6} parent=0 // loop_pre_header
    _
  $region3: #{transformer_forward.6} parent=0 // loop_header
    %s34 = sphi 0, %s38
    %p35 = scmp.ge.s32.totalorder %s34, 4
    %s44 = sphi 0, %s46
    %s47 = sphi 0, %s44
    %s48 = sphi 0, %s47
    %s64 = sphi 0, %s48
    %s70 = sphi 0, %s72
    %s73 = sphi 0, %s70
    %s74 = sphi 0, %s73
    %s90 = sphi 0, %s74
    %s94 = sphi 0, %s94
    %s96 = sphi 0, %s94
    %s97 = sphi 0, %s96
    %s111 = sphi 0, %s97
    %s115 = sphi 0, %s115
    %s117 = sphi 0, %s115
    %s118 = sphi 0, %s117
    %s132 = sphi 0, %s118
    %s136 = sphi 0, %s136
    %s138 = sphi 0, %s136
    %s139 = sphi 0, %s138
    %s153 = sphi 0, %s139
    %s157 = sphi 0, %s157
    %s159 = sphi 0, %s157
    %s160 = sphi 0, %s159
    %s174 = sphi 0, %s160
    %s178 = sphi 0, %s178
    %s180 = sphi 0, %s178
    %s181 = sphi 0, %s180
    %s195 = sphi 0, %s181
    %s199 = sphi 0, %s199
    %s201 = sphi 0, %s199
    %s202 = sphi 0, %s201
    %s216 = sphi 0, %s202
    %s220 = sphi 0, %s220
    %s222 = sphi 0, %s220
    %s223 = sphi 0, %s222
    %s237 = sphi 0, %s223
    %s241 = sphi 0, %s241
    %s243 = sphi 0, %s241
    %s244 = sphi 0, %s243
    %s258 = sphi 0, %s244
    %s262 = sphi 0, %s262
    %s264 = sphi 0, %s262
    %s265 = sphi 0, %s264
    %s279 = sphi 0, %s265
    %s283 = sphi 0, %s283
    %s285 = sphi 0, %s283
    %s286 = sphi 0, %s285
    %s300 = sphi 0, %s286
    %s304 = sphi 0, %s304
    %s306 = sphi 0, %s304
    %s307 = sphi 0, %s306
    %s321 = sphi 0, %s307
    %s325 = sphi 0, %s325
    %s327 = sphi 0, %s325
    %s328 = sphi 0, %s327
    %s342 = sphi 0, %s328
    %s346 = sphi 0, %s346
    %s348 = sphi 0, %s346
    %s349 = sphi 0, %s348
    %s363 = sphi 0, %s349
    %s367 = sphi 0, %s367
    %s369 = sphi 0, %s367
    %s370 = sphi 0, %s369
    %s384 = sphi 0, %s370
    %s388 = sphi 0, %s388
    %s390 = sphi 0, %s388
    %s391 = sphi 0, %s390
    %s405 = sphi 0, %s391
    %s409 = sphi 0, %s409
    %s411 = sphi 0, %s409
    %s412 = sphi 0, %s411
    %s426 = sphi 0, %s412
    %s430 = sphi 0, %s430
    %s432 = sphi 0, %s430
    %s433 = sphi 0, %s432
    %s447 = sphi 0, %s433
    %s451 = sphi 0, %s451
    %s453 = sphi 0, %s451
    %s454 = sphi 0, %s453
    %s468 = sphi 0, %s454
    %s472 = sphi 0, %s472
    %s474 = sphi 0, %s472
    %s475 = sphi 0, %s474
    %s489 = sphi 0, %s475
    %s493 = sphi 0, %s493
    %s495 = sphi 0, %s493
    %s496 = sphi 0, %s495
    %s510 = sphi 0, %s496
    %s514 = sphi 0, %s514
    %s516 = sphi 0, %s514
    %s517 = sphi 0, %s516
    %s531 = sphi 0, %s517
    %s535 = sphi 0, %s535
    %s537 = sphi 0, %s535
    %s538 = sphi 0, %s537
    %s552 = sphi 0, %s538
    %s556 = sphi 0, %s556
    %s558 = sphi 0, %s556
    %s559 = sphi 0, %s558
    %s573 = sphi 0, %s559
    %s577 = sphi 0, %s577
    %s579 = sphi 0, %s577
    %s580 = sphi 0, %s579
    %s594 = sphi 0, %s580
    %s598 = sphi 0, %s598
    %s600 = sphi 0, %s598
    %s601 = sphi 0, %s600
    %s615 = sphi 0, %s601
    %s619 = sphi 0, %s619
    %s621 = sphi 0, %s619
    %s622 = sphi 0, %s621
    %s636 = sphi 0, %s622
    %s642 = sphi 0, %s644
    %s645 = sphi 0, %s642
    %s646 = sphi 0, %s645
    %s662 = sphi 0, %s646
  $region4: #{transformer_forward.6} parent=0 // loop_header_branch
    %37 = sbr.rel (%p35) target = $region8
  $region5: #{transformer_forward.6} parent=0 // loop_body
    %s39 = ssub.s32 %s34, 1
    %s40 = ssub.s32 %s34, 2
    %s41 = sadd.s32 %s34, 1
    %s42 = ssub.s32 %s34, %s41
    %p43 = scmp.eq.s32.totalorder %s42, 0
    %s45 = sadd.s32 %s44, 1
    %s46 = scalar_select %p43, %s44, %s45
    %p49 = pneg %p43
    %p50 = scmp.eq.s32.totalorder %s34, 1
    %p51 = por %p49, %p50
    %p52 = scmp.ne.s32.totalorder %s44, %s47
    %p53 = scmp.eq.s32.totalorder %s34, 0
    %p54 = por %p52, %p53
    %p55 = scmp.ne.s32.totalorder %s44, %s47
    %p56 = scmp.eq.s32.totalorder %s39, 1
    %p57 = por %p55, %p56
    %p58 = scmp.ne.s32.totalorder %s47, %s48
    %p59 = scmp.eq.s32.totalorder %s39, 0
    %p60 = por %p58, %p59
    %p61 = scmp.ne.s32.totalorder %s47, %s48
    %p62 = scmp.eq.s32.totalorder %s40, 1
    %p63 = por %p61, %p62
    %p65 = scmp.ne.s32.totalorder %s48, %s64
    %p66 = scmp.eq.s32.totalorder %s40, 0
    %p67 = por %p65, %p66
    %s68 = ssub.s32 %s34, %s41
    %p69 = scmp.eq.s32.totalorder %s68, 0
    %s71 = sadd.s32 %s70, 1
    %s72 = scalar_select %p69, %s70, %s71
    %p75 = pneg %p69
    %p76 = scmp.eq.s32.totalorder %s34, 1
    %p77 = por %p75, %p76
    %p78 = scmp.ne.s32.totalorder %s70, %s73
    %p79 = scmp.eq.s32.totalorder %s34, 0
    %p80 = por %p78, %p79
    %p81 = scmp.ne.s32.totalorder %s70, %s73
    %p82 = scmp.eq.s32.totalorder %s39, 1
    %p83 = por %p81, %p82
    %p84 = scmp.ne.s32.totalorder %s73, %s74
    %p85 = scmp.eq.s32.totalorder %s39, 0
    %p86 = por %p84, %p85
    %p87 = scmp.ne.s32.totalorder %s73, %s74
    %p88 = scmp.eq.s32.totalorder %s40, 1
    %p89 = por %p87, %p88
    %p91 = scmp.ne.s32.totalorder %s74, %s90
    %p92 = scmp.eq.s32.totalorder %s40, 0
    %p93 = por %p91, %p92
    %s95 = sadd.s32 %s94, 1
    %p98 = scmp.eq.s32.totalorder %s34, 1
    %p99 = scmp.ne.s32.totalorder %s94, %s96
    %p100 = scmp.eq.s32.totalorder %s34, 0
    %p101 = por %p99, %p100
    %p102 = scmp.ne.s32.totalorder %s94, %s96
    %p103 = scmp.eq.s32.totalorder %s39, 1
    %p104 = por %p102, %p103
    %p105 = scmp.ne.s32.totalorder %s96, %s97
    %p106 = scmp.eq.s32.totalorder %s39, 0
    %p107 = por %p105, %p106
    %p108 = scmp.ne.s32.totalorder %s96, %s97
    %p109 = scmp.eq.s32.totalorder %s40, 1
    %p110 = por %p108, %p109
    %p112 = scmp.ne.s32.totalorder %s97, %s111
    %p113 = scmp.eq.s32.totalorder %s40, 0
    %p114 = por %p112, %p113
    %s116 = sadd.s32 %s115, 1
    %p119 = scmp.eq.s32.totalorder %s34, 1
    %p120 = scmp.ne.s32.totalorder %s115, %s117
    %p121 = scmp.eq.s32.totalorder %s34, 0
    %p122 = por %p120, %p121
    %p123 = scmp.ne.s32.totalorder %s115, %s117
    %p124 = scmp.eq.s32.totalorder %s39, 1
    %p125 = por %p123, %p124
    %p126 = scmp.ne.s32.totalorder %s117, %s118
    %p127 = scmp.eq.s32.totalorder %s39, 0
    %p128 = por %p126, %p127
    %p129 = scmp.ne.s32.totalorder %s117, %s118
    %p130 = scmp.eq.s32.totalorder %s40, 1
    %p131 = por %p129, %p130
    %p133 = scmp.ne.s32.totalorder %s118, %s132
    %p134 = scmp.eq.s32.totalorder %s40, 0
    %p135 = por %p133, %p134
    %s137 = sadd.s32 %s136, 1
    %p140 = scmp.eq.s32.totalorder %s34, 1
    %p141 = scmp.ne.s32.totalorder %s136, %s138
    %p142 = scmp.eq.s32.totalorder %s34, 0
    %p143 = por %p141, %p142
    %p144 = scmp.ne.s32.totalorder %s136, %s138
    %p145 = scmp.eq.s32.totalorder %s39, 1
    %p146 = por %p144, %p145
    %p147 = scmp.ne.s32.totalorder %s138, %s139
    %p148 = scmp.eq.s32.totalorder %s39, 0
    %p149 = por %p147, %p148
    %p150 = scmp.ne.s32.totalorder %s138, %s139
    %p151 = scmp.eq.s32.totalorder %s40, 1
    %p152 = por %p150, %p151
    %p154 = scmp.ne.s32.totalorder %s139, %s153
    %p155 = scmp.eq.s32.totalorder %s40, 0
    %p156 = por %p154, %p155
    %s158 = sadd.s32 %s157, 1
    %p161 = scmp.eq.s32.totalorder %s34, 1
    %p162 = scmp.ne.s32.totalorder %s157, %s159
    %p163 = scmp.eq.s32.totalorder %s34, 0
    %p164 = por %p162, %p163
    %p165 = scmp.ne.s32.totalorder %s157, %s159
    %p166 = scmp.eq.s32.totalorder %s39, 1
    %p167 = por %p165, %p166
    %p168 = scmp.ne.s32.totalorder %s159, %s160
    %p169 = scmp.eq.s32.totalorder %s39, 0
    %p170 = por %p168, %p169
    %p171 = scmp.ne.s32.totalorder %s159, %s160
    %p172 = scmp.eq.s32.totalorder %s40, 1
    %p173 = por %p171, %p172
    %p175 = scmp.ne.s32.totalorder %s160, %s174
    %p176 = scmp.eq.s32.totalorder %s40, 0
    %p177 = por %p175, %p176
    %s179 = sadd.s32 %s178, 1
    %p182 = scmp.eq.s32.totalorder %s34, 1
    %p183 = scmp.ne.s32.totalorder %s178, %s180
    %p184 = scmp.eq.s32.totalorder %s34, 0
    %p185 = por %p183, %p184
    %p186 = scmp.ne.s32.totalorder %s178, %s180
    %p187 = scmp.eq.s32.totalorder %s39, 1
    %p188 = por %p186, %p187
    %p189 = scmp.ne.s32.totalorder %s180, %s181
    %p190 = scmp.eq.s32.totalorder %s39, 0
    %p191 = por %p189, %p190
    %p192 = scmp.ne.s32.totalorder %s180, %s181
    %p193 = scmp.eq.s32.totalorder %s40, 1
    %p194 = por %p192, %p193
    %p196 = scmp.ne.s32.totalorder %s181, %s195
    %p197 = scmp.eq.s32.totalorder %s40, 0
    %p198 = por %p196, %p197
    %s200 = sadd.s32 %s199, 1
    %p203 = scmp.eq.s32.totalorder %s34, 1
    %p204 = scmp.ne.s32.totalorder %s199, %s201
    %p205 = scmp.eq.s32.totalorder %s34, 0
    %p206 = por %p204, %p205
    %p207 = scmp.ne.s32.totalorder %s199, %s201
    %p208 = scmp.eq.s32.totalorder %s39, 1
    %p209 = por %p207, %p208
    %p210 = scmp.ne.s32.totalorder %s201, %s202
    %p211 = scmp.eq.s32.totalorder %s39, 0
    %p212 = por %p210, %p211
    %p213 = scmp.ne.s32.totalorder %s201, %s202
    %p214 = scmp.eq.s32.totalorder %s40, 1
    %p215 = por %p213, %p214
    %p217 = scmp.ne.s32.totalorder %s202, %s216
    %p218 = scmp.eq.s32.totalorder %s40, 0
    %p219 = por %p217, %p218
    %s221 = sadd.s32 %s220, 1
    %p224 = scmp.eq.s32.totalorder %s34, 1
    %p225 = scmp.ne.s32.totalorder %s220, %s222
    %p226 = scmp.eq.s32.totalorder %s34, 0
    %p227 = por %p225, %p226
    %p228 = scmp.ne.s32.totalorder %s220, %s222
    %p229 = scmp.eq.s32.totalorder %s39, 1
    %p230 = por %p228, %p229
    %p231 = scmp.ne.s32.totalorder %s222, %s223
    %p232 = scmp.eq.s32.totalorder %s39, 0
    %p233 = por %p231, %p232
    %p234 = scmp.ne.s32.totalorder %s222, %s223
    %p235 = scmp.eq.s32.totalorder %s40, 1
    %p236 = por %p234, %p235
    %p238 = scmp.ne.s32.totalorder %s223, %s237
    %p239 = scmp.eq.s32.totalorder %s40, 0
    %p240 = por %p238, %p239
    %s242 = sadd.s32 %s241, 1
    %p245 = scmp.eq.s32.totalorder %s34, 1
    %p246 = scmp.ne.s32.totalorder %s241, %s243
    %p247 = scmp.eq.s32.totalorder %s34, 0
    %p248 = por %p246, %p247
    %p249 = scmp.ne.s32.totalorder %s241, %s243
    %p250 = scmp.eq.s32.totalorder %s39, 1
    %p251 = por %p249, %p250
    %p252 = scmp.ne.s32.totalorder %s243, %s244
    %p253 = scmp.eq.s32.totalorder %s39, 0
    %p254 = por %p252, %p253
    %p255 = scmp.ne.s32.totalorder %s243, %s244
    %p256 = scmp.eq.s32.totalorder %s40, 1
    %p257 = por %p255, %p256
    %p259 = scmp.ne.s32.totalorder %s244, %s258
    %p260 = scmp.eq.s32.totalorder %s40, 0
    %p261 = por %p259, %p260
    %s263 = sadd.s32 %s262, 1
    %p266 = scmp.eq.s32.totalorder %s34, 1
    %p267 = scmp.ne.s32.totalorder %s262, %s264
    %p268 = scmp.eq.s32.totalorder %s34, 0
    %p269 = por %p267, %p268
    %p270 = scmp.ne.s32.totalorder %s262, %s264
    %p271 = scmp.eq.s32.totalorder %s39, 1
    %p272 = por %p270, %p271
    %p273 = scmp.ne.s32.totalorder %s264, %s265
    %p274 = scmp.eq.s32.totalorder %s39, 0
    %p275 = por %p273, %p274
    %p276 = scmp.ne.s32.totalorder %s264, %s265
    %p277 = scmp.eq.s32.totalorder %s40, 1
    %p278 = por %p276, %p277
    %p280 = scmp.ne.s32.totalorder %s265, %s279
    %p281 = scmp.eq.s32.totalorder %s40, 0
    %p282 = por %p280, %p281
    %s284 = sadd.s32 %s283, 1
    %p287 = scmp.eq.s32.totalorder %s34, 1
    %p288 = scmp.ne.s32.totalorder %s283, %s285
    %p289 = scmp.eq.s32.totalorder %s34, 0
    %p290 = por %p288, %p289
    %p291 = scmp.ne.s32.totalorder %s283, %s285
    %p292 = scmp.eq.s32.totalorder %s39, 1
    %p293 = por %p291, %p292
    %p294 = scmp.ne.s32.totalorder %s285, %s286
    %p295 = scmp.eq.s32.totalorder %s39, 0
    %p296 = por %p294, %p295
    %p297 = scmp.ne.s32.totalorder %s285, %s286
    %p298 = scmp.eq.s32.totalorder %s40, 1
    %p299 = por %p297, %p298
    %p301 = scmp.ne.s32.totalorder %s286, %s300
    %p302 = scmp.eq.s32.totalorder %s40, 0
    %p303 = por %p301, %p302
    %s305 = sadd.s32 %s304, 1
    %p308 = scmp.eq.s32.totalorder %s34, 1
    %p309 = scmp.ne.s32.totalorder %s304, %s306
    %p310 = scmp.eq.s32.totalorder %s34, 0
    %p311 = por %p309, %p310
    %p312 = scmp.ne.s32.totalorder %s304, %s306
    %p313 = scmp.eq.s32.totalorder %s39, 1
    %p314 = por %p312, %p313
    %p315 = scmp.ne.s32.totalorder %s306, %s307
    %p316 = scmp.eq.s32.totalorder %s39, 0
    %p317 = por %p315, %p316
    %p318 = scmp.ne.s32.totalorder %s306, %s307
    %p319 = scmp.eq.s32.totalorder %s40, 1
    %p320 = por %p318, %p319
    %p322 = scmp.ne.s32.totalorder %s307, %s321
    %p323 = scmp.eq.s32.totalorder %s40, 0
    %p324 = por %p322, %p323
    %s326 = sadd.s32 %s325, 1
    %p329 = scmp.eq.s32.totalorder %s34, 1
    %p330 = scmp.ne.s32.totalorder %s325, %s327
    %p331 = scmp.eq.s32.totalorder %s34, 0
    %p332 = por %p330, %p331
    %p333 = scmp.ne.s32.totalorder %s325, %s327
    %p334 = scmp.eq.s32.totalorder %s39, 1
    %p335 = por %p333, %p334
    %p336 = scmp.ne.s32.totalorder %s327, %s328
    %p337 = scmp.eq.s32.totalorder %s39, 0
    %p338 = por %p336, %p337
    %p339 = scmp.ne.s32.totalorder %s327, %s328
    %p340 = scmp.eq.s32.totalorder %s40, 1
    %p341 = por %p339, %p340
    %p343 = scmp.ne.s32.totalorder %s328, %s342
    %p344 = scmp.eq.s32.totalorder %s40, 0
    %p345 = por %p343, %p344
    %s347 = sadd.s32 %s346, 1
    %p350 = scmp.eq.s32.totalorder %s34, 1
    %p351 = scmp.ne.s32.totalorder %s346, %s348
    %p352 = scmp.eq.s32.totalorder %s34, 0
    %p353 = por %p351, %p352
    %p354 = scmp.ne.s32.totalorder %s346, %s348
    %p355 = scmp.eq.s32.totalorder %s39, 1
    %p356 = por %p354, %p355
    %p357 = scmp.ne.s32.totalorder %s348, %s349
    %p358 = scmp.eq.s32.totalorder %s39, 0
    %p359 = por %p357, %p358
    %p360 = scmp.ne.s32.totalorder %s348, %s349
    %p361 = scmp.eq.s32.totalorder %s40, 1
    %p362 = por %p360, %p361
    %p364 = scmp.ne.s32.totalorder %s349, %s363
    %p365 = scmp.eq.s32.totalorder %s40, 0
    %p366 = por %p364, %p365
    %s368 = sadd.s32 %s367, 1
    %p371 = scmp.eq.s32.totalorder %s34, 1
    %p372 = scmp.ne.s32.totalorder %s367, %s369
    %p373 = scmp.eq.s32.totalorder %s34, 0
    %p374 = por %p372, %p373
    %p375 = scmp.ne.s32.totalorder %s367, %s369
    %p376 = scmp.eq.s32.totalorder %s39, 1
    %p377 = por %p375, %p376
    %p378 = scmp.ne.s32.totalorder %s369, %s370
    %p379 = scmp.eq.s32.totalorder %s39, 0
    %p380 = por %p378, %p379
    %p381 = scmp.ne.s32.totalorder %s369, %s370
    %p382 = scmp.eq.s32.totalorder %s40, 1
    %p383 = por %p381, %p382
    %p385 = scmp.ne.s32.totalorder %s370, %s384
    %p386 = scmp.eq.s32.totalorder %s40, 0
    %p387 = por %p385, %p386
    %s389 = sadd.s32 %s388, 1
    %p392 = scmp.eq.s32.totalorder %s34, 1
    %p393 = scmp.ne.s32.totalorder %s388, %s390
    %p394 = scmp.eq.s32.totalorder %s34, 0
    %p395 = por %p393, %p394
    %p396 = scmp.ne.s32.totalorder %s388, %s390
    %p397 = scmp.eq.s32.totalorder %s39, 1
    %p398 = por %p396, %p397
    %p399 = scmp.ne.s32.totalorder %s390, %s391
    %p400 = scmp.eq.s32.totalorder %s39, 0
    %p401 = por %p399, %p400
    %p402 = scmp.ne.s32.totalorder %s390, %s391
    %p403 = scmp.eq.s32.totalorder %s40, 1
    %p404 = por %p402, %p403
    %p406 = scmp.ne.s32.totalorder %s391, %s405
    %p407 = scmp.eq.s32.totalorder %s40, 0
    %p408 = por %p406, %p407
    %s410 = sadd.s32 %s409, 1
    %p413 = scmp.eq.s32.totalorder %s34, 1
    %p414 = scmp.ne.s32.totalorder %s409, %s411
    %p415 = scmp.eq.s32.totalorder %s34, 0
    %p416 = por %p414, %p415
    %p417 = scmp.ne.s32.totalorder %s409, %s411
    %p418 = scmp.eq.s32.totalorder %s39, 1
    %p419 = por %p417, %p418
    %p420 = scmp.ne.s32.totalorder %s411, %s412
    %p421 = scmp.eq.s32.totalorder %s39, 0
    %p422 = por %p420, %p421
    %p423 = scmp.ne.s32.totalorder %s411, %s412
    %p424 = scmp.eq.s32.totalorder %s40, 1
    %p425 = por %p423, %p424
    %p427 = scmp.ne.s32.totalorder %s412, %s426
    %p428 = scmp.eq.s32.totalorder %s40, 0
    %p429 = por %p427, %p428
    %s431 = sadd.s32 %s430, 1
    %p434 = scmp.eq.s32.totalorder %s34, 1
    %p435 = scmp.ne.s32.totalorder %s430, %s432
    %p436 = scmp.eq.s32.totalorder %s34, 0
    %p437 = por %p435, %p436
    %p438 = scmp.ne.s32.totalorder %s430, %s432
    %p439 = scmp.eq.s32.totalorder %s39, 1
    %p440 = por %p438, %p439
    %p441 = scmp.ne.s32.totalorder %s432, %s433
    %p442 = scmp.eq.s32.totalorder %s39, 0
    %p443 = por %p441, %p442
    %p444 = scmp.ne.s32.totalorder %s432, %s433
    %p445 = scmp.eq.s32.totalorder %s40, 1
    %p446 = por %p444, %p445
    %p448 = scmp.ne.s32.totalorder %s433, %s447
    %p449 = scmp.eq.s32.totalorder %s40, 0
    %p450 = por %p448, %p449
    %s452 = sadd.s32 %s451, 1
    %p455 = scmp.eq.s32.totalorder %s34, 1
    %p456 = scmp.ne.s32.totalorder %s451, %s453
    %p457 = scmp.eq.s32.totalorder %s34, 0
    %p458 = por %p456, %p457
    %p459 = scmp.ne.s32.totalorder %s451, %s453
    %p460 = scmp.eq.s32.totalorder %s39, 1
    %p461 = por %p459, %p460
    %p462 = scmp.ne.s32.totalorder %s453, %s454
    %p463 = scmp.eq.s32.totalorder %s39, 0
    %p464 = por %p462, %p463
    %p465 = scmp.ne.s32.totalorder %s453, %s454
    %p466 = scmp.eq.s32.totalorder %s40, 1
    %p467 = por %p465, %p466
    %p469 = scmp.ne.s32.totalorder %s454, %s468
    %p470 = scmp.eq.s32.totalorder %s40, 0
    %p471 = por %p469, %p470
    %s473 = sadd.s32 %s472, 1
    %p476 = scmp.eq.s32.totalorder %s34, 1
    %p477 = scmp.ne.s32.totalorder %s472, %s474
    %p478 = scmp.eq.s32.totalorder %s34, 0
    %p479 = por %p477, %p478
    %p480 = scmp.ne.s32.totalorder %s472, %s474
    %p481 = scmp.eq.s32.totalorder %s39, 1
    %p482 = por %p480, %p481
    %p483 = scmp.ne.s32.totalorder %s474, %s475
    %p484 = scmp.eq.s32.totalorder %s39, 0
    %p485 = por %p483, %p484
    %p486 = scmp.ne.s32.totalorder %s474, %s475
    %p487 = scmp.eq.s32.totalorder %s40, 1
    %p488 = por %p486, %p487
    %p490 = scmp.ne.s32.totalorder %s475, %s489
    %p491 = scmp.eq.s32.totalorder %s40, 0
    %p492 = por %p490, %p491
    %s494 = sadd.s32 %s493, 1
    %p497 = scmp.eq.s32.totalorder %s34, 1
    %p498 = scmp.ne.s32.totalorder %s493, %s495
    %p499 = scmp.eq.s32.totalorder %s34, 0
    %p500 = por %p498, %p499
    %p501 = scmp.ne.s32.totalorder %s493, %s495
    %p502 = scmp.eq.s32.totalorder %s39, 1
    %p503 = por %p501, %p502
    %p504 = scmp.ne.s32.totalorder %s495, %s496
    %p505 = scmp.eq.s32.totalorder %s39, 0
    %p506 = por %p504, %p505
    %p507 = scmp.ne.s32.totalorder %s495, %s496
    %p508 = scmp.eq.s32.totalorder %s40, 1
    %p509 = por %p507, %p508
    %p511 = scmp.ne.s32.totalorder %s496, %s510
    %p512 = scmp.eq.s32.totalorder %s40, 0
    %p513 = por %p511, %p512
    %s515 = sadd.s32 %s514, 1
    %p518 = scmp.eq.s32.totalorder %s34, 1
    %p519 = scmp.ne.s32.totalorder %s514, %s516
    %p520 = scmp.eq.s32.totalorder %s34, 0
    %p521 = por %p519, %p520
    %p522 = scmp.ne.s32.totalorder %s514, %s516
    %p523 = scmp.eq.s32.totalorder %s39, 1
    %p524 = por %p522, %p523
    %p525 = scmp.ne.s32.totalorder %s516, %s517
    %p526 = scmp.eq.s32.totalorder %s39, 0
    %p527 = por %p525, %p526
    %p528 = scmp.ne.s32.totalorder %s516, %s517
    %p529 = scmp.eq.s32.totalorder %s40, 1
    %p530 = por %p528, %p529
    %p532 = scmp.ne.s32.totalorder %s517, %s531
    %p533 = scmp.eq.s32.totalorder %s40, 0
    %p534 = por %p532, %p533
    %s536 = sadd.s32 %s535, 1
    %p539 = scmp.eq.s32.totalorder %s34, 1
    %p540 = scmp.ne.s32.totalorder %s535, %s537
    %p541 = scmp.eq.s32.totalorder %s34, 0
    %p542 = por %p540, %p541
    %p543 = scmp.ne.s32.totalorder %s535, %s537
    %p544 = scmp.eq.s32.totalorder %s39, 1
    %p545 = por %p543, %p544
    %p546 = scmp.ne.s32.totalorder %s537, %s538
    %p547 = scmp.eq.s32.totalorder %s39, 0
    %p548 = por %p546, %p547
    %p549 = scmp.ne.s32.totalorder %s537, %s538
    %p550 = scmp.eq.s32.totalorder %s40, 1
    %p551 = por %p549, %p550
    %p553 = scmp.ne.s32.totalorder %s538, %s552
    %p554 = scmp.eq.s32.totalorder %s40, 0
    %p555 = por %p553, %p554
    %s557 = sadd.s32 %s556, 1
    %p560 = scmp.eq.s32.totalorder %s34, 1
    %p561 = scmp.ne.s32.totalorder %s556, %s558
    %p562 = scmp.eq.s32.totalorder %s34, 0
    %p563 = por %p561, %p562
    %p564 = scmp.ne.s32.totalorder %s556, %s558
    %p565 = scmp.eq.s32.totalorder %s39, 1
    %p566 = por %p564, %p565
    %p567 = scmp.ne.s32.totalorder %s558, %s559
    %p568 = scmp.eq.s32.totalorder %s39, 0
    %p569 = por %p567, %p568
    %p570 = scmp.ne.s32.totalorder %s558, %s559
    %p571 = scmp.eq.s32.totalorder %s40, 1
    %p572 = por %p570, %p571
    %p574 = scmp.ne.s32.totalorder %s559, %s573
    %p575 = scmp.eq.s32.totalorder %s40, 0
    %p576 = por %p574, %p575
    %s578 = sadd.s32 %s577, 1
    %p581 = scmp.eq.s32.totalorder %s34, 1
    %p582 = scmp.ne.s32.totalorder %s577, %s579
    %p583 = scmp.eq.s32.totalorder %s34, 0
    %p584 = por %p582, %p583
    %p585 = scmp.ne.s32.totalorder %s577, %s579
    %p586 = scmp.eq.s32.totalorder %s39, 1
    %p587 = por %p585, %p586
    %p588 = scmp.ne.s32.totalorder %s579, %s580
    %p589 = scmp.eq.s32.totalorder %s39, 0
    %p590 = por %p588, %p589
    %p591 = scmp.ne.s32.totalorder %s579, %s580
    %p592 = scmp.eq.s32.totalorder %s40, 1
    %p593 = por %p591, %p592
    %p595 = scmp.ne.s32.totalorder %s580, %s594
    %p596 = scmp.eq.s32.totalorder %s40, 0
    %p597 = por %p595, %p596
    %s599 = sadd.s32 %s598, 1
    %p602 = scmp.eq.s32.totalorder %s34, 1
    %p603 = scmp.ne.s32.totalorder %s598, %s600
    %p604 = scmp.eq.s32.totalorder %s34, 0
    %p605 = por %p603, %p604
    %p606 = scmp.ne.s32.totalorder %s598, %s600
    %p607 = scmp.eq.s32.totalorder %s39, 1
    %p608 = por %p606, %p607
    %p609 = scmp.ne.s32.totalorder %s600, %s601
    %p610 = scmp.eq.s32.totalorder %s39, 0
    %p611 = por %p609, %p610
    %p612 = scmp.ne.s32.totalorder %s600, %s601
    %p613 = scmp.eq.s32.totalorder %s40, 1
    %p614 = por %p612, %p613
    %p616 = scmp.ne.s32.totalorder %s601, %s615
    %p617 = scmp.eq.s32.totalorder %s40, 0
    %p618 = por %p616, %p617
    %s620 = sadd.s32 %s619, 1
    %p623 = scmp.eq.s32.totalorder %s34, 1
    %p624 = scmp.ne.s32.totalorder %s619, %s621
    %p625 = scmp.eq.s32.totalorder %s34, 0
    %p626 = por %p624, %p625
    %p627 = scmp.ne.s32.totalorder %s619, %s621
    %p628 = scmp.eq.s32.totalorder %s39, 1
    %p629 = por %p627, %p628
    %p630 = scmp.ne.s32.totalorder %s621, %s622
    %p631 = scmp.eq.s32.totalorder %s39, 0
    %p632 = por %p630, %p631
    %p633 = scmp.ne.s32.totalorder %s621, %s622
    %p634 = scmp.eq.s32.totalorder %s40, 1
    %p635 = por %p633, %p634
    %p637 = scmp.ne.s32.totalorder %s622, %s636
    %p638 = scmp.eq.s32.totalorder %s40, 0
    %p639 = por %p637, %p638
    %s640 = ssub.s32 %s34, %s41
    %p641 = scmp.eq.s32.totalorder %s640, 0
    %s643 = sadd.s32 %s642, 1
    %s644 = scalar_select %p641, %s642, %s643
    %p647 = pneg %p641
    %p648 = scmp.eq.s32.totalorder %s34, 1
    %p649 = por %p647, %p648
    %p650 = scmp.ne.s32.totalorder %s642, %s645
    %p651 = scmp.eq.s32.totalorder %s34, 0
    %p652 = por %p650, %p651
    %p653 = scmp.ne.s32.totalorder %s642, %s645
    %p654 = scmp.eq.s32.totalorder %s39, 1
    %p655 = por %p653, %p654
    %p656 = scmp.ne.s32.totalorder %s645, %s646
    %p657 = scmp.eq.s32.totalorder %s39, 0
    %p658 = por %p656, %p657
    %p659 = scmp.ne.s32.totalorder %s645, %s646
    %p660 = scmp.eq.s32.totalorder %s40, 1
    %p661 = por %p659, %p660
    %p663 = scmp.ne.s32.totalorder %s646, %s662
    %p664 = scmp.eq.s32.totalorder %s40, 0
    %p665 = por %p663, %p664
    %p666 = scmp.le.s32.totalorder 1, %s34
    %p667 = scmp.lt.s32.totalorder %s34, 3
    %p668 = pnand %p666, %p667
    %p669 = pneg %p668
    // Predicated region
    $region9: #{transformer_forward.6} parent=5 // pred_check
      _
    $region10: #{transformer_forward.6} parent=5 // pred_check_branch
      %671 = sbr.rel (%p668) target = $region12
    $region11: #{transformer_forward.6} parent=5 // pred_region
      %s672 = ssub.s32 %s34, 1
      // Predicated region
      $region13: #{transformer_forward.6} parent=11 // pred_check
        %p673 = pneg %p107
      $region14: #{transformer_forward.6} parent=11 // pred_check_branch
        %675 = sbr.rel (%p673) target = $region16
      $region15: #{transformer_forward.6} parent=11 // pred_region
        _
      $region16: #{transformer_forward.6} parent=11 // pred_fallthru
        _
      // Predicated region
      $region17: #{transformer_forward.6} parent=11 // pred_check
        %p676 = pneg %p128
      $region18: #{transformer_forward.6} parent=11 // pred_check_branch
        %678 = sbr.rel (%p676) target = $region20
      $region19: #{transformer_forward.6} parent=11 // pred_region
        _
      $region20: #{transformer_forward.6} parent=11 // pred_fallthru
        _
      // Predicated region
      $region21: #{transformer_forward.6} parent=11 // pred_check
        %p679 = pneg %p149
      $region22: #{transformer_forward.6} parent=11 // pred_check_branch
        %681 = sbr.rel (%p679) target = $region24
      $region23: #{transformer_forward.6} parent=11 // pred_region
        _
      $region24: #{transformer_forward.6} parent=11 // pred_fallthru
        _
      // Predicated region
      $region25: #{transformer_forward.6} parent=11 // pred_check
        %p682 = pneg %p170
      $region26: #{transformer_forward.6} parent=11 // pred_check_branch
        %684 = sbr.rel (%p682) target = $region28
      $region27: #{transformer_forward.6} parent=11 // pred_region
        _
      $region28: #{transformer_forward.6} parent=11 // pred_fallthru
        _
      // Predicated region
      $region29: #{transformer_forward.6} parent=11 // pred_check
        %p685 = pneg %p191
      $region30: #{transformer_forward.6} parent=11 // pred_check_branch
        %687 = sbr.rel (%p685) target = $region32
      $region31: #{transformer_forward.6} parent=11 // pred_region
        _
      $region32: #{transformer_forward.6} parent=11 // pred_fallthru
        _
      // Predicated region
      $region33: #{transformer_forward.6} parent=11 // pred_check
        %p688 = pneg %p212
      $region34: #{transformer_forward.6} parent=11 // pred_check_branch
        %690 = sbr.rel (%p688) target = $region36
      $region35: #{transformer_forward.6} parent=11 // pred_region
        _
      $region36: #{transformer_forward.6} parent=11 // pred_fallthru
        _
      // Predicated region
      $region37: #{transformer_forward.6} parent=11 // pred_check
        %p691 = pneg %p233
      $region38: #{transformer_forward.6} parent=11 // pred_check_branch
        %693 = sbr.rel (%p691) target = $region40
      $region39: #{transformer_forward.6} parent=11 // pred_region
        _
      $region40: #{transformer_forward.6} parent=11 // pred_fallthru
        _
      // Predicated region
      $region41: #{transformer_forward.6} parent=11 // pred_check
        %p694 = pneg %p254
      $region42: #{transformer_forward.6} parent=11 // pred_check_branch
        %696 = sbr.rel (%p694) target = $region44
      $region43: #{transformer_forward.6} parent=11 // pred_region
        _
      $region44: #{transformer_forward.6} parent=11 // pred_fallthru
        _
      // Predicated region
      $region45: #{transformer_forward.6} parent=11 // pred_check
        %p697 = pneg %p275
      $region46: #{transformer_forward.6} parent=11 // pred_check_branch
        %699 = sbr.rel (%p697) target = $region48
      $region47: #{transformer_forward.6} parent=11 // pred_region
        _
      $region48: #{transformer_forward.6} parent=11 // pred_fallthru
        _
      // Predicated region
      $region49: #{transformer_forward.6} parent=11 // pred_check
        %p700 = pneg %p296
      $region50: #{transformer_forward.6} parent=11 // pred_check_branch
        %702 = sbr.rel (%p700) target = $region52
      $region51: #{transformer_forward.6} parent=11 // pred_region
        _
      $region52: #{transformer_forward.6} parent=11 // pred_fallthru
        _
      // Predicated region
      $region53: #{transformer_forward.6} parent=11 // pred_check
        %p703 = pneg %p317
      $region54: #{transformer_forward.6} parent=11 // pred_check_branch
        %705 = sbr.rel (%p703) target = $region56
      $region55: #{transformer_forward.6} parent=11 // pred_region
        _
      $region56: #{transformer_forward.6} parent=11 // pred_fallthru
        _
      // Predicated region
      $region57: #{transformer_forward.6} parent=11 // pred_check
        %p706 = pneg %p338
      $region58: #{transformer_forward.6} parent=11 // pred_check_branch
        %708 = sbr.rel (%p706) target = $region60
      $region59: #{transformer_forward.6} parent=11 // pred_region
        _
      $region60: #{transformer_forward.6} parent=11 // pred_fallthru
        _
      // Predicated region
      $region61: #{transformer_forward.6} parent=11 // pred_check
        %p709 = pneg %p359
      $region62: #{transformer_forward.6} parent=11 // pred_check_branch
        %711 = sbr.rel (%p709) target = $region64
      $region63: #{transformer_forward.6} parent=11 // pred_region
        _
      $region64: #{transformer_forward.6} parent=11 // pred_fallthru
        _
      // Predicated region
      $region65: #{transformer_forward.6} parent=11 // pred_check
        %p712 = pneg %p380
      $region66: #{transformer_forward.6} parent=11 // pred_check_branch
        %714 = sbr.rel (%p712) target = $region68
      $region67: #{transformer_forward.6} parent=11 // pred_region
        _
      $region68: #{transformer_forward.6} parent=11 // pred_fallthru
        _
      // Predicated region
      $region69: #{transformer_forward.6} parent=11 // pred_check
        %p715 = pneg %p401
      $region70: #{transformer_forward.6} parent=11 // pred_check_branch
        %717 = sbr.rel (%p715) target = $region72
      $region71: #{transformer_forward.6} parent=11 // pred_region
        _
      $region72: #{transformer_forward.6} parent=11 // pred_fallthru
        _
      // Predicated region
      $region73: #{transformer_forward.6} parent=11 // pred_check
        %p718 = pneg %p422
      $region74: #{transformer_forward.6} parent=11 // pred_check_branch
        %720 = sbr.rel (%p718) target = $region76
      $region75: #{transformer_forward.6} parent=11 // pred_region
        _
      $region76: #{transformer_forward.6} parent=11 // pred_fallthru
        _
      // Predicated region
      $region77: #{transformer_forward.6} parent=11 // pred_check
        %p721 = pneg %p443
      $region78: #{transformer_forward.6} parent=11 // pred_check_branch
        %723 = sbr.rel (%p721) target = $region80
      $region79: #{transformer_forward.6} parent=11 // pred_region
        _
      $region80: #{transformer_forward.6} parent=11 // pred_fallthru
        _
      // Predicated region
      $region81: #{transformer_forward.6} parent=11 // pred_check
        %p724 = pneg %p464
      $region82: #{transformer_forward.6} parent=11 // pred_check_branch
        %726 = sbr.rel (%p724) target = $region84
      $region83: #{transformer_forward.6} parent=11 // pred_region
        _
      $region84: #{transformer_forward.6} parent=11 // pred_fallthru
        _
      // Predicated region
      $region85: #{transformer_forward.6} parent=11 // pred_check
        %p727 = pneg %p485
      $region86: #{transformer_forward.6} parent=11 // pred_check_branch
        %729 = sbr.rel (%p727) target = $region88
      $region87: #{transformer_forward.6} parent=11 // pred_region
        _
      $region88: #{transformer_forward.6} parent=11 // pred_fallthru
        _
      // Predicated region
      $region89: #{transformer_forward.6} parent=11 // pred_check
        %p730 = pneg %p506
      $region90: #{transformer_forward.6} parent=11 // pred_check_branch
        %732 = sbr.rel (%p730) target = $region92
      $region91: #{transformer_forward.6} parent=11 // pred_region
        _
      $region92: #{transformer_forward.6} parent=11 // pred_fallthru
        _
      // Predicated region
      $region93: #{transformer_forward.6} parent=11 // pred_check
        %p733 = pneg %p527
      $region94: #{transformer_forward.6} parent=11 // pred_check_branch
        %735 = sbr.rel (%p733) target = $region96
      $region95: #{transformer_forward.6} parent=11 // pred_region
        _
      $region96: #{transformer_forward.6} parent=11 // pred_fallthru
        _
      // Predicated region
      $region97: #{transformer_forward.6} parent=11 // pred_check
        %p736 = pneg %p548
      $region98: #{transformer_forward.6} parent=11 // pred_check_branch
        %738 = sbr.rel (%p736) target = $region100
      $region99: #{transformer_forward.6} parent=11 // pred_region
        _
      $region100: #{transformer_forward.6} parent=11 // pred_fallthru
        _
      // Predicated region
      $region101: #{transformer_forward.6} parent=11 // pred_check
        %p739 = pneg %p569
      $region102: #{transformer_forward.6} parent=11 // pred_check_branch
        %741 = sbr.rel (%p739) target = $region104
      $region103: #{transformer_forward.6} parent=11 // pred_region
        _
      $region104: #{transformer_forward.6} parent=11 // pred_fallthru
        _
      // Predicated region
      $region105: #{transformer_forward.6} parent=11 // pred_check
        %p742 = pneg %p590
      $region106: #{transformer_forward.6} parent=11 // pred_check_branch
        %744 = sbr.rel (%p742) target = $region108
      $region107: #{transformer_forward.6} parent=11 // pred_region
        _
      $region108: #{transformer_forward.6} parent=11 // pred_fallthru
        _
      // Predicated region
      $region109: #{transformer_forward.6} parent=11 // pred_check
        %p745 = pneg %p611
      $region110: #{transformer_forward.6} parent=11 // pred_check_branch
        %747 = sbr.rel (%p745) target = $region112
      $region111: #{transformer_forward.6} parent=11 // pred_region
        _
      $region112: #{transformer_forward.6} parent=11 // pred_fallthru
        _
      // Predicated region
      $region113: #{transformer_forward.6} parent=11 // pred_check
        %p748 = pneg %p632
      $region114: #{transformer_forward.6} parent=11 // pred_check_branch
        %750 = sbr.rel (%p748) target = $region116
      $region115: #{transformer_forward.6} parent=11 // pred_region
        _
      $region116: #{transformer_forward.6} parent=11 // pred_fallthru
        _
    $region12: #{transformer_forward.6} parent=5 // pred_fallthru
      _
    %p751 = scmp.lt.s32.totalorder %s34, 2
    // Predicated region
    $region117: #{transformer_forward.6} parent=5 // pred_check
      %p752 = pneg %p751
    $region118: #{transformer_forward.6} parent=5 // pred_check_branch
      %754 = sbr.rel (%p752) target = $region120
    $region119: #{transformer_forward.6} parent=5 // pred_region
      // Predicated region
      $region121: #{transformer_forward.6} parent=119 // pred_check
        %p755 = pneg %p54
      $region122: #{transformer_forward.6} parent=119 // pred_check_branch
        %757 = sbr.rel (%p755) target = $region124
      $region123: #{transformer_forward.6} parent=119 // pred_region
        %p758 = scmp.lt.s32.totalorder %s34, 1
        %s759 = scalar_select %p758, %s34, 1
        %s760 = smul.addr %s759, 8
        %s761 = scalar_lea.vmem %s0, %s760
      $region124: #{transformer_forward.6} parent=119 // pred_fallthru
        _
      // Predicated region
      $region125: #{transformer_forward.6} parent=119 // pred_check
        %p762 = pneg %p80
      $region126: #{transformer_forward.6} parent=119 // pred_check_branch
        %764 = sbr.rel (%p762) target = $region128
      $region127: #{transformer_forward.6} parent=119 // pred_region
        %p765 = scmp.lt.s32.totalorder %s34, 1
        %s766 = scalar_select %p765, %s34, 1
        %s767 = smul.addr %s766, 8
        %s768 = scalar_lea.vmem %s1, %s767
      $region128: #{transformer_forward.6} parent=119 // pred_fallthru
        _
    $region120: #{transformer_forward.6} parent=5 // pred_fallthru
      _
    %p769 = scmp.le.s32.totalorder 1, %s34
    %p770 = scmp.lt.s32.totalorder %s34, 3
    %p771 = pnand %p769, %p770
    %p772 = pneg %p771
    // Predicated region
    $region129: #{transformer_forward.6} parent=5 // pred_check
      _
    $region130: #{transformer_forward.6} parent=5 // pred_check_branch
      %774 = sbr.rel (%p771) target = $region132
    $region131: #{transformer_forward.6} parent=5 // pred_region
      %s775 = ssub.s32 %s34, 1
      %p776 = scmp.lt.s32.totalorder %s39, 1
      %s777 = scalar_select %p776, %s39, 1
      %s778 = smul.addr %s777, 8
      %s779 = scalar_lea.vmem %s0, %s778
      %p780 = pneg %p60
      %p781 = pneg %p57
      %p782 = scmp.lt.s32.totalorder %s39, 1
      %s783 = scalar_select %p782, %s39, 1
      %s784 = smul.addr %s783, 8
      %s785 = scalar_lea.vmem %s1, %s784
      %p786 = pneg %p86
      %p787 = pneg %p83
      %p788 = pneg %p107
      %p789 = pneg %p104
      %p790 = pneg %p128
      %p791 = pneg %p125
      %p792 = pneg %p149
      %p793 = pneg %p146
      %p794 = pneg %p170
      %p795 = pneg %p167
      %p796 = pneg %p191
      %p797 = pneg %p188
      %p798 = pneg %p212
      %p799 = pneg %p209
      %p800 = pneg %p233
      %p801 = pneg %p230
      %p802 = pneg %p254
      %p803 = pneg %p251
      %p804 = pneg %p275
      %p805 = pneg %p272
      %p806 = pneg %p296
      %p807 = pneg %p293
      %p808 = pneg %p317
      %p809 = pneg %p314
      %p810 = pneg %p338
      %p811 = pneg %p335
      %p812 = pneg %p359
      %p813 = pneg %p356
      %p814 = pneg %p380
      %p815 = pneg %p377
      %p816 = pneg %p401
      %p817 = pneg %p398
      %p818 = pneg %p422
      %p819 = pneg %p419
      %p820 = pneg %p443
      %p821 = pneg %p440
      %p822 = pneg %p464
      %p823 = pneg %p461
      %p824 = pneg %p485
      %p825 = pneg %p482
      %p826 = pneg %p506
      %p827 = pneg %p503
      %p828 = pneg %p527
      %p829 = pneg %p524
      %p830 = pneg %p548
      %p831 = pneg %p545
      %p832 = pneg %p569
      %p833 = pneg %p566
      %p834 = pneg %p590
      %p835 = pneg %p587
      %p836 = pneg %p611
      %p837 = pneg %p608
      %p838 = pneg %p632
      %p839 = pneg %p629
      %p840 = pneg %p658
      %p841 = pneg %p655
      %p842 = scmp.lt.s32.totalorder %s39, 1
      %s843 = scalar_select %p842, %s39, 1
      %s844 = smul.addr %s843, 8
      %s845 = scalar_lea.vmem %s28, %s844
      %p846 = scmp.lt.s32.totalorder %s39, 1
      %s847 = scalar_select %p846, %s39, 1
      %s848 = smul.addr %s847, 8
      %s849 = scalar_lea.vmem %s0, %s848
      %p850 = scmp.lt.s32.totalorder %s39, 1
      %s851 = scalar_select %p850, %s39, 1
      %s852 = smul.addr %s851, 8
      %s853 = scalar_lea.vmem %s1, %s852
      %p854 = scmp.lt.s32.totalorder %s39, 1
      %s855 = scalar_select %p854, %s39, 1
      %s856 = smul.addr %s855, 8
      %s857 = scalar_lea.vmem %s28, %s856
      %v859 = vld [vmem:[%s849] sm:$0xff]
      %v860 = vld [vmem:[%s853] sm:$0xff]
      %v861 = vld [vmem:[%s2] sm:$0xff]
      %v862 = vld [vmem:[%s2 + $0x8] sm:$0xff]
      %v863 = vld [vmem:[%s2 + $0x10] sm:$0xff]
      %v864 = vld [vmem:[%s2 + $0x18] sm:$0xff]
      %v865 = vld [vmem:[%s3] sm:$0x1]
      %v866 = vld [vmem:[%s4] sm:$0xff]
      %v867 = vld [vmem:[%s4 + $0x8] sm:$0xff]
      %v868 = vld [vmem:[%s4 + $0x10] sm:$0xff]
      %v869 = vld [vmem:[%s4 + $0x18] sm:$0xff]
      %v870 = vld [vmem:[%s5] sm:$0x1]
      %v871 = vld [vmem:[%s6] sm:$0xff]
      %v872 = vld [vmem:[%s6 + $0x8] sm:$0xff]
      %v873 = vld [vmem:[%s6 + $0x10] sm:$0xff]
      %v874 = vld [vmem:[%s6 + $0x18] sm:$0xff]
      %v875 = vld [vmem:[%s7] sm:$0x1]
      %v876 = vld [vmem:[%s8] sm:$0xff]
      %v877 = vld [vmem:[%s8 + $0x8] sm:$0xff]
      %v878 = vld [vmem:[%s8 + $0x10] sm:$0xff]
      %v879 = vld [vmem:[%s8 + $0x18] sm:$0xff]
      %v880 = vld [vmem:[%s9] sm:$0x1]
      %v881 = vpack.c.bf16 %v859, %v859
      %v882 = vpack.c.bf16 %v862, %v861
      %v883 = vpack.c.bf16 %v864, %v863
      %v885 = vlaneseq
      %v886 = vshrl.u32 %v885, 7
      %v887 = vsub.s32 0, %v886
      %v888 = vrot.slane %v865, %v887
      %vm890 = vcmask 261120
      %v892 = vsel %vm890, %v881, 0
      %894 = vmatprep.subr.bf16.mxu0 0
      %895 = vmatpush1.bf16.msra.mxu0 %v882
      %896 = vmatprep.subr.bf16.mxu0 0
      %897 = vmatpush1.bf16.msra.mxu0 %v883
      %898 = vmatprep.subr.bf16.mxu0 0
      %899 = vmatpush1.bf16.msra.mxu0 0
      %900 = vmatprep.subr.bf16.mxu0 0
      %901 = vmatpush1.bf16.msra.mxu0 0
      %902 = vmatprep.subr.bf16.mxu0 0
      %903 = vmatpush1.bf16.msra.mxu0 0
      %904 = vmatprep.subr.bf16.mxu0 0
      %905 = vmatpush1.bf16.msra.mxu0 0
      %906 = vmatprep.subr.bf16.mxu0 0
      %907 = vmatpush1.bf16.msra.mxu0 0
      %908 = vmatprep.subr.bf16.mxu0 0
      %909 = vmatpush1.bf16.msra.mxu0 0
      %910 = vmatprep.subr.bf16.mxu0 0
      %911 = vmatpush1.bf16.msra.mxu0 0
      %912 = vmatprep.subr.bf16.mxu0 0
      %913 = vmatpush1.bf16.msra.mxu0 0
      %914 = vmatprep.subr.bf16.mxu0 0
      %915 = vmatpush1.bf16.msra.mxu0 0
      %916 = vmatprep.subr.bf16.mxu0 0
      %917 = vmatpush1.bf16.msra.mxu0 0
      %918 = vmatprep.subr.bf16.mxu0 0
      %919 = vmatpush1.bf16.msra.mxu0 0
      %920 = vmatprep.subr.bf16.mxu0 0
      %921 = vmatpush1.bf16.msra.mxu0 0
      %922 = vmatprep.subr.bf16.mxu0 0
      %923 = vmatpush1.bf16.msra.mxu0 0
      %924 = vmatprep.subr.bf16.mxu0 0
      %925 = vmatpush1.bf16.msra.mxu0 0
      %926 = vmatprep.mubr.bf16.mxu0 0
      %927 = vmatmul.mubr.bf16.gmra.mrb[0].mxu0 %v892
      %v928 = vpop.f32.mrb[0].mxu0
      %v929 = vadd.f32 %v888, %v928
      %v930 = vpop.f32.mrb[0].mxu0
      %v931 = vpop.f32.mrb[0].mxu0
      %v932 = vpop.f32.mrb[0].mxu0
      %933 = vdwg.mxu0
      %v934 = vpack.c.bf16 %v867, %v866
      %v935 = vpack.c.bf16 %v869, %v868
      %v937 = vlaneseq
      %v938 = vshrl.u32 %v937, 7
      %v939 = vsub.s32 0, %v938
      %v940 = vrot.slane %v870, %v939
      %942 = vmatprep.subr.bf16.mxu0 0
      %943 = vmatpush1.bf16.msra.mxu0 %v934
      %944 = vmatprep.subr.bf16.mxu0 0
      %945 = vmatpush1.bf16.msra.mxu0 %v935
      %946 = vmatprep.subr.bf16.mxu0 0
      %947 = vmatpush1.bf16.msra.mxu0 0
      %948 = vmatprep.subr.bf16.mxu0 0
      %949 = vmatpush1.bf16.msra.mxu0 0
      %950 = vmatprep.subr.bf16.mxu0 0
      %951 = vmatpush1.bf16.msra.mxu0 0
      %952 = vmatprep.subr.bf16.mxu0 0
      %953 = vmatpush1.bf16.msra.mxu0 0
      %954 = vmatprep.subr.bf16.mxu0 0
      %955 = vmatpush1.bf16.msra.mxu0 0
      %956 = vmatprep.subr.bf16.mxu0 0
      %957 = vmatpush1.bf16.msra.mxu0 0
      %958 = vmatprep.subr.bf16.mxu0 0
      %959 = vmatpush1.bf16.msra.mxu0 0
      %960 = vmatprep.subr.bf16.mxu0 0
      %961 = vmatpush1.bf16.msra.mxu0 0
      %962 = vmatprep.subr.bf16.mxu0 0
      %963 = vmatpush1.bf16.msra.mxu0 0
      %964 = vmatprep.subr.bf16.mxu0 0
      %965 = vmatpush1.bf16.msra.mxu0 0
      %966 = vmatprep.subr.bf16.mxu0 0
      %967 = vmatpush1.bf16.msra.mxu0 0
      %968 = vmatprep.subr.bf16.mxu0 0
      %969 = vmatpush1.bf16.msra.mxu0 0
      %970 = vmatprep.subr.bf16.mxu0 0
      %971 = vmatpush1.bf16.msra.mxu0 0
      %972 = vmatprep.subr.bf16.mxu0 0
      %973 = vmatpush1.bf16.msra.mxu0 0
      %974 = vmatprep.mubr.bf16.mxu0 0
      %975 = vmatmul.mubr.bf16.gmra.mrb[0].mxu0 %v892
      %v976 = vpop.f32.mrb[0].mxu0
      %v977 = vadd.f32 %v940, %v976
      %v978 = vpop.f32.mrb[0].mxu0
      %v979 = vpop.f32.mrb[0].mxu0
      %v980 = vpop.f32.mrb[0].mxu0
      %981 = vdwg.mxu0
      %v982 = vpack.c.bf16 %v872, %v871
      %v983 = vpack.c.bf16 %v874, %v873
      %v985 = vlaneseq
      %v986 = vshrl.u32 %v985, 7
      %v987 = vsub.s32 0, %v986
      %v988 = vrot.slane %v875, %v987
      %990 = vmatprep.subr.bf16.mxu0 0
      %991 = vmatpush1.bf16.msra.mxu0 %v982
      %992 = vmatprep.subr.bf16.mxu0 0
      %993 = vmatpush1.bf16.msra.mxu0 %v983
      %994 = vmatprep.subr.bf16.mxu0 0
      %995 = vmatpush1.bf16.msra.mxu0 0
      %996 = vmatprep.subr.bf16.mxu0 0
      %997 = vmatpush1.bf16.msra.mxu0 0
      %998 = vmatprep.subr.bf16.mxu0 0
      %999 = vmatpush1.bf16.msra.mxu0 0
      %1000 = vmatprep.subr.bf16.mxu0 0
      %1001 = vmatpush1.bf16.msra.mxu0 0
      %1002 = vmatprep.subr.bf16.mxu0 0
      %1003 = vmatpush1.bf16.msra.mxu0 0
      %1004 = vmatprep.subr.bf16.mxu0 0
      %1005 = vmatpush1.bf16.msra.mxu0 0
      %1006 = vmatprep.subr.bf16.mxu0 0
      %1007 = vmatpush1.bf16.msra.mxu0 0
      %1008 = vmatprep.subr.bf16.mxu0 0
      %1009 = vmatpush1.bf16.msra.mxu0 0
      %1010 = vmatprep.subr.bf16.mxu0 0
      %1011 = vmatpush1.bf16.msra.mxu0 0
      %1012 = vmatprep.subr.bf16.mxu0 0
      %1013 = vmatpush1.bf16.msra.mxu0 0
      %1014 = vmatprep.subr.bf16.mxu0 0
      %1015 = vmatpush1.bf16.msra.mxu0 0
      %1016 = vmatprep.subr.bf16.mxu0 0
      %1017 = vmatpush1.bf16.msra.mxu0 0
      %1018 = vmatprep.subr.bf16.mxu0 0
      %1019 = vmatpush1.bf16.msra.mxu0 0
      %1020 = vmatprep.subr.bf16.mxu0 0
      %1021 = vmatpush1.bf16.msra.mxu0 0
      %1022 = vmatprep.mubr.bf16.mxu0 0
      %1023 = vmatmul.mubr.bf16.gmra.mrb[0].mxu0 %v892
      %v1024 = vpop.f32.mrb[0].mxu0
      %v1025 = vadd.f32 %v988, %v1024
      %v1026 = vpop.f32.mrb[0].mxu0
      %v1027 = vpop.f32.mrb[0].mxu0
      %v1028 = vpop.f32.mrb[0].mxu0
      %1029 = vdwg.mxu0
      %v1030 = vlaneseq
      %v1031 = vand.u32 %v1030, 127
      %vm1032 = vcmp.ge.s32.totalorder %v1031, 0
      %vm1033 = vcmp.lt.s32.totalorder %v1031, 8
      %vm1034 = vmand %vm1032, %vm1033
      %v1035 = vsel %vm1034, 1, 0
      %v1036 = vcvt.s32.f32 %v1035
      %v1037 = vmul.f32 %v929, %v1036
      %v1038 = vpack.c.bf16 %v1037, %v1037
      %v1039 = vpack.c.bf16 %v977, %v977
      %v1041 = vsel %vm890, %v1038, 0
      %v1044 = vsel %vm890, %v1039, 0
      %1046 = vmatprep.subr.bf16.mxu0 0
      %1047 = vmatpush1.bf16.xpose.msra.mxu0 %v1044
      %1048 = vmatprep.subr.bf16.mxu0 0
      %1049 = vmatpush1.bf16.xpose.msra.mxu0 0
      %1050 = vmatprep.subr.bf16.mxu0 0
      %1051 = vmatpush1.bf16.xpose.msra.mxu0 0
      %1052 = vmatprep.subr.bf16.mxu0 0
      %1053 = vmatpush1.bf16.xpose.msra.mxu0 0
      %1054 = vmatprep.subr.bf16.mxu0 0
      %1055 = vmatpush1.bf16.xpose.msra.mxu0 0
      %1056 = vmatprep.subr.bf16.mxu0 0
      %1057 = vmatpush1.bf16.xpose.msra.mxu0 0
      %1058 = vmatprep.subr.bf16.mxu0 0
      %1059 = vmatpush1.bf16.xpose.msra.mxu0 0
      %1060 = vmatprep.subr.bf16.mxu0 0
      %1061 = vmatpush1.bf16.xpose.msra.mxu0 0
      %1062 = vmatprep.subr.bf16.mxu0 0
      %1063 = vmatpush1.bf16.xpose.msra.mxu0 0
      %1064 = vmatprep.subr.bf16.mxu0 0
      %1065 = vmatpush1.bf16.xpose.msra.mxu0 0
      %1066 = vmatprep.subr.bf16.mxu0 0
      %1067 = vmatpush1.bf16.xpose.msra.mxu0 0
      %1068 = vmatprep.subr.bf16.mxu0 0
      %1069 = vmatpush1.bf16.xpose.msra.mxu0 0
      %1070 = vmatprep.subr.bf16.mxu0 0
      %1071 = vmatpush1.bf16.xpose.msra.mxu0 0
      %1072 = vmatprep.subr.bf16.mxu0 0
      %1073 = vmatpush1.bf16.xpose.msra.mxu0 0
      %1074 = vmatprep.subr.bf16.mxu0 0
      %1075 = vmatpush1.bf16.xpose.msra.mxu0 0
      %1076 = vmatprep.subr.bf16.mxu0 0
      %1077 = vmatpush1.bf16.xpose.msra.mxu0 0
      %1078 = vmatprep.mubr.bf16.mxu0 0
      %1079 = vmatmul.mubr.bf16.gmra.mrb[0].mxu0 %v1041
      %v1080 = vpop.f32.mrb[0].mxu0
      %v1081 = vadd.f32 0.0, %v1080
      %v1082 = vpop.f32.mrb[0].mxu0
      %v1083 = vpop.f32.mrb[0].mxu0
      %v1084 = vpop.f32.mrb[0].mxu0
      %1085 = vdwg.mxu0
      %vm1086 = vcmask 64512
      %v1087 = vsel %vm1086, %v1081, -inf
      %1088 = vmax.xlane.f32.xlu0 %v1087
      %v1089 = vpop.xlane.xlu0 %1088
      %v1090 = vsub.f32 %v1081, %v1089
      %v1091 = vmul.f32 %v1090, 1.442695
      %v1092 = vpow.pop %v1091
      %v1093 = vsel %vm1086, %v1092, 0.0
      %1094 = vadd.xlane.f32.xlu0 %v1093
      %v1095 = vpop.xlane.xlu0 %1094
      %v1096 = vrcp.pop %v1095
      %v1097 = vmul.f32 %v1092, %v1096
      %v1098 = vmul.f32 %v1025, %v1036
      %v1099 = vpack.c.bf16 %v1097, %v1097
      %v1100 = vpack.c.bf16 %v1098, %v1098
      %vm1101 = vcmp.ge.s32.totalorder %v1031, 8
      %vm1102 = vcmp.lt.s32.totalorder %v1031, 16
      %vm1103 = vmand %vm1101, %vm1102
      %v1104 = vsel %vm1103, 1, 0
      %v1105 = vcvt.s32.f32 %v1104
      %v1106 = vmul.f32 %v929, %v1105
      %v1107 = vpack.c.bf16 %v1106, %v1106
      %v1109 = vsel %vm890, %v1107, 0
      %1111 = vmatprep.subr.bf16.mxu0 0
      %1112 = vmatpush1.bf16.xpose.msra.mxu0 %v1044
      %1113 = vmatprep.subr.bf16.mxu0 0
      %1114 = vmatpush1.bf16.xpose.msra.mxu0 0
      %1115 = vmatprep.subr.bf16.mxu0 0
      %1116 = vmatpush1.bf16.xpose.msra.mxu0 0
      %1117 = vmatprep.subr.bf16.mxu0 0
      %1118 = vmatpush1.bf16.xpose.msra.mxu0 0
      %1119 = vmatprep.subr.bf16.mxu0 0
      %1120 = vmatpush1.bf16.xpose.msra.mxu0 0
      %1121 = vmatprep.subr.bf16.mxu0 0
      %1122 = vmatpush1.bf16.xpose.msra.mxu0 0
      %1123 = vmatprep.subr.bf16.mxu0 0
      %1124 = vmatpush1.bf16.xpose.msra.mxu0 0
      %1125 = vmatprep.subr.bf16.mxu0 0
      %1126 = vmatpush1.bf16.xpose.msra.mxu0 0
      %1127 = vmatprep.subr.bf16.mxu0 0
      %1128 = vmatpush1.bf16.xpose.msra.mxu0 0
      %1129 = vmatprep.subr.bf16.mxu0 0
      %1130 = vmatpush1.bf16.xpose.msra.mxu0 0
      %1131 = vmatprep.subr.bf16.mxu0 0
      %1132 = vmatpush1.bf16.xpose.msra.mxu0 0
      %1133 = vmatprep.subr.bf16.mxu0 0
      %1134 = vmatpush1.bf16.xpose.msra.mxu0 0
      %1135 = vmatprep.subr.bf16.mxu0 0
      %1136 = vmatpush1.bf16.xpose.msra.mxu0 0
      %1137 = vmatprep.subr.bf16.mxu0 0
      %1138 = vmatpush1.bf16.xpose.msra.mxu0 0
      %1139 = vmatprep.subr.bf16.mxu0 0
      %1140 = vmatpush1.bf16.xpose.msra.mxu0 0
      %1141 = vmatprep.subr.bf16.mxu0 0
      %1142 = vmatpush1.bf16.xpose.msra.mxu0 0
      %1143 = vmatprep.mubr.bf16.mxu0 0
      %1144 = vmatmul.mubr.bf16.gmra.mrb[0].mxu0 %v1109
      %v1145 = vpop.f32.mrb[0].mxu0
      %v1146 = vadd.f32 0.0, %v1145
      %v1147 = vpop.f32.mrb[0].mxu0
      %v1148 = vpop.f32.mrb[0].mxu0
      %v1149 = vpop.f32.mrb[0].mxu0
      %1150 = vdwg.mxu0
      %v1151 = vsel %vm1086, %v1146, -inf
      %1152 = vmax.xlane.f32.xlu0 %v1151
      %v1153 = vpop.xlane.xlu0 %1152
      %v1154 = vsub.f32 %v1146, %v1153
      %v1155 = vmul.f32 %v1154, 1.442695
      %v1156 = vpow.pop %v1155
      %v1157 = vsel %vm1086, %v1156, 0.0
      %1158 = vadd.xlane.f32.xlu0 %v1157
      %v1159 = vpop.xlane.xlu0 %1158
      %v1160 = vrcp.pop %v1159
      %v1161 = vmul.f32 %v1156, %v1160
      %v1162 = vmul.f32 %v1025, %v1105
      %v1163 = vpack.c.bf16 %v1161, %v1161
      %v1164 = vpack.c.bf16 %v1162, %v1162
      %v1166 = vsel %vm1086, %v1163, 0
      %vm1168 = vcmask 1043456
      %v1170 = vsel %vm1168, %v1164, 0
      %1172 = vmatprep.subr.bf16.mxu0 0
      %1173 = vmatpush1.bf16.msra.mxu0 %v1170
      %1174 = vmatprep.subr.bf16.mxu0 0
      %1175 = vmatpush1.bf16.msra.mxu0 0
      %1176 = vmatprep.subr.bf16.mxu0 0
      %1177 = vmatpush1.bf16.msra.mxu0 0
      %1178 = vmatprep.subr.bf16.mxu0 0
      %1179 = vmatpush1.bf16.msra.mxu0 0
      %1180 = vmatprep.subr.bf16.mxu0 0
      %1181 = vmatpush1.bf16.msra.mxu0 0
      %1182 = vmatprep.subr.bf16.mxu0 0
      %1183 = vmatpush1.bf16.msra.mxu0 0
      %1184 = vmatprep.subr.bf16.mxu0 0
      %1185 = vmatpush1.bf16.msra.mxu0 0
      %1186 = vmatprep.subr.bf16.mxu0 0
      %1187 = vmatpush1.bf16.msra.mxu0 0
      %1188 = vmatprep.subr.bf16.mxu0 0
      %1189 = vmatpush1.bf16.msra.mxu0 0
      %1190 = vmatprep.subr.bf16.mxu0 0
      %1191 = vmatpush1.bf16.msra.mxu0 0
      %1192 = vmatprep.subr.bf16.mxu0 0
      %1193 = vmatpush1.bf16.msra.mxu0 0
      %1194 = vmatprep.subr.bf16.mxu0 0
      %1195 = vmatpush1.bf16.msra.mxu0 0
      %1196 = vmatprep.subr.bf16.mxu0 0
      %1197 = vmatpush1.bf16.msra.mxu0 0
      %1198 = vmatprep.subr.bf16.mxu0 0
      %1199 = vmatpush1.bf16.msra.mxu0 0
      %1200 = vmatprep.subr.bf16.mxu0 0
      %1201 = vmatpush1.bf16.msra.mxu0 0
      %1202 = vmatprep.subr.bf16.mxu0 0
      %1203 = vmatpush1.bf16.msra.mxu0 0
      %1204 = vmatprep.mubr.bf16.mxu0 0
      %1205 = vmatmul.mubr.bf16.gmra.mrb[0].mxu0 %v1166
      %v1206 = vpop.f32.mrb[0].mxu0
      %v1207 = vadd.f32 0.0, %v1206
      %v1208 = vpop.f32.mrb[0].mxu0
      %v1209 = vpop.f32.mrb[0].mxu0
      %v1210 = vpop.f32.mrb[0].mxu0
      %1211 = vdwg.mxu0
      %v1213 = vsel %vm1086, %v1099, 0
      %v1216 = vsel %vm1168, %v1100, 0
      %1218 = vmatprep.subr.bf16.mxu0 0
      %1219 = vmatpush1.bf16.msra.mxu0 %v1216
      %1220 = vmatprep.subr.bf16.mxu0 0
      %1221 = vmatpush1.bf16.msra.mxu0 0
      %1222 = vmatprep.subr.bf16.mxu0 0
      %1223 = vmatpush1.bf16.msra.mxu0 0
      %1224 = vmatprep.subr.bf16.mxu0 0
      %1225 = vmatpush1.bf16.msra.mxu0 0
      %1226 = vmatprep.subr.bf16.mxu0 0
      %1227 = vmatpush1.bf16.msra.mxu0 0
      %1228 = vmatprep.subr.bf16.mxu0 0
      %1229 = vmatpush1.bf16.msra.mxu0 0
      %1230 = vmatprep.subr.bf16.mxu0 0
      %1231 = vmatpush1.bf16.msra.mxu0 0
      %1232 = vmatprep.subr.bf16.mxu0 0
      %1233 = vmatpush1.bf16.msra.mxu0 0
      %1234 = vmatprep.subr.bf16.mxu0 0
      %1235 = vmatpush1.bf16.msra.mxu0 0
      %1236 = vmatprep.subr.bf16.mxu0 0
      %1237 = vmatpush1.bf16.msra.mxu0 0
      %1238 = vmatprep.subr.bf16.mxu0 0
      %1239 = vmatpush1.bf16.msra.mxu0 0
      %1240 = vmatprep.subr.bf16.mxu0 0
      %1241 = vmatpush1.bf16.msra.mxu0 0
      %1242 = vmatprep.subr.bf16.mxu0 0
      %1243 = vmatpush1.bf16.msra.mxu0 0
      %1244 = vmatprep.subr.bf16.mxu0 0
      %1245 = vmatpush1.bf16.msra.mxu0 0
      %1246 = vmatprep.subr.bf16.mxu0 0
      %1247 = vmatpush1.bf16.msra.mxu0 0
      %1248 = vmatprep.subr.bf16.mxu0 0
      %1249 = vmatpush1.bf16.msra.mxu0 0
      %1250 = vmatprep.mubr.bf16.mxu0 0
      %1251 = vmatmul.mubr.bf16.gmra.mrb[0].mxu0 %v1213
      %v1252 = vpop.f32.mrb[0].mxu0
      %v1253 = vadd.f32 %v1207, %v1252
      %v1254 = vpop.f32.mrb[0].mxu0
      %v1255 = vpop.f32.mrb[0].mxu0
      %v1256 = vpop.f32.mrb[0].mxu0
      %1257 = vdwg.mxu0
      %vm1258 = vcmp.ge.s32.totalorder %v1031, 16
      %vm1259 = vcmp.lt.s32.totalorder %v1031, 24
      %vm1260 = vmand %vm1258, %vm1259
      %v1261 = vsel %vm1260, 1, 0
      %v1262 = vcvt.s32.f32 %v1261
      %v1263 = vmul.f32 %v929, %v1262
      %v1264 = vpack.c.bf16 %v1263, %v1263
      %v1266 = vsel %vm890, %v1264, 0
      %1268 = vmatprep.subr.bf16.mxu0 0
      %1269 = vmatpush1.bf16.xpose.msra.mxu0 %v1044
      %1270 = vmatprep.subr.bf16.mxu0 0
      %1271 = vmatpush1.bf16.xpose.msra.mxu0 0
      %1272 = vmatprep.subr.bf16.mxu0 0
      %1273 = vmatpush1.bf16.xpose.msra.mxu0 0
      %1274 = vmatprep.subr.bf16.mxu0 0
      %1275 = vmatpush1.bf16.xpose.msra.mxu0 0
      %1276 = vmatprep.subr.bf16.mxu0 0
      %1277 = vmatpush1.bf16.xpose.msra.mxu0 0
      %1278 = vmatprep.subr.bf16.mxu0 0
      %1279 = vmatpush1.bf16.xpose.msra.mxu0 0
      %1280 = vmatprep.subr.bf16.mxu0 0
      %1281 = vmatpush1.bf16.xpose.msra.mxu0 0
      %1282 = vmatprep.subr.bf16.mxu0 0
      %1283 = vmatpush1.bf16.xpose.msra.mxu0 0
      %1284 = vmatprep.subr.bf16.mxu0 0
      %1285 = vmatpush1.bf16.xpose.msra.mxu0 0
      %1286 = vmatprep.subr.bf16.mxu0 0
      %1287 = vmatpush1.bf16.xpose.msra.mxu0 0
      %1288 = vmatprep.subr.bf16.mxu0 0
      %1289 = vmatpush1.bf16.xpose.msra.mxu0 0
      %1290 = vmatprep.subr.bf16.mxu0 0
      %1291 = vmatpush1.bf16.xpose.msra.mxu0 0
      %1292 = vmatprep.subr.bf16.mxu0 0
      %1293 = vmatpush1.bf16.xpose.msra.mxu0 0
      %1294 = vmatprep.subr.bf16.mxu0 0
      %1295 = vmatpush1.bf16.xpose.msra.mxu0 0
      %1296 = vmatprep.subr.bf16.mxu0 0
      %1297 = vmatpush1.bf16.xpose.msra.mxu0 0
      %1298 = vmatprep.subr.bf16.mxu0 0
      %1299 = vmatpush1.bf16.xpose.msra.mxu0 0
      %1300 = vmatprep.mubr.bf16.mxu0 0
      %1301 = vmatmul.mubr.bf16.gmra.mrb[0].mxu0 %v1266
      %v1302 = vpop.f32.mrb[0].mxu0
      %v1303 = vadd.f32 0.0, %v1302
      %v1304 = vpop.f32.mrb[0].mxu0
      %v1305 = vpop.f32.mrb[0].mxu0
      %v1306 = vpop.f32.mrb[0].mxu0
      %1307 = vdwg.mxu0
      %v1308 = vsel %vm1086, %v1303, -inf
      %1309 = vmax.xlane.f32.xlu0 %v1308
      %v1310 = vpop.xlane.xlu0 %1309
      %v1311 = vsub.f32 %v1303, %v1310
      %v1312 = vmul.f32 %v1311, 1.442695
      %v1313 = vpow.pop %v1312
      %v1314 = vsel %vm1086, %v1313, 0.0
      %1315 = vadd.xlane.f32.xlu0 %v1314
      %v1316 = vpop.xlane.xlu0 %1315
      %v1317 = vrcp.pop %v1316
      %v1318 = vmul.f32 %v1313, %v1317
      %v1319 = vmul.f32 %v1025, %v1262
      %v1320 = vpack.c.bf16 %v1318, %v1318
      %v1321 = vpack.c.bf16 %v1319, %v1319
      %v1323 = vsel %vm1086, %v1320, 0
      %v1326 = vsel %vm1168, %v1321, 0
      %1328 = vmatprep.subr.bf16.mxu0 0
      %1329 = vmatpush1.bf16.msra.mxu0 %v1326
      %1330 = vmatprep.subr.bf16.mxu0 0
      %1331 = vmatpush1.bf16.msra.mxu0 0
      %1332 = vmatprep.subr.bf16.mxu0 0
      %1333 = vmatpush1.bf16.msra.mxu0 0
      %1334 = vmatprep.subr.bf16.mxu0 0
      %1335 = vmatpush1.bf16.msra.mxu0 0
      %1336 = vmatprep.subr.bf16.mxu0 0
      %1337 = vmatpush1.bf16.msra.mxu0 0
      %1338 = vmatprep.subr.bf16.mxu0 0
      %1339 = vmatpush1.bf16.msra.mxu0 0
      %1340 = vmatprep.subr.bf16.mxu0 0
      %1341 = vmatpush1.bf16.msra.mxu0 0
      %1342 = vmatprep.subr.bf16.mxu0 0
      %1343 = vmatpush1.bf16.msra.mxu0 0
      %1344 = vmatprep.subr.bf16.mxu0 0
      %1345 = vmatpush1.bf16.msra.mxu0 0
      %1346 = vmatprep.subr.bf16.mxu0 0
      %1347 = vmatpush1.bf16.msra.mxu0 0
      %1348 = vmatprep.subr.bf16.mxu0 0
      %1349 = vmatpush1.bf16.msra.mxu0 0
      %1350 = vmatprep.subr.bf16.mxu0 0
      %1351 = vmatpush1.bf16.msra.mxu0 0
      %1352 = vmatprep.subr.bf16.mxu0 0
      %1353 = vmatpush1.bf16.msra.mxu0 0
      %1354 = vmatprep.subr.bf16.mxu0 0
      %1355 = vmatpush1.bf16.msra.mxu0 0
      %1356 = vmatprep.subr.bf16.mxu0 0
      %1357 = vmatpush1.bf16.msra.mxu0 0
      %1358 = vmatprep.subr.bf16.mxu0 0
      %1359 = vmatpush1.bf16.msra.mxu0 0
      %1360 = vmatprep.mubr.bf16.mxu0 0
      %1361 = vmatmul.mubr.bf16.gmra.mrb[0].mxu0 %v1323
      %v1362 = vpop.f32.mrb[0].mxu0
      %v1363 = vadd.f32 0.0, %v1362
      %v1364 = vpop.f32.mrb[0].mxu0
      %v1365 = vpop.f32.mrb[0].mxu0
      %v1366 = vpop.f32.mrb[0].mxu0
      %1367 = vdwg.mxu0
      %v1368 = vadd.f32 %v1253, %v1363
      %vm1369 = vcmp.ge.s32.totalorder %v1031, 24
      %vm1370 = vcmp.lt.s32.totalorder %v1031, 32
      %vm1371 = vmand %vm1369, %vm1370
      %v1372 = vsel %vm1371, 1, 0
      %v1373 = vcvt.s32.f32 %v1372
      %v1374 = vmul.f32 %v929, %v1373
      %v1375 = vpack.c.bf16 %v1374, %v1374
      %v1377 = vsel %vm890, %v1375, 0
      %1379 = vmatprep.subr.bf16.mxu0 0
      %1380 = vmatpush1.bf16.xpose.msra.mxu0 %v1044
      %1381 = vmatprep.subr.bf16.mxu0 0
      %1382 = vmatpush1.bf16.xpose.msra.mxu0 0
      %1383 = vmatprep.subr.bf16.mxu0 0
      %1384 = vmatpush1.bf16.xpose.msra.mxu0 0
      %1385 = vmatprep.subr.bf16.mxu0 0
      %1386 = vmatpush1.bf16.xpose.msra.mxu0 0
      %1387 = vmatprep.subr.bf16.mxu0 0
      %1388 = vmatpush1.bf16.xpose.msra.mxu0 0
      %1389 = vmatprep.subr.bf16.mxu0 0
      %1390 = vmatpush1.bf16.xpose.msra.mxu0 0
      %1391 = vmatprep.subr.bf16.mxu0 0
      %1392 = vmatpush1.bf16.xpose.msra.mxu0 0
      %1393 = vmatprep.subr.bf16.mxu0 0
      %1394 = vmatpush1.bf16.xpose.msra.mxu0 0
      %1395 = vmatprep.subr.bf16.mxu0 0
      %1396 = vmatpush1.bf16.xpose.msra.mxu0 0
      %1397 = vmatprep.subr.bf16.mxu0 0
      %1398 = vmatpush1.bf16.xpose.msra.mxu0 0
      %1399 = vmatprep.subr.bf16.mxu0 0
      %1400 = vmatpush1.bf16.xpose.msra.mxu0 0
      %1401 = vmatprep.subr.bf16.mxu0 0
      %1402 = vmatpush1.bf16.xpose.msra.mxu0 0
      %1403 = vmatprep.subr.bf16.mxu0 0
      %1404 = vmatpush1.bf16.xpose.msra.mxu0 0
      %1405 = vmatprep.subr.bf16.mxu0 0
      %1406 = vmatpush1.bf16.xpose.msra.mxu0 0
      %1407 = vmatprep.subr.bf16.mxu0 0
      %1408 = vmatpush1.bf16.xpose.msra.mxu0 0
      %1409 = vmatprep.subr.bf16.mxu0 0
      %1410 = vmatpush1.bf16.xpose.msra.mxu0 0
      %1411 = vmatprep.mubr.bf16.mxu0 0
      %1412 = vmatmul.mubr.bf16.gmra.mrb[0].mxu0 %v1377
      %v1413 = vpop.f32.mrb[0].mxu0
      %v1414 = vadd.f32 0.0, %v1413
      %v1415 = vpop.f32.mrb[0].mxu0
      %v1416 = vpop.f32.mrb[0].mxu0
      %v1417 = vpop.f32.mrb[0].mxu0
      %1418 = vdwg.mxu0
      %v1419 = vsel %vm1086, %v1414, -inf
      %1420 = vmax.xlane.f32.xlu0 %v1419
      %v1421 = vpop.xlane.xlu0 %1420
      %v1422 = vsub.f32 %v1414, %v1421
      %v1423 = vmul.f32 %v1422, 1.442695
      %v1424 = vpow.pop %v1423
      %v1425 = vsel %vm1086, %v1424, 0.0
      %1426 = vadd.xlane.f32.xlu0 %v1425
      %v1427 = vpop.xlane.xlu0 %1426
      %v1428 = vrcp.pop %v1427
      %v1429 = vmul.f32 %v1424, %v1428
      %v1430 = vmul.f32 %v1025, %v1373
      %v1431 = vpack.c.bf16 %v1429, %v1429
      %v1432 = vpack.c.bf16 %v1430, %v1430
      %v1434 = vsel %vm1086, %v1431, 0
      %v1437 = vsel %vm1168, %v1432, 0
      %1439 = vmatprep.subr.bf16.mxu0 0
      %1440 = vmatpush1.bf16.msra.mxu0 %v1437
      %1441 = vmatprep.subr.bf16.mxu0 0
      %1442 = vmatpush1.bf16.msra.mxu0 0
      %1443 = vmatprep.subr.bf16.mxu0 0
      %1444 = vmatpush1.bf16.msra.mxu0 0
      %1445 = vmatprep.subr.bf16.mxu0 0
      %1446 = vmatpush1.bf16.msra.mxu0 0
      %1447 = vmatprep.subr.bf16.mxu0 0
      %1448 = vmatpush1.bf16.msra.mxu0 0
      %1449 = vmatprep.subr.bf16.mxu0 0
      %1450 = vmatpush1.bf16.msra.mxu0 0
      %1451 = vmatprep.subr.bf16.mxu0 0
      %1452 = vmatpush1.bf16.msra.mxu0 0
      %1453 = vmatprep.subr.bf16.mxu0 0
      %1454 = vmatpush1.bf16.msra.mxu0 0
      %1455 = vmatprep.subr.bf16.mxu0 0
      %1456 = vmatpush1.bf16.msra.mxu0 0
      %1457 = vmatprep.subr.bf16.mxu0 0
      %1458 = vmatpush1.bf16.msra.mxu0 0
      %1459 = vmatprep.subr.bf16.mxu0 0
      %1460 = vmatpush1.bf16.msra.mxu0 0
      %1461 = vmatprep.subr.bf16.mxu0 0
      %1462 = vmatpush1.bf16.msra.mxu0 0
      %1463 = vmatprep.subr.bf16.mxu0 0
      %1464 = vmatpush1.bf16.msra.mxu0 0
      %1465 = vmatprep.subr.bf16.mxu0 0
      %1466 = vmatpush1.bf16.msra.mxu0 0
      %1467 = vmatprep.subr.bf16.mxu0 0
      %1468 = vmatpush1.bf16.msra.mxu0 0
      %1469 = vmatprep.subr.bf16.mxu0 0
      %1470 = vmatpush1.bf16.msra.mxu0 0
      %1471 = vmatprep.mubr.bf16.mxu0 0
      %1472 = vmatmul.mubr.bf16.gmra.mrb[0].mxu0 %v1434
      %v1473 = vpop.f32.mrb[0].mxu0
      %v1474 = vadd.f32 0.0, %v1473
      %v1475 = vpop.f32.mrb[0].mxu0
      %v1476 = vpop.f32.mrb[0].mxu0
      %v1477 = vpop.f32.mrb[0].mxu0
      %1478 = vdwg.mxu0
      %v1479 = vadd.f32 %v1368, %v1474
      %v1480 = vpack.c.bf16 %v1479, %v1479
      %v1481 = vpack.c.bf16 %v877, %v876
      %v1482 = vpack.c.bf16 %v879, %v878
      %v1484 = vlaneseq
      %v1485 = vshrl.u32 %v1484, 7
      %v1486 = vsub.s32 0, %v1485
      %v1487 = vrot.slane %v880, %v1486
      %v1490 = vsel %vm890, %v1480, 0
      %1492 = vmatprep.subr.bf16.mxu0 0
      %1493 = vmatpush1.bf16.msra.mxu0 %v1481
      %1494 = vmatprep.subr.bf16.mxu0 0
      %1495 = vmatpush1.bf16.msra.mxu0 %v1482
      %1496 = vmatprep.subr.bf16.mxu0 0
      %1497 = vmatpush1.bf16.msra.mxu0 0
      %1498 = vmatprep.subr.bf16.mxu0 0
      %1499 = vmatpush1.bf16.msra.mxu0 0
      %1500 = vmatprep.subr.bf16.mxu0 0
      %1501 = vmatpush1.bf16.msra.mxu0 0
      %1502 = vmatprep.subr.bf16.mxu0 0
      %1503 = vmatpush1.bf16.msra.mxu0 0
      %1504 = vmatprep.subr.bf16.mxu0 0
      %1505 = vmatpush1.bf16.msra.mxu0 0
      %1506 = vmatprep.subr.bf16.mxu0 0
      %1507 = vmatpush1.bf16.msra.mxu0 0
      %1508 = vmatprep.subr.bf16.mxu0 0
      %1509 = vmatpush1.bf16.msra.mxu0 0
      %1510 = vmatprep.subr.bf16.mxu0 0
      %1511 = vmatpush1.bf16.msra.mxu0 0
      %1512 = vmatprep.subr.bf16.mxu0 0
      %1513 = vmatpush1.bf16.msra.mxu0 0
      %1514 = vmatprep.subr.bf16.mxu0 0
      %1515 = vmatpush1.bf16.msra.mxu0 0
      %1516 = vmatprep.subr.bf16.mxu0 0
      %1517 = vmatpush1.bf16.msra.mxu0 0
      %1518 = vmatprep.subr.bf16.mxu0 0
      %1519 = vmatpush1.bf16.msra.mxu0 0
      %1520 = vmatprep.subr.bf16.mxu0 0
      %1521 = vmatpush1.bf16.msra.mxu0 0
      %1522 = vmatprep.subr.bf16.mxu0 0
      %1523 = vmatpush1.bf16.msra.mxu0 0
      %1524 = vmatprep.mubr.bf16.mxu0 0
      %1525 = vmatmul.mubr.bf16.gmra.mrb[0].mxu0 %v1490
      %v1526 = vpop.f32.mrb[0].mxu0
      %v1527 = vadd.f32 %v1487, %v1526
      %v1528 = vpop.f32.mrb[0].mxu0
      %v1529 = vpop.f32.mrb[0].mxu0
      %v1530 = vpop.f32.mrb[0].mxu0
      %1531 = vdwg.mxu0
      %v1532 = vadd.f32 %v859, %v1527
      %v1533 = vld [vmem:[%s10] sm:$0x1]
      %v1534 = vld [vmem:[%s11] sm:$0x1]
      %v1535 = vsel %vm890, %v1532, 0.0
      %1536 = vadd.xlane.f32.xlu0 %v1535
      %v1537 = vpop.xlane.xlu0 %1536
      %v1538 = vrcp.pop 32.0
      %v1539 = vmul.f32 %v1537, %v1538
      %v1540 = vsub.f32 %v1532, %v1539
      %v1541 = vmul.f32 %v1540, %v1540
      %v1542 = vsel %vm890, %v1541, 0.0
      %1543 = vadd.xlane.f32.xlu0 %v1542
      %v1544 = vpop.xlane.xlu0 %1543
      %v1545 = vmul.f32 %v1544, %v1538
      %v1546 = vadd.f32 %v1545, 1e-05
      %v1547 = vrsqrt.pop %v1546
      %v1548 = vmul.f32 %v1540, %v1547
      %v1550 = vlaneseq
      %v1551 = vshrl.u32 %v1550, 7
      %v1552 = vsub.s32 0, %v1551
      %v1553 = vrot.slane %v1533, %v1552
      %v1555 = vmul.f32 %v1548, %v1553
      %v1557 = vlaneseq
      %v1558 = vshrl.u32 %v1557, 7
      %v1559 = vsub.s32 0, %v1558
      %v1560 = vrot.slane %v1534, %v1559
      %v1562 = vadd.f32 %v1555, %v1560
      %v1563 = vld [vmem:[%s12] sm:$0xff]
      %v1564 = vld [vmem:[%s12 + $0x8] sm:$0xff]
      %v1565 = vld [vmem:[%s12 + $0x10] sm:$0xff]
      %v1566 = vld [vmem:[%s12 + $0x18] sm:$0xff]
      %v1567 = vld [vmem:[%s13] sm:$0x1]
      %v1568 = vld [vmem:[%s14] sm:$0xff]
      %v1569 = vld [vmem:[%s14 + $0x8] sm:$0xff]
      %v1570 = vld [vmem:[%s14 + $0x10] sm:$0xff]
      %v1571 = vld [vmem:[%s14 + $0x18] sm:$0xff]
      %v1572 = vld [vmem:[%s15] sm:$0x1]
      %v1573 = vld [vmem:[%s16] sm:$0xff]
      %v1574 = vld [vmem:[%s16 + $0x8] sm:$0xff]
      %v1575 = vld [vmem:[%s16 + $0x10] sm:$0xff]
      %v1576 = vld [vmem:[%s16 + $0x18] sm:$0xff]
      %v1577 = vld [vmem:[%s17] sm:$0x1]
      %v1578 = vld [vmem:[%s18] sm:$0xff]
      %v1579 = vld [vmem:[%s18 + $0x8] sm:$0xff]
      %v1580 = vld [vmem:[%s18 + $0x10] sm:$0xff]
      %v1581 = vld [vmem:[%s18 + $0x18] sm:$0xff]
      %v1582 = vld [vmem:[%s19] sm:$0x1]
      %v1583 = vpack.c.bf16 %v1562, %v1562
      %v1584 = vpack.c.bf16 %v1564, %v1563
      %v1585 = vpack.c.bf16 %v1566, %v1565
      %v1587 = vlaneseq
      %v1588 = vshrl.u32 %v1587, 7
      %v1589 = vsub.s32 0, %v1588
      %v1590 = vrot.slane %v1567, %v1589
      %v1593 = vsel %vm890, %v1583, 0
      %1595 = vmatprep.subr.bf16.mxu0 0
      %1596 = vmatpush1.bf16.msra.mxu0 %v1584
      %1597 = vmatprep.subr.bf16.mxu0 0
      %1598 = vmatpush1.bf16.msra.mxu0 %v1585
      %1599 = vmatprep.subr.bf16.mxu0 0
      %1600 = vmatpush1.bf16.msra.mxu0 0
      %1601 = vmatprep.subr.bf16.mxu0 0
      %1602 = vmatpush1.bf16.msra.mxu0 0
      %1603 = vmatprep.subr.bf16.mxu0 0
      %1604 = vmatpush1.bf16.msra.mxu0 0
      %1605 = vmatprep.subr.bf16.mxu0 0
      %1606 = vmatpush1.bf16.msra.mxu0 0
      %1607 = vmatprep.subr.bf16.mxu0 0
      %1608 = vmatpush1.bf16.msra.mxu0 0
      %1609 = vmatprep.subr.bf16.mxu0 0
      %1610 = vmatpush1.bf16.msra.mxu0 0
      %1611 = vmatprep.subr.bf16.mxu0 0
      %1612 = vmatpush1.bf16.msra.mxu0 0
      %1613 = vmatprep.subr.bf16.mxu0 0
      %1614 = vmatpush1.bf16.msra.mxu0 0
      %1615 = vmatprep.subr.bf16.mxu0 0
      %1616 = vmatpush1.bf16.msra.mxu0 0
      %1617 = vmatprep.subr.bf16.mxu0 0
      %1618 = vmatpush1.bf16.msra.mxu0 0
      %1619 = vmatprep.subr.bf16.mxu0 0
      %1620 = vmatpush1.bf16.msra.mxu0 0
      %1621 = vmatprep.subr.bf16.mxu0 0
      %1622 = vmatpush1.bf16.msra.mxu0 0
      %1623 = vmatprep.subr.bf16.mxu0 0
      %1624 = vmatpush1.bf16.msra.mxu0 0
      %1625 = vmatprep.subr.bf16.mxu0 0
      %1626 = vmatpush1.bf16.msra.mxu0 0
      %1627 = vmatprep.mubr.bf16.mxu0 0
      %1628 = vmatmul.mubr.bf16.gmra.mrb[0].mxu0 %v1593
      %v1629 = vpop.f32.mrb[0].mxu0
      %v1630 = vadd.f32 %v1590, %v1629
      %v1631 = vpop.f32.mrb[0].mxu0
      %v1632 = vpop.f32.mrb[0].mxu0
      %v1633 = vpop.f32.mrb[0].mxu0
      %1634 = vdwg.mxu0
      %v1635 = vpack.c.bf16 %v860, %v860
      %v1636 = vpack.c.bf16 %v1569, %v1568
      %v1637 = vpack.c.bf16 %v1571, %v1570
      %v1639 = vlaneseq
      %v1640 = vshrl.u32 %v1639, 7
      %v1641 = vsub.s32 0, %v1640
      %v1642 = vrot.slane %v1572, %v1641
      %v1645 = vsel %vm890, %v1635, 0
      %1647 = vmatprep.subr.bf16.mxu0 0
      %1648 = vmatpush1.bf16.msra.mxu0 %v1636
      %1649 = vmatprep.subr.bf16.mxu0 0
      %1650 = vmatpush1.bf16.msra.mxu0 %v1637
      %1651 = vmatprep.subr.bf16.mxu0 0
      %1652 = vmatpush1.bf16.msra.mxu0 0
      %1653 = vmatprep.subr.bf16.mxu0 0
      %1654 = vmatpush1.bf16.msra.mxu0 0
      %1655 = vmatprep.subr.bf16.mxu0 0
      %1656 = vmatpush1.bf16.msra.mxu0 0
      %1657 = vmatprep.subr.bf16.mxu0 0
      %1658 = vmatpush1.bf16.msra.mxu0 0
      %1659 = vmatprep.subr.bf16.mxu0 0
      %1660 = vmatpush1.bf16.msra.mxu0 0
      %1661 = vmatprep.subr.bf16.mxu0 0
      %1662 = vmatpush1.bf16.msra.mxu0 0
      %1663 = vmatprep.subr.bf16.mxu0 0
      %1664 = vmatpush1.bf16.msra.mxu0 0
      %1665 = vmatprep.subr.bf16.mxu0 0
      %1666 = vmatpush1.bf16.msra.mxu0 0
      %1667 = vmatprep.subr.bf16.mxu0 0
      %1668 = vmatpush1.bf16.msra.mxu0 0
      %1669 = vmatprep.subr.bf16.mxu0 0
      %1670 = vmatpush1.bf16.msra.mxu0 0
      %1671 = vmatprep.subr.bf16.mxu0 0
      %1672 = vmatpush1.bf16.msra.mxu0 0
      %1673 = vmatprep.subr.bf16.mxu0 0
      %1674 = vmatpush1.bf16.msra.mxu0 0
      %1675 = vmatprep.subr.bf16.mxu0 0
      %1676 = vmatpush1.bf16.msra.mxu0 0
      %1677 = vmatprep.subr.bf16.mxu0 0
      %1678 = vmatpush1.bf16.msra.mxu0 0
      %1679 = vmatprep.mubr.bf16.mxu0 0
      %1680 = vmatmul.mubr.bf16.gmra.mrb[0].mxu0 %v1645
      %v1681 = vpop.f32.mrb[0].mxu0
      %v1682 = vadd.f32 %v1642, %v1681
      %v1683 = vpop.f32.mrb[0].mxu0
      %v1684 = vpop.f32.mrb[0].mxu0
      %v1685 = vpop.f32.mrb[0].mxu0
      %1686 = vdwg.mxu0
      %v1687 = vpack.c.bf16 %v1574, %v1573
      %v1688 = vpack.c.bf16 %v1576, %v1575
      %v1690 = vlaneseq
      %v1691 = vshrl.u32 %v1690, 7
      %v1692 = vsub.s32 0, %v1691
      %v1693 = vrot.slane %v1577, %v1692
      %1695 = vmatprep.subr.bf16.mxu0 0
      %1696 = vmatpush1.bf16.msra.mxu0 %v1687
      %1697 = vmatprep.subr.bf16.mxu0 0
      %1698 = vmatpush1.bf16.msra.mxu0 %v1688
      %1699 = vmatprep.subr.bf16.mxu0 0
      %1700 = vmatpush1.bf16.msra.mxu0 0
      %1701 = vmatprep.subr.bf16.mxu0 0
      %1702 = vmatpush1.bf16.msra.mxu0 0
      %1703 = vmatprep.subr.bf16.mxu0 0
      %1704 = vmatpush1.bf16.msra.mxu0 0
      %1705 = vmatprep.subr.bf16.mxu0 0
      %1706 = vmatpush1.bf16.msra.mxu0 0
      %1707 = vmatprep.subr.bf16.mxu0 0
      %1708 = vmatpush1.bf16.msra.mxu0 0
      %1709 = vmatprep.subr.bf16.mxu0 0
      %1710 = vmatpush1.bf16.msra.mxu0 0
      %1711 = vmatprep.subr.bf16.mxu0 0
      %1712 = vmatpush1.bf16.msra.mxu0 0
      %1713 = vmatprep.subr.bf16.mxu0 0
      %1714 = vmatpush1.bf16.msra.mxu0 0
      %1715 = vmatprep.subr.bf16.mxu0 0
      %1716 = vmatpush1.bf16.msra.mxu0 0
      %1717 = vmatprep.subr.bf16.mxu0 0
      %1718 = vmatpush1.bf16.msra.mxu0 0
      %1719 = vmatprep.subr.bf16.mxu0 0
      %1720 = vmatpush1.bf16.msra.mxu0 0
      %1721 = vmatprep.subr.bf16.mxu0 0
      %1722 = vmatpush1.bf16.msra.mxu0 0
      %1723 = vmatprep.subr.bf16.mxu0 0
      %1724 = vmatpush1.bf16.msra.mxu0 0
      %1725 = vmatprep.subr.bf16.mxu0 0
      %1726 = vmatpush1.bf16.msra.mxu0 0
      %1727 = vmatprep.mubr.bf16.mxu0 0
      %1728 = vmatmul.mubr.bf16.gmra.mrb[0].mxu0 %v1645
      %v1729 = vpop.f32.mrb[0].mxu0
      %v1730 = vadd.f32 %v1693, %v1729
      %v1731 = vpop.f32.mrb[0].mxu0
      %v1732 = vpop.f32.mrb[0].mxu0
      %v1733 = vpop.f32.mrb[0].mxu0
      %1734 = vdwg.mxu0
      %v1735 = vmul.f32 %v1630, %v1036
      %v1736 = vpack.c.bf16 %v1735, %v1735
      %v1737 = vpack.c.bf16 %v1682, %v1682
      %v1739 = vsel %vm890, %v1736, 0
      %v1742 = vsel %vm890, %v1737, 0
      %1744 = vmatprep.subr.bf16.mxu0 0
      %1745 = vmatpush1.bf16.xpose.msra.mxu0 %v1742
      %1746 = vmatprep.subr.bf16.mxu0 0
      %1747 = vmatpush1.bf16.xpose.msra.mxu0 0
      %1748 = vmatprep.subr.bf16.mxu0 0
      %1749 = vmatpush1.bf16.xpose.msra.mxu0 0
      %1750 = vmatprep.subr.bf16.mxu0 0
      %1751 = vmatpush1.bf16.xpose.msra.mxu0 0
      %1752 = vmatprep.subr.bf16.mxu0 0
      %1753 = vmatpush1.bf16.xpose.msra.mxu0 0
      %1754 = vmatprep.subr.bf16.mxu0 0
      %1755 = vmatpush1.bf16.xpose.msra.mxu0 0
      %1756 = vmatprep.subr.bf16.mxu0 0
      %1757 = vmatpush1.bf16.xpose.msra.mxu0 0
      %1758 = vmatprep.subr.bf16.mxu0 0
      %1759 = vmatpush1.bf16.xpose.msra.mxu0 0
      %1760 = vmatprep.subr.bf16.mxu0 0
      %1761 = vmatpush1.bf16.xpose.msra.mxu0 0
      %1762 = vmatprep.subr.bf16.mxu0 0
      %1763 = vmatpush1.bf16.xpose.msra.mxu0 0
      %1764 = vmatprep.subr.bf16.mxu0 0
      %1765 = vmatpush1.bf16.xpose.msra.mxu0 0
      %1766 = vmatprep.subr.bf16.mxu0 0
      %1767 = vmatpush1.bf16.xpose.msra.mxu0 0
      %1768 = vmatprep.subr.bf16.mxu0 0
      %1769 = vmatpush1.bf16.xpose.msra.mxu0 0
      %1770 = vmatprep.subr.bf16.mxu0 0
      %1771 = vmatpush1.bf16.xpose.msra.mxu0 0
      %1772 = vmatprep.subr.bf16.mxu0 0
      %1773 = vmatpush1.bf16.xpose.msra.mxu0 0
      %1774 = vmatprep.subr.bf16.mxu0 0
      %1775 = vmatpush1.bf16.xpose.msra.mxu0 0
      %1776 = vmatprep.mubr.bf16.mxu0 0
      %1777 = vmatmul.mubr.bf16.gmra.mrb[0].mxu0 %v1739
      %v1778 = vpop.f32.mrb[0].mxu0
      %v1779 = vadd.f32 0.0, %v1778
      %v1780 = vpop.f32.mrb[0].mxu0
      %v1781 = vpop.f32.mrb[0].mxu0
      %v1782 = vpop.f32.mrb[0].mxu0
      %1783 = vdwg.mxu0
      %v1784 = vsel %vm1086, %v1779, -inf
      %1785 = vmax.xlane.f32.xlu0 %v1784
      %v1786 = vpop.xlane.xlu0 %1785
      %v1787 = vsub.f32 %v1779, %v1786
      %v1788 = vmul.f32 %v1787, 1.442695
      %v1789 = vpow.pop %v1788
      %v1790 = vsel %vm1086, %v1789, 0.0
      %1791 = vadd.xlane.f32.xlu0 %v1790
      %v1792 = vpop.xlane.xlu0 %1791
      %v1793 = vrcp.pop %v1792
      %v1794 = vmul.f32 %v1789, %v1793
      %v1795 = vmul.f32 %v1730, %v1036
      %v1796 = vpack.c.bf16 %v1794, %v1794
      %v1797 = vpack.c.bf16 %v1795, %v1795
      %v1798 = vmul.f32 %v1630, %v1105
      %v1799 = vpack.c.bf16 %v1798, %v1798
      %v1801 = vsel %vm890, %v1799, 0
      %1803 = vmatprep.subr.bf16.mxu0 0
      %1804 = vmatpush1.bf16.xpose.msra.mxu0 %v1742
      %1805 = vmatprep.subr.bf16.mxu0 0
      %1806 = vmatpush1.bf16.xpose.msra.mxu0 0
      %1807 = vmatprep.subr.bf16.mxu0 0
      %1808 = vmatpush1.bf16.xpose.msra.mxu0 0
      %1809 = vmatprep.subr.bf16.mxu0 0
      %1810 = vmatpush1.bf16.xpose.msra.mxu0 0
      %1811 = vmatprep.subr.bf16.mxu0 0
      %1812 = vmatpush1.bf16.xpose.msra.mxu0 0
      %1813 = vmatprep.subr.bf16.mxu0 0
      %1814 = vmatpush1.bf16.xpose.msra.mxu0 0
      %1815 = vmatprep.subr.bf16.mxu0 0
      %1816 = vmatpush1.bf16.xpose.msra.mxu0 0
      %1817 = vmatprep.subr.bf16.mxu0 0
      %1818 = vmatpush1.bf16.xpose.msra.mxu0 0
      %1819 = vmatprep.subr.bf16.mxu0 0
      %1820 = vmatpush1.bf16.xpose.msra.mxu0 0
      %1821 = vmatprep.subr.bf16.mxu0 0
      %1822 = vmatpush1.bf16.xpose.msra.mxu0 0
      %1823 = vmatprep.subr.bf16.mxu0 0
      %1824 = vmatpush1.bf16.xpose.msra.mxu0 0
      %1825 = vmatprep.subr.bf16.mxu0 0
      %1826 = vmatpush1.bf16.xpose.msra.mxu0 0
      %1827 = vmatprep.subr.bf16.mxu0 0
      %1828 = vmatpush1.bf16.xpose.msra.mxu0 0
      %1829 = vmatprep.subr.bf16.mxu0 0
      %1830 = vmatpush1.bf16.xpose.msra.mxu0 0
      %1831 = vmatprep.subr.bf16.mxu0 0
      %1832 = vmatpush1.bf16.xpose.msra.mxu0 0
      %1833 = vmatprep.subr.bf16.mxu0 0
      %1834 = vmatpush1.bf16.xpose.msra.mxu0 0
      %1835 = vmatprep.mubr.bf16.mxu0 0
      %1836 = vmatmul.mubr.bf16.gmra.mrb[0].mxu0 %v1801
      %v1837 = vpop.f32.mrb[0].mxu0
      %v1838 = vadd.f32 0.0, %v1837
      %v1839 = vpop.f32.mrb[0].mxu0
      %v1840 = vpop.f32.mrb[0].mxu0
      %v1841 = vpop.f32.mrb[0].mxu0
      %1842 = vdwg.mxu0
      %v1843 = vsel %vm1086, %v1838, -inf
      %1844 = vmax.xlane.f32.xlu0 %v1843
      %v1845 = vpop.xlane.xlu0 %1844
      %v1846 = vsub.f32 %v1838, %v1845
      %v1847 = vmul.f32 %v1846, 1.442695
      %v1848 = vpow.pop %v1847
      %v1849 = vsel %vm1086, %v1848, 0.0
      %1850 = vadd.xlane.f32.xlu0 %v1849
      %v1851 = vpop.xlane.xlu0 %1850
      %v1852 = vrcp.pop %v1851
      %v1853 = vmul.f32 %v1848, %v1852
      %v1854 = vmul.f32 %v1730, %v1105
      %v1855 = vpack.c.bf16 %v1853, %v1853
      %v1856 = vpack.c.bf16 %v1854, %v1854
      %v1858 = vsel %vm1086, %v1855, 0
      %v1861 = vsel %vm1168, %v1856, 0
      %1863 = vmatprep.subr.bf16.mxu0 0
      %1864 = vmatpush1.bf16.msra.mxu0 %v1861
      %1865 = vmatprep.subr.bf16.mxu0 0
      %1866 = vmatpush1.bf16.msra.mxu0 0
      %1867 = vmatprep.subr.bf16.mxu0 0
      %1868 = vmatpush1.bf16.msra.mxu0 0
      %1869 = vmatprep.subr.bf16.mxu0 0
      %1870 = vmatpush1.bf16.msra.mxu0 0
      %1871 = vmatprep.subr.bf16.mxu0 0
      %1872 = vmatpush1.bf16.msra.mxu0 0
      %1873 = vmatprep.subr.bf16.mxu0 0
      %1874 = vmatpush1.bf16.msra.mxu0 0
      %1875 = vmatprep.subr.bf16.mxu0 0
      %1876 = vmatpush1.bf16.msra.mxu0 0
      %1877 = vmatprep.subr.bf16.mxu0 0
      %1878 = vmatpush1.bf16.msra.mxu0 0
      %1879 = vmatprep.subr.bf16.mxu0 0
      %1880 = vmatpush1.bf16.msra.mxu0 0
      %1881 = vmatprep.subr.bf16.mxu0 0
      %1882 = vmatpush1.bf16.msra.mxu0 0
      %1883 = vmatprep.subr.bf16.mxu0 0
      %1884 = vmatpush1.bf16.msra.mxu0 0
      %1885 = vmatprep.subr.bf16.mxu0 0
      %1886 = vmatpush1.bf16.msra.mxu0 0
      %1887 = vmatprep.subr.bf16.mxu0 0
      %1888 = vmatpush1.bf16.msra.mxu0 0
      %1889 = vmatprep.subr.bf16.mxu0 0
      %1890 = vmatpush1.bf16.msra.mxu0 0
      %1891 = vmatprep.subr.bf16.mxu0 0
      %1892 = vmatpush1.bf16.msra.mxu0 0
      %1893 = vmatprep.subr.bf16.mxu0 0
      %1894 = vmatpush1.bf16.msra.mxu0 0
      %1895 = vmatprep.mubr.bf16.mxu0 0
      %1896 = vmatmul.mubr.bf16.gmra.mrb[0].mxu0 %v1858
      %v1897 = vpop.f32.mrb[0].mxu0
      %v1898 = vadd.f32 0.0, %v1897
      %v1899 = vpop.f32.mrb[0].mxu0
      %v1900 = vpop.f32.mrb[0].mxu0
      %v1901 = vpop.f32.mrb[0].mxu0
      %1902 = vdwg.mxu0
      %v1904 = vsel %vm1086, %v1796, 0
      %v1907 = vsel %vm1168, %v1797, 0
      %1909 = vmatprep.subr.bf16.mxu0 0
      %1910 = vmatpush1.bf16.msra.mxu0 %v1907
      %1911 = vmatprep.subr.bf16.mxu0 0
      %1912 = vmatpush1.bf16.msra.mxu0 0
      %1913 = vmatprep.subr.bf16.mxu0 0
      %1914 = vmatpush1.bf16.msra.mxu0 0
      %1915 = vmatprep.subr.bf16.mxu0 0
      %1916 = vmatpush1.bf16.msra.mxu0 0
      %1917 = vmatprep.subr.bf16.mxu0 0
      %1918 = vmatpush1.bf16.msra.mxu0 0
      %1919 = vmatprep.subr.bf16.mxu0 0
      %1920 = vmatpush1.bf16.msra.mxu0 0
      %1921 = vmatprep.subr.bf16.mxu0 0
      %1922 = vmatpush1.bf16.msra.mxu0 0
      %1923 = vmatprep.subr.bf16.mxu0 0
      %1924 = vmatpush1.bf16.msra.mxu0 0
      %1925 = vmatprep.subr.bf16.mxu0 0
      %1926 = vmatpush1.bf16.msra.mxu0 0
      %1927 = vmatprep.subr.bf16.mxu0 0
      %1928 = vmatpush1.bf16.msra.mxu0 0
      %1929 = vmatprep.subr.bf16.mxu0 0
      %1930 = vmatpush1.bf16.msra.mxu0 0
      %1931 = vmatprep.subr.bf16.mxu0 0
      %1932 = vmatpush1.bf16.msra.mxu0 0
      %1933 = vmatprep.subr.bf16.mxu0 0
      %1934 = vmatpush1.bf16.msra.mxu0 0
      %1935 = vmatprep.subr.bf16.mxu0 0
      %1936 = vmatpush1.bf16.msra.mxu0 0
      %1937 = vmatprep.subr.bf16.mxu0 0
      %1938 = vmatpush1.bf16.msra.mxu0 0
      %1939 = vmatprep.subr.bf16.mxu0 0
      %1940 = vmatpush1.bf16.msra.mxu0 0
      %1941 = vmatprep.mubr.bf16.mxu0 0
      %1942 = vmatmul.mubr.bf16.gmra.mrb[0].mxu0 %v1904
      %v1943 = vpop.f32.mrb[0].mxu0
      %v1944 = vadd.f32 %v1898, %v1943
      %v1945 = vpop.f32.mrb[0].mxu0
      %v1946 = vpop.f32.mrb[0].mxu0
      %v1947 = vpop.f32.mrb[0].mxu0
      %1948 = vdwg.mxu0
      %v1949 = vmul.f32 %v1630, %v1262
      %v1950 = vpack.c.bf16 %v1949, %v1949
      %v1952 = vsel %vm890, %v1950, 0
      %1954 = vmatprep.subr.bf16.mxu0 0
      %1955 = vmatpush1.bf16.xpose.msra.mxu0 %v1742
      %1956 = vmatprep.subr.bf16.mxu0 0
      %1957 = vmatpush1.bf16.xpose.msra.mxu0 0
      %1958 = vmatprep.subr.bf16.mxu0 0
      %1959 = vmatpush1.bf16.xpose.msra.mxu0 0
      %1960 = vmatprep.subr.bf16.mxu0 0
      %1961 = vmatpush1.bf16.xpose.msra.mxu0 0
      %1962 = vmatprep.subr.bf16.mxu0 0
      %1963 = vmatpush1.bf16.xpose.msra.mxu0 0
      %1964 = vmatprep.subr.bf16.mxu0 0
      %1965 = vmatpush1.bf16.xpose.msra.mxu0 0
      %1966 = vmatprep.subr.bf16.mxu0 0
      %1967 = vmatpush1.bf16.xpose.msra.mxu0 0
      %1968 = vmatprep.subr.bf16.mxu0 0
      %1969 = vmatpush1.bf16.xpose.msra.mxu0 0
      %1970 = vmatprep.subr.bf16.mxu0 0
      %1971 = vmatpush1.bf16.xpose.msra.mxu0 0
      %1972 = vmatprep.subr.bf16.mxu0 0
      %1973 = vmatpush1.bf16.xpose.msra.mxu0 0
      %1974 = vmatprep.subr.bf16.mxu0 0
      %1975 = vmatpush1.bf16.xpose.msra.mxu0 0
      %1976 = vmatprep.subr.bf16.mxu0 0
      %1977 = vmatpush1.bf16.xpose.msra.mxu0 0
      %1978 = vmatprep.subr.bf16.mxu0 0
      %1979 = vmatpush1.bf16.xpose.msra.mxu0 0
      %1980 = vmatprep.subr.bf16.mxu0 0
      %1981 = vmatpush1.bf16.xpose.msra.mxu0 0
      %1982 = vmatprep.subr.bf16.mxu0 0
      %1983 = vmatpush1.bf16.xpose.msra.mxu0 0
      %1984 = vmatprep.subr.bf16.mxu0 0
      %1985 = vmatpush1.bf16.xpose.msra.mxu0 0
      %1986 = vmatprep.mubr.bf16.mxu0 0
      %1987 = vmatmul.mubr.bf16.gmra.mrb[0].mxu0 %v1952
      %v1988 = vpop.f32.mrb[0].mxu0
      %v1989 = vadd.f32 0.0, %v1988
      %v1990 = vpop.f32.mrb[0].mxu0
      %v1991 = vpop.f32.mrb[0].mxu0
      %v1992 = vpop.f32.mrb[0].mxu0
      %1993 = vdwg.mxu0
      %v1994 = vsel %vm1086, %v1989, -inf
      %1995 = vmax.xlane.f32.xlu0 %v1994
      %v1996 = vpop.xlane.xlu0 %1995
      %v1997 = vsub.f32 %v1989, %v1996
      %v1998 = vmul.f32 %v1997, 1.442695
      %v1999 = vpow.pop %v1998
      %v2000 = vsel %vm1086, %v1999, 0.0
      %2001 = vadd.xlane.f32.xlu0 %v2000
      %v2002 = vpop.xlane.xlu0 %2001
      %v2003 = vrcp.pop %v2002
      %v2004 = vmul.f32 %v1999, %v2003
      %v2005 = vmul.f32 %v1730, %v1262
      %v2006 = vpack.c.bf16 %v2004, %v2004
      %v2007 = vpack.c.bf16 %v2005, %v2005
      %v2009 = vsel %vm1086, %v2006, 0
      %v2012 = vsel %vm1168, %v2007, 0
      %2014 = vmatprep.subr.bf16.mxu0 0
      %2015 = vmatpush1.bf16.msra.mxu0 %v2012
      %2016 = vmatprep.subr.bf16.mxu0 0
      %2017 = vmatpush1.bf16.msra.mxu0 0
      %2018 = vmatprep.subr.bf16.mxu0 0
      %2019 = vmatpush1.bf16.msra.mxu0 0
      %2020 = vmatprep.subr.bf16.mxu0 0
      %2021 = vmatpush1.bf16.msra.mxu0 0
      %2022 = vmatprep.subr.bf16.mxu0 0
      %2023 = vmatpush1.bf16.msra.mxu0 0
      %2024 = vmatprep.subr.bf16.mxu0 0
      %2025 = vmatpush1.bf16.msra.mxu0 0
      %2026 = vmatprep.subr.bf16.mxu0 0
      %2027 = vmatpush1.bf16.msra.mxu0 0
      %2028 = vmatprep.subr.bf16.mxu0 0
      %2029 = vmatpush1.bf16.msra.mxu0 0
      %2030 = vmatprep.subr.bf16.mxu0 0
      %2031 = vmatpush1.bf16.msra.mxu0 0
      %2032 = vmatprep.subr.bf16.mxu0 0
      %2033 = vmatpush1.bf16.msra.mxu0 0
      %2034 = vmatprep.subr.bf16.mxu0 0
      %2035 = vmatpush1.bf16.msra.mxu0 0
      %2036 = vmatprep.subr.bf16.mxu0 0
      %2037 = vmatpush1.bf16.msra.mxu0 0
      %2038 = vmatprep.subr.bf16.mxu0 0
      %2039 = vmatpush1.bf16.msra.mxu0 0
      %2040 = vmatprep.subr.bf16.mxu0 0
      %2041 = vmatpush1.bf16.msra.mxu0 0
      %2042 = vmatprep.subr.bf16.mxu0 0
      %2043 = vmatpush1.bf16.msra.mxu0 0
      %2044 = vmatprep.subr.bf16.mxu0 0
      %2045 = vmatpush1.bf16.msra.mxu0 0
      %2046 = vmatprep.mubr.bf16.mxu0 0
      %2047 = vmatmul.mubr.bf16.gmra.mrb[0].mxu0 %v2009
      %v2048 = vpop.f32.mrb[0].mxu0
      %v2049 = vadd.f32 0.0, %v2048
      %v2050 = vpop.f32.mrb[0].mxu0
      %v2051 = vpop.f32.mrb[0].mxu0
      %v2052 = vpop.f32.mrb[0].mxu0
      %2053 = vdwg.mxu0
      %v2054 = vadd.f32 %v1944, %v2049
      %v2055 = vmul.f32 %v1630, %v1373
      %v2056 = vpack.c.bf16 %v2055, %v2055
      %v2058 = vsel %vm890, %v2056, 0
      %2060 = vmatprep.subr.bf16.mxu0 0
      %2061 = vmatpush1.bf16.xpose.msra.mxu0 %v1742
      %2062 = vmatprep.subr.bf16.mxu0 0
      %2063 = vmatpush1.bf16.xpose.msra.mxu0 0
      %2064 = vmatprep.subr.bf16.mxu0 0
      %2065 = vmatpush1.bf16.xpose.msra.mxu0 0
      %2066 = vmatprep.subr.bf16.mxu0 0
      %2067 = vmatpush1.bf16.xpose.msra.mxu0 0
      %2068 = vmatprep.subr.bf16.mxu0 0
      %2069 = vmatpush1.bf16.xpose.msra.mxu0 0
      %2070 = vmatprep.subr.bf16.mxu0 0
      %2071 = vmatpush1.bf16.xpose.msra.mxu0 0
      %2072 = vmatprep.subr.bf16.mxu0 0
      %2073 = vmatpush1.bf16.xpose.msra.mxu0 0
      %2074 = vmatprep.subr.bf16.mxu0 0
      %2075 = vmatpush1.bf16.xpose.msra.mxu0 0
      %2076 = vmatprep.subr.bf16.mxu0 0
      %2077 = vmatpush1.bf16.xpose.msra.mxu0 0
      %2078 = vmatprep.subr.bf16.mxu0 0
      %2079 = vmatpush1.bf16.xpose.msra.mxu0 0
      %2080 = vmatprep.subr.bf16.mxu0 0
      %2081 = vmatpush1.bf16.xpose.msra.mxu0 0
      %2082 = vmatprep.subr.bf16.mxu0 0
      %2083 = vmatpush1.bf16.xpose.msra.mxu0 0
      %2084 = vmatprep.subr.bf16.mxu0 0
      %2085 = vmatpush1.bf16.xpose.msra.mxu0 0
      %2086 = vmatprep.subr.bf16.mxu0 0
      %2087 = vmatpush1.bf16.xpose.msra.mxu0 0
      %2088 = vmatprep.subr.bf16.mxu0 0
      %2089 = vmatpush1.bf16.xpose.msra.mxu0 0
      %2090 = vmatprep.subr.bf16.mxu0 0
      %2091 = vmatpush1.bf16.xpose.msra.mxu0 0
      %2092 = vmatprep.mubr.bf16.mxu0 0
      %2093 = vmatmul.mubr.bf16.gmra.mrb[0].mxu0 %v2058
      %v2094 = vpop.f32.mrb[0].mxu0
      %v2095 = vadd.f32 0.0, %v2094
      %v2096 = vpop.f32.mrb[0].mxu0
      %v2097 = vpop.f32.mrb[0].mxu0
      %v2098 = vpop.f32.mrb[0].mxu0
      %2099 = vdwg.mxu0
      %v2100 = vsel %vm1086, %v2095, -inf
      %2101 = vmax.xlane.f32.xlu0 %v2100
      %v2102 = vpop.xlane.xlu0 %2101
      %v2103 = vsub.f32 %v2095, %v2102
      %v2104 = vmul.f32 %v2103, 1.442695
      %v2105 = vpow.pop %v2104
      %v2106 = vsel %vm1086, %v2105, 0.0
      %2107 = vadd.xlane.f32.xlu0 %v2106
      %v2108 = vpop.xlane.xlu0 %2107
      %v2109 = vrcp.pop %v2108
      %v2110 = vmul.f32 %v2105, %v2109
      %v2111 = vmul.f32 %v1730, %v1373
      %v2112 = vpack.c.bf16 %v2110, %v2110
      %v2113 = vpack.c.bf16 %v2111, %v2111
      %v2115 = vsel %vm1086, %v2112, 0
      %v2118 = vsel %vm1168, %v2113, 0
      %2120 = vmatprep.subr.bf16.mxu0 0
      %2121 = vmatpush1.bf16.msra.mxu0 %v2118
      %2122 = vmatprep.subr.bf16.mxu0 0
      %2123 = vmatpush1.bf16.msra.mxu0 0
      %2124 = vmatprep.subr.bf16.mxu0 0
      %2125 = vmatpush1.bf16.msra.mxu0 0
      %2126 = vmatprep.subr.bf16.mxu0 0
      %2127 = vmatpush1.bf16.msra.mxu0 0
      %2128 = vmatprep.subr.bf16.mxu0 0
      %2129 = vmatpush1.bf16.msra.mxu0 0
      %2130 = vmatprep.subr.bf16.mxu0 0
      %2131 = vmatpush1.bf16.msra.mxu0 0
      %2132 = vmatprep.subr.bf16.mxu0 0
      %2133 = vmatpush1.bf16.msra.mxu0 0
      %2134 = vmatprep.subr.bf16.mxu0 0
      %2135 = vmatpush1.bf16.msra.mxu0 0
      %2136 = vmatprep.subr.bf16.mxu0 0
      %2137 = vmatpush1.bf16.msra.mxu0 0
      %2138 = vmatprep.subr.bf16.mxu0 0
      %2139 = vmatpush1.bf16.msra.mxu0 0
      %2140 = vmatprep.subr.bf16.mxu0 0
      %2141 = vmatpush1.bf16.msra.mxu0 0
      %2142 = vmatprep.subr.bf16.mxu0 0
      %2143 = vmatpush1.bf16.msra.mxu0 0
      %2144 = vmatprep.subr.bf16.mxu0 0
      %2145 = vmatpush1.bf16.msra.mxu0 0
      %2146 = vmatprep.subr.bf16.mxu0 0
      %2147 = vmatpush1.bf16.msra.mxu0 0
      %2148 = vmatprep.subr.bf16.mxu0 0
      %2149 = vmatpush1.bf16.msra.mxu0 0
      %2150 = vmatprep.subr.bf16.mxu0 0
      %2151 = vmatpush1.bf16.msra.mxu0 0
      %2152 = vmatprep.mubr.bf16.mxu0 0
      %2153 = vmatmul.mubr.bf16.gmra.mrb[0].mxu0 %v2115
      %v2154 = vpop.f32.mrb[0].mxu0
      %v2155 = vadd.f32 0.0, %v2154
      %v2156 = vpop.f32.mrb[0].mxu0
      %v2157 = vpop.f32.mrb[0].mxu0
      %v2158 = vpop.f32.mrb[0].mxu0
      %2159 = vdwg.mxu0
      %v2160 = vadd.f32 %v2054, %v2155
      %v2161 = vpack.c.bf16 %v2160, %v2160
      %v2162 = vpack.c.bf16 %v1579, %v1578
      %v2163 = vpack.c.bf16 %v1581, %v1580
      %v2165 = vlaneseq
      %v2166 = vshrl.u32 %v2165, 7
      %v2167 = vsub.s32 0, %v2166
      %v2168 = vrot.slane %v1582, %v2167
      %v2171 = vsel %vm890, %v2161, 0
      %2173 = vmatprep.subr.bf16.mxu0 0
      %2174 = vmatpush1.bf16.msra.mxu0 %v2162
      %2175 = vmatprep.subr.bf16.mxu0 0
      %2176 = vmatpush1.bf16.msra.mxu0 %v2163
      %2177 = vmatprep.subr.bf16.mxu0 0
      %2178 = vmatpush1.bf16.msra.mxu0 0
      %2179 = vmatprep.subr.bf16.mxu0 0
      %2180 = vmatpush1.bf16.msra.mxu0 0
      %2181 = vmatprep.subr.bf16.mxu0 0
      %2182 = vmatpush1.bf16.msra.mxu0 0
      %2183 = vmatprep.subr.bf16.mxu0 0
      %2184 = vmatpush1.bf16.msra.mxu0 0
      %2185 = vmatprep.subr.bf16.mxu0 0
      %2186 = vmatpush1.bf16.msra.mxu0 0
      %2187 = vmatprep.subr.bf16.mxu0 0
      %2188 = vmatpush1.bf16.msra.mxu0 0
      %2189 = vmatprep.subr.bf16.mxu0 0
      %2190 = vmatpush1.bf16.msra.mxu0 0
      %2191 = vmatprep.subr.bf16.mxu0 0
      %2192 = vmatpush1.bf16.msra.mxu0 0
      %2193 = vmatprep.subr.bf16.mxu0 0
      %2194 = vmatpush1.bf16.msra.mxu0 0
      %2195 = vmatprep.subr.bf16.mxu0 0
      %2196 = vmatpush1.bf16.msra.mxu0 0
      %2197 = vmatprep.subr.bf16.mxu0 0
      %2198 = vmatpush1.bf16.msra.mxu0 0
      %2199 = vmatprep.subr.bf16.mxu0 0
      %2200 = vmatpush1.bf16.msra.mxu0 0
      %2201 = vmatprep.subr.bf16.mxu0 0
      %2202 = vmatpush1.bf16.msra.mxu0 0
      %2203 = vmatprep.subr.bf16.mxu0 0
      %2204 = vmatpush1.bf16.msra.mxu0 0
      %2205 = vmatprep.mubr.bf16.mxu0 0
      %2206 = vmatmul.mubr.bf16.gmra.mrb[0].mxu0 %v2171
      %v2207 = vpop.f32.mrb[0].mxu0
      %v2208 = vadd.f32 %v2168, %v2207
      %v2209 = vpop.f32.mrb[0].mxu0
      %v2210 = vpop.f32.mrb[0].mxu0
      %v2211 = vpop.f32.mrb[0].mxu0
      %2212 = vdwg.mxu0
      %v2213 = vadd.f32 %v1562, %v2208
      %v2214 = vld [vmem:[%s20] sm:$0x1]
      %v2215 = vld [vmem:[%s21] sm:$0x1]
      %v2216 = vsel %vm890, %v2213, 0.0
      %2217 = vadd.xlane.f32.xlu0 %v2216
      %v2218 = vpop.xlane.xlu0 %2217
      %v2219 = vmul.f32 %v2218, %v1538
      %v2220 = vsub.f32 %v2213, %v2219
      %v2221 = vmul.f32 %v2220, %v2220
      %v2222 = vsel %vm890, %v2221, 0.0
      %2223 = vadd.xlane.f32.xlu0 %v2222
      %v2224 = vpop.xlane.xlu0 %2223
      %v2225 = vmul.f32 %v2224, %v1538
      %v2226 = vadd.f32 %v2225, 1e-05
      %v2227 = vrsqrt.pop %v2226
      %v2228 = vmul.f32 %v2220, %v2227
      %v2230 = vlaneseq
      %v2231 = vshrl.u32 %v2230, 7
      %v2232 = vsub.s32 0, %v2231
      %v2233 = vrot.slane %v2214, %v2232
      %v2235 = vmul.f32 %v2228, %v2233
      %v2237 = vlaneseq
      %v2238 = vshrl.u32 %v2237, 7
      %v2239 = vsub.s32 0, %v2238
      %v2240 = vrot.slane %v2215, %v2239
      %v2242 = vadd.f32 %v2235, %v2240
      %v2243 = vld [vmem:[%s22] sm:$0xff]
      %v2244 = vld [vmem:[%s22 + $0x8] sm:$0xff]
      %v2245 = vld [vmem:[%s22 + $0x10] sm:$0xff]
      %v2246 = vld [vmem:[%s22 + $0x18] sm:$0xff]
      %v2247 = vld [vmem:[%s22 + $0x20] sm:$0xff]
      %v2248 = vld [vmem:[%s22 + $0x28] sm:$0xff]
      %v2249 = vld [vmem:[%s22 + $0x30] sm:$0xff]
      %v2250 = vld [vmem:[%s22 + $0x38] sm:$0xff]
      %v2251 = vld [vmem:[%s22 + $0x40] sm:$0xff]
      %v2252 = vld [vmem:[%s22 + $0x48] sm:$0xff]
      %v2253 = vld [vmem:[%s22 + $0x50] sm:$0xff]
      %v2254 = vld [vmem:[%s22 + $0x58] sm:$0xff]
      %v2255 = vld [vmem:[%s22 + $0x60] sm:$0xff]
      %v2256 = vld [vmem:[%s22 + $0x68] sm:$0xff]
      %v2257 = vld [vmem:[%s22 + $0x70] sm:$0xff]
      %v2258 = vld [vmem:[%s22 + $0x78] sm:$0xff]
      %v2259 = vld [vmem:[%s22 + $0x80] sm:$0xff]
      %v2260 = vld [vmem:[%s22 + $0x88] sm:$0xff]
      %v2261 = vld [vmem:[%s22 + $0x90] sm:$0xff]
      %v2262 = vld [vmem:[%s22 + $0x98] sm:$0xff]
      %v2263 = vld [vmem:[%s22 + $0xa0] sm:$0xff]
      %v2264 = vld [vmem:[%s22 + $0xa8] sm:$0xff]
      %v2265 = vld [vmem:[%s22 + $0xb0] sm:$0xff]
      %v2266 = vld [vmem:[%s22 + $0xb8] sm:$0xff]
      %v2267 = vld [vmem:[%s22 + $0xc0] sm:$0xff]
      %v2268 = vld [vmem:[%s22 + $0xc8] sm:$0xff]
      %v2269 = vld [vmem:[%s22 + $0xd0] sm:$0xff]
      %v2270 = vld [vmem:[%s22 + $0xd8] sm:$0xff]
      %v2271 = vld [vmem:[%s22 + $0xe0] sm:$0xff]
      %v2272 = vld [vmem:[%s22 + $0xe8] sm:$0xff]
      %v2273 = vld [vmem:[%s22 + $0xf0] sm:$0xff]
      %v2274 = vld [vmem:[%s22 + $0xf8] sm:$0xff]
      %v2275 = vld [vmem:[%s22 + $0x100] sm:$0xff]
      %v2276 = vld [vmem:[%s22 + $0x108] sm:$0xff]
      %v2277 = vld [vmem:[%s22 + $0x110] sm:$0xff]
      %v2278 = vld [vmem:[%s22 + $0x118] sm:$0xff]
      %v2279 = vld [vmem:[%s22 + $0x120] sm:$0xff]
      %v2280 = vld [vmem:[%s22 + $0x128] sm:$0xff]
      %v2281 = vld [vmem:[%s22 + $0x130] sm:$0xff]
      %v2282 = vld [vmem:[%s22 + $0x138] sm:$0xff]
      %v2283 = vld [vmem:[%s22 + $0x140] sm:$0xff]
      %v2284 = vld [vmem:[%s22 + $0x148] sm:$0xff]
      %v2285 = vld [vmem:[%s22 + $0x150] sm:$0xff]
      %v2286 = vld [vmem:[%s22 + $0x158] sm:$0xff]
      %v2287 = vld [vmem:[%s22 + $0x160] sm:$0xff]
      %v2288 = vld [vmem:[%s22 + $0x168] sm:$0xff]
      %v2289 = vld [vmem:[%s22 + $0x170] sm:$0xff]
      %v2290 = vld [vmem:[%s22 + $0x178] sm:$0xff]
      %v2291 = vld [vmem:[%s22 + $0x180] sm:$0xff]
      %v2292 = vld [vmem:[%s22 + $0x188] sm:$0xff]
      %v2293 = vld [vmem:[%s22 + $0x190] sm:$0xff]
      %v2294 = vld [vmem:[%s22 + $0x198] sm:$0xff]
      %v2295 = vld [vmem:[%s22 + $0x1a0] sm:$0xff]
      %v2296 = vld [vmem:[%s22 + $0x1a8] sm:$0xff]
      %v2297 = vld [vmem:[%s22 + $0x1b0] sm:$0xff]
      %v2298 = vld [vmem:[%s22 + $0x1b8] sm:$0xff]
      %v2299 = vld [vmem:[%s22 + $0x1c0] sm:$0xff]
      %v2300 = vld [vmem:[%s22 + $0x1c8] sm:$0xff]
      %v2301 = vld [vmem:[%s22 + $0x1d0] sm:$0xff]
      %v2302 = vld [vmem:[%s22 + $0x1d8] sm:$0xff]
      %v2303 = vld [vmem:[%s22 + $0x1e0] sm:$0xff]
      %v2304 = vld [vmem:[%s22 + $0x1e8] sm:$0xff]
      %v2305 = vld [vmem:[%s22 + $0x1f0] sm:$0xff]
      %v2306 = vld [vmem:[%s22 + $0x1f8] sm:$0xff]
      %v2307 = vld [vmem:[%s23] sm:$0xff]
      %v2308 = vld [vmem:[%s23 + $0x8] sm:$0xff]
      %v2309 = vld [vmem:[%s24] sm:$0xff]
      %v2310 = vld [vmem:[%s24 + $0x8] sm:$0xff]
      %v2311 = vld [vmem:[%s24 + $0x10] sm:$0xff]
      %v2312 = vld [vmem:[%s24 + $0x18] sm:$0xff]
      %v2313 = vld [vmem:[%s24 + $0x20] sm:$0xff]
      %v2314 = vld [vmem:[%s24 + $0x28] sm:$0xff]
      %v2315 = vld [vmem:[%s24 + $0x30] sm:$0xff]
      %v2316 = vld [vmem:[%s24 + $0x38] sm:$0xff]
      %v2317 = vld [vmem:[%s24 + $0x40] sm:$0xff]
      %v2318 = vld [vmem:[%s24 + $0x48] sm:$0xff]
      %v2319 = vld [vmem:[%s24 + $0x50] sm:$0xff]
      %v2320 = vld [vmem:[%s24 + $0x58] sm:$0xff]
      %v2321 = vld [vmem:[%s24 + $0x60] sm:$0xff]
      %v2322 = vld [vmem:[%s24 + $0x68] sm:$0xff]
      %v2323 = vld [vmem:[%s24 + $0x70] sm:$0xff]
      %v2324 = vld [vmem:[%s24 + $0x78] sm:$0xff]
      %v2325 = vld [vmem:[%s24 + $0x80] sm:$0xff]
      %v2326 = vld [vmem:[%s24 + $0x88] sm:$0xff]
      %v2327 = vld [vmem:[%s24 + $0x90] sm:$0xff]
      %v2328 = vld [vmem:[%s24 + $0x98] sm:$0xff]
      %v2329 = vld [vmem:[%s24 + $0xa0] sm:$0xff]
      %v2330 = vld [vmem:[%s24 + $0xa8] sm:$0xff]
      %v2331 = vld [vmem:[%s24 + $0xb0] sm:$0xff]
      %v2332 = vld [vmem:[%s24 + $0xb8] sm:$0xff]
      %v2333 = vld [vmem:[%s24 + $0xc0] sm:$0xff]
      %v2334 = vld [vmem:[%s24 + $0xc8] sm:$0xff]
      %v2335 = vld [vmem:[%s24 + $0xd0] sm:$0xff]
      %v2336 = vld [vmem:[%s24 + $0xd8] sm:$0xff]
      %v2337 = vld [vmem:[%s24 + $0xe0] sm:$0xff]
      %v2338 = vld [vmem:[%s24 + $0xe8] sm:$0xff]
      %v2339 = vld [vmem:[%s24 + $0xf0] sm:$0xff]
      %v2340 = vld [vmem:[%s24 + $0xf8] sm:$0xff]
      %v2341 = vld [vmem:[%s24 + $0x100] sm:$0xff]
      %v2342 = vld [vmem:[%s24 + $0x108] sm:$0xff]
      %v2343 = vld [vmem:[%s24 + $0x110] sm:$0xff]
      %v2344 = vld [vmem:[%s24 + $0x118] sm:$0xff]
      %v2345 = vld [vmem:[%s24 + $0x120] sm:$0xff]
      %v2346 = vld [vmem:[%s24 + $0x128] sm:$0xff]
      %v2347 = vld [vmem:[%s24 + $0x130] sm:$0xff]
      %v2348 = vld [vmem:[%s24 + $0x138] sm:$0xff]
      %v2349 = vld [vmem:[%s24 + $0x140] sm:$0xff]
      %v2350 = vld [vmem:[%s24 + $0x148] sm:$0xff]
      %v2351 = vld [vmem:[%s24 + $0x150] sm:$0xff]
      %v2352 = vld [vmem:[%s24 + $0x158] sm:$0xff]
      %v2353 = vld [vmem:[%s24 + $0x160] sm:$0xff]
      %v2354 = vld [vmem:[%s24 + $0x168] sm:$0xff]
      %v2355 = vld [vmem:[%s24 + $0x170] sm:$0xff]
      %v2356 = vld [vmem:[%s24 + $0x178] sm:$0xff]
      %v2357 = vld [vmem:[%s24 + $0x180] sm:$0xff]
      %v2358 = vld [vmem:[%s24 + $0x188] sm:$0xff]
      %v2359 = vld [vmem:[%s24 + $0x190] sm:$0xff]
      %v2360 = vld [vmem:[%s24 + $0x198] sm:$0xff]
      %v2361 = vld [vmem:[%s24 + $0x1a0] sm:$0xff]
      %v2362 = vld [vmem:[%s24 + $0x1a8] sm:$0xff]
      %v2363 = vld [vmem:[%s24 + $0x1b0] sm:$0xff]
      %v2364 = vld [vmem:[%s24 + $0x1b8] sm:$0xff]
      %v2365 = vld [vmem:[%s24 + $0x1c0] sm:$0xff]
      %v2366 = vld [vmem:[%s24 + $0x1c8] sm:$0xff]
      %v2367 = vld [vmem:[%s24 + $0x1d0] sm:$0xff]
      %v2368 = vld [vmem:[%s24 + $0x1d8] sm:$0xff]
      %v2369 = vld [vmem:[%s24 + $0x1e0] sm:$0xff]
      %v2370 = vld [vmem:[%s24 + $0x1e8] sm:$0xff]
      %v2371 = vld [vmem:[%s24 + $0x1f0] sm:$0xff]
      %v2372 = vld [vmem:[%s24 + $0x1f8] sm:$0xff]
      %v2373 = vld [vmem:[%s24 + $0x200] sm:$0xff]
      %v2374 = vld [vmem:[%s24 + $0x208] sm:$0xff]
      %v2375 = vld [vmem:[%s24 + $0x210] sm:$0xff]
      %v2376 = vld [vmem:[%s24 + $0x218] sm:$0xff]
      %v2377 = vld [vmem:[%s24 + $0x220] sm:$0xff]
      %v2378 = vld [vmem:[%s24 + $0x228] sm:$0xff]
      %v2379 = vld [vmem:[%s24 + $0x230] sm:$0xff]
      %v2380 = vld [vmem:[%s24 + $0x238] sm:$0xff]
      %v2381 = vld [vmem:[%s24 + $0x240] sm:$0xff]
      %v2382 = vld [vmem:[%s24 + $0x248] sm:$0xff]
      %v2383 = vld [vmem:[%s24 + $0x250] sm:$0xff]
      %v2384 = vld [vmem:[%s24 + $0x258] sm:$0xff]
      %v2385 = vld [vmem:[%s24 + $0x260] sm:$0xff]
      %v2386 = vld [vmem:[%s24 + $0x268] sm:$0xff]
      %v2387 = vld [vmem:[%s24 + $0x270] sm:$0xff]
      %v2388 = vld [vmem:[%s24 + $0x278] sm:$0xff]
      %v2389 = vld [vmem:[%s24 + $0x280] sm:$0xff]
      %v2390 = vld [vmem:[%s24 + $0x288] sm:$0xff]
      %v2391 = vld [vmem:[%s24 + $0x290] sm:$0xff]
      %v2392 = vld [vmem:[%s24 + $0x298] sm:$0xff]
      %v2393 = vld [vmem:[%s24 + $0x2a0] sm:$0xff]
      %v2394 = vld [vmem:[%s24 + $0x2a8] sm:$0xff]
      %v2395 = vld [vmem:[%s24 + $0x2b0] sm:$0xff]
      %v2396 = vld [vmem:[%s24 + $0x2b8] sm:$0xff]
      %v2397 = vld [vmem:[%s24 + $0x2c0] sm:$0xff]
      %v2398 = vld [vmem:[%s24 + $0x2c8] sm:$0xff]
      %v2399 = vld [vmem:[%s24 + $0x2d0] sm:$0xff]
      %v2400 = vld [vmem:[%s24 + $0x2d8] sm:$0xff]
      %v2401 = vld [vmem:[%s24 + $0x2e0] sm:$0xff]
      %v2402 = vld [vmem:[%s24 + $0x2e8] sm:$0xff]
      %v2403 = vld [vmem:[%s24 + $0x2f0] sm:$0xff]
      %v2404 = vld [vmem:[%s24 + $0x2f8] sm:$0xff]
      %v2405 = vld [vmem:[%s24 + $0x300] sm:$0xff]
      %v2406 = vld [vmem:[%s24 + $0x308] sm:$0xff]
      %v2407 = vld [vmem:[%s24 + $0x310] sm:$0xff]
      %v2408 = vld [vmem:[%s24 + $0x318] sm:$0xff]
      %v2409 = vld [vmem:[%s24 + $0x320] sm:$0xff]
      %v2410 = vld [vmem:[%s24 + $0x328] sm:$0xff]
      %v2411 = vld [vmem:[%s24 + $0x330] sm:$0xff]
      %v2412 = vld [vmem:[%s24 + $0x338] sm:$0xff]
      %v2413 = vld [vmem:[%s24 + $0x340] sm:$0xff]
      %v2414 = vld [vmem:[%s24 + $0x348] sm:$0xff]
      %v2415 = vld [vmem:[%s24 + $0x350] sm:$0xff]
      %v2416 = vld [vmem:[%s24 + $0x358] sm:$0xff]
      %v2417 = vld [vmem:[%s24 + $0x360] sm:$0xff]
      %v2418 = vld [vmem:[%s24 + $0x368] sm:$0xff]
      %v2419 = vld [vmem:[%s24 + $0x370] sm:$0xff]
      %v2420 = vld [vmem:[%s24 + $0x378] sm:$0xff]
      %v2421 = vld [vmem:[%s24 + $0x380] sm:$0xff]
      %v2422 = vld [vmem:[%s24 + $0x388] sm:$0xff]
      %v2423 = vld [vmem:[%s24 + $0x390] sm:$0xff]
      %v2424 = vld [vmem:[%s24 + $0x398] sm:$0xff]
      %v2425 = vld [vmem:[%s24 + $0x3a0] sm:$0xff]
      %v2426 = vld [vmem:[%s24 + $0x3a8] sm:$0xff]
      %v2427 = vld [vmem:[%s24 + $0x3b0] sm:$0xff]
      %v2428 = vld [vmem:[%s24 + $0x3b8] sm:$0xff]
      %v2429 = vld [vmem:[%s24 + $0x3c0] sm:$0xff]
      %v2430 = vld [vmem:[%s24 + $0x3c8] sm:$0xff]
      %v2431 = vld [vmem:[%s24 + $0x3d0] sm:$0xff]
      %v2432 = vld [vmem:[%s24 + $0x3d8] sm:$0xff]
      %v2433 = vld [vmem:[%s24 + $0x3e0] sm:$0xff]
      %v2434 = vld [vmem:[%s24 + $0x3e8] sm:$0xff]
      %v2435 = vld [vmem:[%s24 + $0x3f0] sm:$0xff]
      %v2436 = vld [vmem:[%s24 + $0x3f8] sm:$0xff]
      %v2437 = vld [vmem:[%s24 + $0x400] sm:$0xff]
      %v2438 = vld [vmem:[%s24 + $0x408] sm:$0xff]
      %v2439 = vld [vmem:[%s24 + $0x410] sm:$0xff]
      %v2440 = vld [vmem:[%s24 + $0x418] sm:$0xff]
      %v2441 = vld [vmem:[%s24 + $0x420] sm:$0xff]
      %v2442 = vld [vmem:[%s24 + $0x428] sm:$0xff]
      %v2443 = vld [vmem:[%s24 + $0x430] sm:$0xff]
      %v2444 = vld [vmem:[%s24 + $0x438] sm:$0xff]
      %v2445 = vld [vmem:[%s24 + $0x440] sm:$0xff]
      %v2446 = vld [vmem:[%s24 + $0x448] sm:$0xff]
      %v2447 = vld [vmem:[%s24 + $0x450] sm:$0xff]
      %v2448 = vld [vmem:[%s24 + $0x458] sm:$0xff]
      %v2449 = vld [vmem:[%s24 + $0x460] sm:$0xff]
      %v2450 = vld [vmem:[%s24 + $0x468] sm:$0xff]
      %v2451 = vld [vmem:[%s24 + $0x470] sm:$0xff]
      %v2452 = vld [vmem:[%s24 + $0x478] sm:$0xff]
      %v2453 = vld [vmem:[%s24 + $0x480] sm:$0xff]
      %v2454 = vld [vmem:[%s24 + $0x488] sm:$0xff]
      %v2455 = vld [vmem:[%s24 + $0x490] sm:$0xff]
      %v2456 = vld [vmem:[%s24 + $0x498] sm:$0xff]
      %v2457 = vld [vmem:[%s24 + $0x4a0] sm:$0xff]
      %v2458 = vld [vmem:[%s24 + $0x4a8] sm:$0xff]
      %v2459 = vld [vmem:[%s24 + $0x4b0] sm:$0xff]
      %v2460 = vld [vmem:[%s24 + $0x4b8] sm:$0xff]
      %v2461 = vld [vmem:[%s24 + $0x4c0] sm:$0xff]
      %v2462 = vld [vmem:[%s24 + $0x4c8] sm:$0xff]
      %v2463 = vld [vmem:[%s24 + $0x4d0] sm:$0xff]
      %v2464 = vld [vmem:[%s24 + $0x4d8] sm:$0xff]
      %v2465 = vld [vmem:[%s24 + $0x4e0] sm:$0xff]
      %v2466 = vld [vmem:[%s24 + $0x4e8] sm:$0xff]
      %v2467 = vld [vmem:[%s24 + $0x4f0] sm:$0xff]
      %v2468 = vld [vmem:[%s24 + $0x4f8] sm:$0xff]
      %v2469 = vld [vmem:[%s24 + $0x500] sm:$0xff]
      %v2470 = vld [vmem:[%s24 + $0x508] sm:$0xff]
      %v2471 = vld [vmem:[%s24 + $0x510] sm:$0xff]
      %v2472 = vld [vmem:[%s24 + $0x518] sm:$0xff]
      %v2473 = vld [vmem:[%s24 + $0x520] sm:$0xff]
      %v2474 = vld [vmem:[%s24 + $0x528] sm:$0xff]
      %v2475 = vld [vmem:[%s24 + $0x530] sm:$0xff]
      %v2476 = vld [vmem:[%s24 + $0x538] sm:$0xff]
      %v2477 = vld [vmem:[%s24 + $0x540] sm:$0xff]
      %v2478 = vld [vmem:[%s24 + $0x548] sm:$0xff]
      %v2479 = vld [vmem:[%s24 + $0x550] sm:$0xff]
      %v2480 = vld [vmem:[%s24 + $0x558] sm:$0xff]
      %v2481 = vld [vmem:[%s24 + $0x560] sm:$0xff]
      %v2482 = vld [vmem:[%s24 + $0x568] sm:$0xff]
      %v2483 = vld [vmem:[%s24 + $0x570] sm:$0xff]
      %v2484 = vld [vmem:[%s24 + $0x578] sm:$0xff]
      %v2485 = vld [vmem:[%s24 + $0x580] sm:$0xff]
      %v2486 = vld [vmem:[%s24 + $0x588] sm:$0xff]
      %v2487 = vld [vmem:[%s24 + $0x590] sm:$0xff]
      %v2488 = vld [vmem:[%s24 + $0x598] sm:$0xff]
      %v2489 = vld [vmem:[%s24 + $0x5a0] sm:$0xff]
      %v2490 = vld [vmem:[%s24 + $0x5a8] sm:$0xff]
      %v2491 = vld [vmem:[%s24 + $0x5b0] sm:$0xff]
      %v2492 = vld [vmem:[%s24 + $0x5b8] sm:$0xff]
      %v2493 = vld [vmem:[%s24 + $0x5c0] sm:$0xff]
      %v2494 = vld [vmem:[%s24 + $0x5c8] sm:$0xff]
      %v2495 = vld [vmem:[%s24 + $0x5d0] sm:$0xff]
      %v2496 = vld [vmem:[%s24 + $0x5d8] sm:$0xff]
      %v2497 = vld [vmem:[%s24 + $0x5e0] sm:$0xff]
      %v2498 = vld [vmem:[%s24 + $0x5e8] sm:$0xff]
      %v2499 = vld [vmem:[%s24 + $0x5f0] sm:$0xff]
      %v2500 = vld [vmem:[%s24 + $0x5f8] sm:$0xff]
      %v2501 = vld [vmem:[%s24 + $0x600] sm:$0xff]
      %v2502 = vld [vmem:[%s24 + $0x608] sm:$0xff]
      %v2503 = vld [vmem:[%s24 + $0x610] sm:$0xff]
      %v2504 = vld [vmem:[%s24 + $0x618] sm:$0xff]
      %v2505 = vld [vmem:[%s24 + $0x620] sm:$0xff]
      %v2506 = vld [vmem:[%s24 + $0x628] sm:$0xff]
      %v2507 = vld [vmem:[%s24 + $0x630] sm:$0xff]
      %v2508 = vld [vmem:[%s24 + $0x638] sm:$0xff]
      %v2509 = vld [vmem:[%s24 + $0x640] sm:$0xff]
      %v2510 = vld [vmem:[%s24 + $0x648] sm:$0xff]
      %v2511 = vld [vmem:[%s24 + $0x650] sm:$0xff]
      %v2512 = vld [vmem:[%s24 + $0x658] sm:$0xff]
      %v2513 = vld [vmem:[%s24 + $0x660] sm:$0xff]
      %v2514 = vld [vmem:[%s24 + $0x668] sm:$0xff]
      %v2515 = vld [vmem:[%s24 + $0x670] sm:$0xff]
      %v2516 = vld [vmem:[%s24 + $0x678] sm:$0xff]
      %v2517 = vld [vmem:[%s24 + $0x680] sm:$0xff]
      %v2518 = vld [vmem:[%s24 + $0x688] sm:$0xff]
      %v2519 = vld [vmem:[%s24 + $0x690] sm:$0xff]
      %v2520 = vld [vmem:[%s24 + $0x698] sm:$0xff]
      %v2521 = vld [vmem:[%s24 + $0x6a0] sm:$0xff]
      %v2522 = vld [vmem:[%s24 + $0x6a8] sm:$0xff]
      %v2523 = vld [vmem:[%s24 + $0x6b0] sm:$0xff]
      %v2524 = vld [vmem:[%s24 + $0x6b8] sm:$0xff]
      %v2525 = vld [vmem:[%s24 + $0x6c0] sm:$0xff]
      %v2526 = vld [vmem:[%s24 + $0x6c8] sm:$0xff]
      %v2527 = vld [vmem:[%s24 + $0x6d0] sm:$0xff]
      %v2528 = vld [vmem:[%s24 + $0x6d8] sm:$0xff]
      %v2529 = vld [vmem:[%s24 + $0x6e0] sm:$0xff]
      %v2530 = vld [vmem:[%s24 + $0x6e8] sm:$0xff]
      %v2531 = vld [vmem:[%s24 + $0x6f0] sm:$0xff]
      %v2532 = vld [vmem:[%s24 + $0x6f8] sm:$0xff]
      %v2533 = vld [vmem:[%s24 + $0x700] sm:$0xff]
      %v2534 = vld [vmem:[%s24 + $0x708] sm:$0xff]
      %v2535 = vld [vmem:[%s24 + $0x710] sm:$0xff]
      %v2536 = vld [vmem:[%s24 + $0x718] sm:$0xff]
      %v2537 = vld [vmem:[%s24 + $0x720] sm:$0xff]
      %v2538 = vld [vmem:[%s24 + $0x728] sm:$0xff]
      %v2539 = vld [vmem:[%s24 + $0x730] sm:$0xff]
      %v2540 = vld [vmem:[%s24 + $0x738] sm:$0xff]
      %v2541 = vld [vmem:[%s24 + $0x740] sm:$0xff]
      %v2542 = vld [vmem:[%s24 + $0x748] sm:$0xff]
      %v2543 = vld [vmem:[%s24 + $0x750] sm:$0xff]
      %v2544 = vld [vmem:[%s24 + $0x758] sm:$0xff]
      %v2545 = vld [vmem:[%s24 + $0x760] sm:$0xff]
      %v2546 = vld [vmem:[%s24 + $0x768] sm:$0xff]
      %v2547 = vld [vmem:[%s24 + $0x770] sm:$0xff]
      %v2548 = vld [vmem:[%s24 + $0x778] sm:$0xff]
      %v2549 = vld [vmem:[%s24 + $0x780] sm:$0xff]
      %v2550 = vld [vmem:[%s24 + $0x788] sm:$0xff]
      %v2551 = vld [vmem:[%s24 + $0x790] sm:$0xff]
      %v2552 = vld [vmem:[%s24 + $0x798] sm:$0xff]
      %v2553 = vld [vmem:[%s24 + $0x7a0] sm:$0xff]
      %v2554 = vld [vmem:[%s24 + $0x7a8] sm:$0xff]
      %v2555 = vld [vmem:[%s24 + $0x7b0] sm:$0xff]
      %v2556 = vld [vmem:[%s24 + $0x7b8] sm:$0xff]
      %v2557 = vld [vmem:[%s24 + $0x7c0] sm:$0xff]
      %v2558 = vld [vmem:[%s24 + $0x7c8] sm:$0xff]
      %v2559 = vld [vmem:[%s24 + $0x7d0] sm:$0xff]
      %v2560 = vld [vmem:[%s24 + $0x7d8] sm:$0xff]
      %v2561 = vld [vmem:[%s24 + $0x7e0] sm:$0xff]
      %v2562 = vld [vmem:[%s24 + $0x7e8] sm:$0xff]
      %v2563 = vld [vmem:[%s24 + $0x7f0] sm:$0xff]
      %v2564 = vld [vmem:[%s24 + $0x7f8] sm:$0xff]
      %v2565 = vld [vmem:[%s25] sm:$0x1]
      %v2566 = vpack.c.bf16 %v2242, %v2242
      %v2567 = vpack.c.bf16 %v2259, %v2243
      %v2568 = vpack.c.bf16 %v2260, %v2244
      %v2569 = vpack.c.bf16 %v2261, %v2245
      %v2570 = vpack.c.bf16 %v2262, %v2246
      %v2571 = vpack.c.bf16 %v2263, %v2247
      %v2572 = vpack.c.bf16 %v2264, %v2248
      %v2573 = vpack.c.bf16 %v2265, %v2249
      %v2574 = vpack.c.bf16 %v2266, %v2250
      %v2575 = vpack.c.bf16 %v2267, %v2251
      %v2576 = vpack.c.bf16 %v2268, %v2252
      %v2577 = vpack.c.bf16 %v2269, %v2253
      %v2578 = vpack.c.bf16 %v2270, %v2254
      %v2579 = vpack.c.bf16 %v2271, %v2255
      %v2580 = vpack.c.bf16 %v2272, %v2256
      %v2581 = vpack.c.bf16 %v2273, %v2257
      %v2582 = vpack.c.bf16 %v2274, %v2258
      %v2583 = vpack.c.bf16 %v2291, %v2275
      %v2584 = vpack.c.bf16 %v2292, %v2276
      %v2585 = vpack.c.bf16 %v2293, %v2277
      %v2586 = vpack.c.bf16 %v2294, %v2278
      %v2587 = vpack.c.bf16 %v2295, %v2279
      %v2588 = vpack.c.bf16 %v2296, %v2280
      %v2589 = vpack.c.bf16 %v2297, %v2281
      %v2590 = vpack.c.bf16 %v2298, %v2282
      %v2591 = vpack.c.bf16 %v2299, %v2283
      %v2592 = vpack.c.bf16 %v2300, %v2284
      %v2593 = vpack.c.bf16 %v2301, %v2285
      %v2594 = vpack.c.bf16 %v2302, %v2286
      %v2595 = vpack.c.bf16 %v2303, %v2287
      %v2596 = vpack.c.bf16 %v2304, %v2288
      %v2597 = vpack.c.bf16 %v2305, %v2289
      %v2598 = vpack.c.bf16 %v2306, %v2290
      %v2601 = vlaneseq
      %v2602 = vshrl.u32 %v2601, 7
      %v2603 = vsub.s32 0, %v2602
      %v2604 = vrot.slane %v2307, %v2603
      %v2605 = vlaneseq
      %v2606 = vshrl.u32 %v2605, 7
      %v2607 = vsub.s32 1, %v2606
      %v2608 = vrot.slane %v2307, %v2607
      %v2609 = vlaneseq
      %v2610 = vshrl.u32 %v2609, 7
      %v2611 = vsub.s32 2, %v2610
      %v2612 = vrot.slane %v2307, %v2611
      %v2613 = vlaneseq
      %v2614 = vshrl.u32 %v2613, 7
      %v2615 = vsub.s32 3, %v2614
      %v2616 = vrot.slane %v2307, %v2615
      %v2617 = vlaneseq
      %v2618 = vshrl.u32 %v2617, 7
      %v2619 = vsub.s32 4, %v2618
      %v2620 = vrot.slane %v2307, %v2619
      %v2621 = vlaneseq
      %v2622 = vshrl.u32 %v2621, 7
      %v2623 = vsub.s32 5, %v2622
      %v2624 = vrot.slane %v2307, %v2623
      %v2625 = vlaneseq
      %v2626 = vshrl.u32 %v2625, 7
      %v2627 = vsub.s32 6, %v2626
      %v2628 = vrot.slane %v2307, %v2627
      %v2629 = vlaneseq
      %v2630 = vshrl.u32 %v2629, 7
      %v2631 = vsub.s32 7, %v2630
      %v2632 = vrot.slane %v2307, %v2631
      %v2633 = vlaneseq
      %v2634 = vshrl.u32 %v2633, 7
      %v2635 = vsub.s32 0, %v2634
      %v2636 = vrot.slane %v2308, %v2635
      %v2637 = vlaneseq
      %v2638 = vshrl.u32 %v2637, 7
      %v2639 = vsub.s32 1, %v2638
      %v2640 = vrot.slane %v2308, %v2639
      %v2641 = vlaneseq
      %v2642 = vshrl.u32 %v2641, 7
      %v2643 = vsub.s32 2, %v2642
      %v2644 = vrot.slane %v2308, %v2643
      %v2645 = vlaneseq
      %v2646 = vshrl.u32 %v2645, 7
      %v2647 = vsub.s32 3, %v2646
      %v2648 = vrot.slane %v2308, %v2647
      %v2649 = vlaneseq
      %v2650 = vshrl.u32 %v2649, 7
      %v2651 = vsub.s32 4, %v2650
      %v2652 = vrot.slane %v2308, %v2651
      %v2653 = vlaneseq
      %v2654 = vshrl.u32 %v2653, 7
      %v2655 = vsub.s32 5, %v2654
      %v2656 = vrot.slane %v2308, %v2655
      %v2657 = vlaneseq
      %v2658 = vshrl.u32 %v2657, 7
      %v2659 = vsub.s32 6, %v2658
      %v2660 = vrot.slane %v2308, %v2659
      %v2661 = vlaneseq
      %v2662 = vshrl.u32 %v2661, 7
      %v2663 = vsub.s32 7, %v2662
      %v2664 = vrot.slane %v2308, %v2663
      %v2682 = vsel %vm890, %v2566, 0
      %2684 = vmatprep.subr.bf16.mxu0 %v2568
      %2685 = vmatpush1.bf16.msra.mxu0 %v2567
      %2686 = vmatprep.subr.bf16.mxu0 %v2584
      %2687 = vmatpush1.bf16.msra.mxu0 %v2583
      %2688 = vmatprep.subr.bf16.mxu0 0
      %2689 = vmatpush1.bf16.msra.mxu0 0
      %2690 = vmatprep.subr.bf16.mxu0 0
      %2691 = vmatpush1.bf16.msra.mxu0 0
      %2692 = vmatprep.subr.bf16.mxu0 0
      %2693 = vmatpush1.bf16.msra.mxu0 0
      %2694 = vmatprep.subr.bf16.mxu0 0
      %2695 = vmatpush1.bf16.msra.mxu0 0
      %2696 = vmatprep.subr.bf16.mxu0 0
      %2697 = vmatpush1.bf16.msra.mxu0 0
      %2698 = vmatprep.subr.bf16.mxu0 0
      %2699 = vmatpush1.bf16.msra.mxu0 0
      %2700 = vmatprep.subr.bf16.mxu0 0
      %2701 = vmatpush1.bf16.msra.mxu0 0
      %2702 = vmatprep.subr.bf16.mxu0 0
      %2703 = vmatpush1.bf16.msra.mxu0 0
      %2704 = vmatprep.subr.bf16.mxu0 0
      %2705 = vmatpush1.bf16.msra.mxu0 0
      %2706 = vmatprep.subr.bf16.mxu0 0
      %2707 = vmatpush1.bf16.msra.mxu0 0
      %2708 = vmatprep.subr.bf16.mxu0 0
      %2709 = vmatpush1.bf16.msra.mxu0 0
      %2710 = vmatprep.subr.bf16.mxu0 0
      %2711 = vmatpush1.bf16.msra.mxu0 0
      %2712 = vmatprep.subr.bf16.mxu0 0
      %2713 = vmatpush1.bf16.msra.mxu0 0
      %2714 = vmatprep.subr.bf16.mxu0 0
      %2715 = vmatpush1.bf16.msra.mxu0 0
      %2716 = vmatprep.mubr.bf16.mxu0 0
      %2717 = vmatmul.mubr.bf16.gmra.mrb[0].mxu0 %v2682
      %v2718 = vpop.f32.mrb[0].mxu0
      %v2719 = vadd.f32 %v2604, %v2718
      %v2720 = vpop.f32.mrb[0].mxu0
      %v2721 = vadd.f32 %v2608, %v2720
      %v2722 = vpop.f32.mrb[0].mxu0
      %v2723 = vpop.f32.mrb[0].mxu0
      %2724 = vdwg.mxu0
      %2725 = vmatprep.subr.bf16.mxu0 %v2570
      %2726 = vmatpush1.bf16.msra.mxu0 %v2569
      %2727 = vmatprep.subr.bf16.mxu0 %v2586
      %2728 = vmatpush1.bf16.msra.mxu0 %v2585
      %2729 = vmatprep.subr.bf16.mxu0 0
      %2730 = vmatpush1.bf16.msra.mxu0 0
      %2731 = vmatprep.subr.bf16.mxu0 0
      %2732 = vmatpush1.bf16.msra.mxu0 0
      %2733 = vmatprep.subr.bf16.mxu0 0
      %2734 = vmatpush1.bf16.msra.mxu0 0
      %2735 = vmatprep.subr.bf16.mxu0 0
      %2736 = vmatpush1.bf16.msra.mxu0 0
      %2737 = vmatprep.subr.bf16.mxu0 0
      %2738 = vmatpush1.bf16.msra.mxu0 0
      %2739 = vmatprep.subr.bf16.mxu0 0
      %2740 = vmatpush1.bf16.msra.mxu0 0
      %2741 = vmatprep.subr.bf16.mxu0 0
      %2742 = vmatpush1.bf16.msra.mxu0 0
      %2743 = vmatprep.subr.bf16.mxu0 0
      %2744 = vmatpush1.bf16.msra.mxu0 0
      %2745 = vmatprep.subr.bf16.mxu0 0
      %2746 = vmatpush1.bf16.msra.mxu0 0
      %2747 = vmatprep.subr.bf16.mxu0 0
      %2748 = vmatpush1.bf16.msra.mxu0 0
      %2749 = vmatprep.subr.bf16.mxu0 0
      %2750 = vmatpush1.bf16.msra.mxu0 0
      %2751 = vmatprep.subr.bf16.mxu0 0
      %2752 = vmatpush1.bf16.msra.mxu0 0
      %2753 = vmatprep.subr.bf16.mxu0 0
      %2754 = vmatpush1.bf16.msra.mxu0 0
      %2755 = vmatprep.subr.bf16.mxu0 0
      %2756 = vmatpush1.bf16.msra.mxu0 0
      %2757 = vmatprep.mubr.bf16.mxu0 0
      %2758 = vmatmul.mubr.bf16.gmra.mrb[0].mxu0 %v2682
      %v2759 = vpop.f32.mrb[0].mxu0
      %v2760 = vadd.f32 %v2612, %v2759
      %v2761 = vpop.f32.mrb[0].mxu0
      %v2762 = vadd.f32 %v2616, %v2761
      %v2763 = vpop.f32.mrb[0].mxu0
      %v2764 = vpop.f32.mrb[0].mxu0
      %2765 = vdwg.mxu0
      %2766 = vmatprep.subr.bf16.mxu0 %v2572
      %2767 = vmatpush1.bf16.msra.mxu0 %v2571
      %2768 = vmatprep.subr.bf16.mxu0 %v2588
      %2769 = vmatpush1.bf16.msra.mxu0 %v2587
      %2770 = vmatprep.subr.bf16.mxu0 0
      %2771 = vmatpush1.bf16.msra.mxu0 0
      %2772 = vmatprep.subr.bf16.mxu0 0
      %2773 = vmatpush1.bf16.msra.mxu0 0
      %2774 = vmatprep.subr.bf16.mxu0 0
      %2775 = vmatpush1.bf16.msra.mxu0 0
      %2776 = vmatprep.subr.bf16.mxu0 0
      %2777 = vmatpush1.bf16.msra.mxu0 0
      %2778 = vmatprep.subr.bf16.mxu0 0
      %2779 = vmatpush1.bf16.msra.mxu0 0
      %2780 = vmatprep.subr.bf16.mxu0 0
      %2781 = vmatpush1.bf16.msra.mxu0 0
      %2782 = vmatprep.subr.bf16.mxu0 0
      %2783 = vmatpush1.bf16.msra.mxu0 0
      %2784 = vmatprep.subr.bf16.mxu0 0
      %2785 = vmatpush1.bf16.msra.mxu0 0
      %2786 = vmatprep.subr.bf16.mxu0 0
      %2787 = vmatpush1.bf16.msra.mxu0 0
      %2788 = vmatprep.subr.bf16.mxu0 0
      %2789 = vmatpush1.bf16.msra.mxu0 0
      %2790 = vmatprep.subr.bf16.mxu0 0
      %2791 = vmatpush1.bf16.msra.mxu0 0
      %2792 = vmatprep.subr.bf16.mxu0 0
      %2793 = vmatpush1.bf16.msra.mxu0 0
      %2794 = vmatprep.subr.bf16.mxu0 0
      %2795 = vmatpush1.bf16.msra.mxu0 0
      %2796 = vmatprep.subr.bf16.mxu0 0
      %2797 = vmatpush1.bf16.msra.mxu0 0
      %2798 = vmatprep.mubr.bf16.mxu0 0
      %2799 = vmatmul.mubr.bf16.gmra.mrb[0].mxu0 %v2682
      %v2800 = vpop.f32.mrb[0].mxu0
      %v2801 = vadd.f32 %v2620, %v2800
      %v2802 = vpop.f32.mrb[0].mxu0
      %v2803 = vadd.f32 %v2624, %v2802
      %v2804 = vpop.f32.mrb[0].mxu0
      %v2805 = vpop.f32.mrb[0].mxu0
      %2806 = vdwg.mxu0
      %2807 = vmatprep.subr.bf16.mxu0 %v2574
      %2808 = vmatpush1.bf16.msra.mxu0 %v2573
      %2809 = vmatprep.subr.bf16.mxu0 %v2590
      %2810 = vmatpush1.bf16.msra.mxu0 %v2589
      %2811 = vmatprep.subr.bf16.mxu0 0
      %2812 = vmatpush1.bf16.msra.mxu0 0
      %2813 = vmatprep.subr.bf16.mxu0 0
      %2814 = vmatpush1.bf16.msra.mxu0 0
      %2815 = vmatprep.subr.bf16.mxu0 0
      %2816 = vmatpush1.bf16.msra.mxu0 0
      %2817 = vmatprep.subr.bf16.mxu0 0
      %2818 = vmatpush1.bf16.msra.mxu0 0
      %2819 = vmatprep.subr.bf16.mxu0 0
      %2820 = vmatpush1.bf16.msra.mxu0 0
      %2821 = vmatprep.subr.bf16.mxu0 0
      %2822 = vmatpush1.bf16.msra.mxu0 0
      %2823 = vmatprep.subr.bf16.mxu0 0
      %2824 = vmatpush1.bf16.msra.mxu0 0
      %2825 = vmatprep.subr.bf16.mxu0 0
      %2826 = vmatpush1.bf16.msra.mxu0 0
      %2827 = vmatprep.subr.bf16.mxu0 0
      %2828 = vmatpush1.bf16.msra.mxu0 0
      %2829 = vmatprep.subr.bf16.mxu0 0
      %2830 = vmatpush1.bf16.msra.mxu0 0
      %2831 = vmatprep.subr.bf16.mxu0 0
      %2832 = vmatpush1.bf16.msra.mxu0 0
      %2833 = vmatprep.subr.bf16.mxu0 0
      %2834 = vmatpush1.bf16.msra.mxu0 0
      %2835 = vmatprep.subr.bf16.mxu0 0
      %2836 = vmatpush1.bf16.msra.mxu0 0
      %2837 = vmatprep.subr.bf16.mxu0 0
      %2838 = vmatpush1.bf16.msra.mxu0 0
      %2839 = vmatprep.mubr.bf16.mxu0 0
      %2840 = vmatmul.mubr.bf16.gmra.mrb[0].mxu0 %v2682
      %v2841 = vpop.f32.mrb[0].mxu0
      %v2842 = vadd.f32 %v2628, %v2841
      %v2843 = vpop.f32.mrb[0].mxu0
      %v2844 = vadd.f32 %v2632, %v2843
      %v2845 = vpop.f32.mrb[0].mxu0
      %v2846 = vpop.f32.mrb[0].mxu0
      %2847 = vdwg.mxu0
      %2848 = vmatprep.subr.bf16.mxu0 %v2576
      %2849 = vmatpush1.bf16.msra.mxu0 %v2575
      %2850 = vmatprep.subr.bf16.mxu0 %v2592
      %2851 = vmatpush1.bf16.msra.mxu0 %v2591
      %2852 = vmatprep.subr.bf16.mxu0 0
      %2853 = vmatpush1.bf16.msra.mxu0 0
      %2854 = vmatprep.subr.bf16.mxu0 0
      %2855 = vmatpush1.bf16.msra.mxu0 0
      %2856 = vmatprep.subr.bf16.mxu0 0
      %2857 = vmatpush1.bf16.msra.mxu0 0
      %2858 = vmatprep.subr.bf16.mxu0 0
      %2859 = vmatpush1.bf16.msra.mxu0 0
      %2860 = vmatprep.subr.bf16.mxu0 0
      %2861 = vmatpush1.bf16.msra.mxu0 0
      %2862 = vmatprep.subr.bf16.mxu0 0
      %2863 = vmatpush1.bf16.msra.mxu0 0
      %2864 = vmatprep.subr.bf16.mxu0 0
      %2865 = vmatpush1.bf16.msra.mxu0 0
      %2866 = vmatprep.subr.bf16.mxu0 0
      %2867 = vmatpush1.bf16.msra.mxu0 0
      %2868 = vmatprep.subr.bf16.mxu0 0
      %2869 = vmatpush1.bf16.msra.mxu0 0
      %2870 = vmatprep.subr.bf16.mxu0 0
      %2871 = vmatpush1.bf16.msra.mxu0 0
      %2872 = vmatprep.subr.bf16.mxu0 0
      %2873 = vmatpush1.bf16.msra.mxu0 0
      %2874 = vmatprep.subr.bf16.mxu0 0
      %2875 = vmatpush1.bf16.msra.mxu0 0
      %2876 = vmatprep.subr.bf16.mxu0 0
      %2877 = vmatpush1.bf16.msra.mxu0 0
      %2878 = vmatprep.subr.bf16.mxu0 0
      %2879 = vmatpush1.bf16.msra.mxu0 0
      %2880 = vmatprep.mubr.bf16.mxu0 0
      %2881 = vmatmul.mubr.bf16.gmra.mrb[0].mxu0 %v2682
      %v2882 = vpop.f32.mrb[0].mxu0
      %v2883 = vadd.f32 %v2636, %v2882
      %v2884 = vpop.f32.mrb[0].mxu0
      %v2885 = vadd.f32 %v2640, %v2884
      %v2886 = vpop.f32.mrb[0].mxu0
      %v2887 = vpop.f32.mrb[0].mxu0
      %2888 = vdwg.mxu0
      %2889 = vmatprep.subr.bf16.mxu0 %v2578
      %2890 = vmatpush1.bf16.msra.mxu0 %v2577
      %2891 = vmatprep.subr.bf16.mxu0 %v2594
      %2892 = vmatpush1.bf16.msra.mxu0 %v2593
      %2893 = vmatprep.subr.bf16.mxu0 0
      %2894 = vmatpush1.bf16.msra.mxu0 0
      %2895 = vmatprep.subr.bf16.mxu0 0
      %2896 = vmatpush1.bf16.msra.mxu0 0
      %2897 = vmatprep.subr.bf16.mxu0 0
      %2898 = vmatpush1.bf16.msra.mxu0 0
      %2899 = vmatprep.subr.bf16.mxu0 0
      %2900 = vmatpush1.bf16.msra.mxu0 0
      %2901 = vmatprep.subr.bf16.mxu0 0
      %2902 = vmatpush1.bf16.msra.mxu0 0
      %2903 = vmatprep.subr.bf16.mxu0 0
      %2904 = vmatpush1.bf16.msra.mxu0 0
      %2905 = vmatprep.subr.bf16.mxu0 0
      %2906 = vmatpush1.bf16.msra.mxu0 0
      %2907 = vmatprep.subr.bf16.mxu0 0
      %2908 = vmatpush1.bf16.msra.mxu0 0
      %2909 = vmatprep.subr.bf16.mxu0 0
      %2910 = vmatpush1.bf16.msra.mxu0 0
      %2911 = vmatprep.subr.bf16.mxu0 0
      %2912 = vmatpush1.bf16.msra.mxu0 0
      %2913 = vmatprep.subr.bf16.mxu0 0
      %2914 = vmatpush1.bf16.msra.mxu0 0
      %2915 = vmatprep.subr.bf16.mxu0 0
      %2916 = vmatpush1.bf16.msra.mxu0 0
      %2917 = vmatprep.subr.bf16.mxu0 0
      %2918 = vmatpush1.bf16.msra.mxu0 0
      %2919 = vmatprep.subr.bf16.mxu0 0
      %2920 = vmatpush1.bf16.msra.mxu0 0
      %2921 = vmatprep.mubr.bf16.mxu0 0
      %2922 = vmatmul.mubr.bf16.gmra.mrb[0].mxu0 %v2682
      %v2923 = vpop.f32.mrb[0].mxu0
      %v2924 = vadd.f32 %v2644, %v2923
      %v2925 = vpop.f32.mrb[0].mxu0
      %v2926 = vadd.f32 %v2648, %v2925
      %v2927 = vpop.f32.mrb[0].mxu0
      %v2928 = vpop.f32.mrb[0].mxu0
      %2929 = vdwg.mxu0
      %2930 = vmatprep.subr.bf16.mxu0 %v2580
      %2931 = vmatpush1.bf16.msra.mxu0 %v2579
      %2932 = vmatprep.subr.bf16.mxu0 %v2596
      %2933 = vmatpush1.bf16.msra.mxu0 %v2595
      %2934 = vmatprep.subr.bf16.mxu0 0
      %2935 = vmatpush1.bf16.msra.mxu0 0
      %2936 = vmatprep.subr.bf16.mxu0 0
      %2937 = vmatpush1.bf16.msra.mxu0 0
      %2938 = vmatprep.subr.bf16.mxu0 0
      %2939 = vmatpush1.bf16.msra.mxu0 0
      %2940 = vmatprep.subr.bf16.mxu0 0
      %2941 = vmatpush1.bf16.msra.mxu0 0
      %2942 = vmatprep.subr.bf16.mxu0 0
      %2943 = vmatpush1.bf16.msra.mxu0 0
      %2944 = vmatprep.subr.bf16.mxu0 0
      %2945 = vmatpush1.bf16.msra.mxu0 0
      %2946 = vmatprep.subr.bf16.mxu0 0
      %2947 = vmatpush1.bf16.msra.mxu0 0
      %2948 = vmatprep.subr.bf16.mxu0 0
      %2949 = vmatpush1.bf16.msra.mxu0 0
      %2950 = vmatprep.subr.bf16.mxu0 0
      %2951 = vmatpush1.bf16.msra.mxu0 0
      %2952 = vmatprep.subr.bf16.mxu0 0
      %2953 = vmatpush1.bf16.msra.mxu0 0
      %2954 = vmatprep.subr.bf16.mxu0 0
      %2955 = vmatpush1.bf16.msra.mxu0 0
      %2956 = vmatprep.subr.bf16.mxu0 0
      %2957 = vmatpush1.bf16.msra.mxu0 0
      %2958 = vmatprep.subr.bf16.mxu0 0
      %2959 = vmatpush1.bf16.msra.mxu0 0
      %2960 = vmatprep.subr.bf16.mxu0 0
      %2961 = vmatpush1.bf16.msra.mxu0 0
      %2962 = vmatprep.mubr.bf16.mxu0 0
      %2963 = vmatmul.mubr.bf16.gmra.mrb[0].mxu0 %v2682
      %v2964 = vpop.f32.mrb[0].mxu0
      %v2965 = vadd.f32 %v2652, %v2964
      %v2966 = vpop.f32.mrb[0].mxu0
      %v2967 = vadd.f32 %v2656, %v2966
      %v2968 = vpop.f32.mrb[0].mxu0
      %v2969 = vpop.f32.mrb[0].mxu0
      %2970 = vdwg.mxu0
      %2971 = vmatprep.subr.bf16.mxu0 %v2582
      %2972 = vmatpush1.bf16.msra.mxu0 %v2581
      %2973 = vmatprep.subr.bf16.mxu0 %v2598
      %2974 = vmatpush1.bf16.msra.mxu0 %v2597
      %2975 = vmatprep.subr.bf16.mxu0 0
      %2976 = vmatpush1.bf16.msra.mxu0 0
      %2977 = vmatprep.subr.bf16.mxu0 0
      %2978 = vmatpush1.bf16.msra.mxu0 0
      %2979 = vmatprep.subr.bf16.mxu0 0
      %2980 = vmatpush1.bf16.msra.mxu0 0
      %2981 = vmatprep.subr.bf16.mxu0 0
      %2982 = vmatpush1.bf16.msra.mxu0 0
      %2983 = vmatprep.subr.bf16.mxu0 0
      %2984 = vmatpush1.bf16.msra.mxu0 0
      %2985 = vmatprep.subr.bf16.mxu0 0
      %2986 = vmatpush1.bf16.msra.mxu0 0
      %2987 = vmatprep.subr.bf16.mxu0 0
      %2988 = vmatpush1.bf16.msra.mxu0 0
      %2989 = vmatprep.subr.bf16.mxu0 0
      %2990 = vmatpush1.bf16.msra.mxu0 0
      %2991 = vmatprep.subr.bf16.mxu0 0
      %2992 = vmatpush1.bf16.msra.mxu0 0
      %2993 = vmatprep.subr.bf16.mxu0 0
      %2994 = vmatpush1.bf16.msra.mxu0 0
      %2995 = vmatprep.subr.bf16.mxu0 0
      %2996 = vmatpush1.bf16.msra.mxu0 0
      %2997 = vmatprep.subr.bf16.mxu0 0
      %2998 = vmatpush1.bf16.msra.mxu0 0
      %2999 = vmatprep.subr.bf16.mxu0 0
      %3000 = vmatpush1.bf16.msra.mxu0 0
      %3001 = vmatprep.subr.bf16.mxu0 0
      %3002 = vmatpush1.bf16.msra.mxu0 0
      %3003 = vmatprep.mubr.bf16.mxu0 0
      %3004 = vmatmul.mubr.bf16.gmra.mrb[0].mxu0 %v2682
      %v3005 = vpop.f32.mrb[0].mxu0
      %v3006 = vadd.f32 %v2660, %v3005
      %v3007 = vpop.f32.mrb[0].mxu0
      %v3008 = vadd.f32 %v2664, %v3007
      %v3009 = vpop.f32.mrb[0].mxu0
      %v3010 = vpop.f32.mrb[0].mxu0
      %3011 = vdwg.mxu0
      %v3012 = vmax.f32 %v2719, 0.0
      %v3013 = vmax.f32 %v2721, 0.0
      %v3014 = vmax.f32 %v2760, 0.0
      %v3015 = vmax.f32 %v2762, 0.0
      %v3016 = vmax.f32 %v2801, 0.0
      %v3017 = vmax.f32 %v2803, 0.0
      %v3018 = vmax.f32 %v2842, 0.0
      %v3019 = vmax.f32 %v2844, 0.0
      %v3020 = vmax.f32 %v2883, 0.0
      %v3021 = vmax.f32 %v2885, 0.0
      %v3022 = vmax.f32 %v2924, 0.0
      %v3023 = vmax.f32 %v2926, 0.0
      %v3024 = vmax.f32 %v2965, 0.0
      %v3025 = vmax.f32 %v2967, 0.0
      %v3026 = vmax.f32 %v3006, 0.0
      %v3027 = vmax.f32 %v3008, 0.0
      %v3028 = vpack.c.bf16 %v3012, %v3012
      %v3029 = vpack.c.bf16 %v3013, %v3013
      %v3030 = vpack.c.bf16 %v3014, %v3014
      %v3031 = vpack.c.bf16 %v3015, %v3015
      %v3032 = vpack.c.bf16 %v3016, %v3016
      %v3033 = vpack.c.bf16 %v3017, %v3017
      %v3034 = vpack.c.bf16 %v3018, %v3018
      %v3035 = vpack.c.bf16 %v3019, %v3019
      %v3036 = vpack.c.bf16 %v3020, %v3020
      %v3037 = vpack.c.bf16 %v3021, %v3021
      %v3038 = vpack.c.bf16 %v3022, %v3022
      %v3039 = vpack.c.bf16 %v3023, %v3023
      %v3040 = vpack.c.bf16 %v3024, %v3024
      %v3041 = vpack.c.bf16 %v3025, %v3025
      %v3042 = vpack.c.bf16 %v3026, %v3026
      %v3043 = vpack.c.bf16 %v3027, %v3027
      %v3044 = vpack.c.bf16 %v2310, %v2309
      %v3045 = vpack.c.bf16 %v2312, %v2311
      %v3046 = vpack.c.bf16 %v2314, %v2313
      %v3047 = vpack.c.bf16 %v2316, %v2315
      %v3048 = vpack.c.bf16 %v2318, %v2317
      %v3049 = vpack.c.bf16 %v2320, %v2319
      %v3050 = vpack.c.bf16 %v2322, %v2321
      %v3051 = vpack.c.bf16 %v2324, %v2323
      %v3052 = vpack.c.bf16 %v2326, %v2325
      %v3053 = vpack.c.bf16 %v2328, %v2327
      %v3054 = vpack.c.bf16 %v2330, %v2329
      %v3055 = vpack.c.bf16 %v2332, %v2331
      %v3056 = vpack.c.bf16 %v2334, %v2333
      %v3057 = vpack.c.bf16 %v2336, %v2335
      %v3058 = vpack.c.bf16 %v2338, %v2337
      %v3059 = vpack.c.bf16 %v2340, %v2339
      %v3060 = vpack.c.bf16 %v2342, %v2341
      %v3061 = vpack.c.bf16 %v2344, %v2343
      %v3062 = vpack.c.bf16 %v2346, %v2345
      %v3063 = vpack.c.bf16 %v2348, %v2347
      %v3064 = vpack.c.bf16 %v2350, %v2349
      %v3065 = vpack.c.bf16 %v2352, %v2351
      %v3066 = vpack.c.bf16 %v2354, %v2353
      %v3067 = vpack.c.bf16 %v2356, %v2355
      %v3068 = vpack.c.bf16 %v2358, %v2357
      %v3069 = vpack.c.bf16 %v2360, %v2359
      %v3070 = vpack.c.bf16 %v2362, %v2361
      %v3071 = vpack.c.bf16 %v2364, %v2363
      %v3072 = vpack.c.bf16 %v2366, %v2365
      %v3073 = vpack.c.bf16 %v2368, %v2367
      %v3074 = vpack.c.bf16 %v2370, %v2369
      %v3075 = vpack.c.bf16 %v2372, %v2371
      %v3076 = vpack.c.bf16 %v2374, %v2373
      %v3077 = vpack.c.bf16 %v2376, %v2375
      %v3078 = vpack.c.bf16 %v2378, %v2377
      %v3079 = vpack.c.bf16 %v2380, %v2379
      %v3080 = vpack.c.bf16 %v2382, %v2381
      %v3081 = vpack.c.bf16 %v2384, %v2383
      %v3082 = vpack.c.bf16 %v2386, %v2385
      %v3083 = vpack.c.bf16 %v2388, %v2387
      %v3084 = vpack.c.bf16 %v2390, %v2389
      %v3085 = vpack.c.bf16 %v2392, %v2391
      %v3086 = vpack.c.bf16 %v2394, %v2393
      %v3087 = vpack.c.bf16 %v2396, %v2395
      %v3088 = vpack.c.bf16 %v2398, %v2397
      %v3089 = vpack.c.bf16 %v2400, %v2399
      %v3090 = vpack.c.bf16 %v2402, %v2401
      %v3091 = vpack.c.bf16 %v2404, %v2403
      %v3092 = vpack.c.bf16 %v2406, %v2405
      %v3093 = vpack.c.bf16 %v2408, %v2407
      %v3094 = vpack.c.bf16 %v2410, %v2409
      %v3095 = vpack.c.bf16 %v2412, %v2411
      %v3096 = vpack.c.bf16 %v2414, %v2413
      %v3097 = vpack.c.bf16 %v2416, %v2415
      %v3098 = vpack.c.bf16 %v2418, %v2417
      %v3099 = vpack.c.bf16 %v2420, %v2419
      %v3100 = vpack.c.bf16 %v2422, %v2421
      %v3101 = vpack.c.bf16 %v2424, %v2423
      %v3102 = vpack.c.bf16 %v2426, %v2425
      %v3103 = vpack.c.bf16 %v2428, %v2427
      %v3104 = vpack.c.bf16 %v2430, %v2429
      %v3105 = vpack.c.bf16 %v2432, %v2431
      %v3106 = vpack.c.bf16 %v2434, %v2433
      %v3107 = vpack.c.bf16 %v2436, %v2435
      %v3108 = vpack.c.bf16 %v2438, %v2437
      %v3109 = vpack.c.bf16 %v2440, %v2439
      %v3110 = vpack.c.bf16 %v2442, %v2441
      %v3111 = vpack.c.bf16 %v2444, %v2443
      %v3112 = vpack.c.bf16 %v2446, %v2445
      %v3113 = vpack.c.bf16 %v2448, %v2447
      %v3114 = vpack.c.bf16 %v2450, %v2449
      %v3115 = vpack.c.bf16 %v2452, %v2451
      %v3116 = vpack.c.bf16 %v2454, %v2453
      %v3117 = vpack.c.bf16 %v2456, %v2455
      %v3118 = vpack.c.bf16 %v2458, %v2457
      %v3119 = vpack.c.bf16 %v2460, %v2459
      %v3120 = vpack.c.bf16 %v2462, %v2461
      %v3121 = vpack.c.bf16 %v2464, %v2463
      %v3122 = vpack.c.bf16 %v2466, %v2465
      %v3123 = vpack.c.bf16 %v2468, %v2467
      %v3124 = vpack.c.bf16 %v2470, %v2469
      %v3125 = vpack.c.bf16 %v2472, %v2471
      %v3126 = vpack.c.bf16 %v2474, %v2473
      %v3127 = vpack.c.bf16 %v2476, %v2475
      %v3128 = vpack.c.bf16 %v2478, %v2477
      %v3129 = vpack.c.bf16 %v2480, %v2479
      %v3130 = vpack.c.bf16 %v2482, %v2481
      %v3131 = vpack.c.bf16 %v2484, %v2483
      %v3132 = vpack.c.bf16 %v2486, %v2485
      %v3133 = vpack.c.bf16 %v2488, %v2487
      %v3134 = vpack.c.bf16 %v2490, %v2489
      %v3135 = vpack.c.bf16 %v2492, %v2491
      %v3136 = vpack.c.bf16 %v2494, %v2493
      %v3137 = vpack.c.bf16 %v2496, %v2495
      %v3138 = vpack.c.bf16 %v2498, %v2497
      %v3139 = vpack.c.bf16 %v2500, %v2499
      %v3140 = vpack.c.bf16 %v2502, %v2501
      %v3141 = vpack.c.bf16 %v2504, %v2503
      %v3142 = vpack.c.bf16 %v2506, %v2505
      %v3143 = vpack.c.bf16 %v2508, %v2507
      %v3144 = vpack.c.bf16 %v2510, %v2509
      %v3145 = vpack.c.bf16 %v2512, %v2511
      %v3146 = vpack.c.bf16 %v2514, %v2513
      %v3147 = vpack.c.bf16 %v2516, %v2515
      %v3148 = vpack.c.bf16 %v2518, %v2517
      %v3149 = vpack.c.bf16 %v2520, %v2519
      %v3150 = vpack.c.bf16 %v2522, %v2521
      %v3151 = vpack.c.bf16 %v2524, %v2523
      %v3152 = vpack.c.bf16 %v2526, %v2525
      %v3153 = vpack.c.bf16 %v2528, %v2527
      %v3154 = vpack.c.bf16 %v2530, %v2529
      %v3155 = vpack.c.bf16 %v2532, %v2531
      %v3156 = vpack.c.bf16 %v2534, %v2533
      %v3157 = vpack.c.bf16 %v2536, %v2535
      %v3158 = vpack.c.bf16 %v2538, %v2537
      %v3159 = vpack.c.bf16 %v2540, %v2539
      %v3160 = vpack.c.bf16 %v2542, %v2541
      %v3161 = vpack.c.bf16 %v2544, %v2543
      %v3162 = vpack.c.bf16 %v2546, %v2545
      %v3163 = vpack.c.bf16 %v2548, %v2547
      %v3164 = vpack.c.bf16 %v2550, %v2549
      %v3165 = vpack.c.bf16 %v2552, %v2551
      %v3166 = vpack.c.bf16 %v2554, %v2553
      %v3167 = vpack.c.bf16 %v2556, %v2555
      %v3168 = vpack.c.bf16 %v2558, %v2557
      %v3169 = vpack.c.bf16 %v2560, %v2559
      %v3170 = vpack.c.bf16 %v2562, %v2561
      %v3171 = vpack.c.bf16 %v2564, %v2563
      %v3173 = vlaneseq
      %v3174 = vshrl.u32 %v3173, 7
      %v3175 = vsub.s32 0, %v3174
      %v3176 = vrot.slane %v2565, %v3175
      %3178 = vmatprep.subr.bf16.mxu0 0
      %3179 = vmatpush1.bf16.msra.mxu0 %v3044
      %3180 = vmatprep.subr.bf16.mxu0 0
      %3181 = vmatpush1.bf16.msra.mxu0 %v3045
      %3182 = vmatprep.subr.bf16.mxu0 0
      %3183 = vmatpush1.bf16.msra.mxu0 %v3046
      %3184 = vmatprep.subr.bf16.mxu0 0
      %3185 = vmatpush1.bf16.msra.mxu0 %v3047
      %3186 = vmatprep.subr.bf16.mxu0 0
      %3187 = vmatpush1.bf16.msra.mxu0 %v3048
      %3188 = vmatprep.subr.bf16.mxu0 0
      %3189 = vmatpush1.bf16.msra.mxu0 %v3049
      %3190 = vmatprep.subr.bf16.mxu0 0
      %3191 = vmatpush1.bf16.msra.mxu0 %v3050
      %3192 = vmatprep.subr.bf16.mxu0 0
      %3193 = vmatpush1.bf16.msra.mxu0 %v3051
      %3194 = vmatprep.subr.bf16.mxu0 0
      %3195 = vmatpush1.bf16.msra.mxu0 %v3052
      %3196 = vmatprep.subr.bf16.mxu0 0
      %3197 = vmatpush1.bf16.msra.mxu0 %v3053
      %3198 = vmatprep.subr.bf16.mxu0 0
      %3199 = vmatpush1.bf16.msra.mxu0 %v3054
      %3200 = vmatprep.subr.bf16.mxu0 0
      %3201 = vmatpush1.bf16.msra.mxu0 %v3055
      %3202 = vmatprep.subr.bf16.mxu0 0
      %3203 = vmatpush1.bf16.msra.mxu0 %v3056
      %3204 = vmatprep.subr.bf16.mxu0 0
      %3205 = vmatpush1.bf16.msra.mxu0 %v3057
      %3206 = vmatprep.subr.bf16.mxu0 0
      %3207 = vmatpush1.bf16.msra.mxu0 %v3058
      %3208 = vmatprep.subr.bf16.mxu0 0
      %3209 = vmatpush1.bf16.msra.mxu0 %v3059
      %3210 = vmatprep.mubr.bf16.mxu0 %v3029
      %3211 = vmatmul.mubr.bf16.gmra.mrb[0].mxu0 %v3028
      %v3212 = vpop.f32.mrb[0].mxu0
      %v3213 = vadd.f32 %v3176, %v3212
      %v3214 = vpop.f32.mrb[0].mxu0
      %v3215 = vpop.f32.mrb[0].mxu0
      %v3216 = vpop.f32.mrb[0].mxu0
      %3217 = vdwg.mxu0
      %3218 = vmatprep.subr.bf16.mxu0 0
      %3219 = vmatpush1.bf16.msra.mxu0 %v3060
      %3220 = vmatprep.subr.bf16.mxu0 0
      %3221 = vmatpush1.bf16.msra.mxu0 %v3061
      %3222 = vmatprep.subr.bf16.mxu0 0
      %3223 = vmatpush1.bf16.msra.mxu0 %v3062
      %3224 = vmatprep.subr.bf16.mxu0 0
      %3225 = vmatpush1.bf16.msra.mxu0 %v3063
      %3226 = vmatprep.subr.bf16.mxu0 0
      %3227 = vmatpush1.bf16.msra.mxu0 %v3064
      %3228 = vmatprep.subr.bf16.mxu0 0
      %3229 = vmatpush1.bf16.msra.mxu0 %v3065
      %3230 = vmatprep.subr.bf16.mxu0 0
      %3231 = vmatpush1.bf16.msra.mxu0 %v3066
      %3232 = vmatprep.subr.bf16.mxu0 0
      %3233 = vmatpush1.bf16.msra.mxu0 %v3067
      %3234 = vmatprep.subr.bf16.mxu0 0
      %3235 = vmatpush1.bf16.msra.mxu0 %v3068
      %3236 = vmatprep.subr.bf16.mxu0 0
      %3237 = vmatpush1.bf16.msra.mxu0 %v3069
      %3238 = vmatprep.subr.bf16.mxu0 0
      %3239 = vmatpush1.bf16.msra.mxu0 %v3070
      %3240 = vmatprep.subr.bf16.mxu0 0
      %3241 = vmatpush1.bf16.msra.mxu0 %v3071
      %3242 = vmatprep.subr.bf16.mxu0 0
      %3243 = vmatpush1.bf16.msra.mxu0 %v3072
      %3244 = vmatprep.subr.bf16.mxu0 0
      %3245 = vmatpush1.bf16.msra.mxu0 %v3073
      %3246 = vmatprep.subr.bf16.mxu0 0
      %3247 = vmatpush1.bf16.msra.mxu0 %v3074
      %3248 = vmatprep.subr.bf16.mxu0 0
      %3249 = vmatpush1.bf16.msra.mxu0 %v3075
      %3250 = vmatprep.mubr.bf16.mxu0 %v3031
      %3251 = vmatmul.mubr.bf16.gmra.mrb[0].mxu0 %v3030
      %v3252 = vpop.f32.mrb[0].mxu0
      %v3253 = vadd.f32 %v3213, %v3252
      %v3254 = vpop.f32.mrb[0].mxu0
      %v3255 = vpop.f32.mrb[0].mxu0
      %v3256 = vpop.f32.mrb[0].mxu0
      %3257 = vdwg.mxu0
      %3258 = vmatprep.subr.bf16.mxu0 0
      %3259 = vmatpush1.bf16.msra.mxu0 %v3076
      %3260 = vmatprep.subr.bf16.mxu0 0
      %3261 = vmatpush1.bf16.msra.mxu0 %v3077
      %3262 = vmatprep.subr.bf16.mxu0 0
      %3263 = vmatpush1.bf16.msra.mxu0 %v3078
      %3264 = vmatprep.subr.bf16.mxu0 0
      %3265 = vmatpush1.bf16.msra.mxu0 %v3079
      %3266 = vmatprep.subr.bf16.mxu0 0
      %3267 = vmatpush1.bf16.msra.mxu0 %v3080
      %3268 = vmatprep.subr.bf16.mxu0 0
      %3269 = vmatpush1.bf16.msra.mxu0 %v3081
      %3270 = vmatprep.subr.bf16.mxu0 0
      %3271 = vmatpush1.bf16.msra.mxu0 %v3082
      %3272 = vmatprep.subr.bf16.mxu0 0
      %3273 = vmatpush1.bf16.msra.mxu0 %v3083
      %3274 = vmatprep.subr.bf16.mxu0 0
      %3275 = vmatpush1.bf16.msra.mxu0 %v3084
      %3276 = vmatprep.subr.bf16.mxu0 0
      %3277 = vmatpush1.bf16.msra.mxu0 %v3085
      %3278 = vmatprep.subr.bf16.mxu0 0
      %3279 = vmatpush1.bf16.msra.mxu0 %v3086
      %3280 = vmatprep.subr.bf16.mxu0 0
      %3281 = vmatpush1.bf16.msra.mxu0 %v3087
      %3282 = vmatprep.subr.bf16.mxu0 0
      %3283 = vmatpush1.bf16.msra.mxu0 %v3088
      %3284 = vmatprep.subr.bf16.mxu0 0
      %3285 = vmatpush1.bf16.msra.mxu0 %v3089
      %3286 = vmatprep.subr.bf16.mxu0 0
      %3287 = vmatpush1.bf16.msra.mxu0 %v3090
      %3288 = vmatprep.subr.bf16.mxu0 0
      %3289 = vmatpush1.bf16.msra.mxu0 %v3091
      %3290 = vmatprep.mubr.bf16.mxu0 %v3033
      %3291 = vmatmul.mubr.bf16.gmra.mrb[0].mxu0 %v3032
      %v3292 = vpop.f32.mrb[0].mxu0
      %v3293 = vadd.f32 %v3253, %v3292
      %v3294 = vpop.f32.mrb[0].mxu0
      %v3295 = vpop.f32.mrb[0].mxu0
      %v3296 = vpop.f32.mrb[0].mxu0
      %3297 = vdwg.mxu0
      %3298 = vmatprep.subr.bf16.mxu0 0
      %3299 = vmatpush1.bf16.msra.mxu0 %v3092
      %3300 = vmatprep.subr.bf16.mxu0 0
      %3301 = vmatpush1.bf16.msra.mxu0 %v3093
      %3302 = vmatprep.subr.bf16.mxu0 0
      %3303 = vmatpush1.bf16.msra.mxu0 %v3094
      %3304 = vmatprep.subr.bf16.mxu0 0
      %3305 = vmatpush1.bf16.msra.mxu0 %v3095
      %3306 = vmatprep.subr.bf16.mxu0 0
      %3307 = vmatpush1.bf16.msra.mxu0 %v3096
      %3308 = vmatprep.subr.bf16.mxu0 0
      %3309 = vmatpush1.bf16.msra.mxu0 %v3097
      %3310 = vmatprep.subr.bf16.mxu0 0
      %3311 = vmatpush1.bf16.msra.mxu0 %v3098
      %3312 = vmatprep.subr.bf16.mxu0 0
      %3313 = vmatpush1.bf16.msra.mxu0 %v3099
      %3314 = vmatprep.subr.bf16.mxu0 0
      %3315 = vmatpush1.bf16.msra.mxu0 %v3100
      %3316 = vmatprep.subr.bf16.mxu0 0
      %3317 = vmatpush1.bf16.msra.mxu0 %v3101
      %3318 = vmatprep.subr.bf16.mxu0 0
      %3319 = vmatpush1.bf16.msra.mxu0 %v3102
      %3320 = vmatprep.subr.bf16.mxu0 0
      %3321 = vmatpush1.bf16.msra.mxu0 %v3103
      %3322 = vmatprep.subr.bf16.mxu0 0
      %3323 = vmatpush1.bf16.msra.mxu0 %v3104
      %3324 = vmatprep.subr.bf16.mxu0 0
      %3325 = vmatpush1.bf16.msra.mxu0 %v3105
      %3326 = vmatprep.subr.bf16.mxu0 0
      %3327 = vmatpush1.bf16.msra.mxu0 %v3106
      %3328 = vmatprep.subr.bf16.mxu0 0
      %3329 = vmatpush1.bf16.msra.mxu0 %v3107
      %3330 = vmatprep.mubr.bf16.mxu0 %v3035
      %3331 = vmatmul.mubr.bf16.gmra.mrb[0].mxu0 %v3034
      %v3332 = vpop.f32.mrb[0].mxu0
      %v3333 = vadd.f32 %v3293, %v3332
      %v3334 = vpop.f32.mrb[0].mxu0
      %v3335 = vpop.f32.mrb[0].mxu0
      %v3336 = vpop.f32.mrb[0].mxu0
      %3337 = vdwg.mxu0
      %3338 = vmatprep.subr.bf16.mxu0 0
      %3339 = vmatpush1.bf16.msra.mxu0 %v3108
      %3340 = vmatprep.subr.bf16.mxu0 0
      %3341 = vmatpush1.bf16.msra.mxu0 %v3109
      %3342 = vmatprep.subr.bf16.mxu0 0
      %3343 = vmatpush1.bf16.msra.mxu0 %v3110
      %3344 = vmatprep.subr.bf16.mxu0 0
      %3345 = vmatpush1.bf16.msra.mxu0 %v3111
      %3346 = vmatprep.subr.bf16.mxu0 0
      %3347 = vmatpush1.bf16.msra.mxu0 %v3112
      %3348 = vmatprep.subr.bf16.mxu0 0
      %3349 = vmatpush1.bf16.msra.mxu0 %v3113
      %3350 = vmatprep.subr.bf16.mxu0 0
      %3351 = vmatpush1.bf16.msra.mxu0 %v3114
      %3352 = vmatprep.subr.bf16.mxu0 0
      %3353 = vmatpush1.bf16.msra.mxu0 %v3115
      %3354 = vmatprep.subr.bf16.mxu0 0
      %3355 = vmatpush1.bf16.msra.mxu0 %v3116
      %3356 = vmatprep.subr.bf16.mxu0 0
      %3357 = vmatpush1.bf16.msra.mxu0 %v3117
      %3358 = vmatprep.subr.bf16.mxu0 0
      %3359 = vmatpush1.bf16.msra.mxu0 %v3118
      %3360 = vmatprep.subr.bf16.mxu0 0
      %3361 = vmatpush1.bf16.msra.mxu0 %v3119
      %3362 = vmatprep.subr.bf16.mxu0 0
      %3363 = vmatpush1.bf16.msra.mxu0 %v3120
      %3364 = vmatprep.subr.bf16.mxu0 0
      %3365 = vmatpush1.bf16.msra.mxu0 %v3121
      %3366 = vmatprep.subr.bf16.mxu0 0
      %3367 = vmatpush1.bf16.msra.mxu0 %v3122
      %3368 = vmatprep.subr.bf16.mxu0 0
      %3369 = vmatpush1.bf16.msra.mxu0 %v3123
      %3370 = vmatprep.mubr.bf16.mxu0 %v3037
      %3371 = vmatmul.mubr.bf16.gmra.mrb[0].mxu0 %v3036
      %v3372 = vpop.f32.mrb[0].mxu0
      %v3373 = vadd.f32 %v3333, %v3372
      %v3374 = vpop.f32.mrb[0].mxu0
      %v3375 = vpop.f32.mrb[0].mxu0
      %v3376 = vpop.f32.mrb[0].mxu0
      %3377 = vdwg.mxu0
      %3378 = vmatprep.subr.bf16.mxu0 0
      %3379 = vmatpush1.bf16.msra.mxu0 %v3124
      %3380 = vmatprep.subr.bf16.mxu0 0
      %3381 = vmatpush1.bf16.msra.mxu0 %v3125
      %3382 = vmatprep.subr.bf16.mxu0 0
      %3383 = vmatpush1.bf16.msra.mxu0 %v3126
      %3384 = vmatprep.subr.bf16.mxu0 0
      %3385 = vmatpush1.bf16.msra.mxu0 %v3127
      %3386 = vmatprep.subr.bf16.mxu0 0
      %3387 = vmatpush1.bf16.msra.mxu0 %v3128
      %3388 = vmatprep.subr.bf16.mxu0 0
      %3389 = vmatpush1.bf16.msra.mxu0 %v3129
      %3390 = vmatprep.subr.bf16.mxu0 0
      %3391 = vmatpush1.bf16.msra.mxu0 %v3130
      %3392 = vmatprep.subr.bf16.mxu0 0
      %3393 = vmatpush1.bf16.msra.mxu0 %v3131
      %3394 = vmatprep.subr.bf16.mxu0 0
      %3395 = vmatpush1.bf16.msra.mxu0 %v3132
      %3396 = vmatprep.subr.bf16.mxu0 0
      %3397 = vmatpush1.bf16.msra.mxu0 %v3133
      %3398 = vmatprep.subr.bf16.mxu0 0
      %3399 = vmatpush1.bf16.msra.mxu0 %v3134
      %3400 = vmatprep.subr.bf16.mxu0 0
      %3401 = vmatpush1.bf16.msra.mxu0 %v3135
      %3402 = vmatprep.subr.bf16.mxu0 0
      %3403 = vmatpush1.bf16.msra.mxu0 %v3136
      %3404 = vmatprep.subr.bf16.mxu0 0
      %3405 = vmatpush1.bf16.msra.mxu0 %v3137
      %3406 = vmatprep.subr.bf16.mxu0 0
      %3407 = vmatpush1.bf16.msra.mxu0 %v3138
      %3408 = vmatprep.subr.bf16.mxu0 0
      %3409 = vmatpush1.bf16.msra.mxu0 %v3139
      %3410 = vmatprep.mubr.bf16.mxu0 %v3039
      %3411 = vmatmul.mubr.bf16.gmra.mrb[0].mxu0 %v3038
      %v3412 = vpop.f32.mrb[0].mxu0
      %v3413 = vadd.f32 %v3373, %v3412
      %v3414 = vpop.f32.mrb[0].mxu0
      %v3415 = vpop.f32.mrb[0].mxu0
      %v3416 = vpop.f32.mrb[0].mxu0
      %3417 = vdwg.mxu0
      %3418 = vmatprep.subr.bf16.mxu0 0
      %3419 = vmatpush1.bf16.msra.mxu0 %v3140
      %3420 = vmatprep.subr.bf16.mxu0 0
      %3421 = vmatpush1.bf16.msra.mxu0 %v3141
      %3422 = vmatprep.subr.bf16.mxu0 0
      %3423 = vmatpush1.bf16.msra.mxu0 %v3142
      %3424 = vmatprep.subr.bf16.mxu0 0
      %3425 = vmatpush1.bf16.msra.mxu0 %v3143
      %3426 = vmatprep.subr.bf16.mxu0 0
      %3427 = vmatpush1.bf16.msra.mxu0 %v3144
      %3428 = vmatprep.subr.bf16.mxu0 0
      %3429 = vmatpush1.bf16.msra.mxu0 %v3145
      %3430 = vmatprep.subr.bf16.mxu0 0
      %3431 = vmatpush1.bf16.msra.mxu0 %v3146
      %3432 = vmatprep.subr.bf16.mxu0 0
      %3433 = vmatpush1.bf16.msra.mxu0 %v3147
      %3434 = vmatprep.subr.bf16.mxu0 0
      %3435 = vmatpush1.bf16.msra.mxu0 %v3148
      %3436 = vmatprep.subr.bf16.mxu0 0
      %3437 = vmatpush1.bf16.msra.mxu0 %v3149
      %3438 = vmatprep.subr.bf16.mxu0 0
      %3439 = vmatpush1.bf16.msra.mxu0 %v3150
      %3440 = vmatprep.subr.bf16.mxu0 0
      %3441 = vmatpush1.bf16.msra.mxu0 %v3151
      %3442 = vmatprep.subr.bf16.mxu0 0
      %3443 = vmatpush1.bf16.msra.mxu0 %v3152
      %3444 = vmatprep.subr.bf16.mxu0 0
      %3445 = vmatpush1.bf16.msra.mxu0 %v3153
      %3446 = vmatprep.subr.bf16.mxu0 0
      %3447 = vmatpush1.bf16.msra.mxu0 %v3154
      %3448 = vmatprep.subr.bf16.mxu0 0
      %3449 = vmatpush1.bf16.msra.mxu0 %v3155
      %3450 = vmatprep.mubr.bf16.mxu0 %v3041
      %3451 = vmatmul.mubr.bf16.gmra.mrb[0].mxu0 %v3040
      %v3452 = vpop.f32.mrb[0].mxu0
      %v3453 = vadd.f32 %v3413, %v3452
      %v3454 = vpop.f32.mrb[0].mxu0
      %v3455 = vpop.f32.mrb[0].mxu0
      %v3456 = vpop.f32.mrb[0].mxu0
      %3457 = vdwg.mxu0
      %3458 = vmatprep.subr.bf16.mxu0 0
      %3459 = vmatpush1.bf16.msra.mxu0 %v3156
      %3460 = vmatprep.subr.bf16.mxu0 0
      %3461 = vmatpush1.bf16.msra.mxu0 %v3157
      %3462 = vmatprep.subr.bf16.mxu0 0
      %3463 = vmatpush1.bf16.msra.mxu0 %v3158
      %3464 = vmatprep.subr.bf16.mxu0 0
      %3465 = vmatpush1.bf16.msra.mxu0 %v3159
      %3466 = vmatprep.subr.bf16.mxu0 0
      %3467 = vmatpush1.bf16.msra.mxu0 %v3160
      %3468 = vmatprep.subr.bf16.mxu0 0
      %3469 = vmatpush1.bf16.msra.mxu0 %v3161
      %3470 = vmatprep.subr.bf16.mxu0 0
      %3471 = vmatpush1.bf16.msra.mxu0 %v3162
      %3472 = vmatprep.subr.bf16.mxu0 0
      %3473 = vmatpush1.bf16.msra.mxu0 %v3163
      %3474 = vmatprep.subr.bf16.mxu0 0
      %3475 = vmatpush1.bf16.msra.mxu0 %v3164
      %3476 = vmatprep.subr.bf16.mxu0 0
      %3477 = vmatpush1.bf16.msra.mxu0 %v3165
      %3478 = vmatprep.subr.bf16.mxu0 0
      %3479 = vmatpush1.bf16.msra.mxu0 %v3166
      %3480 = vmatprep.subr.bf16.mxu0 0
      %3481 = vmatpush1.bf16.msra.mxu0 %v3167
      %3482 = vmatprep.subr.bf16.mxu0 0
      %3483 = vmatpush1.bf16.msra.mxu0 %v3168
      %3484 = vmatprep.subr.bf16.mxu0 0
      %3485 = vmatpush1.bf16.msra.mxu0 %v3169
      %3486 = vmatprep.subr.bf16.mxu0 0
      %3487 = vmatpush1.bf16.msra.mxu0 %v3170
      %3488 = vmatprep.subr.bf16.mxu0 0
      %3489 = vmatpush1.bf16.msra.mxu0 %v3171
      %3490 = vmatprep.mubr.bf16.mxu0 %v3043
      %3491 = vmatmul.mubr.bf16.gmra.mrb[0].mxu0 %v3042
      %v3492 = vpop.f32.mrb[0].mxu0
      %v3493 = vadd.f32 %v3453, %v3492
      %v3494 = vpop.f32.mrb[0].mxu0
      %v3495 = vpop.f32.mrb[0].mxu0
      %v3496 = vpop.f32.mrb[0].mxu0
      %3497 = vdwg.mxu0
      %v3498 = vadd.f32 %v2242, %v3493
      %v3499 = vld [vmem:[%s26] sm:$0x1]
      %v3500 = vld [vmem:[%s27] sm:$0x1]
      %v3501 = vsel %vm890, %v3498, 0.0
      %3502 = vadd.xlane.f32.xlu0 %v3501
      %v3503 = vpop.xlane.xlu0 %3502
      %v3504 = vmul.f32 %v3503, %v1538
      %v3505 = vsub.f32 %v3498, %v3504
      %v3506 = vmul.f32 %v3505, %v3505
      %v3507 = vsel %vm890, %v3506, 0.0
      %3508 = vadd.xlane.f32.xlu0 %v3507
      %v3509 = vpop.xlane.xlu0 %3508
      %v3510 = vmul.f32 %v3509, %v1538
      %v3511 = vadd.f32 %v3510, 1e-05
      %v3512 = vrsqrt.pop %v3511
      %v3513 = vmul.f32 %v3505, %v3512
      %v3515 = vlaneseq
      %v3516 = vshrl.u32 %v3515, 7
      %v3517 = vsub.s32 0, %v3516
      %v3518 = vrot.slane %v3499, %v3517
      %v3520 = vmul.f32 %v3513, %v3518
      %v3522 = vlaneseq
      %v3523 = vshrl.u32 %v3522, 7
      %v3524 = vsub.s32 0, %v3523
      %v3525 = vrot.slane %v3500, %v3524
      %v3527 = vadd.f32 %v3520, %v3525
      %3528 = vst.msk [vmem:[%s857] sm:$0xff] %vm890, %v3527
      %p3529 = scmp.lt.s32.totalorder %s39, 1
      %s3530 = scalar_select %p3529, %s39, 1
      %s3531 = smul.addr %s3530, 8
      %s3532 = scalar_lea.vmem %s28, %s3531
      // Predicated region
      $region133: #{transformer_forward.6} parent=131 // pred_check
        %p3533 = pneg %p655
      $region134: #{transformer_forward.6} parent=131 // pred_check_branch
        %3535 = sbr.rel (%p3533) target = $region136
      $region135: #{transformer_forward.6} parent=131 // pred_region
        _
      $region136: #{transformer_forward.6} parent=131 // pred_fallthru
        _
    $region132: #{transformer_forward.6} parent=5 // pred_fallthru
      _
    %p3536 = scmp.le.s32.totalorder 2, %s34
    // Predicated region
    $region137: #{transformer_forward.6} parent=5 // pred_check
      %p3537 = pneg %p3536
    $region138: #{transformer_forward.6} parent=5 // pred_check_branch
      %3539 = sbr.rel (%p3537) target = $region140
    $region139: #{transformer_forward.6} parent=5 // pred_region
      %s3540 = ssub.s32 %s34, 2
      // Predicated region
      $region141: #{transformer_forward.6} parent=139 // pred_check
        %p3541 = pneg %p661
      $region142: #{transformer_forward.6} parent=139 // pred_check_branch
        %3543 = sbr.rel (%p3541) target = $region144
      $region143: #{transformer_forward.6} parent=139 // pred_region
        %p3544 = scmp.lt.s32.totalorder %s40, 1
        %s3545 = scalar_select %p3544, %s40, 1
        %s3546 = smul.addr %s3545, 8
        %s3547 = scalar_lea.vmem %s28, %s3546
      $region144: #{transformer_forward.6} parent=139 // pred_fallthru
        _
    $region140: #{transformer_forward.6} parent=5 // pred_fallthru
      _
  $region6: #{transformer_forward.6} parent=0 // loop_footer
    %s38 = sadd.s32 1, %s34
  $region7: #{transformer_forward.6} parent=0 // loop_footer_branch
    %33 = sbr.rel target = $region3
  $region8: #{transformer_forward.6} parent=0 // loop_exit
    _

</llo_original>
